<compile_context>
chip_gen: v7x
topology: tpu7x:2x2x1
jax: 0.10.0
libtpu: 0.0.40
codegen_flags: <defaults>
</compile_context>

<pallas_src>
import numpy as np
import jax
import jax.numpy as jnp
from jax.experimental import pallas as pl
from jax.experimental.pallas import tpu as pltpu

# ----------------------------- static config ------------------------------
N = 2                   # batch
IN_CHANNELS = 4
OUT_CHANNELS = 8
CHANNELS = (8, 16, 32)
H0 = 16                 # input spatial size (square)

CIN_PAD = 32            # channels per kw lane group (>= max Cin = 32)
K_PAD = 128             # contraction width per kh matmul (3*32 padded to 128)
COUT_PAD = 128          # lane-dense output width (>= max Cout = 32)
CHUNK = 192             # row chunk for the stride-1 matmuls (multiple of 8)


def _round8(v):
    return ((v + 7) // 8) * 8


def _geom(h):
    """Flat, halo-padded geometry of an h x h activation map."""
    hp = h + 2                        # padded spatial rows
    wp = _round8(h + 2)               # padded row pitch (sublane aligned)
    return dict(h=h, hp=hp, wp=wp, rows=hp * wp)


def _layer_defs():
    defs = [dict(cin=IN_CHANNELS, cout=CHANNELS[0], stride=1, act=True)]
    for i in range(len(CHANNELS) - 1):
        defs.append(dict(cin=CHANNELS[i], cout=CHANNELS[i], stride=1, act=True))
        defs.append(dict(cin=CHANNELS[i], cout=CHANNELS[i + 1], stride=2,
                         act=True))
    defs.append(dict(cin=CHANNELS[-1], cout=OUT_CHANNELS, stride=1, act=False))
    h = H0
    for d in defs:
        d["gin"] = _geom(h)
        if d["stride"] == 2:
            h //= 2
        d["gout"] = _geom(h)
    return defs


LAYERS = _layer_defs()
NUM_LAYERS = len(LAYERS)
G_IN = LAYERS[0]["gin"]                     # 16x16 -> hp=18, wp=24, rows=432
G_OUT = LAYERS[-1]["gout"]                  # 4x4   -> hp=6,  wp=8,  rows=48
R_MAX = G_IN["rows"]                        # 432 rows per image (largest geom)
R_OUT = G_OUT["h"] * G_OUT["wp"]            # 32 lane-dense output rows / image

# One lane-dense halo mask per geometry used by an intermediate stride-1 layer
# (the final conv needs no mask: its halo columns are sliced away host-side).
_MASK_OFFS = {}
_MASK_GEOMS = []
_off = 0
for _d in LAYERS[:-1]:
    _g = _d["gin"]
    if _d["stride"] == 1 and _g["h"] not in _MASK_OFFS:
        _MASK_OFFS[_g["h"]] = _off
        _MASK_GEOMS.append(_g)
        _off += _g["rows"] - 2 * _g["wp"]
MASK_ROWS = _off                            # 384 (16x16) + 128 (8x8) = 512


def _build_masks():
    m = np.zeros((MASK_ROWS, COUT_PAD), np.float32)
    for g in _MASK_GEOMS:
        off = _MASK_OFFS[g["h"]]
        rc = g["rows"] - 2 * g["wp"]
        col = np.arange(rc) % g["wp"]
        keep = (col >= 1) & (col <= g["h"])
        m[off:off + rc, :] = keep[:, None].astype(np.float32)
    return m


_MASKS_NP = _build_masks()


# ---------------------------------------------------------------------------
# Fused kernel.  Activation layout: flat row = i*Wp + j (padded coords) per
# image, 128 lanes = [act(col-1) | act(col) | act(col+1) | 0] with 32 channels
# per group ("tri-lane" / im2col-at-store).  A 3x3/pad-1 conv is then 3 MXU
# matmuls (one per kh) with K=128, plus bias/SiLU/halo-mask.
# ---------------------------------------------------------------------------
def _fused_kernel(x_ref, w_ref, b_ref, m_ref, o_ref, buf_a, buf_b):
    f32, bf16 = jnp.float32, jnp.bfloat16

    def w_slab(l, kh):
        r0 = (l * 3 + kh) * K_PAD
        return w_ref[r0:r0 + K_PAD, :]                         # (128,128) bf16

    def zero_rows(buf, nrows):
        buf[0:nrows, :] = jnp.zeros((nrows, COUT_PAD), f32)

    def store_trilane(dst, base, z):
        zc = z[:, 0:CIN_PAD]                                   # (rows, 32)
        rows = zc.shape[0]
        dst[base:base + rows, CIN_PAD:2 * CIN_PAD] = zc            # center
        dst[base + 1:base + 1 + rows, 0:CIN_PAD] = zc              # left nbr
        dst[base - 1:base - 1 + rows, 2 * CIN_PAD:3 * CIN_PAD] = zc  # right nbr

    def conv_s1(l, g, read, dst, mask_off, act):
        """3x3 stride-1 conv over all non-halo spatial rows of geometry g."""
        wp, rows = g["wp"], g["rows"]
        rc = rows - 2 * wp                                     # computed rows
        chunk = min(CHUNK, rc)
        bias = jnp.broadcast_to(b_ref[l:l + 1, :], (chunk, COUT_PAD))
        for c0 in range(0, rc, chunk):
            cs = min(chunk, rc - c0)
            base = wp + c0
            acc = None
            for kh in range(3):
                lhs = read(base + (kh - 1) * wp, cs).astype(bf16)
                p = jnp.dot(lhs, w_slab(l, kh), preferred_element_type=f32)
                acc = p if acc is None else acc + p
            z = acc + (bias if cs == chunk else bias[:cs])
            if act:
                z = z * jax.nn.sigmoid(z)                      # SiLU / SWISH
            if mask_off is not None:
                z = z * m_ref[mask_off + c0:mask_off + c0 + cs, :].astype(f32)
            if dst is None:                                    # final conv
                o_ref[0, c0:c0 + cs, :] = z
            else:
                store_trilane(dst, base, z)

    def conv_s2(l, gin, gout, src, dst, act):
        """3x3 stride-2 conv, evaluated only at the kept (even) positions."""
        wpi, wpo = gin["wp"], gout["wp"]
        h_out = gout["h"]
        bias = jnp.broadcast_to(b_ref[l:l + 1, :], (h_out, COUT_PAD))
        for ho in range(h_out):
            acc = None
            for kh in range(3):
                s = (2 * ho + kh) * wpi + 1
                lhs = src[pl.ds(s, h_out, stride=2), :].astype(bf16)
                p = jnp.dot(lhs, w_slab(l, kh), preferred_element_type=f32)
                acc = p if acc is None else acc + p
            z = acc + bias
            if act:
                z = z * jax.nn.sigmoid(z)
            store_trilane(dst, (1 + ho) * wpo + 1, z)

    def read_x(lo, cs):
        return x_ref[0, lo:lo + cs, :]

    bufs = (buf_a, buf_b)
    cur = -1                              # -1: activation still lives in x_ref
    for l, d in enumerate(LAYERS):
        last = l == NUM_LAYERS - 1
        gin, gout = d["gin"], d["gout"]
        if cur < 0:
            read = read_x
            src_buf = None
        else:
            src_buf = bufs[cur]
            read = (lambda lo, cs, _b=src_buf: _b[lo:lo + cs, :])
        nxt = 0 if cur < 0 else 1 - cur
        dst = None if last else bufs[nxt]
        if dst is not None:
            # halo rows of the new geometry must be exact zero for consumers
            zero_rows(dst, gout["rows"])
        if d["stride"] == 1:
            mask_off = None if last else _MASK_OFFS[gin["h"]]
            conv_s1(l, gin, read, dst, mask_off, d["act"])
        else:
            conv_s2(l, gin, gout, src_buf, dst, d["act"])
        cur = nxt


def _fused_forward(x_tri, w_pack, b_pack, masks):
    return pl.pallas_call(
        _fused_kernel,
        out_shape=jax.ShapeDtypeStruct((N, R_OUT, COUT_PAD), jnp.float32),
        grid_spec=pltpu.PrefetchScalarGridSpec(
            num_scalar_prefetch=0,
            grid=(N,),
            in_specs=[
                pl.BlockSpec((1, R_MAX, COUT_PAD), lambda n: (n, 0, 0)),
                pl.BlockSpec((NUM_LAYERS * 3 * K_PAD, COUT_PAD),
                             lambda n: (0, 0)),
                pl.BlockSpec((NUM_LAYERS, COUT_PAD), lambda n: (0, 0)),
                pl.BlockSpec((MASK_ROWS, COUT_PAD), lambda n: (0, 0)),
            ],
            out_specs=pl.BlockSpec((1, R_OUT, COUT_PAD), lambda n: (n, 0, 0)),
            scratch_shapes=[
                pltpu.VMEM((R_MAX, COUT_PAD), jnp.float32),   # ping
                pltpu.VMEM((R_MAX, COUT_PAD), jnp.float32),   # pong
            ],
        ),
        compiler_params=pltpu.CompilerParams(
            dimension_semantics=("parallel",)),
    )(x_tri, w_pack, b_pack, masks)


# ---------------------------------------------------------------------------
# Host-side packing
# ---------------------------------------------------------------------------
def _pack_weights(params):
    """Per layer / per kh: (128,128) block with kw taps stacked along K."""
    blocks = []
    for p in params:
        w = p["w"].astype(jnp.float32)                 # (3,3,cin,cout) HWIO
        cin, cout = w.shape[2], w.shape[3]
        wl = jnp.zeros((3, K_PAD, COUT_PAD), jnp.float32)
        for kh in range(3):
            for kw in range(3):
                wl = wl.at[kh, kw * CIN_PAD:kw * CIN_PAD + cin,
                           :cout].set(w[kh, kw])
        blocks.append(wl.reshape(3 * K_PAD, COUT_PAD))
    return jnp.concatenate(blocks, axis=0).astype(jnp.bfloat16)


def _pack_bias(params):
    rows = [jnp.pad(p["b"].astype(jnp.float32),
                    (0, COUT_PAD - p["b"].shape[0])) for p in params]
    return jnp.stack(rows, axis=0)


@jax.jit
def controlnet_cond_embedding(x_nchw, params):
    """Forward pass matching the PyTorch module (NCHW in, NCHW out)."""
    hp0, wp0 = G_IN["hp"], G_IN["wp"]
    x = jnp.transpose(x_nchw, (0, 2, 3, 1)).astype(jnp.float32)     # NHWC
    x = jnp.pad(x, ((0, 0), (1, 1), (1, wp0 - H0 - 1),
                    (0, CIN_PAD - IN_CHANNELS)))                    # (N,18,24,32)
    xf = x.reshape(N, hp0 * wp0, CIN_PAD)
    # tri-lane (im2col) packing of the input: lanes = [col-1 | col | col+1 | 0]
    left = jnp.pad(xf, ((0, 0), (1, 0), (0, 0)))[:, :hp0 * wp0, :]
    right = jnp.pad(xf, ((0, 0), (0, 1), (0, 0)))[:, 1:, :]
    x_tri = jnp.concatenate([left, xf, right, jnp.zeros_like(xf)], axis=-1)

    w_pack = _pack_weights(params)                                  # bf16
    b_pack = _pack_bias(params)                                     # f32
    masks = jnp.asarray(_MASKS_NP, dtype=jnp.bfloat16)

    out = _fused_forward(x_tri, w_pack, b_pack, masks)              # (N,32,128)
    hf, wpf = G_OUT["h"], G_OUT["wp"]
    y = out.reshape(N, hf, wpf, COUT_PAD)[:, :, 1:hf + 1, :OUT_CHANNELS]
    return jnp.transpose(y, (0, 3, 1, 2))                           # NCHW


# ---------------------------------------------------------------------------
# Parameters (deterministic, in-script): conv_in, stride-1/stride-2 block
# pairs, zero-initialized conv_out (conv_only, no activation).
# ---------------------------------------------------------------------------
def init_params(key, in_channels, out_channels, channels):
    defs = [(in_channels, channels[0], 1, True)]
    for i in range(len(channels) - 1):
        defs.append((channels[i], channels[i], 1, True))
        defs.append((channels[i], channels[i + 1], 2, True))
    defs.append((channels[-1], out_channels, 1, False))

    params = []
    keys = jax.random.split(key, len(defs))
    for idx, (cin, cout, stride, act) in enumerate(defs):
        if idx == len(defs) - 1:          # zero_module(conv_out)
            w = jnp.zeros((3, 3, cin, cout), jnp.float32)
            b = jnp.zeros((cout,), jnp.float32)
        else:
            wk, bk = jax.random.split(keys[idx])
            w = 0.1 * jax.random.normal(wk, (3, 3, cin, cout), jnp.float32)
            b = 0.1 * jax.random.normal(bk, (cout,), jnp.float32)
        params.append({"w": w, "b": b, "stride": stride, "act": act})
    return params


def reference_forward(x_nchw, params):
    """Pure-JAX reference (lax.conv) for correctness checking."""
    x = jnp.transpose(x_nchw, (0, 2, 3, 1))
    dn = jax.lax.conv_dimension_numbers(x.shape, (3, 3, 1, 1),
                                        ("NHWC", "HWIO", "NHWC"))
    for p in params:
        x = jax.lax.conv_general_dilated(
            x, p["w"], window_strides=(p["stride"], p["stride"]),
            padding=((1, 1), (1, 1)), dimension_numbers=dn)
        x = x + p["b"]
        if p["act"]:
            x = x * jax.nn.sigmoid(x)
    return jnp.transpose(x, (0, 3, 1, 2))


if __name__ == "__main__":
    x = jax.random.normal(jax.random.PRNGKey(0), (N, IN_CHANNELS, H0, H0),
                          jnp.float32)
    params = init_params(jax.random.PRNGKey(1), IN_CHANNELS, OUT_CHANNELS,
                         CHANNELS)

    # Spec-faithful forward (conv_out is zero-initialized -> output is zero).
    y = jax.block_until_ready(controlnet_cond_embedding(x, params))
    assert y.shape == (N, OUT_CHANNELS, H0 // 4, H0 // 4), y.shape
    y_ref = reference_forward(x, params)
    assert jnp.allclose(y, y_ref, atol=2e-2, rtol=2e-2), (
        float(jnp.max(jnp.abs(y - y_ref))))

    # Numeric validation with a non-zero conv_out so every layer's math is
    # exercised (tolerance accounts for bf16 MXU operands vs the f32 ref).
    params_nz = [dict(p) for p in params]
    k1, k2 = jax.random.split(jax.random.PRNGKey(2))
    params_nz[-1]["w"] = 0.1 * jax.random.normal(
        k1, params[-1]["w"].shape, jnp.float32)
    params_nz[-1]["b"] = 0.1 * jax.random.normal(
        k2, params[-1]["b"].shape, jnp.float32)
    y_nz = jax.block_until_ready(controlnet_cond_embedding(x, params_nz))
    y_nz_ref = reference_forward(x, params_nz)
    err = float(jnp.max(jnp.abs(y_nz - y_nz_ref)))
    assert jnp.allclose(y_nz, y_nz_ref, atol=2e-2, rtol=2e-2), err

    print("KERNEL_OK")
</pallas_src>

<mosaic_0001>
module attributes {stable_mosaic.version = 11 : i64} {
  func.func @_fused_kernel(%arg0: i32, %arg1: memref<1x432x128xf32, #tpu.memory_space<vmem>>, %arg2: memref<2304x128xbf16, #tpu.memory_space<vmem>>, %arg3: memref<6x128xf32, #tpu.memory_space<vmem>>, %arg4: memref<512x128xbf16, #tpu.memory_space<vmem>>, %arg5: memref<1x32x128xf32, #tpu.memory_space<vmem>>, %arg6: memref<432x128xf32, #tpu.memory_space<vmem>>, %arg7: memref<432x128xf32, #tpu.memory_space<vmem>>) attributes {dimension_semantics = [#tpu.dimension_semantics<parallel>], iteration_bounds = array<i64: 2>, scalar_prefetch = 0 : i64, scratch_operands = 2 : i64, tpu.core_type = #tpu.core_type<tc>, window_params = [{transform_indices = @transform_0, window_bounds = array<i64: 1, 432, 128>}, {pipeline_mode = #tpu.pipeline_mode<synchronous>, transform_indices = @transform_1, window_bounds = array<i64: 2304, 128>}, {pipeline_mode = #tpu.pipeline_mode<synchronous>, transform_indices = @transform_2, window_bounds = array<i64: 6, 128>}, {pipeline_mode = #tpu.pipeline_mode<synchronous>, transform_indices = @transform_3, window_bounds = array<i64: 512, 128>}, {transform_indices = @transform_4, window_bounds = array<i64: 1, 32, 128>}]} {
    %cst = arith.constant 0.000000e+00 : f32
    %0 = vector.broadcast %cst : f32 to vector<432x128xf32>
    %c0 = arith.constant 0 : index
    %c0_0 = arith.constant 0 : index
    %1 = vector.load %arg6[%c0, %c0_0] : memref<432x128xf32, #tpu.memory_space<vmem>>, vector<432x128xf32>
    tpu.vector_store %arg6[%c0, %c0_0], %0 {strides = array<i32>} : memref<432x128xf32, #tpu.memory_space<vmem>>, vector<432x128xf32>,
    %c0_1 = arith.constant 0 : index
    %c0_2 = arith.constant 0 : index
    %2 = vector.load %arg3[%c0_1, %c0_2] : memref<6x128xf32, #tpu.memory_space<vmem>>, vector<1x128xf32>
    %3 = vector.shape_cast %2 : vector<1x128xf32> to vector<1x128xf32>
    %4 = vector.broadcast %3 : vector<1x128xf32> to vector<192x128xf32>
    %c0_3 = arith.constant 0 : index
    %c0_4 = arith.constant 0 : index
    %c0_5 = arith.constant 0 : index
    %5 = vector.load %arg1[%c0_3, %c0_4, %c0_5] : memref<1x432x128xf32, #tpu.memory_space<vmem>>, vector<1x192x128xf32>
    %6 = vector.shape_cast %5 : vector<1x192x128xf32> to vector<192x128xf32>
    %7 = arith.truncf %6 : vector<192x128xf32> to vector<192x128xbf16>
    %c0_6 = arith.constant 0 : index
    %c0_7 = arith.constant 0 : index
    %8 = vector.load %arg2[%c0_6, %c0_7] : memref<2304x128xbf16, #tpu.memory_space<vmem>>, vector<128x128xbf16>
    %cst_8 = arith.constant dense<0.000000e+00> : vector<192x128xf32>
    %9 = tpu.matmul %7, %8, %cst_8 {dimension_numbers = #tpu.dot_dimension_numbers<[1], [0], [0], [1], [0, 0, 1, 1], [], []>} : vector<192x128xbf16>, vector<128x128xbf16>, vector<192x128xf32> -> vector<192x128xf32>
    %c0_9 = arith.constant 0 : index
    %c24 = arith.constant 24 : index
    %c0_10 = arith.constant 0 : index
    %10 = vector.load %arg1[%c0_9, %c24, %c0_10] : memref<1x432x128xf32, #tpu.memory_space<vmem>>, vector<1x192x128xf32>
    %11 = vector.shape_cast %10 : vector<1x192x128xf32> to vector<192x128xf32>
    %12 = arith.truncf %11 : vector<192x128xf32> to vector<192x128xbf16>
    %c128 = arith.constant 128 : index
    %c0_11 = arith.constant 0 : index
    %13 = vector.load %arg2[%c128, %c0_11] : memref<2304x128xbf16, #tpu.memory_space<vmem>>, vector<128x128xbf16>
    %cst_12 = arith.constant dense<0.000000e+00> : vector<192x128xf32>
    %14 = tpu.matmul %12, %13, %cst_12 {dimension_numbers = #tpu.dot_dimension_numbers<[1], [0], [0], [1], [0, 0, 1, 1], [], []>} : vector<192x128xbf16>, vector<128x128xbf16>, vector<192x128xf32> -> vector<192x128xf32>
    %15 = arith.addf %9, %14 : vector<192x128xf32>
    %c0_13 = arith.constant 0 : index
    %c48 = arith.constant 48 : index
    %c0_14 = arith.constant 0 : index
    %16 = vector.load %arg1[%c0_13, %c48, %c0_14] : memref<1x432x128xf32, #tpu.memory_space<vmem>>, vector<1x192x128xf32>
    %17 = vector.shape_cast %16 : vector<1x192x128xf32> to vector<192x128xf32>
    %18 = arith.truncf %17 : vector<192x128xf32> to vector<192x128xbf16>
    %c256 = arith.constant 256 : index
    %c0_15 = arith.constant 0 : index
    %19 = vector.load %arg2[%c256, %c0_15] : memref<2304x128xbf16, #tpu.memory_space<vmem>>, vector<128x128xbf16>
    %cst_16 = arith.constant dense<0.000000e+00> : vector<192x128xf32>
    %20 = tpu.matmul %18, %19, %cst_16 {dimension_numbers = #tpu.dot_dimension_numbers<[1], [0], [0], [1], [0, 0, 1, 1], [], []>} : vector<192x128xbf16>, vector<128x128xbf16>, vector<192x128xf32> -> vector<192x128xf32>
    %21 = arith.addf %15, %20 : vector<192x128xf32>
    %22 = arith.addf %21, %4 : vector<192x128xf32>
    %23 = arith.negf %22 : vector<192x128xf32>
    %24 = math.exp %23 : vector<192x128xf32>
    %cst_17 = arith.constant 1.000000e+00 : f32
    %25 = vector.broadcast %cst_17 : f32 to vector<192x128xf32>
    %26 = arith.addf %25, %24 : vector<192x128xf32>
    %27 = arith.divf %25, %26 : vector<192x128xf32>
    %28 = arith.mulf %22, %27 : vector<192x128xf32>
    %c0_18 = arith.constant 0 : index
    %c0_19 = arith.constant 0 : index
    %29 = vector.load %arg4[%c0_18, %c0_19] : memref<512x128xbf16, #tpu.memory_space<vmem>>, vector<192x128xbf16>
    %30 = arith.extf %29 : vector<192x128xbf16> to vector<192x128xf32>
    %31 = arith.mulf %28, %30 : vector<192x128xf32>
    %32 = vector.extract_strided_slice %31 {offsets = [0, 0], sizes = [192, 32], strides = [1, 1]} : vector<192x128xf32> to vector<192x32xf32>
    %c24_20 = arith.constant 24 : index
    %c32 = arith.constant 32 : index
    %33 = vector.load %arg6[%c24_20, %c32] : memref<432x128xf32, #tpu.memory_space<vmem>>, vector<192x32xf32>
    tpu.vector_store %arg6[%c24_20, %c32], %32 {strides = array<i32>} : memref<432x128xf32, #tpu.memory_space<vmem>>, vector<192x32xf32>,
    %c25 = arith.constant 25 : index
    %c0_21 = arith.constant 0 : index
    %34 = vector.load %arg6[%c25, %c0_21] : memref<432x128xf32, #tpu.memory_space<vmem>>, vector<192x32xf32>
    tpu.vector_store %arg6[%c25, %c0_21], %32 {strides = array<i32>} : memref<432x128xf32, #tpu.memory_space<vmem>>, vector<192x32xf32>,
    %c23 = arith.constant 23 : index
    %c64 = arith.constant 64 : index
    %35 = vector.load %arg6[%c23, %c64] : memref<432x128xf32, #tpu.memory_space<vmem>>, vector<192x32xf32>
    tpu.vector_store %arg6[%c23, %c64], %32 {strides = array<i32>} : memref<432x128xf32, #tpu.memory_space<vmem>>, vector<192x32xf32>,
    %c0_22 = arith.constant 0 : index
    %c192 = arith.constant 192 : index
    %c0_23 = arith.constant 0 : index
    %36 = vector.load %arg1[%c0_22, %c192, %c0_23] : memref<1x432x128xf32, #tpu.memory_space<vmem>>, vector<1x192x128xf32>
    %37 = vector.shape_cast %36 : vector<1x192x128xf32> to vector<192x128xf32>
    %38 = arith.truncf %37 : vector<192x128xf32> to vector<192x128xbf16>
    %c0_24 = arith.constant 0 : index
    %c0_25 = arith.constant 0 : index
    %39 = vector.load %arg2[%c0_24, %c0_25] : memref<2304x128xbf16, #tpu.memory_space<vmem>>, vector<128x128xbf16>
    %cst_26 = arith.constant dense<0.000000e+00> : vector<192x128xf32>
    %40 = tpu.matmul %38, %39, %cst_26 {dimension_numbers = #tpu.dot_dimension_numbers<[1], [0], [0], [1], [0, 0, 1, 1], [], []>} : vector<192x128xbf16>, vector<128x128xbf16>, vector<192x128xf32> -> vector<192x128xf32>
    %c0_27 = arith.constant 0 : index
    %c216 = arith.constant 216 : index
    %c0_28 = arith.constant 0 : index
    %41 = vector.load %arg1[%c0_27, %c216, %c0_28] : memref<1x432x128xf32, #tpu.memory_space<vmem>>, vector<1x192x128xf32>
    %42 = vector.shape_cast %41 : vector<1x192x128xf32> to vector<192x128xf32>
    %43 = arith.truncf %42 : vector<192x128xf32> to vector<192x128xbf16>
    %c128_29 = arith.constant 128 : index
    %c0_30 = arith.constant 0 : index
    %44 = vector.load %arg2[%c128_29, %c0_30] : memref<2304x128xbf16, #tpu.memory_space<vmem>>, vector<128x128xbf16>
    %cst_31 = arith.constant dense<0.000000e+00> : vector<192x128xf32>
    %45 = tpu.matmul %43, %44, %cst_31 {dimension_numbers = #tpu.dot_dimension_numbers<[1], [0], [0], [1], [0, 0, 1, 1], [], []>} : vector<192x128xbf16>, vector<128x128xbf16>, vector<192x128xf32> -> vector<192x128xf32>
    %46 = arith.addf %40, %45 : vector<192x128xf32>
    %c0_32 = arith.constant 0 : index
    %c240 = arith.constant 240 : index
    %c0_33 = arith.constant 0 : index
    %47 = vector.load %arg1[%c0_32, %c240, %c0_33] : memref<1x432x128xf32, #tpu.memory_space<vmem>>, vector<1x192x128xf32>
    %48 = vector.shape_cast %47 : vector<1x192x128xf32> to vector<192x128xf32>
    %49 = arith.truncf %48 : vector<192x128xf32> to vector<192x128xbf16>
    %c256_34 = arith.constant 256 : index
    %c0_35 = arith.constant 0 : index
    %50 = vector.load %arg2[%c256_34, %c0_35] : memref<2304x128xbf16, #tpu.memory_space<vmem>>, vector<128x128xbf16>
    %cst_36 = arith.constant dense<0.000000e+00> : vector<192x128xf32>
    %51 = tpu.matmul %49, %50, %cst_36 {dimension_numbers = #tpu.dot_dimension_numbers<[1], [0], [0], [1], [0, 0, 1, 1], [], []>} : vector<192x128xbf16>, vector<128x128xbf16>, vector<192x128xf32> -> vector<192x128xf32>
    %52 = arith.addf %46, %51 : vector<192x128xf32>
    %53 = arith.addf %52, %4 : vector<192x128xf32>
    %54 = arith.negf %53 : vector<192x128xf32>
    %55 = math.exp %54 : vector<192x128xf32>
    %cst_37 = arith.constant 1.000000e+00 : f32
    %56 = vector.broadcast %cst_37 : f32 to vector<192x128xf32>
    %57 = arith.addf %56, %55 : vector<192x128xf32>
    %58 = arith.divf %56, %57 : vector<192x128xf32>
    %59 = arith.mulf %53, %58 : vector<192x128xf32>
    %c192_38 = arith.constant 192 : index
    %c0_39 = arith.constant 0 : index
    %60 = vector.load %arg4[%c192_38, %c0_39] : memref<512x128xbf16, #tpu.memory_space<vmem>>, vector<192x128xbf16>
    %61 = arith.extf %60 : vector<192x128xbf16> to vector<192x128xf32>
    %62 = arith.mulf %59, %61 : vector<192x128xf32>
    %63 = vector.extract_strided_slice %62 {offsets = [0, 0], sizes = [192, 32], strides = [1, 1]} : vector<192x128xf32> to vector<192x32xf32>
    %c216_40 = arith.constant 216 : index
    %c32_41 = arith.constant 32 : index
    %64 = vector.load %arg6[%c216_40, %c32_41] : memref<432x128xf32, #tpu.memory_space<vmem>>, vector<192x32xf32>
    tpu.vector_store %arg6[%c216_40, %c32_41], %63 {strides = array<i32>} : memref<432x128xf32, #tpu.memory_space<vmem>>, vector<192x32xf32>,
    %c217 = arith.constant 217 : index
    %c0_42 = arith.constant 0 : index
    %65 = vector.load %arg6[%c217, %c0_42] : memref<432x128xf32, #tpu.memory_space<vmem>>, vector<192x32xf32>
    tpu.vector_store %arg6[%c217, %c0_42], %63 {strides = array<i32>} : memref<432x128xf32, #tpu.memory_space<vmem>>, vector<192x32xf32>,
    %c215 = arith.constant 215 : index
    %c64_43 = arith.constant 64 : index
    %66 = vector.load %arg6[%c215, %c64_43] : memref<432x128xf32, #tpu.memory_space<vmem>>, vector<192x32xf32>
    tpu.vector_store %arg6[%c215, %c64_43], %63 {strides = array<i32>} : memref<432x128xf32, #tpu.memory_space<vmem>>, vector<192x32xf32>,
    %cst_44 = arith.constant 0.000000e+00 : f32
    %67 = vector.broadcast %cst_44 : f32 to vector<432x128xf32>
    %c0_45 = arith.constant 0 : index
    %c0_46 = arith.constant 0 : index
    %68 = vector.load %arg7[%c0_45, %c0_46] : memref<432x128xf32, #tpu.memory_space<vmem>>, vector<432x128xf32>
    tpu.vector_store %arg7[%c0_45, %c0_46], %67 {strides = array<i32>} : memref<432x128xf32, #tpu.memory_space<vmem>>, vector<432x128xf32>,
    %c1 = arith.constant 1 : index
    %c0_47 = arith.constant 0 : index
    %69 = vector.load %arg3[%c1, %c0_47] : memref<6x128xf32, #tpu.memory_space<vmem>>, vector<1x128xf32>
    %70 = vector.shape_cast %69 : vector<1x128xf32> to vector<1x128xf32>
    %71 = vector.broadcast %70 : vector<1x128xf32> to vector<192x128xf32>
    %c0_48 = arith.constant 0 : index
    %c0_49 = arith.constant 0 : index
    %72 = vector.load %arg6[%c0_48, %c0_49] : memref<432x128xf32, #tpu.memory_space<vmem>>, vector<192x128xf32>
    %73 = arith.truncf %72 : vector<192x128xf32> to vector<192x128xbf16>
    %c384 = arith.constant 384 : index
    %c0_50 = arith.constant 0 : index
    %74 = vector.load %arg2[%c384, %c0_50] : memref<2304x128xbf16, #tpu.memory_space<vmem>>, vector<128x128xbf16>
    %cst_51 = arith.constant dense<0.000000e+00> : vector<192x128xf32>
    %75 = tpu.matmul %73, %74, %cst_51 {dimension_numbers = #tpu.dot_dimension_numbers<[1], [0], [0], [1], [0, 0, 1, 1], [], []>} : vector<192x128xbf16>, vector<128x128xbf16>, vector<192x128xf32> -> vector<192x128xf32>
    %c24_52 = arith.constant 24 : index
    %c0_53 = arith.constant 0 : index
    %76 = vector.load %arg6[%c24_52, %c0_53] : memref<432x128xf32, #tpu.memory_space<vmem>>, vector<192x128xf32>
    %77 = arith.truncf %76 : vector<192x128xf32> to vector<192x128xbf16>
    %c512 = arith.constant 512 : index
    %c0_54 = arith.constant 0 : index
    %78 = vector.load %arg2[%c512, %c0_54] : memref<2304x128xbf16, #tpu.memory_space<vmem>>, vector<128x128xbf16>
    %cst_55 = arith.constant dense<0.000000e+00> : vector<192x128xf32>
    %79 = tpu.matmul %77, %78, %cst_55 {dimension_numbers = #tpu.dot_dimension_numbers<[1], [0], [0], [1], [0, 0, 1, 1], [], []>} : vector<192x128xbf16>, vector<128x128xbf16>, vector<192x128xf32> -> vector<192x128xf32>
    %80 = arith.addf %75, %79 : vector<192x128xf32>
    %c48_56 = arith.constant 48 : index
    %c0_57 = arith.constant 0 : index
    %81 = vector.load %arg6[%c48_56, %c0_57] : memref<432x128xf32, #tpu.memory_space<vmem>>, vector<192x128xf32>
    %82 = arith.truncf %81 : vector<192x128xf32> to vector<192x128xbf16>
    %c640 = arith.constant 640 : index
    %c0_58 = arith.constant 0 : index
    %83 = vector.load %arg2[%c640, %c0_58] : memref<2304x128xbf16, #tpu.memory_space<vmem>>, vector<128x128xbf16>
    %cst_59 = arith.constant dense<0.000000e+00> : vector<192x128xf32>
    %84 = tpu.matmul %82, %83, %cst_59 {dimension_numbers = #tpu.dot_dimension_numbers<[1], [0], [0], [1], [0, 0, 1, 1], [], []>} : vector<192x128xbf16>, vector<128x128xbf16>, vector<192x128xf32> -> vector<192x128xf32>
    %85 = arith.addf %80, %84 : vector<192x128xf32>
    %86 = arith.addf %85, %71 : vector<192x128xf32>
    %87 = arith.negf %86 : vector<192x128xf32>
    %88 = math.exp %87 : vector<192x128xf32>
    %cst_60 = arith.constant 1.000000e+00 : f32
    %89 = vector.broadcast %cst_60 : f32 to vector<192x128xf32>
    %90 = arith.addf %89, %88 : vector<192x128xf32>
    %91 = arith.divf %89, %90 : vector<192x128xf32>
    %92 = arith.mulf %86, %91 : vector<192x128xf32>
    %c0_61 = arith.constant 0 : index
    %c0_62 = arith.constant 0 : index
    %93 = vector.load %arg4[%c0_61, %c0_62] : memref<512x128xbf16, #tpu.memory_space<vmem>>, vector<192x128xbf16>
    %94 = arith.extf %93 : vector<192x128xbf16> to vector<192x128xf32>
    %95 = arith.mulf %92, %94 : vector<192x128xf32>
    %96 = vector.extract_strided_slice %95 {offsets = [0, 0], sizes = [192, 32], strides = [1, 1]} : vector<192x128xf32> to vector<192x32xf32>
    %c24_63 = arith.constant 24 : index
    %c32_64 = arith.constant 32 : index
    %97 = vector.load %arg7[%c24_63, %c32_64] : memref<432x128xf32, #tpu.memory_space<vmem>>, vector<192x32xf32>
    tpu.vector_store %arg7[%c24_63, %c32_64], %96 {strides = array<i32>} : memref<432x128xf32, #tpu.memory_space<vmem>>, vector<192x32xf32>,
    %c25_65 = arith.constant 25 : index
    %c0_66 = arith.constant 0 : index
    %98 = vector.load %arg7[%c25_65, %c0_66] : memref<432x128xf32, #tpu.memory_space<vmem>>, vector<192x32xf32>
    tpu.vector_store %arg7[%c25_65, %c0_66], %96 {strides = array<i32>} : memref<432x128xf32, #tpu.memory_space<vmem>>, vector<192x32xf32>,
    %c23_67 = arith.constant 23 : index
    %c64_68 = arith.constant 64 : index
    %99 = vector.load %arg7[%c23_67, %c64_68] : memref<432x128xf32, #tpu.memory_space<vmem>>, vector<192x32xf32>
    tpu.vector_store %arg7[%c23_67, %c64_68], %96 {strides = array<i32>} : memref<432x128xf32, #tpu.memory_space<vmem>>, vector<192x32xf32>,
    %c192_69 = arith.constant 192 : index
    %c0_70 = arith.constant 0 : index
    %100 = vector.load %arg6[%c192_69, %c0_70] : memref<432x128xf32, #tpu.memory_space<vmem>>, vector<192x128xf32>
    %101 = arith.truncf %100 : vector<192x128xf32> to vector<192x128xbf16>
    %c384_71 = arith.constant 384 : index
    %c0_72 = arith.constant 0 : index
    %102 = vector.load %arg2[%c384_71, %c0_72] : memref<2304x128xbf16, #tpu.memory_space<vmem>>, vector<128x128xbf16>
    %cst_73 = arith.constant dense<0.000000e+00> : vector<192x128xf32>
    %103 = tpu.matmul %101, %102, %cst_73 {dimension_numbers = #tpu.dot_dimension_numbers<[1], [0], [0], [1], [0, 0, 1, 1], [], []>} : vector<192x128xbf16>, vector<128x128xbf16>, vector<192x128xf32> -> vector<192x128xf32>
    %c216_74 = arith.constant 216 : index
    %c0_75 = arith.constant 0 : index
    %104 = vector.load %arg6[%c216_74, %c0_75] : memref<432x128xf32, #tpu.memory_space<vmem>>, vector<192x128xf32>
    %105 = arith.truncf %104 : vector<192x128xf32> to vector<192x128xbf16>
    %c512_76 = arith.constant 512 : index
    %c0_77 = arith.constant 0 : index
    %106 = vector.load %arg2[%c512_76, %c0_77] : memref<2304x128xbf16, #tpu.memory_space<vmem>>, vector<128x128xbf16>
    %cst_78 = arith.constant dense<0.000000e+00> : vector<192x128xf32>
    %107 = tpu.matmul %105, %106, %cst_78 {dimension_numbers = #tpu.dot_dimension_numbers<[1], [0], [0], [1], [0, 0, 1, 1], [], []>} : vector<192x128xbf16>, vector<128x128xbf16>, vector<192x128xf32> -> vector<192x128xf32>
    %108 = arith.addf %103, %107 : vector<192x128xf32>
    %c240_79 = arith.constant 240 : index
    %c0_80 = arith.constant 0 : index
    %109 = vector.load %arg6[%c240_79, %c0_80] : memref<432x128xf32, #tpu.memory_space<vmem>>, vector<192x128xf32>
    %110 = arith.truncf %109 : vector<192x128xf32> to vector<192x128xbf16>
    %c640_81 = arith.constant 640 : index
    %c0_82 = arith.constant 0 : index
    %111 = vector.load %arg2[%c640_81, %c0_82] : memref<2304x128xbf16, #tpu.memory_space<vmem>>, vector<128x128xbf16>
    %cst_83 = arith.constant dense<0.000000e+00> : vector<192x128xf32>
    %112 = tpu.matmul %110, %111, %cst_83 {dimension_numbers = #tpu.dot_dimension_numbers<[1], [0], [0], [1], [0, 0, 1, 1], [], []>} : vector<192x128xbf16>, vector<128x128xbf16>, vector<192x128xf32> -> vector<192x128xf32>
    %113 = arith.addf %108, %112 : vector<192x128xf32>
    %114 = arith.addf %113, %71 : vector<192x128xf32>
    %115 = arith.negf %114 : vector<192x128xf32>
    %116 = math.exp %115 : vector<192x128xf32>
    %cst_84 = arith.constant 1.000000e+00 : f32
    %117 = vector.broadcast %cst_84 : f32 to vector<192x128xf32>
    %118 = arith.addf %117, %116 : vector<192x128xf32>
    %119 = arith.divf %117, %118 : vector<192x128xf32>
    %120 = arith.mulf %114, %119 : vector<192x128xf32>
    %c192_85 = arith.constant 192 : index
    %c0_86 = arith.constant 0 : index
    %121 = vector.load %arg4[%c192_85, %c0_86] : memref<512x128xbf16, #tpu.memory_space<vmem>>, vector<192x128xbf16>
    %122 = arith.extf %121 : vector<192x128xbf16> to vector<192x128xf32>
    %123 = arith.mulf %120, %122 : vector<192x128xf32>
    %124 = vector.extract_strided_slice %123 {offsets = [0, 0], sizes = [192, 32], strides = [1, 1]} : vector<192x128xf32> to vector<192x32xf32>
    %c216_87 = arith.constant 216 : index
    %c32_88 = arith.constant 32 : index
    %125 = vector.load %arg7[%c216_87, %c32_88] : memref<432x128xf32, #tpu.memory_space<vmem>>, vector<192x32xf32>
    tpu.vector_store %arg7[%c216_87, %c32_88], %124 {strides = array<i32>} : memref<432x128xf32, #tpu.memory_space<vmem>>, vector<192x32xf32>,
    %c217_89 = arith.constant 217 : index
    %c0_90 = arith.constant 0 : index
    %126 = vector.load %arg7[%c217_89, %c0_90] : memref<432x128xf32, #tpu.memory_space<vmem>>, vector<192x32xf32>
    tpu.vector_store %arg7[%c217_89, %c0_90], %124 {strides = array<i32>} : memref<432x128xf32, #tpu.memory_space<vmem>>, vector<192x32xf32>,
    %c215_91 = arith.constant 215 : index
    %c64_92 = arith.constant 64 : index
    %127 = vector.load %arg7[%c215_91, %c64_92] : memref<432x128xf32, #tpu.memory_space<vmem>>, vector<192x32xf32>
    tpu.vector_store %arg7[%c215_91, %c64_92], %124 {strides = array<i32>} : memref<432x128xf32, #tpu.memory_space<vmem>>, vector<192x32xf32>,
    %cst_93 = arith.constant 0.000000e+00 : f32
    %128 = vector.broadcast %cst_93 : f32 to vector<160x128xf32>
    %c0_94 = arith.constant 0 : index
    %c0_95 = arith.constant 0 : index
    %129 = vector.load %arg6[%c0_94, %c0_95] : memref<432x128xf32, #tpu.memory_space<vmem>>, vector<160x128xf32>
    tpu.vector_store %arg6[%c0_94, %c0_95], %128 {strides = array<i32>} : memref<432x128xf32, #tpu.memory_space<vmem>>, vector<160x128xf32>,
    %c2 = arith.constant 2 : index
    %c0_96 = arith.constant 0 : index
    %130 = vector.load %arg3[%c2, %c0_96] : memref<6x128xf32, #tpu.memory_space<vmem>>, vector<1x128xf32>
    %131 = vector.shape_cast %130 : vector<1x128xf32> to vector<1x128xf32>
    %132 = vector.broadcast %131 : vector<1x128xf32> to vector<8x128xf32>
    %c1_97 = arith.constant 1 : index
    %c0_98 = arith.constant 0 : index
    %133 = tpu.strided_load %arg7[%c1_97, %c0_98] {strides = array<i32: 2, 1>} : memref<432x128xf32, #tpu.memory_space<vmem>>, vector<8x128xf32>
    %134 = arith.truncf %133 : vector<8x128xf32> to vector<8x128xbf16>
    %c768 = arith.constant 768 : index
    %c0_99 = arith.constant 0 : index
    %135 = vector.load %arg2[%c768, %c0_99] : memref<2304x128xbf16, #tpu.memory_space<vmem>>, vector<128x128xbf16>
    %cst_100 = arith.constant dense<0.000000e+00> : vector<8x128xf32>
    %136 = tpu.matmul %134, %135, %cst_100 {dimension_numbers = #tpu.dot_dimension_numbers<[1], [0], [0], [1], [0, 0, 1, 1], [], []>} : vector<8x128xbf16>, vector<128x128xbf16>, vector<8x128xf32> -> vector<8x128xf32>
    %c25_101 = arith.constant 25 : index
    %c0_102 = arith.constant 0 : index
    %137 = tpu.strided_load %arg7[%c25_101, %c0_102] {strides = array<i32: 2, 1>} : memref<432x128xf32, #tpu.memory_space<vmem>>, vector<8x128xf32>
    %138 = arith.truncf %137 : vector<8x128xf32> to vector<8x128xbf16>
    %c896 = arith.constant 896 : index
    %c0_103 = arith.constant 0 : index
    %139 = vector.load %arg2[%c896, %c0_103] : memref<2304x128xbf16, #tpu.memory_space<vmem>>, vector<128x128xbf16>
    %cst_104 = arith.constant dense<0.000000e+00> : vector<8x128xf32>
    %140 = tpu.matmul %138, %139, %cst_104 {dimension_numbers = #tpu.dot_dimension_numbers<[1], [0], [0], [1], [0, 0, 1, 1], [], []>} : vector<8x128xbf16>, vector<128x128xbf16>, vector<8x128xf32> -> vector<8x128xf32>
    %141 = arith.addf %136, %140 : vector<8x128xf32>
    %c49 = arith.constant 49 : index
    %c0_105 = arith.constant 0 : index
    %142 = tpu.strided_load %arg7[%c49, %c0_105] {strides = array<i32: 2, 1>} : memref<432x128xf32, #tpu.memory_space<vmem>>, vector<8x128xf32>
    %143 = arith.truncf %142 : vector<8x128xf32> to vector<8x128xbf16>
    %c1024 = arith.constant 1024 : index
    %c0_106 = arith.constant 0 : index
    %144 = vector.load %arg2[%c1024, %c0_106] : memref<2304x128xbf16, #tpu.memory_space<vmem>>, vector<128x128xbf16>
    %cst_107 = arith.constant dense<0.000000e+00> : vector<8x128xf32>
    %145 = tpu.matmul %143, %144, %cst_107 {dimension_numbers = #tpu.dot_dimension_numbers<[1], [0], [0], [1], [0, 0, 1, 1], [], []>} : vector<8x128xbf16>, vector<128x128xbf16>, vector<8x128xf32> -> vector<8x128xf32>
    %146 = arith.addf %141, %145 : vector<8x128xf32>
    %147 = arith.addf %146, %132 : vector<8x128xf32>
    %148 = arith.negf %147 : vector<8x128xf32>
    %149 = math.exp %148 : vector<8x128xf32>
    %cst_108 = arith.constant 1.000000e+00 : f32
    %150 = vector.broadcast %cst_108 : f32 to vector<8x128xf32>
    %151 = arith.addf %150, %149 : vector<8x128xf32>
    %152 = arith.divf %150, %151 : vector<8x128xf32>
    %153 = arith.mulf %147, %152 : vector<8x128xf32>
    %154 = vector.extract_strided_slice %153 {offsets = [0, 0], sizes = [8, 32], strides = [1, 1]} : vector<8x128xf32> to vector<8x32xf32>
    %c17 = arith.constant 17 : index
    %c32_109 = arith.constant 32 : index
    %155 = vector.load %arg6[%c17, %c32_109] : memref<432x128xf32, #tpu.memory_space<vmem>>, vector<8x32xf32>
    tpu.vector_store %arg6[%c17, %c32_109], %154 {strides = array<i32>} : memref<432x128xf32, #tpu.memory_space<vmem>>, vector<8x32xf32>,
    %c18 = arith.constant 18 : index
    %c0_110 = arith.constant 0 : index
    %156 = vector.load %arg6[%c18, %c0_110] : memref<432x128xf32, #tpu.memory_space<vmem>>, vector<8x32xf32>
    tpu.vector_store %arg6[%c18, %c0_110], %154 {strides = array<i32>} : memref<432x128xf32, #tpu.memory_space<vmem>>, vector<8x32xf32>,
    %c16 = arith.constant 16 : index
    %c64_111 = arith.constant 64 : index
    %157 = vector.load %arg6[%c16, %c64_111] : memref<432x128xf32, #tpu.memory_space<vmem>>, vector<8x32xf32>
    tpu.vector_store %arg6[%c16, %c64_111], %154 {strides = array<i32>} : memref<432x128xf32, #tpu.memory_space<vmem>>, vector<8x32xf32>,
    %c49_112 = arith.constant 49 : index
    %c0_113 = arith.constant 0 : index
    %158 = tpu.strided_load %arg7[%c49_112, %c0_113] {strides = array<i32: 2, 1>} : memref<432x128xf32, #tpu.memory_space<vmem>>, vector<8x128xf32>
    %159 = arith.truncf %158 : vector<8x128xf32> to vector<8x128xbf16>
    %c768_114 = arith.constant 768 : index
    %c0_115 = arith.constant 0 : index
    %160 = vector.load %arg2[%c768_114, %c0_115] : memref<2304x128xbf16, #tpu.memory_space<vmem>>, vector<128x128xbf16>
    %cst_116 = arith.constant dense<0.000000e+00> : vector<8x128xf32>
    %161 = tpu.matmul %159, %160, %cst_116 {dimension_numbers = #tpu.dot_dimension_numbers<[1], [0], [0], [1], [0, 0, 1, 1], [], []>} : vector<8x128xbf16>, vector<128x128xbf16>, vector<8x128xf32> -> vector<8x128xf32>
    %c73 = arith.constant 73 : index
    %c0_117 = arith.constant 0 : index
    %162 = tpu.strided_load %arg7[%c73, %c0_117] {strides = array<i32: 2, 1>} : memref<432x128xf32, #tpu.memory_space<vmem>>, vector<8x128xf32>
    %163 = arith.truncf %162 : vector<8x128xf32> to vector<8x128xbf16>
    %c896_118 = arith.constant 896 : index
    %c0_119 = arith.constant 0 : index
    %164 = vector.load %arg2[%c896_118, %c0_119] : memref<2304x128xbf16, #tpu.memory_space<vmem>>, vector<128x128xbf16>
    %cst_120 = arith.constant dense<0.000000e+00> : vector<8x128xf32>
    %165 = tpu.matmul %163, %164, %cst_120 {dimension_numbers = #tpu.dot_dimension_numbers<[1], [0], [0], [1], [0, 0, 1, 1], [], []>} : vector<8x128xbf16>, vector<128x128xbf16>, vector<8x128xf32> -> vector<8x128xf32>
    %166 = arith.addf %161, %165 : vector<8x128xf32>
    %c97 = arith.constant 97 : index
    %c0_121 = arith.constant 0 : index
    %167 = tpu.strided_load %arg7[%c97, %c0_121] {strides = array<i32: 2, 1>} : memref<432x128xf32, #tpu.memory_space<vmem>>, vector<8x128xf32>
    %168 = arith.truncf %167 : vector<8x128xf32> to vector<8x128xbf16>
    %c1024_122 = arith.constant 1024 : index
    %c0_123 = arith.constant 0 : index
    %169 = vector.load %arg2[%c1024_122, %c0_123] : memref<2304x128xbf16, #tpu.memory_space<vmem>>, vector<128x128xbf16>
    %cst_124 = arith.constant dense<0.000000e+00> : vector<8x128xf32>
    %170 = tpu.matmul %168, %169, %cst_124 {dimension_numbers = #tpu.dot_dimension_numbers<[1], [0], [0], [1], [0, 0, 1, 1], [], []>} : vector<8x128xbf16>, vector<128x128xbf16>, vector<8x128xf32> -> vector<8x128xf32>
    %171 = arith.addf %166, %170 : vector<8x128xf32>
    %172 = arith.addf %171, %132 : vector<8x128xf32>
    %173 = arith.negf %172 : vector<8x128xf32>
    %174 = math.exp %173 : vector<8x128xf32>
    %cst_125 = arith.constant 1.000000e+00 : f32
    %175 = vector.broadcast %cst_125 : f32 to vector<8x128xf32>
    %176 = arith.addf %175, %174 : vector<8x128xf32>
    %177 = arith.divf %175, %176 : vector<8x128xf32>
    %178 = arith.mulf %172, %177 : vector<8x128xf32>
    %179 = vector.extract_strided_slice %178 {offsets = [0, 0], sizes = [8, 32], strides = [1, 1]} : vector<8x128xf32> to vector<8x32xf32>
    %c33 = arith.constant 33 : index
    %c32_126 = arith.constant 32 : index
    %180 = vector.load %arg6[%c33, %c32_126] : memref<432x128xf32, #tpu.memory_space<vmem>>, vector<8x32xf32>
    tpu.vector_store %arg6[%c33, %c32_126], %179 {strides = array<i32>} : memref<432x128xf32, #tpu.memory_space<vmem>>, vector<8x32xf32>,
    %c34 = arith.constant 34 : index
    %c0_127 = arith.constant 0 : index
    %181 = vector.load %arg6[%c34, %c0_127] : memref<432x128xf32, #tpu.memory_space<vmem>>, vector<8x32xf32>
    tpu.vector_store %arg6[%c34, %c0_127], %179 {strides = array<i32>} : memref<432x128xf32, #tpu.memory_space<vmem>>, vector<8x32xf32>,
    %c32_128 = arith.constant 32 : index
    %c64_129 = arith.constant 64 : index
    %182 = vector.load %arg6[%c32_128, %c64_129] : memref<432x128xf32, #tpu.memory_space<vmem>>, vector<8x32xf32>
    tpu.vector_store %arg6[%c32_128, %c64_129], %179 {strides = array<i32>} : memref<432x128xf32, #tpu.memory_space<vmem>>, vector<8x32xf32>,
    %c97_130 = arith.constant 97 : index
    %c0_131 = arith.constant 0 : index
    %183 = tpu.strided_load %arg7[%c97_130, %c0_131] {strides = array<i32: 2, 1>} : memref<432x128xf32, #tpu.memory_space<vmem>>, vector<8x128xf32>
    %184 = arith.truncf %183 : vector<8x128xf32> to vector<8x128xbf16>
    %c768_132 = arith.constant 768 : index
    %c0_133 = arith.constant 0 : index
    %185 = vector.load %arg2[%c768_132, %c0_133] : memref<2304x128xbf16, #tpu.memory_space<vmem>>, vector<128x128xbf16>
    %cst_134 = arith.constant dense<0.000000e+00> : vector<8x128xf32>
    %186 = tpu.matmul %184, %185, %cst_134 {dimension_numbers = #tpu.dot_dimension_numbers<[1], [0], [0], [1], [0, 0, 1, 1], [], []>} : vector<8x128xbf16>, vector<128x128xbf16>, vector<8x128xf32> -> vector<8x128xf32>
    %c121 = arith.constant 121 : index
    %c0_135 = arith.constant 0 : index
    %187 = tpu.strided_load %arg7[%c121, %c0_135] {strides = array<i32: 2, 1>} : memref<432x128xf32, #tpu.memory_space<vmem>>, vector<8x128xf32>
    %188 = arith.truncf %187 : vector<8x128xf32> to vector<8x128xbf16>
    %c896_136 = arith.constant 896 : index
    %c0_137 = arith.constant 0 : index
    %189 = vector.load %arg2[%c896_136, %c0_137] : memref<2304x128xbf16, #tpu.memory_space<vmem>>, vector<128x128xbf16>
    %cst_138 = arith.constant dense<0.000000e+00> : vector<8x128xf32>
    %190 = tpu.matmul %188, %189, %cst_138 {dimension_numbers = #tpu.dot_dimension_numbers<[1], [0], [0], [1], [0, 0, 1, 1], [], []>} : vector<8x128xbf16>, vector<128x128xbf16>, vector<8x128xf32> -> vector<8x128xf32>
    %191 = arith.addf %186, %190 : vector<8x128xf32>
    %c145 = arith.constant 145 : index
    %c0_139 = arith.constant 0 : index
    %192 = tpu.strided_load %arg7[%c145, %c0_139] {strides = array<i32: 2, 1>} : memref<432x128xf32, #tpu.memory_space<vmem>>, vector<8x128xf32>
    %193 = arith.truncf %192 : vector<8x128xf32> to vector<8x128xbf16>
    %c1024_140 = arith.constant 1024 : index
    %c0_141 = arith.constant 0 : index
    %194 = vector.load %arg2[%c1024_140, %c0_141] : memref<2304x128xbf16, #tpu.memory_space<vmem>>, vector<128x128xbf16>
    %cst_142 = arith.constant dense<0.000000e+00> : vector<8x128xf32>
    %195 = tpu.matmul %193, %194, %cst_142 {dimension_numbers = #tpu.dot_dimension_numbers<[1], [0], [0], [1], [0, 0, 1, 1], [], []>} : vector<8x128xbf16>, vector<128x128xbf16>, vector<8x128xf32> -> vector<8x128xf32>
    %196 = arith.addf %191, %195 : vector<8x128xf32>
    %197 = arith.addf %196, %132 : vector<8x128xf32>
    %198 = arith.negf %197 : vector<8x128xf32>
    %199 = math.exp %198 : vector<8x128xf32>
    %cst_143 = arith.constant 1.000000e+00 : f32
    %200 = vector.broadcast %cst_143 : f32 to vector<8x128xf32>
    %201 = arith.addf %200, %199 : vector<8x128xf32>
    %202 = arith.divf %200, %201 : vector<8x128xf32>
    %203 = arith.mulf %197, %202 : vector<8x128xf32>
    %204 = vector.extract_strided_slice %203 {offsets = [0, 0], sizes = [8, 32], strides = [1, 1]} : vector<8x128xf32> to vector<8x32xf32>
    %c49_144 = arith.constant 49 : index
    %c32_145 = arith.constant 32 : index
    %205 = vector.load %arg6[%c49_144, %c32_145] : memref<432x128xf32, #tpu.memory_space<vmem>>, vector<8x32xf32>
    tpu.vector_store %arg6[%c49_144, %c32_145], %204 {strides = array<i32>} : memref<432x128xf32, #tpu.memory_space<vmem>>, vector<8x32xf32>,
    %c50 = arith.constant 50 : index
    %c0_146 = arith.constant 0 : index
    %206 = vector.load %arg6[%c50, %c0_146] : memref<432x128xf32, #tpu.memory_space<vmem>>, vector<8x32xf32>
    tpu.vector_store %arg6[%c50, %c0_146], %204 {strides = array<i32>} : memref<432x128xf32, #tpu.memory_space<vmem>>, vector<8x32xf32>,
    %c48_147 = arith.constant 48 : index
    %c64_148 = arith.constant 64 : index
    %207 = vector.load %arg6[%c48_147, %c64_148] : memref<432x128xf32, #tpu.memory_space<vmem>>, vector<8x32xf32>
    tpu.vector_store %arg6[%c48_147, %c64_148], %204 {strides = array<i32>} : memref<432x128xf32, #tpu.memory_space<vmem>>, vector<8x32xf32>,
    %c145_149 = arith.constant 145 : index
    %c0_150 = arith.constant 0 : index
    %208 = tpu.strided_load %arg7[%c145_149, %c0_150] {strides = array<i32: 2, 1>} : memref<432x128xf32, #tpu.memory_space<vmem>>, vector<8x128xf32>
    %209 = arith.truncf %208 : vector<8x128xf32> to vector<8x128xbf16>
    %c768_151 = arith.constant 768 : index
    %c0_152 = arith.constant 0 : index
    %210 = vector.load %arg2[%c768_151, %c0_152] : memref<2304x128xbf16, #tpu.memory_space<vmem>>, vector<128x128xbf16>
    %cst_153 = arith.constant dense<0.000000e+00> : vector<8x128xf32>
    %211 = tpu.matmul %209, %210, %cst_153 {dimension_numbers = #tpu.dot_dimension_numbers<[1], [0], [0], [1], [0, 0, 1, 1], [], []>} : vector<8x128xbf16>, vector<128x128xbf16>, vector<8x128xf32> -> vector<8x128xf32>
    %c169 = arith.constant 169 : index
    %c0_154 = arith.constant 0 : index
    %212 = tpu.strided_load %arg7[%c169, %c0_154] {strides = array<i32: 2, 1>} : memref<432x128xf32, #tpu.memory_space<vmem>>, vector<8x128xf32>
    %213 = arith.truncf %212 : vector<8x128xf32> to vector<8x128xbf16>
    %c896_155 = arith.constant 896 : index
    %c0_156 = arith.constant 0 : index
    %214 = vector.load %arg2[%c896_155, %c0_156] : memref<2304x128xbf16, #tpu.memory_space<vmem>>, vector<128x128xbf16>
    %cst_157 = arith.constant dense<0.000000e+00> : vector<8x128xf32>
    %215 = tpu.matmul %213, %214, %cst_157 {dimension_numbers = #tpu.dot_dimension_numbers<[1], [0], [0], [1], [0, 0, 1, 1], [], []>} : vector<8x128xbf16>, vector<128x128xbf16>, vector<8x128xf32> -> vector<8x128xf32>
    %216 = arith.addf %211, %215 : vector<8x128xf32>
    %c193 = arith.constant 193 : index
    %c0_158 = arith.constant 0 : index
    %217 = tpu.strided_load %arg7[%c193, %c0_158] {strides = array<i32: 2, 1>} : memref<432x128xf32, #tpu.memory_space<vmem>>, vector<8x128xf32>
    %218 = arith.truncf %217 : vector<8x128xf32> to vector<8x128xbf16>
    %c1024_159 = arith.constant 1024 : index
    %c0_160 = arith.constant 0 : index
    %219 = vector.load %arg2[%c1024_159, %c0_160] : memref<2304x128xbf16, #tpu.memory_space<vmem>>, vector<128x128xbf16>
    %cst_161 = arith.constant dense<0.000000e+00> : vector<8x128xf32>
    %220 = tpu.matmul %218, %219, %cst_161 {dimension_numbers = #tpu.dot_dimension_numbers<[1], [0], [0], [1], [0, 0, 1, 1], [], []>} : vector<8x128xbf16>, vector<128x128xbf16>, vector<8x128xf32> -> vector<8x128xf32>
    %221 = arith.addf %216, %220 : vector<8x128xf32>
    %222 = arith.addf %221, %132 : vector<8x128xf32>
    %223 = arith.negf %222 : vector<8x128xf32>
    %224 = math.exp %223 : vector<8x128xf32>
    %cst_162 = arith.constant 1.000000e+00 : f32
    %225 = vector.broadcast %cst_162 : f32 to vector<8x128xf32>
    %226 = arith.addf %225, %224 : vector<8x128xf32>
    %227 = arith.divf %225, %226 : vector<8x128xf32>
    %228 = arith.mulf %222, %227 : vector<8x128xf32>
    %229 = vector.extract_strided_slice %228 {offsets = [0, 0], sizes = [8, 32], strides = [1, 1]} : vector<8x128xf32> to vector<8x32xf32>
    %c65 = arith.constant 65 : index
    %c32_163 = arith.constant 32 : index
    %230 = vector.load %arg6[%c65, %c32_163] : memref<432x128xf32, #tpu.memory_space<vmem>>, vector<8x32xf32>
    tpu.vector_store %arg6[%c65, %c32_163], %229 {strides = array<i32>} : memref<432x128xf32, #tpu.memory_space<vmem>>, vector<8x32xf32>,
    %c66 = arith.constant 66 : index
    %c0_164 = arith.constant 0 : index
    %231 = vector.load %arg6[%c66, %c0_164] : memref<432x128xf32, #tpu.memory_space<vmem>>, vector<8x32xf32>
    tpu.vector_store %arg6[%c66, %c0_164], %229 {strides = array<i32>} : memref<432x128xf32, #tpu.memory_space<vmem>>, vector<8x32xf32>,
    %c64_165 = arith.constant 64 : index
    %c64_166 = arith.constant 64 : index
    %232 = vector.load %arg6[%c64_165, %c64_166] : memref<432x128xf32, #tpu.memory_space<vmem>>, vector<8x32xf32>
    tpu.vector_store %arg6[%c64_165, %c64_166], %229 {strides = array<i32>} : memref<432x128xf32, #tpu.memory_space<vmem>>, vector<8x32xf32>,
    %c193_167 = arith.constant 193 : index
    %c0_168 = arith.constant 0 : index
    %233 = tpu.strided_load %arg7[%c193_167, %c0_168] {strides = array<i32: 2, 1>} : memref<432x128xf32, #tpu.memory_space<vmem>>, vector<8x128xf32>
    %234 = arith.truncf %233 : vector<8x128xf32> to vector<8x128xbf16>
    %c768_169 = arith.constant 768 : index
    %c0_170 = arith.constant 0 : index
    %235 = vector.load %arg2[%c768_169, %c0_170] : memref<2304x128xbf16, #tpu.memory_space<vmem>>, vector<128x128xbf16>
    %cst_171 = arith.constant dense<0.000000e+00> : vector<8x128xf32>
    %236 = tpu.matmul %234, %235, %cst_171 {dimension_numbers = #tpu.dot_dimension_numbers<[1], [0], [0], [1], [0, 0, 1, 1], [], []>} : vector<8x128xbf16>, vector<128x128xbf16>, vector<8x128xf32> -> vector<8x128xf32>
    %c217_172 = arith.constant 217 : index
    %c0_173 = arith.constant 0 : index
    %237 = tpu.strided_load %arg7[%c217_172, %c0_173] {strides = array<i32: 2, 1>} : memref<432x128xf32, #tpu.memory_space<vmem>>, vector<8x128xf32>
    %238 = arith.truncf %237 : vector<8x128xf32> to vector<8x128xbf16>
    %c896_174 = arith.constant 896 : index
    %c0_175 = arith.constant 0 : index
    %239 = vector.load %arg2[%c896_174, %c0_175] : memref<2304x128xbf16, #tpu.memory_space<vmem>>, vector<128x128xbf16>
    %cst_176 = arith.constant dense<0.000000e+00> : vector<8x128xf32>
    %240 = tpu.matmul %238, %239, %cst_176 {dimension_numbers = #tpu.dot_dimension_numbers<[1], [0], [0], [1], [0, 0, 1, 1], [], []>} : vector<8x128xbf16>, vector<128x128xbf16>, vector<8x128xf32> -> vector<8x128xf32>
    %241 = arith.addf %236, %240 : vector<8x128xf32>
    %c241 = arith.constant 241 : index
    %c0_177 = arith.constant 0 : index
    %242 = tpu.strided_load %arg7[%c241, %c0_177] {strides = array<i32: 2, 1>} : memref<432x128xf32, #tpu.memory_space<vmem>>, vector<8x128xf32>
    %243 = arith.truncf %242 : vector<8x128xf32> to vector<8x128xbf16>
    %c1024_178 = arith.constant 1024 : index
    %c0_179 = arith.constant 0 : index
    %244 = vector.load %arg2[%c1024_178, %c0_179] : memref<2304x128xbf16, #tpu.memory_space<vmem>>, vector<128x128xbf16>
    %cst_180 = arith.constant dense<0.000000e+00> : vector<8x128xf32>
    %245 = tpu.matmul %243, %244, %cst_180 {dimension_numbers = #tpu.dot_dimension_numbers<[1], [0], [0], [1], [0, 0, 1, 1], [], []>} : vector<8x128xbf16>, vector<128x128xbf16>, vector<8x128xf32> -> vector<8x128xf32>
    %246 = arith.addf %241, %245 : vector<8x128xf32>
    %247 = arith.addf %246, %132 : vector<8x128xf32>
    %248 = arith.negf %247 : vector<8x128xf32>
    %249 = math.exp %248 : vector<8x128xf32>
    %cst_181 = arith.constant 1.000000e+00 : f32
    %250 = vector.broadcast %cst_181 : f32 to vector<8x128xf32>
    %251 = arith.addf %250, %249 : vector<8x128xf32>
    %252 = arith.divf %250, %251 : vector<8x128xf32>
    %253 = arith.mulf %247, %252 : vector<8x128xf32>
    %254 = vector.extract_strided_slice %253 {offsets = [0, 0], sizes = [8, 32], strides = [1, 1]} : vector<8x128xf32> to vector<8x32xf32>
    %c81 = arith.constant 81 : index
    %c32_182 = arith.constant 32 : index
    %255 = vector.load %arg6[%c81, %c32_182] : memref<432x128xf32, #tpu.memory_space<vmem>>, vector<8x32xf32>
    tpu.vector_store %arg6[%c81, %c32_182], %254 {strides = array<i32>} : memref<432x128xf32, #tpu.memory_space<vmem>>, vector<8x32xf32>,
    %c82 = arith.constant 82 : index
    %c0_183 = arith.constant 0 : index
    %256 = vector.load %arg6[%c82, %c0_183] : memref<432x128xf32, #tpu.memory_space<vmem>>, vector<8x32xf32>
    tpu.vector_store %arg6[%c82, %c0_183], %254 {strides = array<i32>} : memref<432x128xf32, #tpu.memory_space<vmem>>, vector<8x32xf32>,
    %c80 = arith.constant 80 : index
    %c64_184 = arith.constant 64 : index
    %257 = vector.load %arg6[%c80, %c64_184] : memref<432x128xf32, #tpu.memory_space<vmem>>, vector<8x32xf32>
    tpu.vector_store %arg6[%c80, %c64_184], %254 {strides = array<i32>} : memref<432x128xf32, #tpu.memory_space<vmem>>, vector<8x32xf32>,
    %c241_185 = arith.constant 241 : index
    %c0_186 = arith.constant 0 : index
    %258 = tpu.strided_load %arg7[%c241_185, %c0_186] {strides = array<i32: 2, 1>} : memref<432x128xf32, #tpu.memory_space<vmem>>, vector<8x128xf32>
    %259 = arith.truncf %258 : vector<8x128xf32> to vector<8x128xbf16>
    %c768_187 = arith.constant 768 : index
    %c0_188 = arith.constant 0 : index
    %260 = vector.load %arg2[%c768_187, %c0_188] : memref<2304x128xbf16, #tpu.memory_space<vmem>>, vector<128x128xbf16>
    %cst_189 = arith.constant dense<0.000000e+00> : vector<8x128xf32>
    %261 = tpu.matmul %259, %260, %cst_189 {dimension_numbers = #tpu.dot_dimension_numbers<[1], [0], [0], [1], [0, 0, 1, 1], [], []>} : vector<8x128xbf16>, vector<128x128xbf16>, vector<8x128xf32> -> vector<8x128xf32>
    %c265 = arith.constant 265 : index
    %c0_190 = arith.constant 0 : index
    %262 = tpu.strided_load %arg7[%c265, %c0_190] {strides = array<i32: 2, 1>} : memref<432x128xf32, #tpu.memory_space<vmem>>, vector<8x128xf32>
    %263 = arith.truncf %262 : vector<8x128xf32> to vector<8x128xbf16>
    %c896_191 = arith.constant 896 : index
    %c0_192 = arith.constant 0 : index
    %264 = vector.load %arg2[%c896_191, %c0_192] : memref<2304x128xbf16, #tpu.memory_space<vmem>>, vector<128x128xbf16>
    %cst_193 = arith.constant dense<0.000000e+00> : vector<8x128xf32>
    %265 = tpu.matmul %263, %264, %cst_193 {dimension_numbers = #tpu.dot_dimension_numbers<[1], [0], [0], [1], [0, 0, 1, 1], [], []>} : vector<8x128xbf16>, vector<128x128xbf16>, vector<8x128xf32> -> vector<8x128xf32>
    %266 = arith.addf %261, %265 : vector<8x128xf32>
    %c289 = arith.constant 289 : index
    %c0_194 = arith.constant 0 : index
    %267 = tpu.strided_load %arg7[%c289, %c0_194] {strides = array<i32: 2, 1>} : memref<432x128xf32, #tpu.memory_space<vmem>>, vector<8x128xf32>
    %268 = arith.truncf %267 : vector<8x128xf32> to vector<8x128xbf16>
    %c1024_195 = arith.constant 1024 : index
    %c0_196 = arith.constant 0 : index
    %269 = vector.load %arg2[%c1024_195, %c0_196] : memref<2304x128xbf16, #tpu.memory_space<vmem>>, vector<128x128xbf16>
    %cst_197 = arith.constant dense<0.000000e+00> : vector<8x128xf32>
    %270 = tpu.matmul %268, %269, %cst_197 {dimension_numbers = #tpu.dot_dimension_numbers<[1], [0], [0], [1], [0, 0, 1, 1], [], []>} : vector<8x128xbf16>, vector<128x128xbf16>, vector<8x128xf32> -> vector<8x128xf32>
    %271 = arith.addf %266, %270 : vector<8x128xf32>
    %272 = arith.addf %271, %132 : vector<8x128xf32>
    %273 = arith.negf %272 : vector<8x128xf32>
    %274 = math.exp %273 : vector<8x128xf32>
    %cst_198 = arith.constant 1.000000e+00 : f32
    %275 = vector.broadcast %cst_198 : f32 to vector<8x128xf32>
    %276 = arith.addf %275, %274 : vector<8x128xf32>
    %277 = arith.divf %275, %276 : vector<8x128xf32>
    %278 = arith.mulf %272, %277 : vector<8x128xf32>
    %279 = vector.extract_strided_slice %278 {offsets = [0, 0], sizes = [8, 32], strides = [1, 1]} : vector<8x128xf32> to vector<8x32xf32>
    %c97_199 = arith.constant 97 : index
    %c32_200 = arith.constant 32 : index
    %280 = vector.load %arg6[%c97_199, %c32_200] : memref<432x128xf32, #tpu.memory_space<vmem>>, vector<8x32xf32>
    tpu.vector_store %arg6[%c97_199, %c32_200], %279 {strides = array<i32>} : memref<432x128xf32, #tpu.memory_space<vmem>>, vector<8x32xf32>,
    %c98 = arith.constant 98 : index
    %c0_201 = arith.constant 0 : index
    %281 = vector.load %arg6[%c98, %c0_201] : memref<432x128xf32, #tpu.memory_space<vmem>>, vector<8x32xf32>
    tpu.vector_store %arg6[%c98, %c0_201], %279 {strides = array<i32>} : memref<432x128xf32, #tpu.memory_space<vmem>>, vector<8x32xf32>,
    %c96 = arith.constant 96 : index
    %c64_202 = arith.constant 64 : index
    %282 = vector.load %arg6[%c96, %c64_202] : memref<432x128xf32, #tpu.memory_space<vmem>>, vector<8x32xf32>
    tpu.vector_store %arg6[%c96, %c64_202], %279 {strides = array<i32>} : memref<432x128xf32, #tpu.memory_space<vmem>>, vector<8x32xf32>,
    %c289_203 = arith.constant 289 : index
    %c0_204 = arith.constant 0 : index
    %283 = tpu.strided_load %arg7[%c289_203, %c0_204] {strides = array<i32: 2, 1>} : memref<432x128xf32, #tpu.memory_space<vmem>>, vector<8x128xf32>
    %284 = arith.truncf %283 : vector<8x128xf32> to vector<8x128xbf16>
    %c768_205 = arith.constant 768 : index
    %c0_206 = arith.constant 0 : index
    %285 = vector.load %arg2[%c768_205, %c0_206] : memref<2304x128xbf16, #tpu.memory_space<vmem>>, vector<128x128xbf16>
    %cst_207 = arith.constant dense<0.000000e+00> : vector<8x128xf32>
    %286 = tpu.matmul %284, %285, %cst_207 {dimension_numbers = #tpu.dot_dimension_numbers<[1], [0], [0], [1], [0, 0, 1, 1], [], []>} : vector<8x128xbf16>, vector<128x128xbf16>, vector<8x128xf32> -> vector<8x128xf32>
    %c313 = arith.constant 313 : index
    %c0_208 = arith.constant 0 : index
    %287 = tpu.strided_load %arg7[%c313, %c0_208] {strides = array<i32: 2, 1>} : memref<432x128xf32, #tpu.memory_space<vmem>>, vector<8x128xf32>
    %288 = arith.truncf %287 : vector<8x128xf32> to vector<8x128xbf16>
    %c896_209 = arith.constant 896 : index
    %c0_210 = arith.constant 0 : index
    %289 = vector.load %arg2[%c896_209, %c0_210] : memref<2304x128xbf16, #tpu.memory_space<vmem>>, vector<128x128xbf16>
    %cst_211 = arith.constant dense<0.000000e+00> : vector<8x128xf32>
    %290 = tpu.matmul %288, %289, %cst_211 {dimension_numbers = #tpu.dot_dimension_numbers<[1], [0], [0], [1], [0, 0, 1, 1], [], []>} : vector<8x128xbf16>, vector<128x128xbf16>, vector<8x128xf32> -> vector<8x128xf32>
    %291 = arith.addf %286, %290 : vector<8x128xf32>
    %c337 = arith.constant 337 : index
    %c0_212 = arith.constant 0 : index
    %292 = tpu.strided_load %arg7[%c337, %c0_212] {strides = array<i32: 2, 1>} : memref<432x128xf32, #tpu.memory_space<vmem>>, vector<8x128xf32>
    %293 = arith.truncf %292 : vector<8x128xf32> to vector<8x128xbf16>
    %c1024_213 = arith.constant 1024 : index
    %c0_214 = arith.constant 0 : index
    %294 = vector.load %arg2[%c1024_213, %c0_214] : memref<2304x128xbf16, #tpu.memory_space<vmem>>, vector<128x128xbf16>
    %cst_215 = arith.constant dense<0.000000e+00> : vector<8x128xf32>
    %295 = tpu.matmul %293, %294, %cst_215 {dimension_numbers = #tpu.dot_dimension_numbers<[1], [0], [0], [1], [0, 0, 1, 1], [], []>} : vector<8x128xbf16>, vector<128x128xbf16>, vector<8x128xf32> -> vector<8x128xf32>
    %296 = arith.addf %291, %295 : vector<8x128xf32>
    %297 = arith.addf %296, %132 : vector<8x128xf32>
    %298 = arith.negf %297 : vector<8x128xf32>
    %299 = math.exp %298 : vector<8x128xf32>
    %cst_216 = arith.constant 1.000000e+00 : f32
    %300 = vector.broadcast %cst_216 : f32 to vector<8x128xf32>
    %301 = arith.addf %300, %299 : vector<8x128xf32>
    %302 = arith.divf %300, %301 : vector<8x128xf32>
    %303 = arith.mulf %297, %302 : vector<8x128xf32>
    %304 = vector.extract_strided_slice %303 {offsets = [0, 0], sizes = [8, 32], strides = [1, 1]} : vector<8x128xf32> to vector<8x32xf32>
    %c113 = arith.constant 113 : index
    %c32_217 = arith.constant 32 : index
    %305 = vector.load %arg6[%c113, %c32_217] : memref<432x128xf32, #tpu.memory_space<vmem>>, vector<8x32xf32>
    tpu.vector_store %arg6[%c113, %c32_217], %304 {strides = array<i32>} : memref<432x128xf32, #tpu.memory_space<vmem>>, vector<8x32xf32>,
    %c114 = arith.constant 114 : index
    %c0_218 = arith.constant 0 : index
    %306 = vector.load %arg6[%c114, %c0_218] : memref<432x128xf32, #tpu.memory_space<vmem>>, vector<8x32xf32>
    tpu.vector_store %arg6[%c114, %c0_218], %304 {strides = array<i32>} : memref<432x128xf32, #tpu.memory_space<vmem>>, vector<8x32xf32>,
    %c112 = arith.constant 112 : index
    %c64_219 = arith.constant 64 : index
    %307 = vector.load %arg6[%c112, %c64_219] : memref<432x128xf32, #tpu.memory_space<vmem>>, vector<8x32xf32>
    tpu.vector_store %arg6[%c112, %c64_219], %304 {strides = array<i32>} : memref<432x128xf32, #tpu.memory_space<vmem>>, vector<8x32xf32>,
    %c337_220 = arith.constant 337 : index
    %c0_221 = arith.constant 0 : index
    %308 = tpu.strided_load %arg7[%c337_220, %c0_221] {strides = array<i32: 2, 1>} : memref<432x128xf32, #tpu.memory_space<vmem>>, vector<8x128xf32>
    %309 = arith.truncf %308 : vector<8x128xf32> to vector<8x128xbf16>
    %c768_222 = arith.constant 768 : index
    %c0_223 = arith.constant 0 : index
    %310 = vector.load %arg2[%c768_222, %c0_223] : memref<2304x128xbf16, #tpu.memory_space<vmem>>, vector<128x128xbf16>
    %cst_224 = arith.constant dense<0.000000e+00> : vector<8x128xf32>
    %311 = tpu.matmul %309, %310, %cst_224 {dimension_numbers = #tpu.dot_dimension_numbers<[1], [0], [0], [1], [0, 0, 1, 1], [], []>} : vector<8x128xbf16>, vector<128x128xbf16>, vector<8x128xf32> -> vector<8x128xf32>
    %c361 = arith.constant 361 : index
    %c0_225 = arith.constant 0 : index
    %312 = tpu.strided_load %arg7[%c361, %c0_225] {strides = array<i32: 2, 1>} : memref<432x128xf32, #tpu.memory_space<vmem>>, vector<8x128xf32>
    %313 = arith.truncf %312 : vector<8x128xf32> to vector<8x128xbf16>
    %c896_226 = arith.constant 896 : index
    %c0_227 = arith.constant 0 : index
    %314 = vector.load %arg2[%c896_226, %c0_227] : memref<2304x128xbf16, #tpu.memory_space<vmem>>, vector<128x128xbf16>
    %cst_228 = arith.constant dense<0.000000e+00> : vector<8x128xf32>
    %315 = tpu.matmul %313, %314, %cst_228 {dimension_numbers = #tpu.dot_dimension_numbers<[1], [0], [0], [1], [0, 0, 1, 1], [], []>} : vector<8x128xbf16>, vector<128x128xbf16>, vector<8x128xf32> -> vector<8x128xf32>
    %316 = arith.addf %311, %315 : vector<8x128xf32>
    %c385 = arith.constant 385 : index
    %c0_229 = arith.constant 0 : index
    %317 = tpu.strided_load %arg7[%c385, %c0_229] {strides = array<i32: 2, 1>} : memref<432x128xf32, #tpu.memory_space<vmem>>, vector<8x128xf32>
    %318 = arith.truncf %317 : vector<8x128xf32> to vector<8x128xbf16>
    %c1024_230 = arith.constant 1024 : index
    %c0_231 = arith.constant 0 : index
    %319 = vector.load %arg2[%c1024_230, %c0_231] : memref<2304x128xbf16, #tpu.memory_space<vmem>>, vector<128x128xbf16>
    %cst_232 = arith.constant dense<0.000000e+00> : vector<8x128xf32>
    %320 = tpu.matmul %318, %319, %cst_232 {dimension_numbers = #tpu.dot_dimension_numbers<[1], [0], [0], [1], [0, 0, 1, 1], [], []>} : vector<8x128xbf16>, vector<128x128xbf16>, vector<8x128xf32> -> vector<8x128xf32>
    %321 = arith.addf %316, %320 : vector<8x128xf32>
    %322 = arith.addf %321, %132 : vector<8x128xf32>
    %323 = arith.negf %322 : vector<8x128xf32>
    %324 = math.exp %323 : vector<8x128xf32>
    %cst_233 = arith.constant 1.000000e+00 : f32
    %325 = vector.broadcast %cst_233 : f32 to vector<8x128xf32>
    %326 = arith.addf %325, %324 : vector<8x128xf32>
    %327 = arith.divf %325, %326 : vector<8x128xf32>
    %328 = arith.mulf %322, %327 : vector<8x128xf32>
    %329 = vector.extract_strided_slice %328 {offsets = [0, 0], sizes = [8, 32], strides = [1, 1]} : vector<8x128xf32> to vector<8x32xf32>
    %c129 = arith.constant 129 : index
    %c32_234 = arith.constant 32 : index
    %330 = vector.load %arg6[%c129, %c32_234] : memref<432x128xf32, #tpu.memory_space<vmem>>, vector<8x32xf32>
    tpu.vector_store %arg6[%c129, %c32_234], %329 {strides = array<i32>} : memref<432x128xf32, #tpu.memory_space<vmem>>, vector<8x32xf32>,
    %c130 = arith.constant 130 : index
    %c0_235 = arith.constant 0 : index
    %331 = vector.load %arg6[%c130, %c0_235] : memref<432x128xf32, #tpu.memory_space<vmem>>, vector<8x32xf32>
    tpu.vector_store %arg6[%c130, %c0_235], %329 {strides = array<i32>} : memref<432x128xf32, #tpu.memory_space<vmem>>, vector<8x32xf32>,
    %c128_236 = arith.constant 128 : index
    %c64_237 = arith.constant 64 : index
    %332 = vector.load %arg6[%c128_236, %c64_237] : memref<432x128xf32, #tpu.memory_space<vmem>>, vector<8x32xf32>
    tpu.vector_store %arg6[%c128_236, %c64_237], %329 {strides = array<i32>} : memref<432x128xf32, #tpu.memory_space<vmem>>, vector<8x32xf32>,
    %cst_238 = arith.constant 0.000000e+00 : f32
    %333 = vector.broadcast %cst_238 : f32 to vector<160x128xf32>
    %c0_239 = arith.constant 0 : index
    %c0_240 = arith.constant 0 : index
    %334 = vector.load %arg7[%c0_239, %c0_240] : memref<432x128xf32, #tpu.memory_space<vmem>>, vector<160x128xf32>
    tpu.vector_store %arg7[%c0_239, %c0_240], %333 {strides = array<i32>} : memref<432x128xf32, #tpu.memory_space<vmem>>, vector<160x128xf32>,
    %c3 = arith.constant 3 : index
    %c0_241 = arith.constant 0 : index
    %335 = vector.load %arg3[%c3, %c0_241] : memref<6x128xf32, #tpu.memory_space<vmem>>, vector<1x128xf32>
    %336 = vector.shape_cast %335 : vector<1x128xf32> to vector<1x128xf32>
    %337 = vector.broadcast %336 : vector<1x128xf32> to vector<128x128xf32>
    %c0_242 = arith.constant 0 : index
    %c0_243 = arith.constant 0 : index
    %338 = vector.load %arg6[%c0_242, %c0_243] : memref<432x128xf32, #tpu.memory_space<vmem>>, vector<128x128xf32>
    %339 = arith.truncf %338 : vector<128x128xf32> to vector<128x128xbf16>
    %c1152 = arith.constant 1152 : index
    %c0_244 = arith.constant 0 : index
    %340 = vector.load %arg2[%c1152, %c0_244] : memref<2304x128xbf16, #tpu.memory_space<vmem>>, vector<128x128xbf16>
    %cst_245 = arith.constant dense<0.000000e+00> : vector<128x128xf32>
    %341 = tpu.matmul %339, %340, %cst_245 {dimension_numbers = #tpu.dot_dimension_numbers<[1], [0], [0], [1], [0, 0, 1, 1], [], []>} : vector<128x128xbf16>, vector<128x128xbf16>, vector<128x128xf32> -> vector<128x128xf32>
    %c16_246 = arith.constant 16 : index
    %c0_247 = arith.constant 0 : index
    %342 = vector.load %arg6[%c16_246, %c0_247] : memref<432x128xf32, #tpu.memory_space<vmem>>, vector<128x128xf32>
    %343 = arith.truncf %342 : vector<128x128xf32> to vector<128x128xbf16>
    %c1280 = arith.constant 1280 : index
    %c0_248 = arith.constant 0 : index
    %344 = vector.load %arg2[%c1280, %c0_248] : memref<2304x128xbf16, #tpu.memory_space<vmem>>, vector<128x128xbf16>
    %cst_249 = arith.constant dense<0.000000e+00> : vector<128x128xf32>
    %345 = tpu.matmul %343, %344, %cst_249 {dimension_numbers = #tpu.dot_dimension_numbers<[1], [0], [0], [1], [0, 0, 1, 1], [], []>} : vector<128x128xbf16>, vector<128x128xbf16>, vector<128x128xf32> -> vector<128x128xf32>
    %346 = arith.addf %341, %345 : vector<128x128xf32>
    %c32_250 = arith.constant 32 : index
    %c0_251 = arith.constant 0 : index
    %347 = vector.load %arg6[%c32_250, %c0_251] : memref<432x128xf32, #tpu.memory_space<vmem>>, vector<128x128xf32>
    %348 = arith.truncf %347 : vector<128x128xf32> to vector<128x128xbf16>
    %c1408 = arith.constant 1408 : index
    %c0_252 = arith.constant 0 : index
    %349 = vector.load %arg2[%c1408, %c0_252] : memref<2304x128xbf16, #tpu.memory_space<vmem>>, vector<128x128xbf16>
    %cst_253 = arith.constant dense<0.000000e+00> : vector<128x128xf32>
    %350 = tpu.matmul %348, %349, %cst_253 {dimension_numbers = #tpu.dot_dimension_numbers<[1], [0], [0], [1], [0, 0, 1, 1], [], []>} : vector<128x128xbf16>, vector<128x128xbf16>, vector<128x128xf32> -> vector<128x128xf32>
    %351 = arith.addf %346, %350 : vector<128x128xf32>
    %352 = arith.addf %351, %337 : vector<128x128xf32>
    %353 = arith.negf %352 : vector<128x128xf32>
    %354 = math.exp %353 : vector<128x128xf32>
    %cst_254 = arith.constant 1.000000e+00 : f32
    %355 = vector.broadcast %cst_254 : f32 to vector<128x128xf32>
    %356 = arith.addf %355, %354 : vector<128x128xf32>
    %357 = arith.divf %355, %356 : vector<128x128xf32>
    %358 = arith.mulf %352, %357 : vector<128x128xf32>
    %c384_255 = arith.constant 384 : index
    %c0_256 = arith.constant 0 : index
    %359 = vector.load %arg4[%c384_255, %c0_256] : memref<512x128xbf16, #tpu.memory_space<vmem>>, vector<128x128xbf16>
    %360 = arith.extf %359 : vector<128x128xbf16> to vector<128x128xf32>
    %361 = arith.mulf %358, %360 : vector<128x128xf32>
    %362 = vector.extract_strided_slice %361 {offsets = [0, 0], sizes = [128, 32], strides = [1, 1]} : vector<128x128xf32> to vector<128x32xf32>
    %c16_257 = arith.constant 16 : index
    %c32_258 = arith.constant 32 : index
    %363 = vector.load %arg7[%c16_257, %c32_258] : memref<432x128xf32, #tpu.memory_space<vmem>>, vector<128x32xf32>
    tpu.vector_store %arg7[%c16_257, %c32_258], %362 {strides = array<i32>} : memref<432x128xf32, #tpu.memory_space<vmem>>, vector<128x32xf32>,
    %c17_259 = arith.constant 17 : index
    %c0_260 = arith.constant 0 : index
    %364 = vector.load %arg7[%c17_259, %c0_260] : memref<432x128xf32, #tpu.memory_space<vmem>>, vector<128x32xf32>
    tpu.vector_store %arg7[%c17_259, %c0_260], %362 {strides = array<i32>} : memref<432x128xf32, #tpu.memory_space<vmem>>, vector<128x32xf32>,
    %c15 = arith.constant 15 : index
    %c64_261 = arith.constant 64 : index
    %365 = vector.load %arg7[%c15, %c64_261] : memref<432x128xf32, #tpu.memory_space<vmem>>, vector<128x32xf32>
    tpu.vector_store %arg7[%c15, %c64_261], %362 {strides = array<i32>} : memref<432x128xf32, #tpu.memory_space<vmem>>, vector<128x32xf32>,
    %cst_262 = arith.constant 0.000000e+00 : f32
    %366 = vector.broadcast %cst_262 : f32 to vector<48x128xf32>
    %c0_263 = arith.constant 0 : index
    %c0_264 = arith.constant 0 : index
    %367 = vector.load %arg6[%c0_263, %c0_264] : memref<432x128xf32, #tpu.memory_space<vmem>>, vector<48x128xf32>
    tpu.vector_store %arg6[%c0_263, %c0_264], %366 {strides = array<i32>} : memref<432x128xf32, #tpu.memory_space<vmem>>, vector<48x128xf32>,
    %c4 = arith.constant 4 : index
    %c0_265 = arith.constant 0 : index
    %368 = vector.load %arg3[%c4, %c0_265] : memref<6x128xf32, #tpu.memory_space<vmem>>, vector<1x128xf32>
    %369 = vector.shape_cast %368 : vector<1x128xf32> to vector<1x128xf32>
    %370 = vector.broadcast %369 : vector<1x128xf32> to vector<4x128xf32>
    %c1_266 = arith.constant 1 : index
    %c0_267 = arith.constant 0 : index
    %371 = tpu.strided_load %arg7[%c1_266, %c0_267] {strides = array<i32: 2, 1>} : memref<432x128xf32, #tpu.memory_space<vmem>>, vector<4x128xf32>
    %372 = arith.truncf %371 : vector<4x128xf32> to vector<4x128xbf16>
    %c1536 = arith.constant 1536 : index
    %c0_268 = arith.constant 0 : index
    %373 = vector.load %arg2[%c1536, %c0_268] : memref<2304x128xbf16, #tpu.memory_space<vmem>>, vector<128x128xbf16>
    %cst_269 = arith.constant dense<0.000000e+00> : vector<4x128xf32>
    %374 = tpu.matmul %372, %373, %cst_269 {dimension_numbers = #tpu.dot_dimension_numbers<[1], [0], [0], [1], [0, 0, 1, 1], [], []>} : vector<4x128xbf16>, vector<128x128xbf16>, vector<4x128xf32> -> vector<4x128xf32>
    %c17_270 = arith.constant 17 : index
    %c0_271 = arith.constant 0 : index
    %375 = tpu.strided_load %arg7[%c17_270, %c0_271] {strides = array<i32: 2, 1>} : memref<432x128xf32, #tpu.memory_space<vmem>>, vector<4x128xf32>
    %376 = arith.truncf %375 : vector<4x128xf32> to vector<4x128xbf16>
    %c1664 = arith.constant 1664 : index
    %c0_272 = arith.constant 0 : index
    %377 = vector.load %arg2[%c1664, %c0_272] : memref<2304x128xbf16, #tpu.memory_space<vmem>>, vector<128x128xbf16>
    %cst_273 = arith.constant dense<0.000000e+00> : vector<4x128xf32>
    %378 = tpu.matmul %376, %377, %cst_273 {dimension_numbers = #tpu.dot_dimension_numbers<[1], [0], [0], [1], [0, 0, 1, 1], [], []>} : vector<4x128xbf16>, vector<128x128xbf16>, vector<4x128xf32> -> vector<4x128xf32>
    %379 = arith.addf %374, %378 : vector<4x128xf32>
    %c33_274 = arith.constant 33 : index
    %c0_275 = arith.constant 0 : index
    %380 = tpu.strided_load %arg7[%c33_274, %c0_275] {strides = array<i32: 2, 1>} : memref<432x128xf32, #tpu.memory_space<vmem>>, vector<4x128xf32>
    %381 = arith.truncf %380 : vector<4x128xf32> to vector<4x128xbf16>
    %c1792 = arith.constant 1792 : index
    %c0_276 = arith.constant 0 : index
    %382 = vector.load %arg2[%c1792, %c0_276] : memref<2304x128xbf16, #tpu.memory_space<vmem>>, vector<128x128xbf16>
    %cst_277 = arith.constant dense<0.000000e+00> : vector<4x128xf32>
    %383 = tpu.matmul %381, %382, %cst_277 {dimension_numbers = #tpu.dot_dimension_numbers<[1], [0], [0], [1], [0, 0, 1, 1], [], []>} : vector<4x128xbf16>, vector<128x128xbf16>, vector<4x128xf32> -> vector<4x128xf32>
    %384 = arith.addf %379, %383 : vector<4x128xf32>
    %385 = arith.addf %384, %370 : vector<4x128xf32>
    %386 = arith.negf %385 : vector<4x128xf32>
    %387 = math.exp %386 : vector<4x128xf32>
    %cst_278 = arith.constant 1.000000e+00 : f32
    %388 = vector.broadcast %cst_278 : f32 to vector<4x128xf32>
    %389 = arith.addf %388, %387 : vector<4x128xf32>
    %390 = arith.divf %388, %389 : vector<4x128xf32>
    %391 = arith.mulf %385, %390 : vector<4x128xf32>
    %392 = vector.extract_strided_slice %391 {offsets = [0, 0], sizes = [4, 32], strides = [1, 1]} : vector<4x128xf32> to vector<4x32xf32>
    %c9 = arith.constant 9 : index
    %c32_279 = arith.constant 32 : index
    %393 = vector.load %arg6[%c9, %c32_279] : memref<432x128xf32, #tpu.memory_space<vmem>>, vector<4x32xf32>
    tpu.vector_store %arg6[%c9, %c32_279], %392 {strides = array<i32>} : memref<432x128xf32, #tpu.memory_space<vmem>>, vector<4x32xf32>,
    %c10 = arith.constant 10 : index
    %c0_280 = arith.constant 0 : index
    %394 = vector.load %arg6[%c10, %c0_280] : memref<432x128xf32, #tpu.memory_space<vmem>>, vector<4x32xf32>
    tpu.vector_store %arg6[%c10, %c0_280], %392 {strides = array<i32>} : memref<432x128xf32, #tpu.memory_space<vmem>>, vector<4x32xf32>,
    %c8 = arith.constant 8 : index
    %c64_281 = arith.constant 64 : index
    %395 = vector.load %arg6[%c8, %c64_281] : memref<432x128xf32, #tpu.memory_space<vmem>>, vector<4x32xf32>
    tpu.vector_store %arg6[%c8, %c64_281], %392 {strides = array<i32>} : memref<432x128xf32, #tpu.memory_space<vmem>>, vector<4x32xf32>,
    %c33_282 = arith.constant 33 : index
    %c0_283 = arith.constant 0 : index
    %396 = tpu.strided_load %arg7[%c33_282, %c0_283] {strides = array<i32: 2, 1>} : memref<432x128xf32, #tpu.memory_space<vmem>>, vector<4x128xf32>
    %397 = arith.truncf %396 : vector<4x128xf32> to vector<4x128xbf16>
    %c1536_284 = arith.constant 1536 : index
    %c0_285 = arith.constant 0 : index
    %398 = vector.load %arg2[%c1536_284, %c0_285] : memref<2304x128xbf16, #tpu.memory_space<vmem>>, vector<128x128xbf16>
    %cst_286 = arith.constant dense<0.000000e+00> : vector<4x128xf32>
    %399 = tpu.matmul %397, %398, %cst_286 {dimension_numbers = #tpu.dot_dimension_numbers<[1], [0], [0], [1], [0, 0, 1, 1], [], []>} : vector<4x128xbf16>, vector<128x128xbf16>, vector<4x128xf32> -> vector<4x128xf32>
    %c49_287 = arith.constant 49 : index
    %c0_288 = arith.constant 0 : index
    %400 = tpu.strided_load %arg7[%c49_287, %c0_288] {strides = array<i32: 2, 1>} : memref<432x128xf32, #tpu.memory_space<vmem>>, vector<4x128xf32>
    %401 = arith.truncf %400 : vector<4x128xf32> to vector<4x128xbf16>
    %c1664_289 = arith.constant 1664 : index
    %c0_290 = arith.constant 0 : index
    %402 = vector.load %arg2[%c1664_289, %c0_290] : memref<2304x128xbf16, #tpu.memory_space<vmem>>, vector<128x128xbf16>
    %cst_291 = arith.constant dense<0.000000e+00> : vector<4x128xf32>
    %403 = tpu.matmul %401, %402, %cst_291 {dimension_numbers = #tpu.dot_dimension_numbers<[1], [0], [0], [1], [0, 0, 1, 1], [], []>} : vector<4x128xbf16>, vector<128x128xbf16>, vector<4x128xf32> -> vector<4x128xf32>
    %404 = arith.addf %399, %403 : vector<4x128xf32>
    %c65_292 = arith.constant 65 : index
    %c0_293 = arith.constant 0 : index
    %405 = tpu.strided_load %arg7[%c65_292, %c0_293] {strides = array<i32: 2, 1>} : memref<432x128xf32, #tpu.memory_space<vmem>>, vector<4x128xf32>
    %406 = arith.truncf %405 : vector<4x128xf32> to vector<4x128xbf16>
    %c1792_294 = arith.constant 1792 : index
    %c0_295 = arith.constant 0 : index
    %407 = vector.load %arg2[%c1792_294, %c0_295] : memref<2304x128xbf16, #tpu.memory_space<vmem>>, vector<128x128xbf16>
    %cst_296 = arith.constant dense<0.000000e+00> : vector<4x128xf32>
    %408 = tpu.matmul %406, %407, %cst_296 {dimension_numbers = #tpu.dot_dimension_numbers<[1], [0], [0], [1], [0, 0, 1, 1], [], []>} : vector<4x128xbf16>, vector<128x128xbf16>, vector<4x128xf32> -> vector<4x128xf32>
    %409 = arith.addf %404, %408 : vector<4x128xf32>
    %410 = arith.addf %409, %370 : vector<4x128xf32>
    %411 = arith.negf %410 : vector<4x128xf32>
    %412 = math.exp %411 : vector<4x128xf32>
    %cst_297 = arith.constant 1.000000e+00 : f32
    %413 = vector.broadcast %cst_297 : f32 to vector<4x128xf32>
    %414 = arith.addf %413, %412 : vector<4x128xf32>
    %415 = arith.divf %413, %414 : vector<4x128xf32>
    %416 = arith.mulf %410, %415 : vector<4x128xf32>
    %417 = vector.extract_strided_slice %416 {offsets = [0, 0], sizes = [4, 32], strides = [1, 1]} : vector<4x128xf32> to vector<4x32xf32>
    %c17_298 = arith.constant 17 : index
    %c32_299 = arith.constant 32 : index
    %418 = vector.load %arg6[%c17_298, %c32_299] : memref<432x128xf32, #tpu.memory_space<vmem>>, vector<4x32xf32>
    tpu.vector_store %arg6[%c17_298, %c32_299], %417 {strides = array<i32>} : memref<432x128xf32, #tpu.memory_space<vmem>>, vector<4x32xf32>,
    %c18_300 = arith.constant 18 : index
    %c0_301 = arith.constant 0 : index
    %419 = vector.load %arg6[%c18_300, %c0_301] : memref<432x128xf32, #tpu.memory_space<vmem>>, vector<4x32xf32>
    tpu.vector_store %arg6[%c18_300, %c0_301], %417 {strides = array<i32>} : memref<432x128xf32, #tpu.memory_space<vmem>>, vector<4x32xf32>,
    %c16_302 = arith.constant 16 : index
    %c64_303 = arith.constant 64 : index
    %420 = vector.load %arg6[%c16_302, %c64_303] : memref<432x128xf32, #tpu.memory_space<vmem>>, vector<4x32xf32>
    tpu.vector_store %arg6[%c16_302, %c64_303], %417 {strides = array<i32>} : memref<432x128xf32, #tpu.memory_space<vmem>>, vector<4x32xf32>,
    %c65_304 = arith.constant 65 : index
    %c0_305 = arith.constant 0 : index
    %421 = tpu.strided_load %arg7[%c65_304, %c0_305] {strides = array<i32: 2, 1>} : memref<432x128xf32, #tpu.memory_space<vmem>>, vector<4x128xf32>
    %422 = arith.truncf %421 : vector<4x128xf32> to vector<4x128xbf16>
    %c1536_306 = arith.constant 1536 : index
    %c0_307 = arith.constant 0 : index
    %423 = vector.load %arg2[%c1536_306, %c0_307] : memref<2304x128xbf16, #tpu.memory_space<vmem>>, vector<128x128xbf16>
    %cst_308 = arith.constant dense<0.000000e+00> : vector<4x128xf32>
    %424 = tpu.matmul %422, %423, %cst_308 {dimension_numbers = #tpu.dot_dimension_numbers<[1], [0], [0], [1], [0, 0, 1, 1], [], []>} : vector<4x128xbf16>, vector<128x128xbf16>, vector<4x128xf32> -> vector<4x128xf32>
    %c81_309 = arith.constant 81 : index
    %c0_310 = arith.constant 0 : index
    %425 = tpu.strided_load %arg7[%c81_309, %c0_310] {strides = array<i32: 2, 1>} : memref<432x128xf32, #tpu.memory_space<vmem>>, vector<4x128xf32>
    %426 = arith.truncf %425 : vector<4x128xf32> to vector<4x128xbf16>
    %c1664_311 = arith.constant 1664 : index
    %c0_312 = arith.constant 0 : index
    %427 = vector.load %arg2[%c1664_311, %c0_312] : memref<2304x128xbf16, #tpu.memory_space<vmem>>, vector<128x128xbf16>
    %cst_313 = arith.constant dense<0.000000e+00> : vector<4x128xf32>
    %428 = tpu.matmul %426, %427, %cst_313 {dimension_numbers = #tpu.dot_dimension_numbers<[1], [0], [0], [1], [0, 0, 1, 1], [], []>} : vector<4x128xbf16>, vector<128x128xbf16>, vector<4x128xf32> -> vector<4x128xf32>
    %429 = arith.addf %424, %428 : vector<4x128xf32>
    %c97_314 = arith.constant 97 : index
    %c0_315 = arith.constant 0 : index
    %430 = tpu.strided_load %arg7[%c97_314, %c0_315] {strides = array<i32: 2, 1>} : memref<432x128xf32, #tpu.memory_space<vmem>>, vector<4x128xf32>
    %431 = arith.truncf %430 : vector<4x128xf32> to vector<4x128xbf16>
    %c1792_316 = arith.constant 1792 : index
    %c0_317 = arith.constant 0 : index
    %432 = vector.load %arg2[%c1792_316, %c0_317] : memref<2304x128xbf16, #tpu.memory_space<vmem>>, vector<128x128xbf16>
    %cst_318 = arith.constant dense<0.000000e+00> : vector<4x128xf32>
    %433 = tpu.matmul %431, %432, %cst_318 {dimension_numbers = #tpu.dot_dimension_numbers<[1], [0], [0], [1], [0, 0, 1, 1], [], []>} : vector<4x128xbf16>, vector<128x128xbf16>, vector<4x128xf32> -> vector<4x128xf32>
    %434 = arith.addf %429, %433 : vector<4x128xf32>
    %435 = arith.addf %434, %370 : vector<4x128xf32>
    %436 = arith.negf %435 : vector<4x128xf32>
    %437 = math.exp %436 : vector<4x128xf32>
    %cst_319 = arith.constant 1.000000e+00 : f32
    %438 = vector.broadcast %cst_319 : f32 to vector<4x128xf32>
    %439 = arith.addf %438, %437 : vector<4x128xf32>
    %440 = arith.divf %438, %439 : vector<4x128xf32>
    %441 = arith.mulf %435, %440 : vector<4x128xf32>
    %442 = vector.extract_strided_slice %441 {offsets = [0, 0], sizes = [4, 32], strides = [1, 1]} : vector<4x128xf32> to vector<4x32xf32>
    %c25_320 = arith.constant 25 : index
    %c32_321 = arith.constant 32 : index
    %443 = vector.load %arg6[%c25_320, %c32_321] : memref<432x128xf32, #tpu.memory_space<vmem>>, vector<4x32xf32>
    tpu.vector_store %arg6[%c25_320, %c32_321], %442 {strides = array<i32>} : memref<432x128xf32, #tpu.memory_space<vmem>>, vector<4x32xf32>,
    %c26 = arith.constant 26 : index
    %c0_322 = arith.constant 0 : index
    %444 = vector.load %arg6[%c26, %c0_322] : memref<432x128xf32, #tpu.memory_space<vmem>>, vector<4x32xf32>
    tpu.vector_store %arg6[%c26, %c0_322], %442 {strides = array<i32>} : memref<432x128xf32, #tpu.memory_space<vmem>>, vector<4x32xf32>,
    %c24_323 = arith.constant 24 : index
    %c64_324 = arith.constant 64 : index
    %445 = vector.load %arg6[%c24_323, %c64_324] : memref<432x128xf32, #tpu.memory_space<vmem>>, vector<4x32xf32>
    tpu.vector_store %arg6[%c24_323, %c64_324], %442 {strides = array<i32>} : memref<432x128xf32, #tpu.memory_space<vmem>>, vector<4x32xf32>,
    %c97_325 = arith.constant 97 : index
    %c0_326 = arith.constant 0 : index
    %446 = tpu.strided_load %arg7[%c97_325, %c0_326] {strides = array<i32: 2, 1>} : memref<432x128xf32, #tpu.memory_space<vmem>>, vector<4x128xf32>
    %447 = arith.truncf %446 : vector<4x128xf32> to vector<4x128xbf16>
    %c1536_327 = arith.constant 1536 : index
    %c0_328 = arith.constant 0 : index
    %448 = vector.load %arg2[%c1536_327, %c0_328] : memref<2304x128xbf16, #tpu.memory_space<vmem>>, vector<128x128xbf16>
    %cst_329 = arith.constant dense<0.000000e+00> : vector<4x128xf32>
    %449 = tpu.matmul %447, %448, %cst_329 {dimension_numbers = #tpu.dot_dimension_numbers<[1], [0], [0], [1], [0, 0, 1, 1], [], []>} : vector<4x128xbf16>, vector<128x128xbf16>, vector<4x128xf32> -> vector<4x128xf32>
    %c113_330 = arith.constant 113 : index
    %c0_331 = arith.constant 0 : index
    %450 = tpu.strided_load %arg7[%c113_330, %c0_331] {strides = array<i32: 2, 1>} : memref<432x128xf32, #tpu.memory_space<vmem>>, vector<4x128xf32>
    %451 = arith.truncf %450 : vector<4x128xf32> to vector<4x128xbf16>
    %c1664_332 = arith.constant 1664 : index
    %c0_333 = arith.constant 0 : index
    %452 = vector.load %arg2[%c1664_332, %c0_333] : memref<2304x128xbf16, #tpu.memory_space<vmem>>, vector<128x128xbf16>
    %cst_334 = arith.constant dense<0.000000e+00> : vector<4x128xf32>
    %453 = tpu.matmul %451, %452, %cst_334 {dimension_numbers = #tpu.dot_dimension_numbers<[1], [0], [0], [1], [0, 0, 1, 1], [], []>} : vector<4x128xbf16>, vector<128x128xbf16>, vector<4x128xf32> -> vector<4x128xf32>
    %454 = arith.addf %449, %453 : vector<4x128xf32>
    %c129_335 = arith.constant 129 : index
    %c0_336 = arith.constant 0 : index
    %455 = tpu.strided_load %arg7[%c129_335, %c0_336] {strides = array<i32: 2, 1>} : memref<432x128xf32, #tpu.memory_space<vmem>>, vector<4x128xf32>
    %456 = arith.truncf %455 : vector<4x128xf32> to vector<4x128xbf16>
    %c1792_337 = arith.constant 1792 : index
    %c0_338 = arith.constant 0 : index
    %457 = vector.load %arg2[%c1792_337, %c0_338] : memref<2304x128xbf16, #tpu.memory_space<vmem>>, vector<128x128xbf16>
    %cst_339 = arith.constant dense<0.000000e+00> : vector<4x128xf32>
    %458 = tpu.matmul %456, %457, %cst_339 {dimension_numbers = #tpu.dot_dimension_numbers<[1], [0], [0], [1], [0, 0, 1, 1], [], []>} : vector<4x128xbf16>, vector<128x128xbf16>, vector<4x128xf32> -> vector<4x128xf32>
    %459 = arith.addf %454, %458 : vector<4x128xf32>
    %460 = arith.addf %459, %370 : vector<4x128xf32>
    %461 = arith.negf %460 : vector<4x128xf32>
    %462 = math.exp %461 : vector<4x128xf32>
    %cst_340 = arith.constant 1.000000e+00 : f32
    %463 = vector.broadcast %cst_340 : f32 to vector<4x128xf32>
    %464 = arith.addf %463, %462 : vector<4x128xf32>
    %465 = arith.divf %463, %464 : vector<4x128xf32>
    %466 = arith.mulf %460, %465 : vector<4x128xf32>
    %467 = vector.extract_strided_slice %466 {offsets = [0, 0], sizes = [4, 32], strides = [1, 1]} : vector<4x128xf32> to vector<4x32xf32>
    %c33_341 = arith.constant 33 : index
    %c32_342 = arith.constant 32 : index
    %468 = vector.load %arg6[%c33_341, %c32_342] : memref<432x128xf32, #tpu.memory_space<vmem>>, vector<4x32xf32>
    tpu.vector_store %arg6[%c33_341, %c32_342], %467 {strides = array<i32>} : memref<432x128xf32, #tpu.memory_space<vmem>>, vector<4x32xf32>,
    %c34_343 = arith.constant 34 : index
    %c0_344 = arith.constant 0 : index
    %469 = vector.load %arg6[%c34_343, %c0_344] : memref<432x128xf32, #tpu.memory_space<vmem>>, vector<4x32xf32>
    tpu.vector_store %arg6[%c34_343, %c0_344], %467 {strides = array<i32>} : memref<432x128xf32, #tpu.memory_space<vmem>>, vector<4x32xf32>,
    %c32_345 = arith.constant 32 : index
    %c64_346 = arith.constant 64 : index
    %470 = vector.load %arg6[%c32_345, %c64_346] : memref<432x128xf32, #tpu.memory_space<vmem>>, vector<4x32xf32>
    tpu.vector_store %arg6[%c32_345, %c64_346], %467 {strides = array<i32>} : memref<432x128xf32, #tpu.memory_space<vmem>>, vector<4x32xf32>,
    %c5 = arith.constant 5 : index
    %c0_347 = arith.constant 0 : index
    %471 = vector.load %arg3[%c5, %c0_347] : memref<6x128xf32, #tpu.memory_space<vmem>>, vector<1x128xf32>
    %472 = vector.shape_cast %471 : vector<1x128xf32> to vector<1x128xf32>
    %473 = vector.broadcast %472 : vector<1x128xf32> to vector<32x128xf32>
    %c0_348 = arith.constant 0 : index
    %c0_349 = arith.constant 0 : index
    %474 = vector.load %arg6[%c0_348, %c0_349] : memref<432x128xf32, #tpu.memory_space<vmem>>, vector<32x128xf32>
    %475 = arith.truncf %474 : vector<32x128xf32> to vector<32x128xbf16>
    %c1920 = arith.constant 1920 : index
    %c0_350 = arith.constant 0 : index
    %476 = vector.load %arg2[%c1920, %c0_350] : memref<2304x128xbf16, #tpu.memory_space<vmem>>, vector<128x128xbf16>
    %cst_351 = arith.constant dense<0.000000e+00> : vector<32x128xf32>
    %477 = tpu.matmul %475, %476, %cst_351 {dimension_numbers = #tpu.dot_dimension_numbers<[1], [0], [0], [1], [0, 0, 1, 1], [], []>} : vector<32x128xbf16>, vector<128x128xbf16>, vector<32x128xf32> -> vector<32x128xf32>
    %c8_352 = arith.constant 8 : index
    %c0_353 = arith.constant 0 : index
    %478 = vector.load %arg6[%c8_352, %c0_353] : memref<432x128xf32, #tpu.memory_space<vmem>>, vector<32x128xf32>
    %479 = arith.truncf %478 : vector<32x128xf32> to vector<32x128xbf16>
    %c2048 = arith.constant 2048 : index
    %c0_354 = arith.constant 0 : index
    %480 = vector.load %arg2[%c2048, %c0_354] : memref<2304x128xbf16, #tpu.memory_space<vmem>>, vector<128x128xbf16>
    %cst_355 = arith.constant dense<0.000000e+00> : vector<32x128xf32>
    %481 = tpu.matmul %479, %480, %cst_355 {dimension_numbers = #tpu.dot_dimension_numbers<[1], [0], [0], [1], [0, 0, 1, 1], [], []>} : vector<32x128xbf16>, vector<128x128xbf16>, vector<32x128xf32> -> vector<32x128xf32>
    %482 = arith.addf %477, %481 : vector<32x128xf32>
    %c16_356 = arith.constant 16 : index
    %c0_357 = arith.constant 0 : index
    %483 = vector.load %arg6[%c16_356, %c0_357] : memref<432x128xf32, #tpu.memory_space<vmem>>, vector<32x128xf32>
    %484 = arith.truncf %483 : vector<32x128xf32> to vector<32x128xbf16>
    %c2176 = arith.constant 2176 : index
    %c0_358 = arith.constant 0 : index
    %485 = vector.load %arg2[%c2176, %c0_358] : memref<2304x128xbf16, #tpu.memory_space<vmem>>, vector<128x128xbf16>
    %cst_359 = arith.constant dense<0.000000e+00> : vector<32x128xf32>
    %486 = tpu.matmul %484, %485, %cst_359 {dimension_numbers = #tpu.dot_dimension_numbers<[1], [0], [0], [1], [0, 0, 1, 1], [], []>} : vector<32x128xbf16>, vector<128x128xbf16>, vector<32x128xf32> -> vector<32x128xf32>
    %487 = arith.addf %482, %486 : vector<32x128xf32>
    %488 = arith.addf %487, %473 : vector<32x128xf32>
    %c0_360 = arith.constant 0 : index
    %c0_361 = arith.constant 0 : index
    %c0_362 = arith.constant 0 : index
    %489 = vector.load %arg5[%c0_360, %c0_361, %c0_362] : memref<1x32x128xf32, #tpu.memory_space<vmem>>, vector<1x32x128xf32>
    %490 = vector.shape_cast %489 : vector<1x32x128xf32> to vector<32x128xf32>
    %491 = vector.shape_cast %488 : vector<32x128xf32> to vector<1x32x128xf32>
    tpu.vector_store %arg5[%c0_360, %c0_361, %c0_362], %491 {strides = array<i32>} : memref<1x32x128xf32, #tpu.memory_space<vmem>>, vector<1x32x128xf32>,
    return
  }
  func.func @transform_0(%arg0: i32) -> (i32, i32, i32) {
    %c0_i32 = arith.constant 0 : i32
    %c0_i32_0 = arith.constant 0 : i32
    %c0_i32_1 = arith.constant 0 : i32
    return %arg0, %c0_i32, %c0_i32_0 : i32, i32, i32
  }
  func.func @transform_1(%arg0: i32) -> (i32, i32) {
    %c0_i32 = arith.constant 0 : i32
    %c0_i32_0 = arith.constant 0 : i32
    %c0_i32_1 = arith.constant 0 : i32
    return %c0_i32, %c0_i32_0 : i32, i32
  }
  func.func @transform_2(%arg0: i32) -> (i32, i32) {
    %c0_i32 = arith.constant 0 : i32
    %c0_i32_0 = arith.constant 0 : i32
    %c0_i32_1 = arith.constant 0 : i32
    return %c0_i32, %c0_i32_0 : i32, i32
  }
  func.func @transform_3(%arg0: i32) -> (i32, i32) {
    %c0_i32 = arith.constant 0 : i32
    %c0_i32_0 = arith.constant 0 : i32
    %c0_i32_1 = arith.constant 0 : i32
    return %c0_i32, %c0_i32_0 : i32, i32
  }
  func.func @transform_4(%arg0: i32) -> (i32, i32, i32) {
    %c0_i32 = arith.constant 0 : i32
    %c0_i32_0 = arith.constant 0 : i32
    %c0_i32_1 = arith.constant 0 : i32
    return %arg0, %c0_i32, %c0_i32_0 : i32, i32, i32
  }
}

</mosaic_0001>

<llo_original>
// kernel: controlnet_cond_embedding.1
$region0: #{controlnet_cond_embedding.1}
  #allocation0 [shape = 'u32[]', space=smem, size = 0x4, offset = 0x4, fixed_abs, tag = 'smem constant byte address 0x4 - core index']
  #allocation1 [shape = 'u32[144,128]{1,0:T(1,128)}', space=vmem, size = 0x12000, scoped, tag = 'internal scratch']
  #allocation2 [shape = 'f32[432,128]{1,0:T(8,128)}', space=vmem, size = 0x36000, scoped, tag = 'scratch operand']
  #allocation3 [shape = 'f32[432,128]{1,0:T(8,128)}', space=vmem, size = 0x36000, scoped, tag = 'scratch operand']
  %s0 = inlined_call_operand.vmem [shape: f32[2,432,128], index: 0, kind: input, shape index: {}]
  %s1 = inlined_call_operand.vmem [shape: bf16[2304,128], index: 1, kind: input, shape index: {}]
  %s2 = inlined_call_operand.vmem [shape: f32[6,128], index: 2, kind: input, shape index: {}]
  %s3 = inlined_call_operand.vmem [shape: bf16[512,128], index: 3, kind: input, shape index: {}]
  %s4 = inlined_call_operand.vmem [shape: f32[2,32,128], index: 4, kind: output, shape index: {}]
  %s5 = sld [smem:[#allocation0]]
  $region49: #{controlnet_cond_embedding.1} parent=0
    _
  %s7 = ssub.s32 1, %s5
  %s8 = scalar_select 0, %s7, %s5
  loop: start=0, step=1, limit=4
  $region2: #{controlnet_cond_embedding.1} parent=0 // loop_pre_header
    _
  $region3: #{controlnet_cond_embedding.1} parent=0 // loop_header
    %s10 = sphi 0, %s14
    %p11 = scmp.ge.s32.totalorder %s10, 4
    %s20 = sphi 0, %s22
    %s23 = sphi 0, %s20
    %s24 = sphi 0, %s23
    %s40 = sphi 0, %s24
    %s44 = sphi 0, %s44
    %s46 = sphi 0, %s44
    %s47 = sphi 0, %s46
    %s61 = sphi 0, %s47
    %s65 = sphi 0, %s65
    %s67 = sphi 0, %s65
    %s68 = sphi 0, %s67
    %s82 = sphi 0, %s68
    %s86 = sphi 0, %s86
    %s88 = sphi 0, %s86
    %s89 = sphi 0, %s88
    %s103 = sphi 0, %s89
    %s109 = sphi 0, %s111
    %s112 = sphi 0, %s109
    %s113 = sphi 0, %s112
    %s129 = sphi 0, %s113
  $region4: #{controlnet_cond_embedding.1} parent=0 // loop_header_branch
    %13 = sbr.rel (%p11) target = $region8
  $region5: #{controlnet_cond_embedding.1} parent=0 // loop_body
    %s15 = ssub.s32 %s10, 1
    %s16 = ssub.s32 %s10, 2
    %s17 = sadd.s32 %s10, 1
    %s18 = ssub.s32 %s10, %s17
    %p19 = scmp.eq.s32.totalorder %s18, 0
    %s21 = sadd.s32 %s20, 1
    %s22 = scalar_select %p19, %s20, %s21
    %p25 = pneg %p19
    %p26 = scmp.eq.s32.totalorder %s10, 1
    %p27 = por %p25, %p26
    %p28 = scmp.ne.s32.totalorder %s20, %s23
    %p29 = scmp.eq.s32.totalorder %s10, 0
    %p30 = por %p28, %p29
    %p31 = scmp.ne.s32.totalorder %s20, %s23
    %p32 = scmp.eq.s32.totalorder %s15, 1
    %p33 = por %p31, %p32
    %p34 = scmp.ne.s32.totalorder %s23, %s24
    %p35 = scmp.eq.s32.totalorder %s15, 0
    %p36 = por %p34, %p35
    %p37 = scmp.ne.s32.totalorder %s23, %s24
    %p38 = scmp.eq.s32.totalorder %s16, 1
    %p39 = por %p37, %p38
    %p41 = scmp.ne.s32.totalorder %s24, %s40
    %p42 = scmp.eq.s32.totalorder %s16, 0
    %p43 = por %p41, %p42
    %s45 = sadd.s32 %s44, 1
    %p48 = scmp.eq.s32.totalorder %s10, 1
    %p49 = scmp.ne.s32.totalorder %s44, %s46
    %p50 = scmp.eq.s32.totalorder %s10, 0
    %p51 = por %p49, %p50
    %p52 = scmp.ne.s32.totalorder %s44, %s46
    %p53 = scmp.eq.s32.totalorder %s15, 1
    %p54 = por %p52, %p53
    %p55 = scmp.ne.s32.totalorder %s46, %s47
    %p56 = scmp.eq.s32.totalorder %s15, 0
    %p57 = por %p55, %p56
    %p58 = scmp.ne.s32.totalorder %s46, %s47
    %p59 = scmp.eq.s32.totalorder %s16, 1
    %p60 = por %p58, %p59
    %p62 = scmp.ne.s32.totalorder %s47, %s61
    %p63 = scmp.eq.s32.totalorder %s16, 0
    %p64 = por %p62, %p63
    %s66 = sadd.s32 %s65, 1
    %p69 = scmp.eq.s32.totalorder %s10, 1
    %p70 = scmp.ne.s32.totalorder %s65, %s67
    %p71 = scmp.eq.s32.totalorder %s10, 0
    %p72 = por %p70, %p71
    %p73 = scmp.ne.s32.totalorder %s65, %s67
    %p74 = scmp.eq.s32.totalorder %s15, 1
    %p75 = por %p73, %p74
    %p76 = scmp.ne.s32.totalorder %s67, %s68
    %p77 = scmp.eq.s32.totalorder %s15, 0
    %p78 = por %p76, %p77
    %p79 = scmp.ne.s32.totalorder %s67, %s68
    %p80 = scmp.eq.s32.totalorder %s16, 1
    %p81 = por %p79, %p80
    %p83 = scmp.ne.s32.totalorder %s68, %s82
    %p84 = scmp.eq.s32.totalorder %s16, 0
    %p85 = por %p83, %p84
    %s87 = sadd.s32 %s86, 1
    %p90 = scmp.eq.s32.totalorder %s10, 1
    %p91 = scmp.ne.s32.totalorder %s86, %s88
    %p92 = scmp.eq.s32.totalorder %s10, 0
    %p93 = por %p91, %p92
    %p94 = scmp.ne.s32.totalorder %s86, %s88
    %p95 = scmp.eq.s32.totalorder %s15, 1
    %p96 = por %p94, %p95
    %p97 = scmp.ne.s32.totalorder %s88, %s89
    %p98 = scmp.eq.s32.totalorder %s15, 0
    %p99 = por %p97, %p98
    %p100 = scmp.ne.s32.totalorder %s88, %s89
    %p101 = scmp.eq.s32.totalorder %s16, 1
    %p102 = por %p100, %p101
    %p104 = scmp.ne.s32.totalorder %s89, %s103
    %p105 = scmp.eq.s32.totalorder %s16, 0
    %p106 = por %p104, %p105
    %s107 = ssub.s32 %s10, %s17
    %p108 = scmp.eq.s32.totalorder %s107, 0
    %s110 = sadd.s32 %s109, 1
    %s111 = scalar_select %p108, %s109, %s110
    %p114 = pneg %p108
    %p115 = scmp.eq.s32.totalorder %s10, 1
    %p116 = por %p114, %p115
    %p117 = scmp.ne.s32.totalorder %s109, %s112
    %p118 = scmp.eq.s32.totalorder %s10, 0
    %p119 = por %p117, %p118
    %p120 = scmp.ne.s32.totalorder %s109, %s112
    %p121 = scmp.eq.s32.totalorder %s15, 1
    %p122 = por %p120, %p121
    %p123 = scmp.ne.s32.totalorder %s112, %s113
    %p124 = scmp.eq.s32.totalorder %s15, 0
    %p125 = por %p123, %p124
    %p126 = scmp.ne.s32.totalorder %s112, %s113
    %p127 = scmp.eq.s32.totalorder %s16, 1
    %p128 = por %p126, %p127
    %p130 = scmp.ne.s32.totalorder %s113, %s129
    %p131 = scmp.eq.s32.totalorder %s16, 0
    %p132 = por %p130, %p131
    %p133 = scmp.le.s32.totalorder 1, %s10
    %p134 = scmp.lt.s32.totalorder %s10, 3
    %p135 = pnand %p133, %p134
    %p136 = pneg %p135
    // Predicated region
    $region9: #{controlnet_cond_embedding.1} parent=5 // pred_check
      _
    $region10: #{controlnet_cond_embedding.1} parent=5 // pred_check_branch
      %138 = sbr.rel (%p135) target = $region12
    $region11: #{controlnet_cond_embedding.1} parent=5 // pred_region
      %s139 = ssub.s32 %s10, 1
      // Predicated region
      $region13: #{controlnet_cond_embedding.1} parent=11 // pred_check
        %p140 = pneg %p57
      $region14: #{controlnet_cond_embedding.1} parent=11 // pred_check_branch
        %142 = sbr.rel (%p140) target = $region16
      $region15: #{controlnet_cond_embedding.1} parent=11 // pred_region
        _
      $region16: #{controlnet_cond_embedding.1} parent=11 // pred_fallthru
        _
      // Predicated region
      $region17: #{controlnet_cond_embedding.1} parent=11 // pred_check
        %p143 = pneg %p78
      $region18: #{controlnet_cond_embedding.1} parent=11 // pred_check_branch
        %145 = sbr.rel (%p143) target = $region20
      $region19: #{controlnet_cond_embedding.1} parent=11 // pred_region
        _
      $region20: #{controlnet_cond_embedding.1} parent=11 // pred_fallthru
        _
      // Predicated region
      $region21: #{controlnet_cond_embedding.1} parent=11 // pred_check
        %p146 = pneg %p99
      $region22: #{controlnet_cond_embedding.1} parent=11 // pred_check_branch
        %148 = sbr.rel (%p146) target = $region24
      $region23: #{controlnet_cond_embedding.1} parent=11 // pred_region
        _
      $region24: #{controlnet_cond_embedding.1} parent=11 // pred_fallthru
        _
    $region12: #{controlnet_cond_embedding.1} parent=5 // pred_fallthru
      _
    %p149 = scmp.lt.s32.totalorder %s10, 2
    // Predicated region
    $region25: #{controlnet_cond_embedding.1} parent=5 // pred_check
      %p150 = pneg %p149
    $region26: #{controlnet_cond_embedding.1} parent=5 // pred_check_branch
      %152 = sbr.rel (%p150) target = $region28
    $region27: #{controlnet_cond_embedding.1} parent=5 // pred_region
      // Predicated region
      $region29: #{controlnet_cond_embedding.1} parent=27 // pred_check
        %p153 = pneg %p30
      $region30: #{controlnet_cond_embedding.1} parent=27 // pred_check_branch
        %155 = sbr.rel (%p153) target = $region32
      $region31: #{controlnet_cond_embedding.1} parent=27 // pred_region
        %p156 = scmp.lt.s32.totalorder %s10, 1
        %s157 = scalar_select %p156, %s10, 1
        %s158 = smul.addr %s157, 54
        %s159 = smul.addr %s158, 8
        %s160 = scalar_lea.vmem %s0, %s159
      $region32: #{controlnet_cond_embedding.1} parent=27 // pred_fallthru
        _
    $region28: #{controlnet_cond_embedding.1} parent=5 // pred_fallthru
      _
    %p161 = scmp.le.s32.totalorder 1, %s10
    %p162 = scmp.lt.s32.totalorder %s10, 3
    %p163 = pnand %p161, %p162
    %p164 = pneg %p163
    // Predicated region
    $region33: #{controlnet_cond_embedding.1} parent=5 // pred_check
      _
    $region34: #{controlnet_cond_embedding.1} parent=5 // pred_check_branch
      %166 = sbr.rel (%p163) target = $region36
    $region35: #{controlnet_cond_embedding.1} parent=5 // pred_region
      %s167 = ssub.s32 %s10, 1
      %p168 = scmp.lt.s32.totalorder %s15, 1
      %s169 = scalar_select %p168, %s15, 1
      %s170 = smul.addr %s169, 54
      %s171 = smul.addr %s170, 8
      %s172 = scalar_lea.vmem %s0, %s171
      %p173 = pneg %p36
      %p174 = pneg %p33
      %p175 = pneg %p57
      %p176 = pneg %p54
      %p177 = pneg %p78
      %p178 = pneg %p75
      %p179 = pneg %p99
      %p180 = pneg %p96
      %p181 = pneg %p125
      %p182 = pneg %p122
      %p183 = scmp.lt.s32.totalorder %s15, 1
      %s184 = scalar_select %p183, %s15, 1
      %s185 = smul.addr %s184, 4
      %s186 = smul.addr %s185, 8
      %s187 = scalar_lea.vmem %s4, %s186
      %p188 = scmp.lt.s32.totalorder %s15, 1
      %s189 = scalar_select %p188, %s15, 1
      %s190 = smul.addr %s189, 54
      %s191 = smul.addr %s190, 8
      %s192 = scalar_lea.vmem %s0, %s191
      %p193 = scmp.lt.s32.totalorder %s15, 1
      %s194 = scalar_select %p193, %s15, 1
      %s195 = smul.addr %s194, 4
      %s196 = smul.addr %s195, 8
      %s197 = scalar_lea.vmem %s4, %s196
      %199 = vst [vmem:[#allocation2] sm:$0xff] 0.0
      %200 = vst [vmem:[#allocation2 + $0x8] sm:$0xff] 0.0
      %201 = vst [vmem:[#allocation2 + $0x10] sm:$0xff] 0.0
      %202 = vst [vmem:[#allocation2 + $0x18] sm:$0xff] 0.0
      %203 = vst [vmem:[#allocation2 + $0x20] sm:$0xff] 0.0
      %204 = vst [vmem:[#allocation2 + $0x28] sm:$0xff] 0.0
      %205 = vst [vmem:[#allocation2 + $0x30] sm:$0xff] 0.0
      %206 = vst [vmem:[#allocation2 + $0x38] sm:$0xff] 0.0
      %207 = vst [vmem:[#allocation2 + $0x40] sm:$0xff] 0.0
      %208 = vst [vmem:[#allocation2 + $0x48] sm:$0xff] 0.0
      %209 = vst [vmem:[#allocation2 + $0x50] sm:$0xff] 0.0
      %210 = vst [vmem:[#allocation2 + $0x58] sm:$0xff] 0.0
      %211 = vst [vmem:[#allocation2 + $0x60] sm:$0xff] 0.0
      %212 = vst [vmem:[#allocation2 + $0x68] sm:$0xff] 0.0
      %213 = vst [vmem:[#allocation2 + $0x70] sm:$0xff] 0.0
      %214 = vst [vmem:[#allocation2 + $0x78] sm:$0xff] 0.0
      %215 = vst [vmem:[#allocation2 + $0x80] sm:$0xff] 0.0
      %216 = vst [vmem:[#allocation2 + $0x88] sm:$0xff] 0.0
      %217 = vst [vmem:[#allocation2 + $0x90] sm:$0xff] 0.0
      %218 = vst [vmem:[#allocation2 + $0x98] sm:$0xff] 0.0
      %219 = vst [vmem:[#allocation2 + $0xa0] sm:$0xff] 0.0
      %220 = vst [vmem:[#allocation2 + $0xa8] sm:$0xff] 0.0
      %221 = vst [vmem:[#allocation2 + $0xb0] sm:$0xff] 0.0
      %222 = vst [vmem:[#allocation2 + $0xb8] sm:$0xff] 0.0
      %223 = vst [vmem:[#allocation2 + $0xc0] sm:$0xff] 0.0
      %224 = vst [vmem:[#allocation2 + $0xc8] sm:$0xff] 0.0
      %225 = vst [vmem:[#allocation2 + $0xd0] sm:$0xff] 0.0
      %226 = vst [vmem:[#allocation2 + $0xd8] sm:$0xff] 0.0
      %227 = vst [vmem:[#allocation2 + $0xe0] sm:$0xff] 0.0
      %228 = vst [vmem:[#allocation2 + $0xe8] sm:$0xff] 0.0
      %229 = vst [vmem:[#allocation2 + $0xf0] sm:$0xff] 0.0
      %230 = vst [vmem:[#allocation2 + $0xf8] sm:$0xff] 0.0
      %231 = vst [vmem:[#allocation2 + $0x100] sm:$0xff] 0.0
      %232 = vst [vmem:[#allocation2 + $0x108] sm:$0xff] 0.0
      %233 = vst [vmem:[#allocation2 + $0x110] sm:$0xff] 0.0
      %234 = vst [vmem:[#allocation2 + $0x118] sm:$0xff] 0.0
      %235 = vst [vmem:[#allocation2 + $0x120] sm:$0xff] 0.0
      %236 = vst [vmem:[#allocation2 + $0x128] sm:$0xff] 0.0
      %237 = vst [vmem:[#allocation2 + $0x130] sm:$0xff] 0.0
      %238 = vst [vmem:[#allocation2 + $0x138] sm:$0xff] 0.0
      %239 = vst [vmem:[#allocation2 + $0x140] sm:$0xff] 0.0
      %240 = vst [vmem:[#allocation2 + $0x148] sm:$0xff] 0.0
      %241 = vst [vmem:[#allocation2 + $0x150] sm:$0xff] 0.0
      %242 = vst [vmem:[#allocation2 + $0x158] sm:$0xff] 0.0
      %243 = vst [vmem:[#allocation2 + $0x160] sm:$0xff] 0.0
      %244 = vst [vmem:[#allocation2 + $0x168] sm:$0xff] 0.0
      %245 = vst [vmem:[#allocation2 + $0x170] sm:$0xff] 0.0
      %246 = vst [vmem:[#allocation2 + $0x178] sm:$0xff] 0.0
      %247 = vst [vmem:[#allocation2 + $0x180] sm:$0xff] 0.0
      %248 = vst [vmem:[#allocation2 + $0x188] sm:$0xff] 0.0
      %249 = vst [vmem:[#allocation2 + $0x190] sm:$0xff] 0.0
      %250 = vst [vmem:[#allocation2 + $0x198] sm:$0xff] 0.0
      %251 = vst [vmem:[#allocation2 + $0x1a0] sm:$0xff] 0.0
      %252 = vst [vmem:[#allocation2 + $0x1a8] sm:$0xff] 0.0
      %v253 = vld [vmem:[%s2] sm:$0x1]
      %v254 = vlaneseq
      %v255 = vshrl.u32 %v254, 7
      %v256 = vsub.s32 0, %v255
      %v257 = vrot.slane %v253, %v256
      %v258 = vld [vmem:[%s192] sm:$0xff]
      %v259 = vld [vmem:[%s192 + $0x8] sm:$0xff]
      %v260 = vld [vmem:[%s192 + $0x10] sm:$0xff]
      %v261 = vld [vmem:[%s192 + $0x18] sm:$0xff]
      %v262 = vld [vmem:[%s192 + $0x20] sm:$0xff]
      %v263 = vld [vmem:[%s192 + $0x28] sm:$0xff]
      %v264 = vld [vmem:[%s192 + $0x30] sm:$0xff]
      %v265 = vld [vmem:[%s192 + $0x38] sm:$0xff]
      %v266 = vld [vmem:[%s192 + $0x40] sm:$0xff]
      %v267 = vld [vmem:[%s192 + $0x48] sm:$0xff]
      %v268 = vld [vmem:[%s192 + $0x50] sm:$0xff]
      %v269 = vld [vmem:[%s192 + $0x58] sm:$0xff]
      %v270 = vld [vmem:[%s192 + $0x60] sm:$0xff]
      %v271 = vld [vmem:[%s192 + $0x68] sm:$0xff]
      %v272 = vld [vmem:[%s192 + $0x70] sm:$0xff]
      %v273 = vld [vmem:[%s192 + $0x78] sm:$0xff]
      %v274 = vld [vmem:[%s192 + $0x80] sm:$0xff]
      %v275 = vld [vmem:[%s192 + $0x88] sm:$0xff]
      %v276 = vld [vmem:[%s192 + $0x90] sm:$0xff]
      %v277 = vld [vmem:[%s192 + $0x98] sm:$0xff]
      %v278 = vld [vmem:[%s192 + $0xa0] sm:$0xff]
      %v279 = vld [vmem:[%s192 + $0xa8] sm:$0xff]
      %v280 = vld [vmem:[%s192 + $0xb0] sm:$0xff]
      %v281 = vld [vmem:[%s192 + $0xb8] sm:$0xff]
      %v282 = vpack.c.bf16 %v259, %v258
      %v283 = vpack.c.bf16 %v261, %v260
      %v284 = vpack.c.bf16 %v263, %v262
      %v285 = vpack.c.bf16 %v265, %v264
      %v286 = vpack.c.bf16 %v267, %v266
      %v287 = vpack.c.bf16 %v269, %v268
      %v288 = vpack.c.bf16 %v271, %v270
      %v289 = vpack.c.bf16 %v273, %v272
      %v290 = vpack.c.bf16 %v275, %v274
      %v291 = vpack.c.bf16 %v277, %v276
      %v292 = vpack.c.bf16 %v279, %v278
      %v293 = vpack.c.bf16 %v281, %v280
      %v294 = vld [vmem:[%s1] sm:$0xf]
      %v295 = vld [vmem:[%s1 + $0x4] sm:$0xf]
      %v296 = vld [vmem:[%s1 + $0x8] sm:$0xf]
      %v297 = vld [vmem:[%s1 + $0xc] sm:$0xf]
      %v298 = vld [vmem:[%s1 + $0x10] sm:$0xf]
      %v299 = vld [vmem:[%s1 + $0x14] sm:$0xf]
      %v300 = vld [vmem:[%s1 + $0x18] sm:$0xf]
      %v301 = vld [vmem:[%s1 + $0x1c] sm:$0xf]
      %v302 = vld [vmem:[%s1 + $0x20] sm:$0xf]
      %v303 = vld [vmem:[%s1 + $0x24] sm:$0xf]
      %v304 = vld [vmem:[%s1 + $0x28] sm:$0xf]
      %v305 = vld [vmem:[%s1 + $0x2c] sm:$0xf]
      %v306 = vld [vmem:[%s1 + $0x30] sm:$0xf]
      %v307 = vld [vmem:[%s1 + $0x34] sm:$0xf]
      %v308 = vld [vmem:[%s1 + $0x38] sm:$0xf]
      %v309 = vld [vmem:[%s1 + $0x3c] sm:$0xf]
      %v310 = vld [vmem:[%s192 + $0xc0] sm:$0xff]
      %v311 = vld [vmem:[%s192 + $0xc8] sm:$0xff]
      %v312 = vld [vmem:[%s192 + $0xd0] sm:$0xff]
      %v313 = vpack.c.bf16 %v262, %v261
      %v314 = vpack.c.bf16 %v264, %v263
      %v315 = vpack.c.bf16 %v266, %v265
      %v316 = vpack.c.bf16 %v268, %v267
      %v317 = vpack.c.bf16 %v270, %v269
      %v318 = vpack.c.bf16 %v272, %v271
      %v319 = vpack.c.bf16 %v274, %v273
      %v320 = vpack.c.bf16 %v276, %v275
      %v321 = vpack.c.bf16 %v278, %v277
      %v322 = vpack.c.bf16 %v280, %v279
      %v323 = vpack.c.bf16 %v310, %v281
      %v324 = vpack.c.bf16 %v312, %v311
      %v325 = vld [vmem:[%s1 + $0x40] sm:$0xf]
      %v326 = vld [vmem:[%s1 + $0x44] sm:$0xf]
      %v327 = vld [vmem:[%s1 + $0x48] sm:$0xf]
      %v328 = vld [vmem:[%s1 + $0x4c] sm:$0xf]
      %v329 = vld [vmem:[%s1 + $0x50] sm:$0xf]
      %v330 = vld [vmem:[%s1 + $0x54] sm:$0xf]
      %v331 = vld [vmem:[%s1 + $0x58] sm:$0xf]
      %v332 = vld [vmem:[%s1 + $0x5c] sm:$0xf]
      %v333 = vld [vmem:[%s1 + $0x60] sm:$0xf]
      %v334 = vld [vmem:[%s1 + $0x64] sm:$0xf]
      %v335 = vld [vmem:[%s1 + $0x68] sm:$0xf]
      %v336 = vld [vmem:[%s1 + $0x6c] sm:$0xf]
      %v337 = vld [vmem:[%s1 + $0x70] sm:$0xf]
      %v338 = vld [vmem:[%s1 + $0x74] sm:$0xf]
      %v339 = vld [vmem:[%s1 + $0x78] sm:$0xf]
      %v340 = vld [vmem:[%s1 + $0x7c] sm:$0xf]
      %v357 = vunpack.c.l.b16 %v325
      %v358 = vunpack.c.l.b16 %v326
      %v359 = vunpack.c.l.b16 %v327
      %v360 = vunpack.c.l.b16 %v328
      %v361 = vunpack.c.l.b16 %v329
      %v362 = vunpack.c.l.b16 %v330
      %v363 = vunpack.c.l.b16 %v331
      %v364 = vunpack.c.l.b16 %v332
      %v365 = vunpack.c.l.b16 %v333
      %v366 = vunpack.c.l.b16 %v334
      %v367 = vunpack.c.l.b16 %v335
      %v368 = vunpack.c.l.b16 %v336
      %v369 = vunpack.c.l.b16 %v337
      %v370 = vunpack.c.l.b16 %v338
      %v371 = vunpack.c.l.b16 %v339
      %v372 = vunpack.c.l.b16 %v340
      %v373 = vpack.c.b16 %v358, %v357
      %v374 = vpack.c.b16 %v360, %v359
      %v375 = vpack.c.b16 %v362, %v361
      %v376 = vpack.c.b16 %v364, %v363
      %v377 = vpack.c.b16 %v366, %v365
      %v378 = vpack.c.b16 %v368, %v367
      %v379 = vpack.c.b16 %v370, %v369
      %v380 = vpack.c.b16 %v372, %v371
      %389 = vmatprep.subr.bf16.mxu0 0
      %390 = vmatpush1.bf16.msra.mxu0 %v373
      %391 = vmatprep.subr.bf16.mxu0 0
      %392 = vmatpush1.bf16.msra.mxu0 %v374
      %393 = vmatprep.subr.bf16.mxu0 0
      %394 = vmatpush1.bf16.msra.mxu0 %v375
      %395 = vmatprep.subr.bf16.mxu0 0
      %396 = vmatpush1.bf16.msra.mxu0 %v376
      %397 = vmatprep.subr.bf16.mxu0 0
      %398 = vmatpush1.bf16.msra.mxu0 %v377
      %399 = vmatprep.subr.bf16.mxu0 0
      %400 = vmatpush1.bf16.msra.mxu0 %v378
      %401 = vmatprep.subr.bf16.mxu0 0
      %402 = vmatpush1.bf16.msra.mxu0 %v379
      %403 = vmatprep.subr.bf16.mxu0 0
      %404 = vmatpush1.bf16.msra.mxu0 %v380
      %405 = vmatprep.subr.bf16.mxu0 0
      %406 = vmatpush1.bf16.msra.mxu0 0
      %407 = vmatprep.subr.bf16.mxu0 0
      %408 = vmatpush1.bf16.msra.mxu0 0
      %409 = vmatprep.subr.bf16.mxu0 0
      %410 = vmatpush1.bf16.msra.mxu0 0
      %411 = vmatprep.subr.bf16.mxu0 0
      %412 = vmatpush1.bf16.msra.mxu0 0
      %413 = vmatprep.subr.bf16.mxu0 0
      %414 = vmatpush1.bf16.msra.mxu0 0
      %415 = vmatprep.subr.bf16.mxu0 0
      %416 = vmatpush1.bf16.msra.mxu0 0
      %417 = vmatprep.subr.bf16.mxu0 0
      %418 = vmatpush1.bf16.msra.mxu0 0
      %419 = vmatprep.subr.bf16.mxu0 0
      %420 = vmatpush1.bf16.msra.mxu0 0
      %421 = vmatprep.mubr.bf16.mxu0 0
      %422 = vmatmul.mubr.bf16.gmra.mrb[0].mxu0 %v313
      %v423 = vpop.f32.mrb[0].mxu0
      %v424 = vadd.f32 0.0, %v423
      %v425 = vpop.f32.mrb[0].mxu0
      %v426 = vpop.f32.mrb[0].mxu0
      %v427 = vadd.f32 0.0, %v426
      %v428 = vpop.f32.mrb[0].mxu0
      %429 = vmatprep.mubr.bf16.mxu0 0
      %430 = vmatmul.mubr.bf16.gmra.mrb[0].mxu0 %v314
      %v431 = vpop.f32.mrb[0].mxu0
      %v432 = vadd.f32 0.0, %v431
      %v433 = vpop.f32.mrb[0].mxu0
      %v434 = vpop.f32.mrb[0].mxu0
      %v435 = vadd.f32 0.0, %v434
      %v436 = vpop.f32.mrb[0].mxu0
      %437 = vmatprep.mubr.bf16.mxu0 0
      %438 = vmatmul.mubr.bf16.gmra.mrb[0].mxu0 %v315
      %v439 = vpop.f32.mrb[0].mxu0
      %v440 = vadd.f32 0.0, %v439
      %v441 = vpop.f32.mrb[0].mxu0
      %v442 = vpop.f32.mrb[0].mxu0
      %v443 = vadd.f32 0.0, %v442
      %v444 = vpop.f32.mrb[0].mxu0
      %445 = vmatprep.mubr.bf16.mxu0 0
      %446 = vmatmul.mubr.bf16.gmra.mrb[0].mxu0 %v316
      %v447 = vpop.f32.mrb[0].mxu0
      %v448 = vadd.f32 0.0, %v447
      %v449 = vpop.f32.mrb[0].mxu0
      %v450 = vpop.f32.mrb[0].mxu0
      %v451 = vadd.f32 0.0, %v450
      %v452 = vpop.f32.mrb[0].mxu0
      %453 = vmatprep.mubr.bf16.mxu0 0
      %454 = vmatmul.mubr.bf16.gmra.mrb[0].mxu0 %v317
      %v455 = vpop.f32.mrb[0].mxu0
      %v456 = vadd.f32 0.0, %v455
      %v457 = vpop.f32.mrb[0].mxu0
      %v458 = vpop.f32.mrb[0].mxu0
      %v459 = vadd.f32 0.0, %v458
      %v460 = vpop.f32.mrb[0].mxu0
      %461 = vmatprep.mubr.bf16.mxu0 0
      %462 = vmatmul.mubr.bf16.gmra.mrb[0].mxu0 %v318
      %v463 = vpop.f32.mrb[0].mxu0
      %v464 = vadd.f32 0.0, %v463
      %v465 = vpop.f32.mrb[0].mxu0
      %v466 = vpop.f32.mrb[0].mxu0
      %v467 = vadd.f32 0.0, %v466
      %v468 = vpop.f32.mrb[0].mxu0
      %469 = vmatprep.mubr.bf16.mxu0 0
      %470 = vmatmul.mubr.bf16.gmra.mrb[0].mxu0 %v319
      %v471 = vpop.f32.mrb[0].mxu0
      %v472 = vadd.f32 0.0, %v471
      %v473 = vpop.f32.mrb[0].mxu0
      %v474 = vpop.f32.mrb[0].mxu0
      %v475 = vadd.f32 0.0, %v474
      %v476 = vpop.f32.mrb[0].mxu0
      %477 = vmatprep.mubr.bf16.mxu0 0
      %478 = vmatmul.mubr.bf16.gmra.mrb[0].mxu0 %v320
      %v479 = vpop.f32.mrb[0].mxu0
      %v480 = vadd.f32 0.0, %v479
      %v481 = vpop.f32.mrb[0].mxu0
      %v482 = vpop.f32.mrb[0].mxu0
      %v483 = vadd.f32 0.0, %v482
      %v484 = vpop.f32.mrb[0].mxu0
      %485 = vmatprep.mubr.bf16.mxu0 0
      %486 = vmatmul.mubr.bf16.gmra.mrb[0].mxu0 %v321
      %v487 = vpop.f32.mrb[0].mxu0
      %v488 = vadd.f32 0.0, %v487
      %v489 = vpop.f32.mrb[0].mxu0
      %v490 = vpop.f32.mrb[0].mxu0
      %v491 = vadd.f32 0.0, %v490
      %v492 = vpop.f32.mrb[0].mxu0
      %493 = vmatprep.mubr.bf16.mxu0 0
      %494 = vmatmul.mubr.bf16.gmra.mrb[0].mxu0 %v322
      %v495 = vpop.f32.mrb[0].mxu0
      %v496 = vadd.f32 0.0, %v495
      %v497 = vpop.f32.mrb[0].mxu0
      %v498 = vpop.f32.mrb[0].mxu0
      %v499 = vadd.f32 0.0, %v498
      %v500 = vpop.f32.mrb[0].mxu0
      %501 = vmatprep.mubr.bf16.mxu0 0
      %502 = vmatmul.mubr.bf16.gmra.mrb[0].mxu0 %v323
      %v503 = vpop.f32.mrb[0].mxu0
      %v504 = vadd.f32 0.0, %v503
      %v505 = vpop.f32.mrb[0].mxu0
      %v506 = vpop.f32.mrb[0].mxu0
      %v507 = vadd.f32 0.0, %v506
      %v508 = vpop.f32.mrb[0].mxu0
      %509 = vmatprep.mubr.bf16.mxu0 0
      %510 = vmatmul.mubr.bf16.gmra.mrb[0].mxu0 %v324
      %v511 = vpop.f32.mrb[0].mxu0
      %v512 = vadd.f32 0.0, %v511
      %v513 = vpop.f32.mrb[0].mxu0
      %v514 = vpop.f32.mrb[0].mxu0
      %v515 = vadd.f32 0.0, %v514
      %v516 = vpop.f32.mrb[0].mxu0
      %517 = vdwg.mxu0
      %v534 = vunpack.c.l.b16 %v294
      %v535 = vunpack.c.l.b16 %v295
      %v536 = vunpack.c.l.b16 %v296
      %v537 = vunpack.c.l.b16 %v297
      %v538 = vunpack.c.l.b16 %v298
      %v539 = vunpack.c.l.b16 %v299
      %v540 = vunpack.c.l.b16 %v300
      %v541 = vunpack.c.l.b16 %v301
      %v542 = vunpack.c.l.b16 %v302
      %v543 = vunpack.c.l.b16 %v303
      %v544 = vunpack.c.l.b16 %v304
      %v545 = vunpack.c.l.b16 %v305
      %v546 = vunpack.c.l.b16 %v306
      %v547 = vunpack.c.l.b16 %v307
      %v548 = vunpack.c.l.b16 %v308
      %v549 = vunpack.c.l.b16 %v309
      %v550 = vpack.c.b16 %v535, %v534
      %v551 = vpack.c.b16 %v537, %v536
      %v552 = vpack.c.b16 %v539, %v538
      %v553 = vpack.c.b16 %v541, %v540
      %v554 = vpack.c.b16 %v543, %v542
      %v555 = vpack.c.b16 %v545, %v544
      %v556 = vpack.c.b16 %v547, %v546
      %v557 = vpack.c.b16 %v549, %v548
      %566 = vmatprep.subr.bf16.mxu0 0
      %567 = vmatpush1.bf16.msra.mxu0 %v550
      %568 = vmatprep.subr.bf16.mxu0 0
      %569 = vmatpush1.bf16.msra.mxu0 %v551
      %570 = vmatprep.subr.bf16.mxu0 0
      %571 = vmatpush1.bf16.msra.mxu0 %v552
      %572 = vmatprep.subr.bf16.mxu0 0
      %573 = vmatpush1.bf16.msra.mxu0 %v553
      %574 = vmatprep.subr.bf16.mxu0 0
      %575 = vmatpush1.bf16.msra.mxu0 %v554
      %576 = vmatprep.subr.bf16.mxu0 0
      %577 = vmatpush1.bf16.msra.mxu0 %v555
      %578 = vmatprep.subr.bf16.mxu0 0
      %579 = vmatpush1.bf16.msra.mxu0 %v556
      %580 = vmatprep.subr.bf16.mxu0 0
      %581 = vmatpush1.bf16.msra.mxu0 %v557
      %582 = vmatprep.subr.bf16.mxu0 0
      %583 = vmatpush1.bf16.msra.mxu0 0
      %584 = vmatprep.subr.bf16.mxu0 0
      %585 = vmatpush1.bf16.msra.mxu0 0
      %586 = vmatprep.subr.bf16.mxu0 0
      %587 = vmatpush1.bf16.msra.mxu0 0
      %588 = vmatprep.subr.bf16.mxu0 0
      %589 = vmatpush1.bf16.msra.mxu0 0
      %590 = vmatprep.subr.bf16.mxu0 0
      %591 = vmatpush1.bf16.msra.mxu0 0
      %592 = vmatprep.subr.bf16.mxu0 0
      %593 = vmatpush1.bf16.msra.mxu0 0
      %594 = vmatprep.subr.bf16.mxu0 0
      %595 = vmatpush1.bf16.msra.mxu0 0
      %596 = vmatprep.subr.bf16.mxu0 0
      %597 = vmatpush1.bf16.msra.mxu0 0
      %598 = vmatprep.mubr.bf16.mxu0 0
      %599 = vmatmul.mubr.bf16.gmra.mrb[0].mxu0 %v282
      %v600 = vpop.f32.mrb[0].mxu0
      %v601 = vadd.f32 %v424, %v600
      %v602 = vpop.f32.mrb[0].mxu0
      %v603 = vpop.f32.mrb[0].mxu0
      %v604 = vadd.f32 %v427, %v603
      %v605 = vpop.f32.mrb[0].mxu0
      %606 = vmatprep.mubr.bf16.mxu0 0
      %607 = vmatmul.mubr.bf16.gmra.mrb[0].mxu0 %v283
      %v608 = vpop.f32.mrb[0].mxu0
      %v609 = vadd.f32 %v432, %v608
      %v610 = vpop.f32.mrb[0].mxu0
      %v611 = vpop.f32.mrb[0].mxu0
      %v612 = vadd.f32 %v435, %v611
      %v613 = vpop.f32.mrb[0].mxu0
      %614 = vmatprep.mubr.bf16.mxu0 0
      %615 = vmatmul.mubr.bf16.gmra.mrb[0].mxu0 %v284
      %v616 = vpop.f32.mrb[0].mxu0
      %v617 = vadd.f32 %v440, %v616
      %v618 = vpop.f32.mrb[0].mxu0
      %v619 = vpop.f32.mrb[0].mxu0
      %v620 = vadd.f32 %v443, %v619
      %v621 = vpop.f32.mrb[0].mxu0
      %622 = vmatprep.mubr.bf16.mxu0 0
      %623 = vmatmul.mubr.bf16.gmra.mrb[0].mxu0 %v285
      %v624 = vpop.f32.mrb[0].mxu0
      %v625 = vadd.f32 %v448, %v624
      %v626 = vpop.f32.mrb[0].mxu0
      %v627 = vpop.f32.mrb[0].mxu0
      %v628 = vadd.f32 %v451, %v627
      %v629 = vpop.f32.mrb[0].mxu0
      %630 = vmatprep.mubr.bf16.mxu0 0
      %631 = vmatmul.mubr.bf16.gmra.mrb[0].mxu0 %v286
      %v632 = vpop.f32.mrb[0].mxu0
      %v633 = vadd.f32 %v456, %v632
      %v634 = vpop.f32.mrb[0].mxu0
      %v635 = vpop.f32.mrb[0].mxu0
      %v636 = vadd.f32 %v459, %v635
      %v637 = vpop.f32.mrb[0].mxu0
      %638 = vmatprep.mubr.bf16.mxu0 0
      %639 = vmatmul.mubr.bf16.gmra.mrb[0].mxu0 %v287
      %v640 = vpop.f32.mrb[0].mxu0
      %v641 = vadd.f32 %v464, %v640
      %v642 = vpop.f32.mrb[0].mxu0
      %v643 = vpop.f32.mrb[0].mxu0
      %v644 = vadd.f32 %v467, %v643
      %v645 = vpop.f32.mrb[0].mxu0
      %646 = vmatprep.mubr.bf16.mxu0 0
      %647 = vmatmul.mubr.bf16.gmra.mrb[0].mxu0 %v288
      %v648 = vpop.f32.mrb[0].mxu0
      %v649 = vadd.f32 %v472, %v648
      %v650 = vpop.f32.mrb[0].mxu0
      %v651 = vpop.f32.mrb[0].mxu0
      %v652 = vadd.f32 %v475, %v651
      %v653 = vpop.f32.mrb[0].mxu0
      %654 = vmatprep.mubr.bf16.mxu0 0
      %655 = vmatmul.mubr.bf16.gmra.mrb[0].mxu0 %v289
      %v656 = vpop.f32.mrb[0].mxu0
      %v657 = vadd.f32 %v480, %v656
      %v658 = vpop.f32.mrb[0].mxu0
      %v659 = vpop.f32.mrb[0].mxu0
      %v660 = vadd.f32 %v483, %v659
      %v661 = vpop.f32.mrb[0].mxu0
      %662 = vmatprep.mubr.bf16.mxu0 0
      %663 = vmatmul.mubr.bf16.gmra.mrb[0].mxu0 %v290
      %v664 = vpop.f32.mrb[0].mxu0
      %v665 = vadd.f32 %v488, %v664
      %v666 = vpop.f32.mrb[0].mxu0
      %v667 = vpop.f32.mrb[0].mxu0
      %v668 = vadd.f32 %v491, %v667
      %v669 = vpop.f32.mrb[0].mxu0
      %670 = vmatprep.mubr.bf16.mxu0 0
      %671 = vmatmul.mubr.bf16.gmra.mrb[0].mxu0 %v291
      %v672 = vpop.f32.mrb[0].mxu0
      %v673 = vadd.f32 %v496, %v672
      %v674 = vpop.f32.mrb[0].mxu0
      %v675 = vpop.f32.mrb[0].mxu0
      %v676 = vadd.f32 %v499, %v675
      %v677 = vpop.f32.mrb[0].mxu0
      %678 = vmatprep.mubr.bf16.mxu0 0
      %679 = vmatmul.mubr.bf16.gmra.mrb[0].mxu0 %v292
      %v680 = vpop.f32.mrb[0].mxu0
      %v681 = vadd.f32 %v504, %v680
      %v682 = vpop.f32.mrb[0].mxu0
      %v683 = vpop.f32.mrb[0].mxu0
      %v684 = vadd.f32 %v507, %v683
      %v685 = vpop.f32.mrb[0].mxu0
      %686 = vmatprep.mubr.bf16.mxu0 0
      %687 = vmatmul.mubr.bf16.gmra.mrb[0].mxu0 %v293
      %v688 = vpop.f32.mrb[0].mxu0
      %v689 = vadd.f32 %v512, %v688
      %v690 = vpop.f32.mrb[0].mxu0
      %v691 = vpop.f32.mrb[0].mxu0
      %v692 = vadd.f32 %v515, %v691
      %v693 = vpop.f32.mrb[0].mxu0
      %694 = vdwg.mxu0
      %v695 = vld [vmem:[%s192 + $0x30] sm:$0xff]
      %v696 = vld [vmem:[%s192 + $0x38] sm:$0xff]
      %v697 = vld [vmem:[%s192 + $0x40] sm:$0xff]
      %v698 = vld [vmem:[%s192 + $0x48] sm:$0xff]
      %v699 = vld [vmem:[%s192 + $0x50] sm:$0xff]
      %v700 = vld [vmem:[%s192 + $0x58] sm:$0xff]
      %v701 = vld [vmem:[%s192 + $0x60] sm:$0xff]
      %v702 = vld [vmem:[%s192 + $0x68] sm:$0xff]
      %v703 = vld [vmem:[%s192 + $0x70] sm:$0xff]
      %v704 = vld [vmem:[%s192 + $0x78] sm:$0xff]
      %v705 = vld [vmem:[%s192 + $0x80] sm:$0xff]
      %v706 = vld [vmem:[%s192 + $0x88] sm:$0xff]
      %v707 = vld [vmem:[%s192 + $0x90] sm:$0xff]
      %v708 = vld [vmem:[%s192 + $0x98] sm:$0xff]
      %v709 = vld [vmem:[%s192 + $0xa0] sm:$0xff]
      %v710 = vld [vmem:[%s192 + $0xa8] sm:$0xff]
      %v711 = vld [vmem:[%s192 + $0xb0] sm:$0xff]
      %v712 = vld [vmem:[%s192 + $0xb8] sm:$0xff]
      %v713 = vld [vmem:[%s192 + $0xc0] sm:$0xff]
      %v714 = vld [vmem:[%s192 + $0xc8] sm:$0xff]
      %v715 = vld [vmem:[%s192 + $0xd0] sm:$0xff]
      %v716 = vld [vmem:[%s192 + $0xd8] sm:$0xff]
      %v717 = vld [vmem:[%s192 + $0xe0] sm:$0xff]
      %v718 = vld [vmem:[%s192 + $0xe8] sm:$0xff]
      %v719 = vpack.c.bf16 %v696, %v695
      %v720 = vpack.c.bf16 %v698, %v697
      %v721 = vpack.c.bf16 %v700, %v699
      %v722 = vpack.c.bf16 %v702, %v701
      %v723 = vpack.c.bf16 %v704, %v703
      %v724 = vpack.c.bf16 %v706, %v705
      %v725 = vpack.c.bf16 %v708, %v707
      %v726 = vpack.c.bf16 %v710, %v709
      %v727 = vpack.c.bf16 %v712, %v711
      %v728 = vpack.c.bf16 %v714, %v713
      %v729 = vpack.c.bf16 %v716, %v715
      %v730 = vpack.c.bf16 %v718, %v717
      %v731 = vld [vmem:[%s1 + $0x80] sm:$0xf]
      %v732 = vld [vmem:[%s1 + $0x84] sm:$0xf]
      %v733 = vld [vmem:[%s1 + $0x88] sm:$0xf]
      %v734 = vld [vmem:[%s1 + $0x8c] sm:$0xf]
      %v735 = vld [vmem:[%s1 + $0x90] sm:$0xf]
      %v736 = vld [vmem:[%s1 + $0x94] sm:$0xf]
      %v737 = vld [vmem:[%s1 + $0x98] sm:$0xf]
      %v738 = vld [vmem:[%s1 + $0x9c] sm:$0xf]
      %v739 = vld [vmem:[%s1 + $0xa0] sm:$0xf]
      %v740 = vld [vmem:[%s1 + $0xa4] sm:$0xf]
      %v741 = vld [vmem:[%s1 + $0xa8] sm:$0xf]
      %v742 = vld [vmem:[%s1 + $0xac] sm:$0xf]
      %v743 = vld [vmem:[%s1 + $0xb0] sm:$0xf]
      %v744 = vld [vmem:[%s1 + $0xb4] sm:$0xf]
      %v745 = vld [vmem:[%s1 + $0xb8] sm:$0xf]
      %v746 = vld [vmem:[%s1 + $0xbc] sm:$0xf]
      %v763 = vunpack.c.l.b16 %v731
      %v764 = vunpack.c.l.b16 %v732
      %v765 = vunpack.c.l.b16 %v733
      %v766 = vunpack.c.l.b16 %v734
      %v767 = vunpack.c.l.b16 %v735
      %v768 = vunpack.c.l.b16 %v736
      %v769 = vunpack.c.l.b16 %v737
      %v770 = vunpack.c.l.b16 %v738
      %v771 = vunpack.c.l.b16 %v739
      %v772 = vunpack.c.l.b16 %v740
      %v773 = vunpack.c.l.b16 %v741
      %v774 = vunpack.c.l.b16 %v742
      %v775 = vunpack.c.l.b16 %v743
      %v776 = vunpack.c.l.b16 %v744
      %v777 = vunpack.c.l.b16 %v745
      %v778 = vunpack.c.l.b16 %v746
      %v779 = vpack.c.b16 %v764, %v763
      %v780 = vpack.c.b16 %v766, %v765
      %v781 = vpack.c.b16 %v768, %v767
      %v782 = vpack.c.b16 %v770, %v769
      %v783 = vpack.c.b16 %v772, %v771
      %v784 = vpack.c.b16 %v774, %v773
      %v785 = vpack.c.b16 %v776, %v775
      %v786 = vpack.c.b16 %v778, %v777
      %795 = vmatprep.subr.bf16.mxu0 0
      %796 = vmatpush1.bf16.msra.mxu0 %v779
      %797 = vmatprep.subr.bf16.mxu0 0
      %798 = vmatpush1.bf16.msra.mxu0 %v780
      %799 = vmatprep.subr.bf16.mxu0 0
      %800 = vmatpush1.bf16.msra.mxu0 %v781
      %801 = vmatprep.subr.bf16.mxu0 0
      %802 = vmatpush1.bf16.msra.mxu0 %v782
      %803 = vmatprep.subr.bf16.mxu0 0
      %804 = vmatpush1.bf16.msra.mxu0 %v783
      %805 = vmatprep.subr.bf16.mxu0 0
      %806 = vmatpush1.bf16.msra.mxu0 %v784
      %807 = vmatprep.subr.bf16.mxu0 0
      %808 = vmatpush1.bf16.msra.mxu0 %v785
      %809 = vmatprep.subr.bf16.mxu0 0
      %810 = vmatpush1.bf16.msra.mxu0 %v786
      %811 = vmatprep.subr.bf16.mxu0 0
      %812 = vmatpush1.bf16.msra.mxu0 0
      %813 = vmatprep.subr.bf16.mxu0 0
      %814 = vmatpush1.bf16.msra.mxu0 0
      %815 = vmatprep.subr.bf16.mxu0 0
      %816 = vmatpush1.bf16.msra.mxu0 0
      %817 = vmatprep.subr.bf16.mxu0 0
      %818 = vmatpush1.bf16.msra.mxu0 0
      %819 = vmatprep.subr.bf16.mxu0 0
      %820 = vmatpush1.bf16.msra.mxu0 0
      %821 = vmatprep.subr.bf16.mxu0 0
      %822 = vmatpush1.bf16.msra.mxu0 0
      %823 = vmatprep.subr.bf16.mxu0 0
      %824 = vmatpush1.bf16.msra.mxu0 0
      %825 = vmatprep.subr.bf16.mxu0 0
      %826 = vmatpush1.bf16.msra.mxu0 0
      %827 = vmatprep.mubr.bf16.mxu0 0
      %828 = vmatmul.mubr.bf16.gmra.mrb[0].mxu0 %v719
      %v829 = vpop.f32.mrb[0].mxu0
      %v830 = vadd.f32 0.0, %v829
      %v831 = vpop.f32.mrb[0].mxu0
      %v832 = vpop.f32.mrb[0].mxu0
      %v833 = vadd.f32 0.0, %v832
      %v834 = vpop.f32.mrb[0].mxu0
      %835 = vmatprep.mubr.bf16.mxu0 0
      %836 = vmatmul.mubr.bf16.gmra.mrb[0].mxu0 %v720
      %v837 = vpop.f32.mrb[0].mxu0
      %v838 = vadd.f32 0.0, %v837
      %v839 = vpop.f32.mrb[0].mxu0
      %v840 = vpop.f32.mrb[0].mxu0
      %v841 = vadd.f32 0.0, %v840
      %v842 = vpop.f32.mrb[0].mxu0
      %843 = vmatprep.mubr.bf16.mxu0 0
      %844 = vmatmul.mubr.bf16.gmra.mrb[0].mxu0 %v721
      %v845 = vpop.f32.mrb[0].mxu0
      %v846 = vadd.f32 0.0, %v845
      %v847 = vpop.f32.mrb[0].mxu0
      %v848 = vpop.f32.mrb[0].mxu0
      %v849 = vadd.f32 0.0, %v848
      %v850 = vpop.f32.mrb[0].mxu0
      %851 = vmatprep.mubr.bf16.mxu0 0
      %852 = vmatmul.mubr.bf16.gmra.mrb[0].mxu0 %v722
      %v853 = vpop.f32.mrb[0].mxu0
      %v854 = vadd.f32 0.0, %v853
      %v855 = vpop.f32.mrb[0].mxu0
      %v856 = vpop.f32.mrb[0].mxu0
      %v857 = vadd.f32 0.0, %v856
      %v858 = vpop.f32.mrb[0].mxu0
      %859 = vmatprep.mubr.bf16.mxu0 0
      %860 = vmatmul.mubr.bf16.gmra.mrb[0].mxu0 %v723
      %v861 = vpop.f32.mrb[0].mxu0
      %v862 = vadd.f32 0.0, %v861
      %v863 = vpop.f32.mrb[0].mxu0
      %v864 = vpop.f32.mrb[0].mxu0
      %v865 = vadd.f32 0.0, %v864
      %v866 = vpop.f32.mrb[0].mxu0
      %867 = vmatprep.mubr.bf16.mxu0 0
      %868 = vmatmul.mubr.bf16.gmra.mrb[0].mxu0 %v724
      %v869 = vpop.f32.mrb[0].mxu0
      %v870 = vadd.f32 0.0, %v869
      %v871 = vpop.f32.mrb[0].mxu0
      %v872 = vpop.f32.mrb[0].mxu0
      %v873 = vadd.f32 0.0, %v872
      %v874 = vpop.f32.mrb[0].mxu0
      %875 = vmatprep.mubr.bf16.mxu0 0
      %876 = vmatmul.mubr.bf16.gmra.mrb[0].mxu0 %v725
      %v877 = vpop.f32.mrb[0].mxu0
      %v878 = vadd.f32 0.0, %v877
      %v879 = vpop.f32.mrb[0].mxu0
      %v880 = vpop.f32.mrb[0].mxu0
      %v881 = vadd.f32 0.0, %v880
      %v882 = vpop.f32.mrb[0].mxu0
      %883 = vmatprep.mubr.bf16.mxu0 0
      %884 = vmatmul.mubr.bf16.gmra.mrb[0].mxu0 %v726
      %v885 = vpop.f32.mrb[0].mxu0
      %v886 = vadd.f32 0.0, %v885
      %v887 = vpop.f32.mrb[0].mxu0
      %v888 = vpop.f32.mrb[0].mxu0
      %v889 = vadd.f32 0.0, %v888
      %v890 = vpop.f32.mrb[0].mxu0
      %891 = vmatprep.mubr.bf16.mxu0 0
      %892 = vmatmul.mubr.bf16.gmra.mrb[0].mxu0 %v727
      %v893 = vpop.f32.mrb[0].mxu0
      %v894 = vadd.f32 0.0, %v893
      %v895 = vpop.f32.mrb[0].mxu0
      %v896 = vpop.f32.mrb[0].mxu0
      %v897 = vadd.f32 0.0, %v896
      %v898 = vpop.f32.mrb[0].mxu0
      %899 = vmatprep.mubr.bf16.mxu0 0
      %900 = vmatmul.mubr.bf16.gmra.mrb[0].mxu0 %v728
      %v901 = vpop.f32.mrb[0].mxu0
      %v902 = vadd.f32 0.0, %v901
      %v903 = vpop.f32.mrb[0].mxu0
      %v904 = vpop.f32.mrb[0].mxu0
      %v905 = vadd.f32 0.0, %v904
      %v906 = vpop.f32.mrb[0].mxu0
      %907 = vmatprep.mubr.bf16.mxu0 0
      %908 = vmatmul.mubr.bf16.gmra.mrb[0].mxu0 %v729
      %v909 = vpop.f32.mrb[0].mxu0
      %v910 = vadd.f32 0.0, %v909
      %v911 = vpop.f32.mrb[0].mxu0
      %v912 = vpop.f32.mrb[0].mxu0
      %v913 = vadd.f32 0.0, %v912
      %v914 = vpop.f32.mrb[0].mxu0
      %915 = vmatprep.mubr.bf16.mxu0 0
      %916 = vmatmul.mubr.bf16.gmra.mrb[0].mxu0 %v730
      %v917 = vpop.f32.mrb[0].mxu0
      %v918 = vadd.f32 0.0, %v917
      %v919 = vpop.f32.mrb[0].mxu0
      %v920 = vpop.f32.mrb[0].mxu0
      %v921 = vadd.f32 0.0, %v920
      %v922 = vpop.f32.mrb[0].mxu0
      %923 = vdwg.mxu0
      %v924 = vadd.f32 %v601, %v830
      %v925 = vadd.f32 %v604, %v833
      %v926 = vadd.f32 %v609, %v838
      %v927 = vadd.f32 %v612, %v841
      %v928 = vadd.f32 %v617, %v846
      %v929 = vadd.f32 %v620, %v849
      %v930 = vadd.f32 %v625, %v854
      %v931 = vadd.f32 %v628, %v857
      %v932 = vadd.f32 %v633, %v862
      %v933 = vadd.f32 %v636, %v865
      %v934 = vadd.f32 %v641, %v870
      %v935 = vadd.f32 %v644, %v873
      %v936 = vadd.f32 %v649, %v878
      %v937 = vadd.f32 %v652, %v881
      %v938 = vadd.f32 %v657, %v886
      %v939 = vadd.f32 %v660, %v889
      %v940 = vadd.f32 %v665, %v894
      %v941 = vadd.f32 %v668, %v897
      %v942 = vadd.f32 %v673, %v902
      %v943 = vadd.f32 %v676, %v905
      %v944 = vadd.f32 %v681, %v910
      %v945 = vadd.f32 %v684, %v913
      %v946 = vadd.f32 %v689, %v918
      %v947 = vadd.f32 %v692, %v921
      %v948 = vadd.f32 %v924, %v257
      %v949 = vadd.f32 %v925, %v257
      %v950 = vadd.f32 %v926, %v257
      %v951 = vadd.f32 %v927, %v257
      %v952 = vadd.f32 %v928, %v257
      %v953 = vadd.f32 %v929, %v257
      %v954 = vadd.f32 %v930, %v257
      %v955 = vadd.f32 %v931, %v257
      %v956 = vadd.f32 %v932, %v257
      %v957 = vadd.f32 %v933, %v257
      %v958 = vadd.f32 %v934, %v257
      %v959 = vadd.f32 %v935, %v257
      %v960 = vadd.f32 %v936, %v257
      %v961 = vadd.f32 %v937, %v257
      %v962 = vadd.f32 %v938, %v257
      %v963 = vadd.f32 %v939, %v257
      %v964 = vadd.f32 %v940, %v257
      %v965 = vadd.f32 %v941, %v257
      %v966 = vadd.f32 %v942, %v257
      %v967 = vadd.f32 %v943, %v257
      %v968 = vadd.f32 %v944, %v257
      %v969 = vadd.f32 %v945, %v257
      %v970 = vadd.f32 %v946, %v257
      %v971 = vadd.f32 %v947, %v257
      %v972 = vxor.u32 %v948, 2147483648
      %v973 = vxor.u32 %v949, 2147483648
      %v974 = vxor.u32 %v950, 2147483648
      %v975 = vxor.u32 %v951, 2147483648
      %v976 = vxor.u32 %v952, 2147483648
      %v977 = vxor.u32 %v953, 2147483648
      %v978 = vxor.u32 %v954, 2147483648
      %v979 = vxor.u32 %v955, 2147483648
      %v980 = vxor.u32 %v956, 2147483648
      %v981 = vxor.u32 %v957, 2147483648
      %v982 = vxor.u32 %v958, 2147483648
      %v983 = vxor.u32 %v959, 2147483648
      %v984 = vxor.u32 %v960, 2147483648
      %v985 = vxor.u32 %v961, 2147483648
      %v986 = vxor.u32 %v962, 2147483648
      %v987 = vxor.u32 %v963, 2147483648
      %v988 = vxor.u32 %v964, 2147483648
      %v989 = vxor.u32 %v965, 2147483648
      %v990 = vxor.u32 %v966, 2147483648
      %v991 = vxor.u32 %v967, 2147483648
      %v992 = vxor.u32 %v968, 2147483648
      %v993 = vxor.u32 %v969, 2147483648
      %v994 = vxor.u32 %v970, 2147483648
      %v995 = vxor.u32 %v971, 2147483648
      %v996 = vmul.f32 %v972, 1.442695
      %v997 = vpow.pop %v996
      %v998 = vmul.f32 %v973, 1.442695
      %v999 = vpow.pop %v998
      %v1000 = vmul.f32 %v974, 1.442695
      %v1001 = vpow.pop %v1000
      %v1002 = vmul.f32 %v975, 1.442695
      %v1003 = vpow.pop %v1002
      %v1004 = vmul.f32 %v976, 1.442695
      %v1005 = vpow.pop %v1004
      %v1006 = vmul.f32 %v977, 1.442695
      %v1007 = vpow.pop %v1006
      %v1008 = vmul.f32 %v978, 1.442695
      %v1009 = vpow.pop %v1008
      %v1010 = vmul.f32 %v979, 1.442695
      %v1011 = vpow.pop %v1010
      %v1012 = vmul.f32 %v980, 1.442695
      %v1013 = vpow.pop %v1012
      %v1014 = vmul.f32 %v981, 1.442695
      %v1015 = vpow.pop %v1014
      %v1016 = vmul.f32 %v982, 1.442695
      %v1017 = vpow.pop %v1016
      %v1018 = vmul.f32 %v983, 1.442695
      %v1019 = vpow.pop %v1018
      %v1020 = vmul.f32 %v984, 1.442695
      %v1021 = vpow.pop %v1020
      %v1022 = vmul.f32 %v985, 1.442695
      %v1023 = vpow.pop %v1022
      %v1024 = vmul.f32 %v986, 1.442695
      %v1025 = vpow.pop %v1024
      %v1026 = vmul.f32 %v987, 1.442695
      %v1027 = vpow.pop %v1026
      %v1028 = vmul.f32 %v988, 1.442695
      %v1029 = vpow.pop %v1028
      %v1030 = vmul.f32 %v989, 1.442695
      %v1031 = vpow.pop %v1030
      %v1032 = vmul.f32 %v990, 1.442695
      %v1033 = vpow.pop %v1032
      %v1034 = vmul.f32 %v991, 1.442695
      %v1035 = vpow.pop %v1034
      %v1036 = vmul.f32 %v992, 1.442695
      %v1037 = vpow.pop %v1036
      %v1038 = vmul.f32 %v993, 1.442695
      %v1039 = vpow.pop %v1038
      %v1040 = vmul.f32 %v994, 1.442695
      %v1041 = vpow.pop %v1040
      %v1042 = vmul.f32 %v995, 1.442695
      %v1043 = vpow.pop %v1042
      %v1044 = vadd.f32 %v997, 1.0
      %v1045 = vadd.f32 %v999, 1.0
      %v1046 = vadd.f32 %v1001, 1.0
      %v1047 = vadd.f32 %v1003, 1.0
      %v1048 = vadd.f32 %v1005, 1.0
      %v1049 = vadd.f32 %v1007, 1.0
      %v1050 = vadd.f32 %v1009, 1.0
      %v1051 = vadd.f32 %v1011, 1.0
      %v1052 = vadd.f32 %v1013, 1.0
      %v1053 = vadd.f32 %v1015, 1.0
      %v1054 = vadd.f32 %v1017, 1.0
      %v1055 = vadd.f32 %v1019, 1.0
      %v1056 = vadd.f32 %v1021, 1.0
      %v1057 = vadd.f32 %v1023, 1.0
      %v1058 = vadd.f32 %v1025, 1.0
      %v1059 = vadd.f32 %v1027, 1.0
      %v1060 = vadd.f32 %v1029, 1.0
      %v1061 = vadd.f32 %v1031, 1.0
      %v1062 = vadd.f32 %v1033, 1.0
      %v1063 = vadd.f32 %v1035, 1.0
      %v1064 = vadd.f32 %v1037, 1.0
      %v1065 = vadd.f32 %v1039, 1.0
      %v1066 = vadd.f32 %v1041, 1.0
      %v1067 = vadd.f32 %v1043, 1.0
      %v1068 = vrcp.pop %v1044
      %v1069 = vmul.f32 1.0, %v1068
      %v1070 = vrcp.pop %v1045
      %v1071 = vmul.f32 1.0, %v1070
      %v1072 = vrcp.pop %v1046
      %v1073 = vmul.f32 1.0, %v1072
      %v1074 = vrcp.pop %v1047
      %v1075 = vmul.f32 1.0, %v1074
      %v1076 = vrcp.pop %v1048
      %v1077 = vmul.f32 1.0, %v1076
      %v1078 = vrcp.pop %v1049
      %v1079 = vmul.f32 1.0, %v1078
      %v1080 = vrcp.pop %v1050
      %v1081 = vmul.f32 1.0, %v1080
      %v1082 = vrcp.pop %v1051
      %v1083 = vmul.f32 1.0, %v1082
      %v1084 = vrcp.pop %v1052
      %v1085 = vmul.f32 1.0, %v1084
      %v1086 = vrcp.pop %v1053
      %v1087 = vmul.f32 1.0, %v1086
      %v1088 = vrcp.pop %v1054
      %v1089 = vmul.f32 1.0, %v1088
      %v1090 = vrcp.pop %v1055
      %v1091 = vmul.f32 1.0, %v1090
      %v1092 = vrcp.pop %v1056
      %v1093 = vmul.f32 1.0, %v1092
      %v1094 = vrcp.pop %v1057
      %v1095 = vmul.f32 1.0, %v1094
      %v1096 = vrcp.pop %v1058
      %v1097 = vmul.f32 1.0, %v1096
      %v1098 = vrcp.pop %v1059
      %v1099 = vmul.f32 1.0, %v1098
      %v1100 = vrcp.pop %v1060
      %v1101 = vmul.f32 1.0, %v1100
      %v1102 = vrcp.pop %v1061
      %v1103 = vmul.f32 1.0, %v1102
      %v1104 = vrcp.pop %v1062
      %v1105 = vmul.f32 1.0, %v1104
      %v1106 = vrcp.pop %v1063
      %v1107 = vmul.f32 1.0, %v1106
      %v1108 = vrcp.pop %v1064
      %v1109 = vmul.f32 1.0, %v1108
      %v1110 = vrcp.pop %v1065
      %v1111 = vmul.f32 1.0, %v1110
      %v1112 = vrcp.pop %v1066
      %v1113 = vmul.f32 1.0, %v1112
      %v1114 = vrcp.pop %v1067
      %v1115 = vmul.f32 1.0, %v1114
      %v1116 = vmul.f32 %v948, %v1069
      %v1117 = vmul.f32 %v949, %v1071
      %v1118 = vmul.f32 %v950, %v1073
      %v1119 = vmul.f32 %v951, %v1075
      %v1120 = vmul.f32 %v952, %v1077
      %v1121 = vmul.f32 %v953, %v1079
      %v1122 = vmul.f32 %v954, %v1081
      %v1123 = vmul.f32 %v955, %v1083
      %v1124 = vmul.f32 %v956, %v1085
      %v1125 = vmul.f32 %v957, %v1087
      %v1126 = vmul.f32 %v958, %v1089
      %v1127 = vmul.f32 %v959, %v1091
      %v1128 = vmul.f32 %v960, %v1093
      %v1129 = vmul.f32 %v961, %v1095
      %v1130 = vmul.f32 %v962, %v1097
      %v1131 = vmul.f32 %v963, %v1099
      %v1132 = vmul.f32 %v964, %v1101
      %v1133 = vmul.f32 %v965, %v1103
      %v1134 = vmul.f32 %v966, %v1105
      %v1135 = vmul.f32 %v967, %v1107
      %v1136 = vmul.f32 %v968, %v1109
      %v1137 = vmul.f32 %v969, %v1111
      %v1138 = vmul.f32 %v970, %v1113
      %v1139 = vmul.f32 %v971, %v1115
      %v1140 = vld [vmem:[%s3] sm:$0xf]
      %v1141 = vld [vmem:[%s3 + $0x4] sm:$0xf]
      %v1142 = vld [vmem:[%s3 + $0x8] sm:$0xf]
      %v1143 = vld [vmem:[%s3 + $0xc] sm:$0xf]
      %v1144 = vld [vmem:[%s3 + $0x10] sm:$0xf]
      %v1145 = vld [vmem:[%s3 + $0x14] sm:$0xf]
      %v1146 = vld [vmem:[%s3 + $0x18] sm:$0xf]
      %v1147 = vld [vmem:[%s3 + $0x1c] sm:$0xf]
      %v1148 = vld [vmem:[%s3 + $0x20] sm:$0xf]
      %v1149 = vld [vmem:[%s3 + $0x24] sm:$0xf]
      %v1150 = vld [vmem:[%s3 + $0x28] sm:$0xf]
      %v1151 = vld [vmem:[%s3 + $0x2c] sm:$0xf]
      %v1152 = vld [vmem:[%s3 + $0x30] sm:$0xf]
      %v1153 = vld [vmem:[%s3 + $0x34] sm:$0xf]
      %v1154 = vld [vmem:[%s3 + $0x38] sm:$0xf]
      %v1155 = vld [vmem:[%s3 + $0x3c] sm:$0xf]
      %v1156 = vld [vmem:[%s3 + $0x40] sm:$0xf]
      %v1157 = vld [vmem:[%s3 + $0x44] sm:$0xf]
      %v1158 = vld [vmem:[%s3 + $0x48] sm:$0xf]
      %v1159 = vld [vmem:[%s3 + $0x4c] sm:$0xf]
      %v1160 = vld [vmem:[%s3 + $0x50] sm:$0xf]
      %v1161 = vld [vmem:[%s3 + $0x54] sm:$0xf]
      %v1162 = vld [vmem:[%s3 + $0x58] sm:$0xf]
      %v1163 = vld [vmem:[%s3 + $0x5c] sm:$0xf]
      %v1164 = vunpack.c.l.bf16 %v1140
      %v1165 = vunpack.c.l.bf16 %v1141
      %v1166 = vunpack.c.l.bf16 %v1142
      %v1167 = vunpack.c.l.bf16 %v1143
      %v1168 = vunpack.c.l.bf16 %v1144
      %v1169 = vunpack.c.l.bf16 %v1145
      %v1170 = vunpack.c.l.bf16 %v1146
      %v1171 = vunpack.c.l.bf16 %v1147
      %v1172 = vunpack.c.l.bf16 %v1148
      %v1173 = vunpack.c.l.bf16 %v1149
      %v1174 = vunpack.c.l.bf16 %v1150
      %v1175 = vunpack.c.l.bf16 %v1151
      %v1176 = vunpack.c.l.bf16 %v1152
      %v1177 = vunpack.c.l.bf16 %v1153
      %v1178 = vunpack.c.l.bf16 %v1154
      %v1179 = vunpack.c.l.bf16 %v1155
      %v1180 = vunpack.c.l.bf16 %v1156
      %v1181 = vunpack.c.l.bf16 %v1157
      %v1182 = vunpack.c.l.bf16 %v1158
      %v1183 = vunpack.c.l.bf16 %v1159
      %v1184 = vunpack.c.l.bf16 %v1160
      %v1185 = vunpack.c.l.bf16 %v1161
      %v1186 = vunpack.c.l.bf16 %v1162
      %v1187 = vunpack.c.l.bf16 %v1163
      %v1188 = vmul.f32 %v1116, %v1164
      %v1189 = vmul.f32 %v1117, %v1165
      %v1190 = vmul.f32 %v1118, %v1166
      %v1191 = vmul.f32 %v1119, %v1167
      %v1192 = vmul.f32 %v1120, %v1168
      %v1193 = vmul.f32 %v1121, %v1169
      %v1194 = vmul.f32 %v1122, %v1170
      %v1195 = vmul.f32 %v1123, %v1171
      %v1196 = vmul.f32 %v1124, %v1172
      %v1197 = vmul.f32 %v1125, %v1173
      %v1198 = vmul.f32 %v1126, %v1174
      %v1199 = vmul.f32 %v1127, %v1175
      %v1200 = vmul.f32 %v1128, %v1176
      %v1201 = vmul.f32 %v1129, %v1177
      %v1202 = vmul.f32 %v1130, %v1178
      %v1203 = vmul.f32 %v1131, %v1179
      %v1204 = vmul.f32 %v1132, %v1180
      %v1205 = vmul.f32 %v1133, %v1181
      %v1206 = vmul.f32 %v1134, %v1182
      %v1207 = vmul.f32 %v1135, %v1183
      %v1208 = vmul.f32 %v1136, %v1184
      %v1209 = vmul.f32 %v1137, %v1185
      %v1210 = vmul.f32 %v1138, %v1186
      %v1211 = vmul.f32 %v1139, %v1187
      %1236 = vrot.lane.b32.xlu0 %v1188, 32
      %v1237 = vpop.permute.xlu0 %1236
      %1238 = vrot.lane.b32.xlu0 %v1189, 32
      %v1239 = vpop.permute.xlu0 %1238
      %1240 = vrot.lane.b32.xlu0 %v1190, 32
      %v1241 = vpop.permute.xlu0 %1240
      %1242 = vrot.lane.b32.xlu0 %v1191, 32
      %v1243 = vpop.permute.xlu0 %1242
      %1244 = vrot.lane.b32.xlu0 %v1192, 32
      %v1245 = vpop.permute.xlu0 %1244
      %1246 = vrot.lane.b32.xlu0 %v1193, 32
      %v1247 = vpop.permute.xlu0 %1246
      %1248 = vrot.lane.b32.xlu0 %v1194, 32
      %v1249 = vpop.permute.xlu0 %1248
      %1250 = vrot.lane.b32.xlu0 %v1195, 32
      %v1251 = vpop.permute.xlu0 %1250
      %1252 = vrot.lane.b32.xlu0 %v1196, 32
      %v1253 = vpop.permute.xlu0 %1252
      %1254 = vrot.lane.b32.xlu0 %v1197, 32
      %v1255 = vpop.permute.xlu0 %1254
      %1256 = vrot.lane.b32.xlu0 %v1198, 32
      %v1257 = vpop.permute.xlu0 %1256
      %1258 = vrot.lane.b32.xlu0 %v1199, 32
      %v1259 = vpop.permute.xlu0 %1258
      %1260 = vrot.lane.b32.xlu0 %v1200, 32
      %v1261 = vpop.permute.xlu0 %1260
      %1262 = vrot.lane.b32.xlu0 %v1201, 32
      %v1263 = vpop.permute.xlu0 %1262
      %1264 = vrot.lane.b32.xlu0 %v1202, 32
      %v1265 = vpop.permute.xlu0 %1264
      %1266 = vrot.lane.b32.xlu0 %v1203, 32
      %v1267 = vpop.permute.xlu0 %1266
      %1268 = vrot.lane.b32.xlu0 %v1204, 32
      %v1269 = vpop.permute.xlu0 %1268
      %1270 = vrot.lane.b32.xlu0 %v1205, 32
      %v1271 = vpop.permute.xlu0 %1270
      %1272 = vrot.lane.b32.xlu0 %v1206, 32
      %v1273 = vpop.permute.xlu0 %1272
      %1274 = vrot.lane.b32.xlu0 %v1207, 32
      %v1275 = vpop.permute.xlu0 %1274
      %1276 = vrot.lane.b32.xlu0 %v1208, 32
      %v1277 = vpop.permute.xlu0 %1276
      %1278 = vrot.lane.b32.xlu0 %v1209, 32
      %v1279 = vpop.permute.xlu0 %1278
      %1280 = vrot.lane.b32.xlu0 %v1210, 32
      %v1281 = vpop.permute.xlu0 %1280
      %1282 = vrot.lane.b32.xlu0 %v1211, 32
      %v1283 = vpop.permute.xlu0 %1282
      %vm1308 = vcmask 523520
      %1309 = vst.msk [vmem:[#allocation2 + $0x18] sm:$0xff] %vm1308, %v1237
      %1310 = vst.msk [vmem:[#allocation2 + $0x20] sm:$0xff] %vm1308, %v1239
      %1311 = vst.msk [vmem:[#allocation2 + $0x28] sm:$0xff] %vm1308, %v1241
      %1312 = vst.msk [vmem:[#allocation2 + $0x30] sm:$0xff] %vm1308, %v1243
      %1313 = vst.msk [vmem:[#allocation2 + $0x38] sm:$0xff] %vm1308, %v1245
      %1314 = vst.msk [vmem:[#allocation2 + $0x40] sm:$0xff] %vm1308, %v1247
      %1315 = vst.msk [vmem:[#allocation2 + $0x48] sm:$0xff] %vm1308, %v1249
      %1316 = vst.msk [vmem:[#allocation2 + $0x50] sm:$0xff] %vm1308, %v1251
      %1317 = vst.msk [vmem:[#allocation2 + $0x58] sm:$0xff] %vm1308, %v1253
      %1318 = vst.msk [vmem:[#allocation2 + $0x60] sm:$0xff] %vm1308, %v1255
      %1319 = vst.msk [vmem:[#allocation2 + $0x68] sm:$0xff] %vm1308, %v1257
      %1320 = vst.msk [vmem:[#allocation2 + $0x70] sm:$0xff] %vm1308, %v1259
      %1321 = vst.msk [vmem:[#allocation2 + $0x78] sm:$0xff] %vm1308, %v1261
      %1322 = vst.msk [vmem:[#allocation2 + $0x80] sm:$0xff] %vm1308, %v1263
      %1323 = vst.msk [vmem:[#allocation2 + $0x88] sm:$0xff] %vm1308, %v1265
      %1324 = vst.msk [vmem:[#allocation2 + $0x90] sm:$0xff] %vm1308, %v1267
      %1325 = vst.msk [vmem:[#allocation2 + $0x98] sm:$0xff] %vm1308, %v1269
      %1326 = vst.msk [vmem:[#allocation2 + $0xa0] sm:$0xff] %vm1308, %v1271
      %1327 = vst.msk [vmem:[#allocation2 + $0xa8] sm:$0xff] %vm1308, %v1273
      %1328 = vst.msk [vmem:[#allocation2 + $0xb0] sm:$0xff] %vm1308, %v1275
      %1329 = vst.msk [vmem:[#allocation2 + $0xb8] sm:$0xff] %vm1308, %v1277
      %1330 = vst.msk [vmem:[#allocation2 + $0xc0] sm:$0xff] %vm1308, %v1279
      %1331 = vst.msk [vmem:[#allocation2 + $0xc8] sm:$0xff] %vm1308, %v1281
      %1332 = vst.msk [vmem:[#allocation2 + $0xd0] sm:$0xff] %vm1308, %v1283
      %vm1333 = vcmask 261120
      %1334 = vst.msk [vmem:[#allocation2 + $0x19] sm:$0xff] %vm1333, %v1188
      %1335 = vst.msk [vmem:[#allocation2 + $0x21] sm:$0xff] %vm1333, %v1189
      %1336 = vst.msk [vmem:[#allocation2 + $0x29] sm:$0xff] %vm1333, %v1190
      %1337 = vst.msk [vmem:[#allocation2 + $0x31] sm:$0xff] %vm1333, %v1191
      %1338 = vst.msk [vmem:[#allocation2 + $0x39] sm:$0xff] %vm1333, %v1192
      %1339 = vst.msk [vmem:[#allocation2 + $0x41] sm:$0xff] %vm1333, %v1193
      %1340 = vst.msk [vmem:[#allocation2 + $0x49] sm:$0xff] %vm1333, %v1194
      %1341 = vst.msk [vmem:[#allocation2 + $0x51] sm:$0xff] %vm1333, %v1195
      %1342 = vst.msk [vmem:[#allocation2 + $0x59] sm:$0xff] %vm1333, %v1196
      %1343 = vst.msk [vmem:[#allocation2 + $0x61] sm:$0xff] %vm1333, %v1197
      %1344 = vst.msk [vmem:[#allocation2 + $0x69] sm:$0xff] %vm1333, %v1198
      %1345 = vst.msk [vmem:[#allocation2 + $0x71] sm:$0xff] %vm1333, %v1199
      %1346 = vst.msk [vmem:[#allocation2 + $0x79] sm:$0xff] %vm1333, %v1200
      %1347 = vst.msk [vmem:[#allocation2 + $0x81] sm:$0xff] %vm1333, %v1201
      %1348 = vst.msk [vmem:[#allocation2 + $0x89] sm:$0xff] %vm1333, %v1202
      %1349 = vst.msk [vmem:[#allocation2 + $0x91] sm:$0xff] %vm1333, %v1203
      %1350 = vst.msk [vmem:[#allocation2 + $0x99] sm:$0xff] %vm1333, %v1204
      %1351 = vst.msk [vmem:[#allocation2 + $0xa1] sm:$0xff] %vm1333, %v1205
      %1352 = vst.msk [vmem:[#allocation2 + $0xa9] sm:$0xff] %vm1333, %v1206
      %1353 = vst.msk [vmem:[#allocation2 + $0xb1] sm:$0xff] %vm1333, %v1207
      %1354 = vst.msk [vmem:[#allocation2 + $0xb9] sm:$0xff] %vm1333, %v1208
      %1355 = vst.msk [vmem:[#allocation2 + $0xc1] sm:$0xff] %vm1333, %v1209
      %1356 = vst.msk [vmem:[#allocation2 + $0xc9] sm:$0xff] %vm1333, %v1210
      %1357 = vst.msk [vmem:[#allocation2 + $0xd1] sm:$0xff] %vm1333, %v1211
      %1358 = vrot.lane.b32.xlu0 %v1188, 64
      %v1359 = vpop.permute.xlu0 %1358
      %1360 = vrot.lane.b32.xlu0 %v1189, 64
      %v1361 = vpop.permute.xlu0 %1360
      %1362 = vrot.lane.b32.xlu0 %v1190, 64
      %v1363 = vpop.permute.xlu0 %1362
      %1364 = vrot.lane.b32.xlu0 %v1191, 64
      %v1365 = vpop.permute.xlu0 %1364
      %1366 = vrot.lane.b32.xlu0 %v1192, 64
      %v1367 = vpop.permute.xlu0 %1366
      %1368 = vrot.lane.b32.xlu0 %v1193, 64
      %v1369 = vpop.permute.xlu0 %1368
      %1370 = vrot.lane.b32.xlu0 %v1194, 64
      %v1371 = vpop.permute.xlu0 %1370
      %1372 = vrot.lane.b32.xlu0 %v1195, 64
      %v1373 = vpop.permute.xlu0 %1372
      %1374 = vrot.lane.b32.xlu0 %v1196, 64
      %v1375 = vpop.permute.xlu0 %1374
      %1376 = vrot.lane.b32.xlu0 %v1197, 64
      %v1377 = vpop.permute.xlu0 %1376
      %1378 = vrot.lane.b32.xlu0 %v1198, 64
      %v1379 = vpop.permute.xlu0 %1378
      %1380 = vrot.lane.b32.xlu0 %v1199, 64
      %v1381 = vpop.permute.xlu0 %1380
      %1382 = vrot.lane.b32.xlu0 %v1200, 64
      %v1383 = vpop.permute.xlu0 %1382
      %1384 = vrot.lane.b32.xlu0 %v1201, 64
      %v1385 = vpop.permute.xlu0 %1384
      %1386 = vrot.lane.b32.xlu0 %v1202, 64
      %v1387 = vpop.permute.xlu0 %1386
      %1388 = vrot.lane.b32.xlu0 %v1203, 64
      %v1389 = vpop.permute.xlu0 %1388
      %1390 = vrot.lane.b32.xlu0 %v1204, 64
      %v1391 = vpop.permute.xlu0 %1390
      %1392 = vrot.lane.b32.xlu0 %v1205, 64
      %v1393 = vpop.permute.xlu0 %1392
      %1394 = vrot.lane.b32.xlu0 %v1206, 64
      %v1395 = vpop.permute.xlu0 %1394
      %1396 = vrot.lane.b32.xlu0 %v1207, 64
      %v1397 = vpop.permute.xlu0 %1396
      %1398 = vrot.lane.b32.xlu0 %v1208, 64
      %v1399 = vpop.permute.xlu0 %1398
      %1400 = vrot.lane.b32.xlu0 %v1209, 64
      %v1401 = vpop.permute.xlu0 %1400
      %1402 = vrot.lane.b32.xlu0 %v1210, 64
      %v1403 = vpop.permute.xlu0 %1402
      %1404 = vrot.lane.b32.xlu0 %v1211, 64
      %v1405 = vpop.permute.xlu0 %1404
      %vm1430 = vcmask 785920
      %1431 = vst.msk [vmem:[#allocation2 + $0x17] sm:$0xff] %vm1430, %v1359
      %1432 = vst.msk [vmem:[#allocation2 + $0x1f] sm:$0xff] %vm1430, %v1361
      %1433 = vst.msk [vmem:[#allocation2 + $0x27] sm:$0xff] %vm1430, %v1363
      %1434 = vst.msk [vmem:[#allocation2 + $0x2f] sm:$0xff] %vm1430, %v1365
      %1435 = vst.msk [vmem:[#allocation2 + $0x37] sm:$0xff] %vm1430, %v1367
      %1436 = vst.msk [vmem:[#allocation2 + $0x3f] sm:$0xff] %vm1430, %v1369
      %1437 = vst.msk [vmem:[#allocation2 + $0x47] sm:$0xff] %vm1430, %v1371
      %1438 = vst.msk [vmem:[#allocation2 + $0x4f] sm:$0xff] %vm1430, %v1373
      %1439 = vst.msk [vmem:[#allocation2 + $0x57] sm:$0xff] %vm1430, %v1375
      %1440 = vst.msk [vmem:[#allocation2 + $0x5f] sm:$0xff] %vm1430, %v1377
      %1441 = vst.msk [vmem:[#allocation2 + $0x67] sm:$0xff] %vm1430, %v1379
      %1442 = vst.msk [vmem:[#allocation2 + $0x6f] sm:$0xff] %vm1430, %v1381
      %1443 = vst.msk [vmem:[#allocation2 + $0x77] sm:$0xff] %vm1430, %v1383
      %1444 = vst.msk [vmem:[#allocation2 + $0x7f] sm:$0xff] %vm1430, %v1385
      %1445 = vst.msk [vmem:[#allocation2 + $0x87] sm:$0xff] %vm1430, %v1387
      %1446 = vst.msk [vmem:[#allocation2 + $0x8f] sm:$0xff] %vm1430, %v1389
      %1447 = vst.msk [vmem:[#allocation2 + $0x97] sm:$0xff] %vm1430, %v1391
      %1448 = vst.msk [vmem:[#allocation2 + $0x9f] sm:$0xff] %vm1430, %v1393
      %1449 = vst.msk [vmem:[#allocation2 + $0xa7] sm:$0xff] %vm1430, %v1395
      %1450 = vst.msk [vmem:[#allocation2 + $0xaf] sm:$0xff] %vm1430, %v1397
      %1451 = vst.msk [vmem:[#allocation2 + $0xb7] sm:$0xff] %vm1430, %v1399
      %1452 = vst.msk [vmem:[#allocation2 + $0xbf] sm:$0xff] %vm1430, %v1401
      %1453 = vst.msk [vmem:[#allocation2 + $0xc7] sm:$0xff] %vm1430, %v1403
      %1454 = vst.msk [vmem:[#allocation2 + $0xcf] sm:$0xff] %vm1430, %v1405
      %v1455 = vld [vmem:[%s192 + $0xc0] sm:$0xff]
      %v1456 = vld [vmem:[%s192 + $0xc8] sm:$0xff]
      %v1457 = vld [vmem:[%s192 + $0xd0] sm:$0xff]
      %v1458 = vld [vmem:[%s192 + $0xd8] sm:$0xff]
      %v1459 = vld [vmem:[%s192 + $0xe0] sm:$0xff]
      %v1460 = vld [vmem:[%s192 + $0xe8] sm:$0xff]
      %v1461 = vld [vmem:[%s192 + $0xf0] sm:$0xff]
      %v1462 = vld [vmem:[%s192 + $0xf8] sm:$0xff]
      %v1463 = vld [vmem:[%s192 + $0x100] sm:$0xff]
      %v1464 = vld [vmem:[%s192 + $0x108] sm:$0xff]
      %v1465 = vld [vmem:[%s192 + $0x110] sm:$0xff]
      %v1466 = vld [vmem:[%s192 + $0x118] sm:$0xff]
      %v1467 = vld [vmem:[%s192 + $0x120] sm:$0xff]
      %v1468 = vld [vmem:[%s192 + $0x128] sm:$0xff]
      %v1469 = vld [vmem:[%s192 + $0x130] sm:$0xff]
      %v1470 = vld [vmem:[%s192 + $0x138] sm:$0xff]
      %v1471 = vld [vmem:[%s192 + $0x140] sm:$0xff]
      %v1472 = vld [vmem:[%s192 + $0x148] sm:$0xff]
      %v1473 = vld [vmem:[%s192 + $0x150] sm:$0xff]
      %v1474 = vld [vmem:[%s192 + $0x158] sm:$0xff]
      %v1475 = vld [vmem:[%s192 + $0x160] sm:$0xff]
      %v1476 = vld [vmem:[%s192 + $0x168] sm:$0xff]
      %v1477 = vld [vmem:[%s192 + $0x170] sm:$0xff]
      %v1478 = vld [vmem:[%s192 + $0x178] sm:$0xff]
      %v1479 = vpack.c.bf16 %v1456, %v1455
      %v1480 = vpack.c.bf16 %v1458, %v1457
      %v1481 = vpack.c.bf16 %v1460, %v1459
      %v1482 = vpack.c.bf16 %v1462, %v1461
      %v1483 = vpack.c.bf16 %v1464, %v1463
      %v1484 = vpack.c.bf16 %v1466, %v1465
      %v1485 = vpack.c.bf16 %v1468, %v1467
      %v1486 = vpack.c.bf16 %v1470, %v1469
      %v1487 = vpack.c.bf16 %v1472, %v1471
      %v1488 = vpack.c.bf16 %v1474, %v1473
      %v1489 = vpack.c.bf16 %v1476, %v1475
      %v1490 = vpack.c.bf16 %v1478, %v1477
      %v1491 = vld [vmem:[%s1] sm:$0xf]
      %v1492 = vld [vmem:[%s1 + $0x4] sm:$0xf]
      %v1493 = vld [vmem:[%s1 + $0x8] sm:$0xf]
      %v1494 = vld [vmem:[%s1 + $0xc] sm:$0xf]
      %v1495 = vld [vmem:[%s1 + $0x10] sm:$0xf]
      %v1496 = vld [vmem:[%s1 + $0x14] sm:$0xf]
      %v1497 = vld [vmem:[%s1 + $0x18] sm:$0xf]
      %v1498 = vld [vmem:[%s1 + $0x1c] sm:$0xf]
      %v1499 = vld [vmem:[%s1 + $0x20] sm:$0xf]
      %v1500 = vld [vmem:[%s1 + $0x24] sm:$0xf]
      %v1501 = vld [vmem:[%s1 + $0x28] sm:$0xf]
      %v1502 = vld [vmem:[%s1 + $0x2c] sm:$0xf]
      %v1503 = vld [vmem:[%s1 + $0x30] sm:$0xf]
      %v1504 = vld [vmem:[%s1 + $0x34] sm:$0xf]
      %v1505 = vld [vmem:[%s1 + $0x38] sm:$0xf]
      %v1506 = vld [vmem:[%s1 + $0x3c] sm:$0xf]
      %v1507 = vld [vmem:[%s192 + $0x180] sm:$0xff]
      %v1508 = vld [vmem:[%s192 + $0x188] sm:$0xff]
      %v1509 = vld [vmem:[%s192 + $0x190] sm:$0xff]
      %v1510 = vpack.c.bf16 %v1459, %v1458
      %v1511 = vpack.c.bf16 %v1461, %v1460
      %v1512 = vpack.c.bf16 %v1463, %v1462
      %v1513 = vpack.c.bf16 %v1465, %v1464
      %v1514 = vpack.c.bf16 %v1467, %v1466
      %v1515 = vpack.c.bf16 %v1469, %v1468
      %v1516 = vpack.c.bf16 %v1471, %v1470
      %v1517 = vpack.c.bf16 %v1473, %v1472
      %v1518 = vpack.c.bf16 %v1475, %v1474
      %v1519 = vpack.c.bf16 %v1477, %v1476
      %v1520 = vpack.c.bf16 %v1507, %v1478
      %v1521 = vpack.c.bf16 %v1509, %v1508
      %v1522 = vld [vmem:[%s1 + $0x40] sm:$0xf]
      %v1523 = vld [vmem:[%s1 + $0x44] sm:$0xf]
      %v1524 = vld [vmem:[%s1 + $0x48] sm:$0xf]
      %v1525 = vld [vmem:[%s1 + $0x4c] sm:$0xf]
      %v1526 = vld [vmem:[%s1 + $0x50] sm:$0xf]
      %v1527 = vld [vmem:[%s1 + $0x54] sm:$0xf]
      %v1528 = vld [vmem:[%s1 + $0x58] sm:$0xf]
      %v1529 = vld [vmem:[%s1 + $0x5c] sm:$0xf]
      %v1530 = vld [vmem:[%s1 + $0x60] sm:$0xf]
      %v1531 = vld [vmem:[%s1 + $0x64] sm:$0xf]
      %v1532 = vld [vmem:[%s1 + $0x68] sm:$0xf]
      %v1533 = vld [vmem:[%s1 + $0x6c] sm:$0xf]
      %v1534 = vld [vmem:[%s1 + $0x70] sm:$0xf]
      %v1535 = vld [vmem:[%s1 + $0x74] sm:$0xf]
      %v1536 = vld [vmem:[%s1 + $0x78] sm:$0xf]
      %v1537 = vld [vmem:[%s1 + $0x7c] sm:$0xf]
      %v1554 = vunpack.c.l.b16 %v1522
      %v1555 = vunpack.c.l.b16 %v1523
      %v1556 = vunpack.c.l.b16 %v1524
      %v1557 = vunpack.c.l.b16 %v1525
      %v1558 = vunpack.c.l.b16 %v1526
      %v1559 = vunpack.c.l.b16 %v1527
      %v1560 = vunpack.c.l.b16 %v1528
      %v1561 = vunpack.c.l.b16 %v1529
      %v1562 = vunpack.c.l.b16 %v1530
      %v1563 = vunpack.c.l.b16 %v1531
      %v1564 = vunpack.c.l.b16 %v1532
      %v1565 = vunpack.c.l.b16 %v1533
      %v1566 = vunpack.c.l.b16 %v1534
      %v1567 = vunpack.c.l.b16 %v1535
      %v1568 = vunpack.c.l.b16 %v1536
      %v1569 = vunpack.c.l.b16 %v1537
      %v1570 = vpack.c.b16 %v1555, %v1554
      %v1571 = vpack.c.b16 %v1557, %v1556
      %v1572 = vpack.c.b16 %v1559, %v1558
      %v1573 = vpack.c.b16 %v1561, %v1560
      %v1574 = vpack.c.b16 %v1563, %v1562
      %v1575 = vpack.c.b16 %v1565, %v1564
      %v1576 = vpack.c.b16 %v1567, %v1566
      %v1577 = vpack.c.b16 %v1569, %v1568
      %1586 = vmatprep.subr.bf16.mxu0 0
      %1587 = vmatpush1.bf16.msra.mxu0 %v1570
      %1588 = vmatprep.subr.bf16.mxu0 0
      %1589 = vmatpush1.bf16.msra.mxu0 %v1571
      %1590 = vmatprep.subr.bf16.mxu0 0
      %1591 = vmatpush1.bf16.msra.mxu0 %v1572
      %1592 = vmatprep.subr.bf16.mxu0 0
      %1593 = vmatpush1.bf16.msra.mxu0 %v1573
      %1594 = vmatprep.subr.bf16.mxu0 0
      %1595 = vmatpush1.bf16.msra.mxu0 %v1574
      %1596 = vmatprep.subr.bf16.mxu0 0
      %1597 = vmatpush1.bf16.msra.mxu0 %v1575
      %1598 = vmatprep.subr.bf16.mxu0 0
      %1599 = vmatpush1.bf16.msra.mxu0 %v1576
      %1600 = vmatprep.subr.bf16.mxu0 0
      %1601 = vmatpush1.bf16.msra.mxu0 %v1577
      %1602 = vmatprep.subr.bf16.mxu0 0
      %1603 = vmatpush1.bf16.msra.mxu0 0
      %1604 = vmatprep.subr.bf16.mxu0 0
      %1605 = vmatpush1.bf16.msra.mxu0 0
      %1606 = vmatprep.subr.bf16.mxu0 0
      %1607 = vmatpush1.bf16.msra.mxu0 0
      %1608 = vmatprep.subr.bf16.mxu0 0
      %1609 = vmatpush1.bf16.msra.mxu0 0
      %1610 = vmatprep.subr.bf16.mxu0 0
      %1611 = vmatpush1.bf16.msra.mxu0 0
      %1612 = vmatprep.subr.bf16.mxu0 0
      %1613 = vmatpush1.bf16.msra.mxu0 0
      %1614 = vmatprep.subr.bf16.mxu0 0
      %1615 = vmatpush1.bf16.msra.mxu0 0
      %1616 = vmatprep.subr.bf16.mxu0 0
      %1617 = vmatpush1.bf16.msra.mxu0 0
      %1618 = vmatprep.mubr.bf16.mxu0 0
      %1619 = vmatmul.mubr.bf16.gmra.mrb[0].mxu0 %v1510
      %v1620 = vpop.f32.mrb[0].mxu0
      %v1621 = vadd.f32 0.0, %v1620
      %v1622 = vpop.f32.mrb[0].mxu0
      %v1623 = vpop.f32.mrb[0].mxu0
      %v1624 = vadd.f32 0.0, %v1623
      %v1625 = vpop.f32.mrb[0].mxu0
      %1626 = vmatprep.mubr.bf16.mxu0 0
      %1627 = vmatmul.mubr.bf16.gmra.mrb[0].mxu0 %v1511
      %v1628 = vpop.f32.mrb[0].mxu0
      %v1629 = vadd.f32 0.0, %v1628
      %v1630 = vpop.f32.mrb[0].mxu0
      %v1631 = vpop.f32.mrb[0].mxu0
      %v1632 = vadd.f32 0.0, %v1631
      %v1633 = vpop.f32.mrb[0].mxu0
      %1634 = vmatprep.mubr.bf16.mxu0 0
      %1635 = vmatmul.mubr.bf16.gmra.mrb[0].mxu0 %v1512
      %v1636 = vpop.f32.mrb[0].mxu0
      %v1637 = vadd.f32 0.0, %v1636
      %v1638 = vpop.f32.mrb[0].mxu0
      %v1639 = vpop.f32.mrb[0].mxu0
      %v1640 = vadd.f32 0.0, %v1639
      %v1641 = vpop.f32.mrb[0].mxu0
      %1642 = vmatprep.mubr.bf16.mxu0 0
      %1643 = vmatmul.mubr.bf16.gmra.mrb[0].mxu0 %v1513
      %v1644 = vpop.f32.mrb[0].mxu0
      %v1645 = vadd.f32 0.0, %v1644
      %v1646 = vpop.f32.mrb[0].mxu0
      %v1647 = vpop.f32.mrb[0].mxu0
      %v1648 = vadd.f32 0.0, %v1647
      %v1649 = vpop.f32.mrb[0].mxu0
      %1650 = vmatprep.mubr.bf16.mxu0 0
      %1651 = vmatmul.mubr.bf16.gmra.mrb[0].mxu0 %v1514
      %v1652 = vpop.f32.mrb[0].mxu0
      %v1653 = vadd.f32 0.0, %v1652
      %v1654 = vpop.f32.mrb[0].mxu0
      %v1655 = vpop.f32.mrb[0].mxu0
      %v1656 = vadd.f32 0.0, %v1655
      %v1657 = vpop.f32.mrb[0].mxu0
      %1658 = vmatprep.mubr.bf16.mxu0 0
      %1659 = vmatmul.mubr.bf16.gmra.mrb[0].mxu0 %v1515
      %v1660 = vpop.f32.mrb[0].mxu0
      %v1661 = vadd.f32 0.0, %v1660
      %v1662 = vpop.f32.mrb[0].mxu0
      %v1663 = vpop.f32.mrb[0].mxu0
      %v1664 = vadd.f32 0.0, %v1663
      %v1665 = vpop.f32.mrb[0].mxu0
      %1666 = vmatprep.mubr.bf16.mxu0 0
      %1667 = vmatmul.mubr.bf16.gmra.mrb[0].mxu0 %v1516
      %v1668 = vpop.f32.mrb[0].mxu0
      %v1669 = vadd.f32 0.0, %v1668
      %v1670 = vpop.f32.mrb[0].mxu0
      %v1671 = vpop.f32.mrb[0].mxu0
      %v1672 = vadd.f32 0.0, %v1671
      %v1673 = vpop.f32.mrb[0].mxu0
      %1674 = vmatprep.mubr.bf16.mxu0 0
      %1675 = vmatmul.mubr.bf16.gmra.mrb[0].mxu0 %v1517
      %v1676 = vpop.f32.mrb[0].mxu0
      %v1677 = vadd.f32 0.0, %v1676
      %v1678 = vpop.f32.mrb[0].mxu0
      %v1679 = vpop.f32.mrb[0].mxu0
      %v1680 = vadd.f32 0.0, %v1679
      %v1681 = vpop.f32.mrb[0].mxu0
      %1682 = vmatprep.mubr.bf16.mxu0 0
      %1683 = vmatmul.mubr.bf16.gmra.mrb[0].mxu0 %v1518
      %v1684 = vpop.f32.mrb[0].mxu0
      %v1685 = vadd.f32 0.0, %v1684
      %v1686 = vpop.f32.mrb[0].mxu0
      %v1687 = vpop.f32.mrb[0].mxu0
      %v1688 = vadd.f32 0.0, %v1687
      %v1689 = vpop.f32.mrb[0].mxu0
      %1690 = vmatprep.mubr.bf16.mxu0 0
      %1691 = vmatmul.mubr.bf16.gmra.mrb[0].mxu0 %v1519
      %v1692 = vpop.f32.mrb[0].mxu0
      %v1693 = vadd.f32 0.0, %v1692
      %v1694 = vpop.f32.mrb[0].mxu0
      %v1695 = vpop.f32.mrb[0].mxu0
      %v1696 = vadd.f32 0.0, %v1695
      %v1697 = vpop.f32.mrb[0].mxu0
      %1698 = vmatprep.mubr.bf16.mxu0 0
      %1699 = vmatmul.mubr.bf16.gmra.mrb[0].mxu0 %v1520
      %v1700 = vpop.f32.mrb[0].mxu0
      %v1701 = vadd.f32 0.0, %v1700
      %v1702 = vpop.f32.mrb[0].mxu0
      %v1703 = vpop.f32.mrb[0].mxu0
      %v1704 = vadd.f32 0.0, %v1703
      %v1705 = vpop.f32.mrb[0].mxu0
      %1706 = vmatprep.mubr.bf16.mxu0 0
      %1707 = vmatmul.mubr.bf16.gmra.mrb[0].mxu0 %v1521
      %v1708 = vpop.f32.mrb[0].mxu0
      %v1709 = vadd.f32 0.0, %v1708
      %v1710 = vpop.f32.mrb[0].mxu0
      %v1711 = vpop.f32.mrb[0].mxu0
      %v1712 = vadd.f32 0.0, %v1711
      %v1713 = vpop.f32.mrb[0].mxu0
      %1714 = vdwg.mxu0
      %v1731 = vunpack.c.l.b16 %v1491
      %v1732 = vunpack.c.l.b16 %v1492
      %v1733 = vunpack.c.l.b16 %v1493
      %v1734 = vunpack.c.l.b16 %v1494
      %v1735 = vunpack.c.l.b16 %v1495
      %v1736 = vunpack.c.l.b16 %v1496
      %v1737 = vunpack.c.l.b16 %v1497
      %v1738 = vunpack.c.l.b16 %v1498
      %v1739 = vunpack.c.l.b16 %v1499
      %v1740 = vunpack.c.l.b16 %v1500
      %v1741 = vunpack.c.l.b16 %v1501
      %v1742 = vunpack.c.l.b16 %v1502
      %v1743 = vunpack.c.l.b16 %v1503
      %v1744 = vunpack.c.l.b16 %v1504
      %v1745 = vunpack.c.l.b16 %v1505
      %v1746 = vunpack.c.l.b16 %v1506
      %v1747 = vpack.c.b16 %v1732, %v1731
      %v1748 = vpack.c.b16 %v1734, %v1733
      %v1749 = vpack.c.b16 %v1736, %v1735
      %v1750 = vpack.c.b16 %v1738, %v1737
      %v1751 = vpack.c.b16 %v1740, %v1739
      %v1752 = vpack.c.b16 %v1742, %v1741
      %v1753 = vpack.c.b16 %v1744, %v1743
      %v1754 = vpack.c.b16 %v1746, %v1745
      %1763 = vmatprep.subr.bf16.mxu0 0
      %1764 = vmatpush1.bf16.msra.mxu0 %v1747
      %1765 = vmatprep.subr.bf16.mxu0 0
      %1766 = vmatpush1.bf16.msra.mxu0 %v1748
      %1767 = vmatprep.subr.bf16.mxu0 0
      %1768 = vmatpush1.bf16.msra.mxu0 %v1749
      %1769 = vmatprep.subr.bf16.mxu0 0
      %1770 = vmatpush1.bf16.msra.mxu0 %v1750
      %1771 = vmatprep.subr.bf16.mxu0 0
      %1772 = vmatpush1.bf16.msra.mxu0 %v1751
      %1773 = vmatprep.subr.bf16.mxu0 0
      %1774 = vmatpush1.bf16.msra.mxu0 %v1752
      %1775 = vmatprep.subr.bf16.mxu0 0
      %1776 = vmatpush1.bf16.msra.mxu0 %v1753
      %1777 = vmatprep.subr.bf16.mxu0 0
      %1778 = vmatpush1.bf16.msra.mxu0 %v1754
      %1779 = vmatprep.subr.bf16.mxu0 0
      %1780 = vmatpush1.bf16.msra.mxu0 0
      %1781 = vmatprep.subr.bf16.mxu0 0
      %1782 = vmatpush1.bf16.msra.mxu0 0
      %1783 = vmatprep.subr.bf16.mxu0 0
      %1784 = vmatpush1.bf16.msra.mxu0 0
      %1785 = vmatprep.subr.bf16.mxu0 0
      %1786 = vmatpush1.bf16.msra.mxu0 0
      %1787 = vmatprep.subr.bf16.mxu0 0
      %1788 = vmatpush1.bf16.msra.mxu0 0
      %1789 = vmatprep.subr.bf16.mxu0 0
      %1790 = vmatpush1.bf16.msra.mxu0 0
      %1791 = vmatprep.subr.bf16.mxu0 0
      %1792 = vmatpush1.bf16.msra.mxu0 0
      %1793 = vmatprep.subr.bf16.mxu0 0
      %1794 = vmatpush1.bf16.msra.mxu0 0
      %1795 = vmatprep.mubr.bf16.mxu0 0
      %1796 = vmatmul.mubr.bf16.gmra.mrb[0].mxu0 %v1479
      %v1797 = vpop.f32.mrb[0].mxu0
      %v1798 = vadd.f32 %v1621, %v1797
      %v1799 = vpop.f32.mrb[0].mxu0
      %v1800 = vpop.f32.mrb[0].mxu0
      %v1801 = vadd.f32 %v1624, %v1800
      %v1802 = vpop.f32.mrb[0].mxu0
      %1803 = vmatprep.mubr.bf16.mxu0 0
      %1804 = vmatmul.mubr.bf16.gmra.mrb[0].mxu0 %v1480
      %v1805 = vpop.f32.mrb[0].mxu0
      %v1806 = vadd.f32 %v1629, %v1805
      %v1807 = vpop.f32.mrb[0].mxu0
      %v1808 = vpop.f32.mrb[0].mxu0
      %v1809 = vadd.f32 %v1632, %v1808
      %v1810 = vpop.f32.mrb[0].mxu0
      %1811 = vmatprep.mubr.bf16.mxu0 0
      %1812 = vmatmul.mubr.bf16.gmra.mrb[0].mxu0 %v1481
      %v1813 = vpop.f32.mrb[0].mxu0
      %v1814 = vadd.f32 %v1637, %v1813
      %v1815 = vpop.f32.mrb[0].mxu0
      %v1816 = vpop.f32.mrb[0].mxu0
      %v1817 = vadd.f32 %v1640, %v1816
      %v1818 = vpop.f32.mrb[0].mxu0
      %1819 = vmatprep.mubr.bf16.mxu0 0
      %1820 = vmatmul.mubr.bf16.gmra.mrb[0].mxu0 %v1482
      %v1821 = vpop.f32.mrb[0].mxu0
      %v1822 = vadd.f32 %v1645, %v1821
      %v1823 = vpop.f32.mrb[0].mxu0
      %v1824 = vpop.f32.mrb[0].mxu0
      %v1825 = vadd.f32 %v1648, %v1824
      %v1826 = vpop.f32.mrb[0].mxu0
      %1827 = vmatprep.mubr.bf16.mxu0 0
      %1828 = vmatmul.mubr.bf16.gmra.mrb[0].mxu0 %v1483
      %v1829 = vpop.f32.mrb[0].mxu0
      %v1830 = vadd.f32 %v1653, %v1829
      %v1831 = vpop.f32.mrb[0].mxu0
      %v1832 = vpop.f32.mrb[0].mxu0
      %v1833 = vadd.f32 %v1656, %v1832
      %v1834 = vpop.f32.mrb[0].mxu0
      %1835 = vmatprep.mubr.bf16.mxu0 0
      %1836 = vmatmul.mubr.bf16.gmra.mrb[0].mxu0 %v1484
      %v1837 = vpop.f32.mrb[0].mxu0
      %v1838 = vadd.f32 %v1661, %v1837
      %v1839 = vpop.f32.mrb[0].mxu0
      %v1840 = vpop.f32.mrb[0].mxu0
      %v1841 = vadd.f32 %v1664, %v1840
      %v1842 = vpop.f32.mrb[0].mxu0
      %1843 = vmatprep.mubr.bf16.mxu0 0
      %1844 = vmatmul.mubr.bf16.gmra.mrb[0].mxu0 %v1485
      %v1845 = vpop.f32.mrb[0].mxu0
      %v1846 = vadd.f32 %v1669, %v1845
      %v1847 = vpop.f32.mrb[0].mxu0
      %v1848 = vpop.f32.mrb[0].mxu0
      %v1849 = vadd.f32 %v1672, %v1848
      %v1850 = vpop.f32.mrb[0].mxu0
      %1851 = vmatprep.mubr.bf16.mxu0 0
      %1852 = vmatmul.mubr.bf16.gmra.mrb[0].mxu0 %v1486
      %v1853 = vpop.f32.mrb[0].mxu0
      %v1854 = vadd.f32 %v1677, %v1853
      %v1855 = vpop.f32.mrb[0].mxu0
      %v1856 = vpop.f32.mrb[0].mxu0
      %v1857 = vadd.f32 %v1680, %v1856
      %v1858 = vpop.f32.mrb[0].mxu0
      %1859 = vmatprep.mubr.bf16.mxu0 0
      %1860 = vmatmul.mubr.bf16.gmra.mrb[0].mxu0 %v1487
      %v1861 = vpop.f32.mrb[0].mxu0
      %v1862 = vadd.f32 %v1685, %v1861
      %v1863 = vpop.f32.mrb[0].mxu0
      %v1864 = vpop.f32.mrb[0].mxu0
      %v1865 = vadd.f32 %v1688, %v1864
      %v1866 = vpop.f32.mrb[0].mxu0
      %1867 = vmatprep.mubr.bf16.mxu0 0
      %1868 = vmatmul.mubr.bf16.gmra.mrb[0].mxu0 %v1488
      %v1869 = vpop.f32.mrb[0].mxu0
      %v1870 = vadd.f32 %v1693, %v1869
      %v1871 = vpop.f32.mrb[0].mxu0
      %v1872 = vpop.f32.mrb[0].mxu0
      %v1873 = vadd.f32 %v1696, %v1872
      %v1874 = vpop.f32.mrb[0].mxu0
      %1875 = vmatprep.mubr.bf16.mxu0 0
      %1876 = vmatmul.mubr.bf16.gmra.mrb[0].mxu0 %v1489
      %v1877 = vpop.f32.mrb[0].mxu0
      %v1878 = vadd.f32 %v1701, %v1877
      %v1879 = vpop.f32.mrb[0].mxu0
      %v1880 = vpop.f32.mrb[0].mxu0
      %v1881 = vadd.f32 %v1704, %v1880
      %v1882 = vpop.f32.mrb[0].mxu0
      %1883 = vmatprep.mubr.bf16.mxu0 0
      %1884 = vmatmul.mubr.bf16.gmra.mrb[0].mxu0 %v1490
      %v1885 = vpop.f32.mrb[0].mxu0
      %v1886 = vadd.f32 %v1709, %v1885
      %v1887 = vpop.f32.mrb[0].mxu0
      %v1888 = vpop.f32.mrb[0].mxu0
      %v1889 = vadd.f32 %v1712, %v1888
      %v1890 = vpop.f32.mrb[0].mxu0
      %1891 = vdwg.mxu0
      %v1892 = vld [vmem:[%s192 + $0xf0] sm:$0xff]
      %v1893 = vld [vmem:[%s192 + $0xf8] sm:$0xff]
      %v1894 = vld [vmem:[%s192 + $0x100] sm:$0xff]
      %v1895 = vld [vmem:[%s192 + $0x108] sm:$0xff]
      %v1896 = vld [vmem:[%s192 + $0x110] sm:$0xff]
      %v1897 = vld [vmem:[%s192 + $0x118] sm:$0xff]
      %v1898 = vld [vmem:[%s192 + $0x120] sm:$0xff]
      %v1899 = vld [vmem:[%s192 + $0x128] sm:$0xff]
      %v1900 = vld [vmem:[%s192 + $0x130] sm:$0xff]
      %v1901 = vld [vmem:[%s192 + $0x138] sm:$0xff]
      %v1902 = vld [vmem:[%s192 + $0x140] sm:$0xff]
      %v1903 = vld [vmem:[%s192 + $0x148] sm:$0xff]
      %v1904 = vld [vmem:[%s192 + $0x150] sm:$0xff]
      %v1905 = vld [vmem:[%s192 + $0x158] sm:$0xff]
      %v1906 = vld [vmem:[%s192 + $0x160] sm:$0xff]
      %v1907 = vld [vmem:[%s192 + $0x168] sm:$0xff]
      %v1908 = vld [vmem:[%s192 + $0x170] sm:$0xff]
      %v1909 = vld [vmem:[%s192 + $0x178] sm:$0xff]
      %v1910 = vld [vmem:[%s192 + $0x180] sm:$0xff]
      %v1911 = vld [vmem:[%s192 + $0x188] sm:$0xff]
      %v1912 = vld [vmem:[%s192 + $0x190] sm:$0xff]
      %v1913 = vld [vmem:[%s192 + $0x198] sm:$0xff]
      %v1914 = vld [vmem:[%s192 + $0x1a0] sm:$0xff]
      %v1915 = vld [vmem:[%s192 + $0x1a8] sm:$0xff]
      %v1916 = vpack.c.bf16 %v1893, %v1892
      %v1917 = vpack.c.bf16 %v1895, %v1894
      %v1918 = vpack.c.bf16 %v1897, %v1896
      %v1919 = vpack.c.bf16 %v1899, %v1898
      %v1920 = vpack.c.bf16 %v1901, %v1900
      %v1921 = vpack.c.bf16 %v1903, %v1902
      %v1922 = vpack.c.bf16 %v1905, %v1904
      %v1923 = vpack.c.bf16 %v1907, %v1906
      %v1924 = vpack.c.bf16 %v1909, %v1908
      %v1925 = vpack.c.bf16 %v1911, %v1910
      %v1926 = vpack.c.bf16 %v1913, %v1912
      %v1927 = vpack.c.bf16 %v1915, %v1914
      %v1928 = vld [vmem:[%s1 + $0x80] sm:$0xf]
      %v1929 = vld [vmem:[%s1 + $0x84] sm:$0xf]
      %v1930 = vld [vmem:[%s1 + $0x88] sm:$0xf]
      %v1931 = vld [vmem:[%s1 + $0x8c] sm:$0xf]
      %v1932 = vld [vmem:[%s1 + $0x90] sm:$0xf]
      %v1933 = vld [vmem:[%s1 + $0x94] sm:$0xf]
      %v1934 = vld [vmem:[%s1 + $0x98] sm:$0xf]
      %v1935 = vld [vmem:[%s1 + $0x9c] sm:$0xf]
      %v1936 = vld [vmem:[%s1 + $0xa0] sm:$0xf]
      %v1937 = vld [vmem:[%s1 + $0xa4] sm:$0xf]
      %v1938 = vld [vmem:[%s1 + $0xa8] sm:$0xf]
      %v1939 = vld [vmem:[%s1 + $0xac] sm:$0xf]
      %v1940 = vld [vmem:[%s1 + $0xb0] sm:$0xf]
      %v1941 = vld [vmem:[%s1 + $0xb4] sm:$0xf]
      %v1942 = vld [vmem:[%s1 + $0xb8] sm:$0xf]
      %v1943 = vld [vmem:[%s1 + $0xbc] sm:$0xf]
      %v1960 = vunpack.c.l.b16 %v1928
      %v1961 = vunpack.c.l.b16 %v1929
      %v1962 = vunpack.c.l.b16 %v1930
      %v1963 = vunpack.c.l.b16 %v1931
      %v1964 = vunpack.c.l.b16 %v1932
      %v1965 = vunpack.c.l.b16 %v1933
      %v1966 = vunpack.c.l.b16 %v1934
      %v1967 = vunpack.c.l.b16 %v1935
      %v1968 = vunpack.c.l.b16 %v1936
      %v1969 = vunpack.c.l.b16 %v1937
      %v1970 = vunpack.c.l.b16 %v1938
      %v1971 = vunpack.c.l.b16 %v1939
      %v1972 = vunpack.c.l.b16 %v1940
      %v1973 = vunpack.c.l.b16 %v1941
      %v1974 = vunpack.c.l.b16 %v1942
      %v1975 = vunpack.c.l.b16 %v1943
      %v1976 = vpack.c.b16 %v1961, %v1960
      %v1977 = vpack.c.b16 %v1963, %v1962
      %v1978 = vpack.c.b16 %v1965, %v1964
      %v1979 = vpack.c.b16 %v1967, %v1966
      %v1980 = vpack.c.b16 %v1969, %v1968
      %v1981 = vpack.c.b16 %v1971, %v1970
      %v1982 = vpack.c.b16 %v1973, %v1972
      %v1983 = vpack.c.b16 %v1975, %v1974
      %1992 = vmatprep.subr.bf16.mxu0 0
      %1993 = vmatpush1.bf16.msra.mxu0 %v1976
      %1994 = vmatprep.subr.bf16.mxu0 0
      %1995 = vmatpush1.bf16.msra.mxu0 %v1977
      %1996 = vmatprep.subr.bf16.mxu0 0
      %1997 = vmatpush1.bf16.msra.mxu0 %v1978
      %1998 = vmatprep.subr.bf16.mxu0 0
      %1999 = vmatpush1.bf16.msra.mxu0 %v1979
      %2000 = vmatprep.subr.bf16.mxu0 0
      %2001 = vmatpush1.bf16.msra.mxu0 %v1980
      %2002 = vmatprep.subr.bf16.mxu0 0
      %2003 = vmatpush1.bf16.msra.mxu0 %v1981
      %2004 = vmatprep.subr.bf16.mxu0 0
      %2005 = vmatpush1.bf16.msra.mxu0 %v1982
      %2006 = vmatprep.subr.bf16.mxu0 0
      %2007 = vmatpush1.bf16.msra.mxu0 %v1983
      %2008 = vmatprep.subr.bf16.mxu0 0
      %2009 = vmatpush1.bf16.msra.mxu0 0
      %2010 = vmatprep.subr.bf16.mxu0 0
      %2011 = vmatpush1.bf16.msra.mxu0 0
      %2012 = vmatprep.subr.bf16.mxu0 0
      %2013 = vmatpush1.bf16.msra.mxu0 0
      %2014 = vmatprep.subr.bf16.mxu0 0
      %2015 = vmatpush1.bf16.msra.mxu0 0
      %2016 = vmatprep.subr.bf16.mxu0 0
      %2017 = vmatpush1.bf16.msra.mxu0 0
      %2018 = vmatprep.subr.bf16.mxu0 0
      %2019 = vmatpush1.bf16.msra.mxu0 0
      %2020 = vmatprep.subr.bf16.mxu0 0
      %2021 = vmatpush1.bf16.msra.mxu0 0
      %2022 = vmatprep.subr.bf16.mxu0 0
      %2023 = vmatpush1.bf16.msra.mxu0 0
      %2024 = vmatprep.mubr.bf16.mxu0 0
      %2025 = vmatmul.mubr.bf16.gmra.mrb[0].mxu0 %v1916
      %v2026 = vpop.f32.mrb[0].mxu0
      %v2027 = vadd.f32 0.0, %v2026
      %v2028 = vpop.f32.mrb[0].mxu0
      %v2029 = vpop.f32.mrb[0].mxu0
      %v2030 = vadd.f32 0.0, %v2029
      %v2031 = vpop.f32.mrb[0].mxu0
      %2032 = vmatprep.mubr.bf16.mxu0 0
      %2033 = vmatmul.mubr.bf16.gmra.mrb[0].mxu0 %v1917
      %v2034 = vpop.f32.mrb[0].mxu0
      %v2035 = vadd.f32 0.0, %v2034
      %v2036 = vpop.f32.mrb[0].mxu0
      %v2037 = vpop.f32.mrb[0].mxu0
      %v2038 = vadd.f32 0.0, %v2037
      %v2039 = vpop.f32.mrb[0].mxu0
      %2040 = vmatprep.mubr.bf16.mxu0 0
      %2041 = vmatmul.mubr.bf16.gmra.mrb[0].mxu0 %v1918
      %v2042 = vpop.f32.mrb[0].mxu0
      %v2043 = vadd.f32 0.0, %v2042
      %v2044 = vpop.f32.mrb[0].mxu0
      %v2045 = vpop.f32.mrb[0].mxu0
      %v2046 = vadd.f32 0.0, %v2045
      %v2047 = vpop.f32.mrb[0].mxu0
      %2048 = vmatprep.mubr.bf16.mxu0 0
      %2049 = vmatmul.mubr.bf16.gmra.mrb[0].mxu0 %v1919
      %v2050 = vpop.f32.mrb[0].mxu0
      %v2051 = vadd.f32 0.0, %v2050
      %v2052 = vpop.f32.mrb[0].mxu0
      %v2053 = vpop.f32.mrb[0].mxu0
      %v2054 = vadd.f32 0.0, %v2053
      %v2055 = vpop.f32.mrb[0].mxu0
      %2056 = vmatprep.mubr.bf16.mxu0 0
      %2057 = vmatmul.mubr.bf16.gmra.mrb[0].mxu0 %v1920
      %v2058 = vpop.f32.mrb[0].mxu0
      %v2059 = vadd.f32 0.0, %v2058
      %v2060 = vpop.f32.mrb[0].mxu0
      %v2061 = vpop.f32.mrb[0].mxu0
      %v2062 = vadd.f32 0.0, %v2061
      %v2063 = vpop.f32.mrb[0].mxu0
      %2064 = vmatprep.mubr.bf16.mxu0 0
      %2065 = vmatmul.mubr.bf16.gmra.mrb[0].mxu0 %v1921
      %v2066 = vpop.f32.mrb[0].mxu0
      %v2067 = vadd.f32 0.0, %v2066
      %v2068 = vpop.f32.mrb[0].mxu0
      %v2069 = vpop.f32.mrb[0].mxu0
      %v2070 = vadd.f32 0.0, %v2069
      %v2071 = vpop.f32.mrb[0].mxu0
      %2072 = vmatprep.mubr.bf16.mxu0 0
      %2073 = vmatmul.mubr.bf16.gmra.mrb[0].mxu0 %v1922
      %v2074 = vpop.f32.mrb[0].mxu0
      %v2075 = vadd.f32 0.0, %v2074
      %v2076 = vpop.f32.mrb[0].mxu0
      %v2077 = vpop.f32.mrb[0].mxu0
      %v2078 = vadd.f32 0.0, %v2077
      %v2079 = vpop.f32.mrb[0].mxu0
      %2080 = vmatprep.mubr.bf16.mxu0 0
      %2081 = vmatmul.mubr.bf16.gmra.mrb[0].mxu0 %v1923
      %v2082 = vpop.f32.mrb[0].mxu0
      %v2083 = vadd.f32 0.0, %v2082
      %v2084 = vpop.f32.mrb[0].mxu0
      %v2085 = vpop.f32.mrb[0].mxu0
      %v2086 = vadd.f32 0.0, %v2085
      %v2087 = vpop.f32.mrb[0].mxu0
      %2088 = vmatprep.mubr.bf16.mxu0 0
      %2089 = vmatmul.mubr.bf16.gmra.mrb[0].mxu0 %v1924
      %v2090 = vpop.f32.mrb[0].mxu0
      %v2091 = vadd.f32 0.0, %v2090
      %v2092 = vpop.f32.mrb[0].mxu0
      %v2093 = vpop.f32.mrb[0].mxu0
      %v2094 = vadd.f32 0.0, %v2093
      %v2095 = vpop.f32.mrb[0].mxu0
      %2096 = vmatprep.mubr.bf16.mxu0 0
      %2097 = vmatmul.mubr.bf16.gmra.mrb[0].mxu0 %v1925
      %v2098 = vpop.f32.mrb[0].mxu0
      %v2099 = vadd.f32 0.0, %v2098
      %v2100 = vpop.f32.mrb[0].mxu0
      %v2101 = vpop.f32.mrb[0].mxu0
      %v2102 = vadd.f32 0.0, %v2101
      %v2103 = vpop.f32.mrb[0].mxu0
      %2104 = vmatprep.mubr.bf16.mxu0 0
      %2105 = vmatmul.mubr.bf16.gmra.mrb[0].mxu0 %v1926
      %v2106 = vpop.f32.mrb[0].mxu0
      %v2107 = vadd.f32 0.0, %v2106
      %v2108 = vpop.f32.mrb[0].mxu0
      %v2109 = vpop.f32.mrb[0].mxu0
      %v2110 = vadd.f32 0.0, %v2109
      %v2111 = vpop.f32.mrb[0].mxu0
      %2112 = vmatprep.mubr.bf16.mxu0 0
      %2113 = vmatmul.mubr.bf16.gmra.mrb[0].mxu0 %v1927
      %v2114 = vpop.f32.mrb[0].mxu0
      %v2115 = vadd.f32 0.0, %v2114
      %v2116 = vpop.f32.mrb[0].mxu0
      %v2117 = vpop.f32.mrb[0].mxu0
      %v2118 = vadd.f32 0.0, %v2117
      %v2119 = vpop.f32.mrb[0].mxu0
      %2120 = vdwg.mxu0
      %v2121 = vadd.f32 %v1798, %v2027
      %v2122 = vadd.f32 %v1801, %v2030
      %v2123 = vadd.f32 %v1806, %v2035
      %v2124 = vadd.f32 %v1809, %v2038
      %v2125 = vadd.f32 %v1814, %v2043
      %v2126 = vadd.f32 %v1817, %v2046
      %v2127 = vadd.f32 %v1822, %v2051
      %v2128 = vadd.f32 %v1825, %v2054
      %v2129 = vadd.f32 %v1830, %v2059
      %v2130 = vadd.f32 %v1833, %v2062
      %v2131 = vadd.f32 %v1838, %v2067
      %v2132 = vadd.f32 %v1841, %v2070
      %v2133 = vadd.f32 %v1846, %v2075
      %v2134 = vadd.f32 %v1849, %v2078
      %v2135 = vadd.f32 %v1854, %v2083
      %v2136 = vadd.f32 %v1857, %v2086
      %v2137 = vadd.f32 %v1862, %v2091
      %v2138 = vadd.f32 %v1865, %v2094
      %v2139 = vadd.f32 %v1870, %v2099
      %v2140 = vadd.f32 %v1873, %v2102
      %v2141 = vadd.f32 %v1878, %v2107
      %v2142 = vadd.f32 %v1881, %v2110
      %v2143 = vadd.f32 %v1886, %v2115
      %v2144 = vadd.f32 %v1889, %v2118
      %v2145 = vadd.f32 %v2121, %v257
      %v2146 = vadd.f32 %v2122, %v257
      %v2147 = vadd.f32 %v2123, %v257
      %v2148 = vadd.f32 %v2124, %v257
      %v2149 = vadd.f32 %v2125, %v257
      %v2150 = vadd.f32 %v2126, %v257
      %v2151 = vadd.f32 %v2127, %v257
      %v2152 = vadd.f32 %v2128, %v257
      %v2153 = vadd.f32 %v2129, %v257
      %v2154 = vadd.f32 %v2130, %v257
      %v2155 = vadd.f32 %v2131, %v257
      %v2156 = vadd.f32 %v2132, %v257
      %v2157 = vadd.f32 %v2133, %v257
      %v2158 = vadd.f32 %v2134, %v257
      %v2159 = vadd.f32 %v2135, %v257
      %v2160 = vadd.f32 %v2136, %v257
      %v2161 = vadd.f32 %v2137, %v257
      %v2162 = vadd.f32 %v2138, %v257
      %v2163 = vadd.f32 %v2139, %v257
      %v2164 = vadd.f32 %v2140, %v257
      %v2165 = vadd.f32 %v2141, %v257
      %v2166 = vadd.f32 %v2142, %v257
      %v2167 = vadd.f32 %v2143, %v257
      %v2168 = vadd.f32 %v2144, %v257
      %v2169 = vxor.u32 %v2145, 2147483648
      %v2170 = vxor.u32 %v2146, 2147483648
      %v2171 = vxor.u32 %v2147, 2147483648
      %v2172 = vxor.u32 %v2148, 2147483648
      %v2173 = vxor.u32 %v2149, 2147483648
      %v2174 = vxor.u32 %v2150, 2147483648
      %v2175 = vxor.u32 %v2151, 2147483648
      %v2176 = vxor.u32 %v2152, 2147483648
      %v2177 = vxor.u32 %v2153, 2147483648
      %v2178 = vxor.u32 %v2154, 2147483648
      %v2179 = vxor.u32 %v2155, 2147483648
      %v2180 = vxor.u32 %v2156, 2147483648
      %v2181 = vxor.u32 %v2157, 2147483648
      %v2182 = vxor.u32 %v2158, 2147483648
      %v2183 = vxor.u32 %v2159, 2147483648
      %v2184 = vxor.u32 %v2160, 2147483648
      %v2185 = vxor.u32 %v2161, 2147483648
      %v2186 = vxor.u32 %v2162, 2147483648
      %v2187 = vxor.u32 %v2163, 2147483648
      %v2188 = vxor.u32 %v2164, 2147483648
      %v2189 = vxor.u32 %v2165, 2147483648
      %v2190 = vxor.u32 %v2166, 2147483648
      %v2191 = vxor.u32 %v2167, 2147483648
      %v2192 = vxor.u32 %v2168, 2147483648
      %v2193 = vmul.f32 %v2169, 1.442695
      %v2194 = vpow.pop %v2193
      %v2195 = vmul.f32 %v2170, 1.442695
      %v2196 = vpow.pop %v2195
      %v2197 = vmul.f32 %v2171, 1.442695
      %v2198 = vpow.pop %v2197
      %v2199 = vmul.f32 %v2172, 1.442695
      %v2200 = vpow.pop %v2199
      %v2201 = vmul.f32 %v2173, 1.442695
      %v2202 = vpow.pop %v2201
      %v2203 = vmul.f32 %v2174, 1.442695
      %v2204 = vpow.pop %v2203
      %v2205 = vmul.f32 %v2175, 1.442695
      %v2206 = vpow.pop %v2205
      %v2207 = vmul.f32 %v2176, 1.442695
      %v2208 = vpow.pop %v2207
      %v2209 = vmul.f32 %v2177, 1.442695
      %v2210 = vpow.pop %v2209
      %v2211 = vmul.f32 %v2178, 1.442695
      %v2212 = vpow.pop %v2211
      %v2213 = vmul.f32 %v2179, 1.442695
      %v2214 = vpow.pop %v2213
      %v2215 = vmul.f32 %v2180, 1.442695
      %v2216 = vpow.pop %v2215
      %v2217 = vmul.f32 %v2181, 1.442695
      %v2218 = vpow.pop %v2217
      %v2219 = vmul.f32 %v2182, 1.442695
      %v2220 = vpow.pop %v2219
      %v2221 = vmul.f32 %v2183, 1.442695
      %v2222 = vpow.pop %v2221
      %v2223 = vmul.f32 %v2184, 1.442695
      %v2224 = vpow.pop %v2223
      %v2225 = vmul.f32 %v2185, 1.442695
      %v2226 = vpow.pop %v2225
      %v2227 = vmul.f32 %v2186, 1.442695
      %v2228 = vpow.pop %v2227
      %v2229 = vmul.f32 %v2187, 1.442695
      %v2230 = vpow.pop %v2229
      %v2231 = vmul.f32 %v2188, 1.442695
      %v2232 = vpow.pop %v2231
      %v2233 = vmul.f32 %v2189, 1.442695
      %v2234 = vpow.pop %v2233
      %v2235 = vmul.f32 %v2190, 1.442695
      %v2236 = vpow.pop %v2235
      %v2237 = vmul.f32 %v2191, 1.442695
      %v2238 = vpow.pop %v2237
      %v2239 = vmul.f32 %v2192, 1.442695
      %v2240 = vpow.pop %v2239
      %v2241 = vadd.f32 %v2194, 1.0
      %v2242 = vadd.f32 %v2196, 1.0
      %v2243 = vadd.f32 %v2198, 1.0
      %v2244 = vadd.f32 %v2200, 1.0
      %v2245 = vadd.f32 %v2202, 1.0
      %v2246 = vadd.f32 %v2204, 1.0
      %v2247 = vadd.f32 %v2206, 1.0
      %v2248 = vadd.f32 %v2208, 1.0
      %v2249 = vadd.f32 %v2210, 1.0
      %v2250 = vadd.f32 %v2212, 1.0
      %v2251 = vadd.f32 %v2214, 1.0
      %v2252 = vadd.f32 %v2216, 1.0
      %v2253 = vadd.f32 %v2218, 1.0
      %v2254 = vadd.f32 %v2220, 1.0
      %v2255 = vadd.f32 %v2222, 1.0
      %v2256 = vadd.f32 %v2224, 1.0
      %v2257 = vadd.f32 %v2226, 1.0
      %v2258 = vadd.f32 %v2228, 1.0
      %v2259 = vadd.f32 %v2230, 1.0
      %v2260 = vadd.f32 %v2232, 1.0
      %v2261 = vadd.f32 %v2234, 1.0
      %v2262 = vadd.f32 %v2236, 1.0
      %v2263 = vadd.f32 %v2238, 1.0
      %v2264 = vadd.f32 %v2240, 1.0
      %v2265 = vrcp.pop %v2241
      %v2266 = vmul.f32 1.0, %v2265
      %v2267 = vrcp.pop %v2242
      %v2268 = vmul.f32 1.0, %v2267
      %v2269 = vrcp.pop %v2243
      %v2270 = vmul.f32 1.0, %v2269
      %v2271 = vrcp.pop %v2244
      %v2272 = vmul.f32 1.0, %v2271
      %v2273 = vrcp.pop %v2245
      %v2274 = vmul.f32 1.0, %v2273
      %v2275 = vrcp.pop %v2246
      %v2276 = vmul.f32 1.0, %v2275
      %v2277 = vrcp.pop %v2247
      %v2278 = vmul.f32 1.0, %v2277
      %v2279 = vrcp.pop %v2248
      %v2280 = vmul.f32 1.0, %v2279
      %v2281 = vrcp.pop %v2249
      %v2282 = vmul.f32 1.0, %v2281
      %v2283 = vrcp.pop %v2250
      %v2284 = vmul.f32 1.0, %v2283
      %v2285 = vrcp.pop %v2251
      %v2286 = vmul.f32 1.0, %v2285
      %v2287 = vrcp.pop %v2252
      %v2288 = vmul.f32 1.0, %v2287
      %v2289 = vrcp.pop %v2253
      %v2290 = vmul.f32 1.0, %v2289
      %v2291 = vrcp.pop %v2254
      %v2292 = vmul.f32 1.0, %v2291
      %v2293 = vrcp.pop %v2255
      %v2294 = vmul.f32 1.0, %v2293
      %v2295 = vrcp.pop %v2256
      %v2296 = vmul.f32 1.0, %v2295
      %v2297 = vrcp.pop %v2257
      %v2298 = vmul.f32 1.0, %v2297
      %v2299 = vrcp.pop %v2258
      %v2300 = vmul.f32 1.0, %v2299
      %v2301 = vrcp.pop %v2259
      %v2302 = vmul.f32 1.0, %v2301
      %v2303 = vrcp.pop %v2260
      %v2304 = vmul.f32 1.0, %v2303
      %v2305 = vrcp.pop %v2261
      %v2306 = vmul.f32 1.0, %v2305
      %v2307 = vrcp.pop %v2262
      %v2308 = vmul.f32 1.0, %v2307
      %v2309 = vrcp.pop %v2263
      %v2310 = vmul.f32 1.0, %v2309
      %v2311 = vrcp.pop %v2264
      %v2312 = vmul.f32 1.0, %v2311
      %v2313 = vmul.f32 %v2145, %v2266
      %v2314 = vmul.f32 %v2146, %v2268
      %v2315 = vmul.f32 %v2147, %v2270
      %v2316 = vmul.f32 %v2148, %v2272
      %v2317 = vmul.f32 %v2149, %v2274
      %v2318 = vmul.f32 %v2150, %v2276
      %v2319 = vmul.f32 %v2151, %v2278
      %v2320 = vmul.f32 %v2152, %v2280
      %v2321 = vmul.f32 %v2153, %v2282
      %v2322 = vmul.f32 %v2154, %v2284
      %v2323 = vmul.f32 %v2155, %v2286
      %v2324 = vmul.f32 %v2156, %v2288
      %v2325 = vmul.f32 %v2157, %v2290
      %v2326 = vmul.f32 %v2158, %v2292
      %v2327 = vmul.f32 %v2159, %v2294
      %v2328 = vmul.f32 %v2160, %v2296
      %v2329 = vmul.f32 %v2161, %v2298
      %v2330 = vmul.f32 %v2162, %v2300
      %v2331 = vmul.f32 %v2163, %v2302
      %v2332 = vmul.f32 %v2164, %v2304
      %v2333 = vmul.f32 %v2165, %v2306
      %v2334 = vmul.f32 %v2166, %v2308
      %v2335 = vmul.f32 %v2167, %v2310
      %v2336 = vmul.f32 %v2168, %v2312
      %v2337 = vld [vmem:[%s3 + $0x60] sm:$0xf]
      %v2338 = vld [vmem:[%s3 + $0x64] sm:$0xf]
      %v2339 = vld [vmem:[%s3 + $0x68] sm:$0xf]
      %v2340 = vld [vmem:[%s3 + $0x6c] sm:$0xf]
      %v2341 = vld [vmem:[%s3 + $0x70] sm:$0xf]
      %v2342 = vld [vmem:[%s3 + $0x74] sm:$0xf]
      %v2343 = vld [vmem:[%s3 + $0x78] sm:$0xf]
      %v2344 = vld [vmem:[%s3 + $0x7c] sm:$0xf]
      %v2345 = vld [vmem:[%s3 + $0x80] sm:$0xf]
      %v2346 = vld [vmem:[%s3 + $0x84] sm:$0xf]
      %v2347 = vld [vmem:[%s3 + $0x88] sm:$0xf]
      %v2348 = vld [vmem:[%s3 + $0x8c] sm:$0xf]
      %v2349 = vld [vmem:[%s3 + $0x90] sm:$0xf]
      %v2350 = vld [vmem:[%s3 + $0x94] sm:$0xf]
      %v2351 = vld [vmem:[%s3 + $0x98] sm:$0xf]
      %v2352 = vld [vmem:[%s3 + $0x9c] sm:$0xf]
      %v2353 = vld [vmem:[%s3 + $0xa0] sm:$0xf]
      %v2354 = vld [vmem:[%s3 + $0xa4] sm:$0xf]
      %v2355 = vld [vmem:[%s3 + $0xa8] sm:$0xf]
      %v2356 = vld [vmem:[%s3 + $0xac] sm:$0xf]
      %v2357 = vld [vmem:[%s3 + $0xb0] sm:$0xf]
      %v2358 = vld [vmem:[%s3 + $0xb4] sm:$0xf]
      %v2359 = vld [vmem:[%s3 + $0xb8] sm:$0xf]
      %v2360 = vld [vmem:[%s3 + $0xbc] sm:$0xf]
      %v2361 = vunpack.c.l.bf16 %v2337
      %v2362 = vunpack.c.l.bf16 %v2338
      %v2363 = vunpack.c.l.bf16 %v2339
      %v2364 = vunpack.c.l.bf16 %v2340
      %v2365 = vunpack.c.l.bf16 %v2341
      %v2366 = vunpack.c.l.bf16 %v2342
      %v2367 = vunpack.c.l.bf16 %v2343
      %v2368 = vunpack.c.l.bf16 %v2344
      %v2369 = vunpack.c.l.bf16 %v2345
      %v2370 = vunpack.c.l.bf16 %v2346
      %v2371 = vunpack.c.l.bf16 %v2347
      %v2372 = vunpack.c.l.bf16 %v2348
      %v2373 = vunpack.c.l.bf16 %v2349
      %v2374 = vunpack.c.l.bf16 %v2350
      %v2375 = vunpack.c.l.bf16 %v2351
      %v2376 = vunpack.c.l.bf16 %v2352
      %v2377 = vunpack.c.l.bf16 %v2353
      %v2378 = vunpack.c.l.bf16 %v2354
      %v2379 = vunpack.c.l.bf16 %v2355
      %v2380 = vunpack.c.l.bf16 %v2356
      %v2381 = vunpack.c.l.bf16 %v2357
      %v2382 = vunpack.c.l.bf16 %v2358
      %v2383 = vunpack.c.l.bf16 %v2359
      %v2384 = vunpack.c.l.bf16 %v2360
      %v2385 = vmul.f32 %v2313, %v2361
      %v2386 = vmul.f32 %v2314, %v2362
      %v2387 = vmul.f32 %v2315, %v2363
      %v2388 = vmul.f32 %v2316, %v2364
      %v2389 = vmul.f32 %v2317, %v2365
      %v2390 = vmul.f32 %v2318, %v2366
      %v2391 = vmul.f32 %v2319, %v2367
      %v2392 = vmul.f32 %v2320, %v2368
      %v2393 = vmul.f32 %v2321, %v2369
      %v2394 = vmul.f32 %v2322, %v2370
      %v2395 = vmul.f32 %v2323, %v2371
      %v2396 = vmul.f32 %v2324, %v2372
      %v2397 = vmul.f32 %v2325, %v2373
      %v2398 = vmul.f32 %v2326, %v2374
      %v2399 = vmul.f32 %v2327, %v2375
      %v2400 = vmul.f32 %v2328, %v2376
      %v2401 = vmul.f32 %v2329, %v2377
      %v2402 = vmul.f32 %v2330, %v2378
      %v2403 = vmul.f32 %v2331, %v2379
      %v2404 = vmul.f32 %v2332, %v2380
      %v2405 = vmul.f32 %v2333, %v2381
      %v2406 = vmul.f32 %v2334, %v2382
      %v2407 = vmul.f32 %v2335, %v2383
      %v2408 = vmul.f32 %v2336, %v2384
      %2433 = vrot.lane.b32.xlu0 %v2385, 32
      %v2434 = vpop.permute.xlu0 %2433
      %2435 = vrot.lane.b32.xlu0 %v2386, 32
      %v2436 = vpop.permute.xlu0 %2435
      %2437 = vrot.lane.b32.xlu0 %v2387, 32
      %v2438 = vpop.permute.xlu0 %2437
      %2439 = vrot.lane.b32.xlu0 %v2388, 32
      %v2440 = vpop.permute.xlu0 %2439
      %2441 = vrot.lane.b32.xlu0 %v2389, 32
      %v2442 = vpop.permute.xlu0 %2441
      %2443 = vrot.lane.b32.xlu0 %v2390, 32
      %v2444 = vpop.permute.xlu0 %2443
      %2445 = vrot.lane.b32.xlu0 %v2391, 32
      %v2446 = vpop.permute.xlu0 %2445
      %2447 = vrot.lane.b32.xlu0 %v2392, 32
      %v2448 = vpop.permute.xlu0 %2447
      %2449 = vrot.lane.b32.xlu0 %v2393, 32
      %v2450 = vpop.permute.xlu0 %2449
      %2451 = vrot.lane.b32.xlu0 %v2394, 32
      %v2452 = vpop.permute.xlu0 %2451
      %2453 = vrot.lane.b32.xlu0 %v2395, 32
      %v2454 = vpop.permute.xlu0 %2453
      %2455 = vrot.lane.b32.xlu0 %v2396, 32
      %v2456 = vpop.permute.xlu0 %2455
      %2457 = vrot.lane.b32.xlu0 %v2397, 32
      %v2458 = vpop.permute.xlu0 %2457
      %2459 = vrot.lane.b32.xlu0 %v2398, 32
      %v2460 = vpop.permute.xlu0 %2459
      %2461 = vrot.lane.b32.xlu0 %v2399, 32
      %v2462 = vpop.permute.xlu0 %2461
      %2463 = vrot.lane.b32.xlu0 %v2400, 32
      %v2464 = vpop.permute.xlu0 %2463
      %2465 = vrot.lane.b32.xlu0 %v2401, 32
      %v2466 = vpop.permute.xlu0 %2465
      %2467 = vrot.lane.b32.xlu0 %v2402, 32
      %v2468 = vpop.permute.xlu0 %2467
      %2469 = vrot.lane.b32.xlu0 %v2403, 32
      %v2470 = vpop.permute.xlu0 %2469
      %2471 = vrot.lane.b32.xlu0 %v2404, 32
      %v2472 = vpop.permute.xlu0 %2471
      %2473 = vrot.lane.b32.xlu0 %v2405, 32
      %v2474 = vpop.permute.xlu0 %2473
      %2475 = vrot.lane.b32.xlu0 %v2406, 32
      %v2476 = vpop.permute.xlu0 %2475
      %2477 = vrot.lane.b32.xlu0 %v2407, 32
      %v2478 = vpop.permute.xlu0 %2477
      %2479 = vrot.lane.b32.xlu0 %v2408, 32
      %v2480 = vpop.permute.xlu0 %2479
      %2505 = vst.msk [vmem:[#allocation2 + $0xd8] sm:$0xff] %vm1308, %v2434
      %2506 = vst.msk [vmem:[#allocation2 + $0xe0] sm:$0xff] %vm1308, %v2436
      %2507 = vst.msk [vmem:[#allocation2 + $0xe8] sm:$0xff] %vm1308, %v2438
      %2508 = vst.msk [vmem:[#allocation2 + $0xf0] sm:$0xff] %vm1308, %v2440
      %2509 = vst.msk [vmem:[#allocation2 + $0xf8] sm:$0xff] %vm1308, %v2442
      %2510 = vst.msk [vmem:[#allocation2 + $0x100] sm:$0xff] %vm1308, %v2444
      %2511 = vst.msk [vmem:[#allocation2 + $0x108] sm:$0xff] %vm1308, %v2446
      %2512 = vst.msk [vmem:[#allocation2 + $0x110] sm:$0xff] %vm1308, %v2448
      %2513 = vst.msk [vmem:[#allocation2 + $0x118] sm:$0xff] %vm1308, %v2450
      %2514 = vst.msk [vmem:[#allocation2 + $0x120] sm:$0xff] %vm1308, %v2452
      %2515 = vst.msk [vmem:[#allocation2 + $0x128] sm:$0xff] %vm1308, %v2454
      %2516 = vst.msk [vmem:[#allocation2 + $0x130] sm:$0xff] %vm1308, %v2456
      %2517 = vst.msk [vmem:[#allocation2 + $0x138] sm:$0xff] %vm1308, %v2458
      %2518 = vst.msk [vmem:[#allocation2 + $0x140] sm:$0xff] %vm1308, %v2460
      %2519 = vst.msk [vmem:[#allocation2 + $0x148] sm:$0xff] %vm1308, %v2462
      %2520 = vst.msk [vmem:[#allocation2 + $0x150] sm:$0xff] %vm1308, %v2464
      %2521 = vst.msk [vmem:[#allocation2 + $0x158] sm:$0xff] %vm1308, %v2466
      %2522 = vst.msk [vmem:[#allocation2 + $0x160] sm:$0xff] %vm1308, %v2468
      %2523 = vst.msk [vmem:[#allocation2 + $0x168] sm:$0xff] %vm1308, %v2470
      %2524 = vst.msk [vmem:[#allocation2 + $0x170] sm:$0xff] %vm1308, %v2472
      %2525 = vst.msk [vmem:[#allocation2 + $0x178] sm:$0xff] %vm1308, %v2474
      %2526 = vst.msk [vmem:[#allocation2 + $0x180] sm:$0xff] %vm1308, %v2476
      %2527 = vst.msk [vmem:[#allocation2 + $0x188] sm:$0xff] %vm1308, %v2478
      %2528 = vst.msk [vmem:[#allocation2 + $0x190] sm:$0xff] %vm1308, %v2480
      %2529 = vst.msk [vmem:[#allocation2 + $0xd9] sm:$0xff] %vm1333, %v2385
      %2530 = vst.msk [vmem:[#allocation2 + $0xe1] sm:$0xff] %vm1333, %v2386
      %2531 = vst.msk [vmem:[#allocation2 + $0xe9] sm:$0xff] %vm1333, %v2387
      %2532 = vst.msk [vmem:[#allocation2 + $0xf1] sm:$0xff] %vm1333, %v2388
      %2533 = vst.msk [vmem:[#allocation2 + $0xf9] sm:$0xff] %vm1333, %v2389
      %2534 = vst.msk [vmem:[#allocation2 + $0x101] sm:$0xff] %vm1333, %v2390
      %2535 = vst.msk [vmem:[#allocation2 + $0x109] sm:$0xff] %vm1333, %v2391
      %2536 = vst.msk [vmem:[#allocation2 + $0x111] sm:$0xff] %vm1333, %v2392
      %2537 = vst.msk [vmem:[#allocation2 + $0x119] sm:$0xff] %vm1333, %v2393
      %2538 = vst.msk [vmem:[#allocation2 + $0x121] sm:$0xff] %vm1333, %v2394
      %2539 = vst.msk [vmem:[#allocation2 + $0x129] sm:$0xff] %vm1333, %v2395
      %2540 = vst.msk [vmem:[#allocation2 + $0x131] sm:$0xff] %vm1333, %v2396
      %2541 = vst.msk [vmem:[#allocation2 + $0x139] sm:$0xff] %vm1333, %v2397
      %2542 = vst.msk [vmem:[#allocation2 + $0x141] sm:$0xff] %vm1333, %v2398
      %2543 = vst.msk [vmem:[#allocation2 + $0x149] sm:$0xff] %vm1333, %v2399
      %2544 = vst.msk [vmem:[#allocation2 + $0x151] sm:$0xff] %vm1333, %v2400
      %2545 = vst.msk [vmem:[#allocation2 + $0x159] sm:$0xff] %vm1333, %v2401
      %2546 = vst.msk [vmem:[#allocation2 + $0x161] sm:$0xff] %vm1333, %v2402
      %2547 = vst.msk [vmem:[#allocation2 + $0x169] sm:$0xff] %vm1333, %v2403
      %2548 = vst.msk [vmem:[#allocation2 + $0x171] sm:$0xff] %vm1333, %v2404
      %2549 = vst.msk [vmem:[#allocation2 + $0x179] sm:$0xff] %vm1333, %v2405
      %2550 = vst.msk [vmem:[#allocation2 + $0x181] sm:$0xff] %vm1333, %v2406
      %2551 = vst.msk [vmem:[#allocation2 + $0x189] sm:$0xff] %vm1333, %v2407
      %2552 = vst.msk [vmem:[#allocation2 + $0x191] sm:$0xff] %vm1333, %v2408
      %2553 = vrot.lane.b32.xlu0 %v2385, 64
      %v2554 = vpop.permute.xlu0 %2553
      %2555 = vrot.lane.b32.xlu0 %v2386, 64
      %v2556 = vpop.permute.xlu0 %2555
      %2557 = vrot.lane.b32.xlu0 %v2387, 64
      %v2558 = vpop.permute.xlu0 %2557
      %2559 = vrot.lane.b32.xlu0 %v2388, 64
      %v2560 = vpop.permute.xlu0 %2559
      %2561 = vrot.lane.b32.xlu0 %v2389, 64
      %v2562 = vpop.permute.xlu0 %2561
      %2563 = vrot.lane.b32.xlu0 %v2390, 64
      %v2564 = vpop.permute.xlu0 %2563
      %2565 = vrot.lane.b32.xlu0 %v2391, 64
      %v2566 = vpop.permute.xlu0 %2565
      %2567 = vrot.lane.b32.xlu0 %v2392, 64
      %v2568 = vpop.permute.xlu0 %2567
      %2569 = vrot.lane.b32.xlu0 %v2393, 64
      %v2570 = vpop.permute.xlu0 %2569
      %2571 = vrot.lane.b32.xlu0 %v2394, 64
      %v2572 = vpop.permute.xlu0 %2571
      %2573 = vrot.lane.b32.xlu0 %v2395, 64
      %v2574 = vpop.permute.xlu0 %2573
      %2575 = vrot.lane.b32.xlu0 %v2396, 64
      %v2576 = vpop.permute.xlu0 %2575
      %2577 = vrot.lane.b32.xlu0 %v2397, 64
      %v2578 = vpop.permute.xlu0 %2577
      %2579 = vrot.lane.b32.xlu0 %v2398, 64
      %v2580 = vpop.permute.xlu0 %2579
      %2581 = vrot.lane.b32.xlu0 %v2399, 64
      %v2582 = vpop.permute.xlu0 %2581
      %2583 = vrot.lane.b32.xlu0 %v2400, 64
      %v2584 = vpop.permute.xlu0 %2583
      %2585 = vrot.lane.b32.xlu0 %v2401, 64
      %v2586 = vpop.permute.xlu0 %2585
      %2587 = vrot.lane.b32.xlu0 %v2402, 64
      %v2588 = vpop.permute.xlu0 %2587
      %2589 = vrot.lane.b32.xlu0 %v2403, 64
      %v2590 = vpop.permute.xlu0 %2589
      %2591 = vrot.lane.b32.xlu0 %v2404, 64
      %v2592 = vpop.permute.xlu0 %2591
      %2593 = vrot.lane.b32.xlu0 %v2405, 64
      %v2594 = vpop.permute.xlu0 %2593
      %2595 = vrot.lane.b32.xlu0 %v2406, 64
      %v2596 = vpop.permute.xlu0 %2595
      %2597 = vrot.lane.b32.xlu0 %v2407, 64
      %v2598 = vpop.permute.xlu0 %2597
      %2599 = vrot.lane.b32.xlu0 %v2408, 64
      %v2600 = vpop.permute.xlu0 %2599
      %2625 = vst.msk [vmem:[#allocation2 + $0xd7] sm:$0xff] %vm1430, %v2554
      %2626 = vst.msk [vmem:[#allocation2 + $0xdf] sm:$0xff] %vm1430, %v2556
      %2627 = vst.msk [vmem:[#allocation2 + $0xe7] sm:$0xff] %vm1430, %v2558
      %2628 = vst.msk [vmem:[#allocation2 + $0xef] sm:$0xff] %vm1430, %v2560
      %2629 = vst.msk [vmem:[#allocation2 + $0xf7] sm:$0xff] %vm1430, %v2562
      %2630 = vst.msk [vmem:[#allocation2 + $0xff] sm:$0xff] %vm1430, %v2564
      %2631 = vst.msk [vmem:[#allocation2 + $0x107] sm:$0xff] %vm1430, %v2566
      %2632 = vst.msk [vmem:[#allocation2 + $0x10f] sm:$0xff] %vm1430, %v2568
      %2633 = vst.msk [vmem:[#allocation2 + $0x117] sm:$0xff] %vm1430, %v2570
      %2634 = vst.msk [vmem:[#allocation2 + $0x11f] sm:$0xff] %vm1430, %v2572
      %2635 = vst.msk [vmem:[#allocation2 + $0x127] sm:$0xff] %vm1430, %v2574
      %2636 = vst.msk [vmem:[#allocation2 + $0x12f] sm:$0xff] %vm1430, %v2576
      %2637 = vst.msk [vmem:[#allocation2 + $0x137] sm:$0xff] %vm1430, %v2578
      %2638 = vst.msk [vmem:[#allocation2 + $0x13f] sm:$0xff] %vm1430, %v2580
      %2639 = vst.msk [vmem:[#allocation2 + $0x147] sm:$0xff] %vm1430, %v2582
      %2640 = vst.msk [vmem:[#allocation2 + $0x14f] sm:$0xff] %vm1430, %v2584
      %2641 = vst.msk [vmem:[#allocation2 + $0x157] sm:$0xff] %vm1430, %v2586
      %2642 = vst.msk [vmem:[#allocation2 + $0x15f] sm:$0xff] %vm1430, %v2588
      %2643 = vst.msk [vmem:[#allocation2 + $0x167] sm:$0xff] %vm1430, %v2590
      %2644 = vst.msk [vmem:[#allocation2 + $0x16f] sm:$0xff] %vm1430, %v2592
      %2645 = vst.msk [vmem:[#allocation2 + $0x177] sm:$0xff] %vm1430, %v2594
      %2646 = vst.msk [vmem:[#allocation2 + $0x17f] sm:$0xff] %vm1430, %v2596
      %2647 = vst.msk [vmem:[#allocation2 + $0x187] sm:$0xff] %vm1430, %v2598
      %2648 = vst.msk [vmem:[#allocation2 + $0x18f] sm:$0xff] %vm1430, %v2600
      %2649 = vst [vmem:[#allocation3] sm:$0xff] 0.0
      %2650 = vst [vmem:[#allocation3 + $0x8] sm:$0xff] 0.0
      %2651 = vst [vmem:[#allocation3 + $0x10] sm:$0xff] 0.0
      %2652 = vst [vmem:[#allocation3 + $0x18] sm:$0xff] 0.0
      %2653 = vst [vmem:[#allocation3 + $0x20] sm:$0xff] 0.0
      %2654 = vst [vmem:[#allocation3 + $0x28] sm:$0xff] 0.0
      %2655 = vst [vmem:[#allocation3 + $0x30] sm:$0xff] 0.0
      %2656 = vst [vmem:[#allocation3 + $0x38] sm:$0xff] 0.0
      %2657 = vst [vmem:[#allocation3 + $0x40] sm:$0xff] 0.0
      %2658 = vst [vmem:[#allocation3 + $0x48] sm:$0xff] 0.0
      %2659 = vst [vmem:[#allocation3 + $0x50] sm:$0xff] 0.0
      %2660 = vst [vmem:[#allocation3 + $0x58] sm:$0xff] 0.0
      %2661 = vst [vmem:[#allocation3 + $0x60] sm:$0xff] 0.0
      %2662 = vst [vmem:[#allocation3 + $0x68] sm:$0xff] 0.0
      %2663 = vst [vmem:[#allocation3 + $0x70] sm:$0xff] 0.0
      %2664 = vst [vmem:[#allocation3 + $0x78] sm:$0xff] 0.0
      %2665 = vst [vmem:[#allocation3 + $0x80] sm:$0xff] 0.0
      %2666 = vst [vmem:[#allocation3 + $0x88] sm:$0xff] 0.0
      %2667 = vst [vmem:[#allocation3 + $0x90] sm:$0xff] 0.0
      %2668 = vst [vmem:[#allocation3 + $0x98] sm:$0xff] 0.0
      %2669 = vst [vmem:[#allocation3 + $0xa0] sm:$0xff] 0.0
      %2670 = vst [vmem:[#allocation3 + $0xa8] sm:$0xff] 0.0
      %2671 = vst [vmem:[#allocation3 + $0xb0] sm:$0xff] 0.0
      %2672 = vst [vmem:[#allocation3 + $0xb8] sm:$0xff] 0.0
      %2673 = vst [vmem:[#allocation3 + $0xc0] sm:$0xff] 0.0
      %2674 = vst [vmem:[#allocation3 + $0xc8] sm:$0xff] 0.0
      %2675 = vst [vmem:[#allocation3 + $0xd0] sm:$0xff] 0.0
      %2676 = vst [vmem:[#allocation3 + $0xd8] sm:$0xff] 0.0
      %2677 = vst [vmem:[#allocation3 + $0xe0] sm:$0xff] 0.0
      %2678 = vst [vmem:[#allocation3 + $0xe8] sm:$0xff] 0.0
      %2679 = vst [vmem:[#allocation3 + $0xf0] sm:$0xff] 0.0
      %2680 = vst [vmem:[#allocation3 + $0xf8] sm:$0xff] 0.0
      %2681 = vst [vmem:[#allocation3 + $0x100] sm:$0xff] 0.0
      %2682 = vst [vmem:[#allocation3 + $0x108] sm:$0xff] 0.0
      %2683 = vst [vmem:[#allocation3 + $0x110] sm:$0xff] 0.0
      %2684 = vst [vmem:[#allocation3 + $0x118] sm:$0xff] 0.0
      %2685 = vst [vmem:[#allocation3 + $0x120] sm:$0xff] 0.0
      %2686 = vst [vmem:[#allocation3 + $0x128] sm:$0xff] 0.0
      %2687 = vst [vmem:[#allocation3 + $0x130] sm:$0xff] 0.0
      %2688 = vst [vmem:[#allocation3 + $0x138] sm:$0xff] 0.0
      %2689 = vst [vmem:[#allocation3 + $0x140] sm:$0xff] 0.0
      %2690 = vst [vmem:[#allocation3 + $0x148] sm:$0xff] 0.0
      %2691 = vst [vmem:[#allocation3 + $0x150] sm:$0xff] 0.0
      %2692 = vst [vmem:[#allocation3 + $0x158] sm:$0xff] 0.0
      %2693 = vst [vmem:[#allocation3 + $0x160] sm:$0xff] 0.0
      %2694 = vst [vmem:[#allocation3 + $0x168] sm:$0xff] 0.0
      %2695 = vst [vmem:[#allocation3 + $0x170] sm:$0xff] 0.0
      %2696 = vst [vmem:[#allocation3 + $0x178] sm:$0xff] 0.0
      %2697 = vst [vmem:[#allocation3 + $0x180] sm:$0xff] 0.0
      %2698 = vst [vmem:[#allocation3 + $0x188] sm:$0xff] 0.0
      %2699 = vst [vmem:[#allocation3 + $0x190] sm:$0xff] 0.0
      %2700 = vst [vmem:[#allocation3 + $0x198] sm:$0xff] 0.0
      %2701 = vst [vmem:[#allocation3 + $0x1a0] sm:$0xff] 0.0
      %2702 = vst [vmem:[#allocation3 + $0x1a8] sm:$0xff] 0.0
      %v2703 = vld [vmem:[%s2 + $0x1] sm:$0x1]
      %v2704 = vlaneseq
      %v2705 = vshrl.u32 %v2704, 7
      %v2706 = vsub.s32 0, %v2705
      %v2707 = vrot.slane %v2703, %v2706
      %v2708 = vld [vmem:[#allocation2] sm:$0xff]
      %v2709 = vld [vmem:[#allocation2 + $0x8] sm:$0xff]
      %v2710 = vld [vmem:[#allocation2 + $0x10] sm:$0xff]
      %v2711 = vld [vmem:[#allocation2 + $0x18] sm:$0xff]
      %v2712 = vld [vmem:[#allocation2 + $0x20] sm:$0xff]
      %v2713 = vld [vmem:[#allocation2 + $0x28] sm:$0xff]
      %v2714 = vld [vmem:[#allocation2 + $0x30] sm:$0xff]
      %v2715 = vld [vmem:[#allocation2 + $0x38] sm:$0xff]
      %v2716 = vld [vmem:[#allocation2 + $0x40] sm:$0xff]
      %v2717 = vld [vmem:[#allocation2 + $0x48] sm:$0xff]
      %v2718 = vld [vmem:[#allocation2 + $0x50] sm:$0xff]
      %v2719 = vld [vmem:[#allocation2 + $0x58] sm:$0xff]
      %v2720 = vld [vmem:[#allocation2 + $0x60] sm:$0xff]
      %v2721 = vld [vmem:[#allocation2 + $0x68] sm:$0xff]
      %v2722 = vld [vmem:[#allocation2 + $0x70] sm:$0xff]
      %v2723 = vld [vmem:[#allocation2 + $0x78] sm:$0xff]
      %v2724 = vld [vmem:[#allocation2 + $0x80] sm:$0xff]
      %v2725 = vld [vmem:[#allocation2 + $0x88] sm:$0xff]
      %v2726 = vld [vmem:[#allocation2 + $0x90] sm:$0xff]
      %v2727 = vld [vmem:[#allocation2 + $0x98] sm:$0xff]
      %v2728 = vld [vmem:[#allocation2 + $0xa0] sm:$0xff]
      %v2729 = vld [vmem:[#allocation2 + $0xa8] sm:$0xff]
      %v2730 = vld [vmem:[#allocation2 + $0xb0] sm:$0xff]
      %v2731 = vld [vmem:[#allocation2 + $0xb8] sm:$0xff]
      %v2732 = vpack.c.bf16 %v2709, %v2708
      %v2733 = vpack.c.bf16 %v2711, %v2710
      %v2734 = vpack.c.bf16 %v2713, %v2712
      %v2735 = vpack.c.bf16 %v2715, %v2714
      %v2736 = vpack.c.bf16 %v2717, %v2716
      %v2737 = vpack.c.bf16 %v2719, %v2718
      %v2738 = vpack.c.bf16 %v2721, %v2720
      %v2739 = vpack.c.bf16 %v2723, %v2722
      %v2740 = vpack.c.bf16 %v2725, %v2724
      %v2741 = vpack.c.bf16 %v2727, %v2726
      %v2742 = vpack.c.bf16 %v2729, %v2728
      %v2743 = vpack.c.bf16 %v2731, %v2730
      %v2744 = vld [vmem:[%s1 + $0xc0] sm:$0xf]
      %v2745 = vld [vmem:[%s1 + $0xc4] sm:$0xf]
      %v2746 = vld [vmem:[%s1 + $0xc8] sm:$0xf]
      %v2747 = vld [vmem:[%s1 + $0xcc] sm:$0xf]
      %v2748 = vld [vmem:[%s1 + $0xd0] sm:$0xf]
      %v2749 = vld [vmem:[%s1 + $0xd4] sm:$0xf]
      %v2750 = vld [vmem:[%s1 + $0xd8] sm:$0xf]
      %v2751 = vld [vmem:[%s1 + $0xdc] sm:$0xf]
      %v2752 = vld [vmem:[%s1 + $0xe0] sm:$0xf]
      %v2753 = vld [vmem:[%s1 + $0xe4] sm:$0xf]
      %v2754 = vld [vmem:[%s1 + $0xe8] sm:$0xf]
      %v2755 = vld [vmem:[%s1 + $0xec] sm:$0xf]
      %v2756 = vld [vmem:[%s1 + $0xf0] sm:$0xf]
      %v2757 = vld [vmem:[%s1 + $0xf4] sm:$0xf]
      %v2758 = vld [vmem:[%s1 + $0xf8] sm:$0xf]
      %v2759 = vld [vmem:[%s1 + $0xfc] sm:$0xf]
      %v2760 = vld [vmem:[#allocation2 + $0xc0] sm:$0xff]
      %v2761 = vld [vmem:[#allocation2 + $0xc8] sm:$0xff]
      %v2762 = vld [vmem:[#allocation2 + $0xd0] sm:$0xff]
      %v2763 = vpack.c.bf16 %v2712, %v2711
      %v2764 = vpack.c.bf16 %v2714, %v2713
      %v2765 = vpack.c.bf16 %v2716, %v2715
      %v2766 = vpack.c.bf16 %v2718, %v2717
      %v2767 = vpack.c.bf16 %v2720, %v2719
      %v2768 = vpack.c.bf16 %v2722, %v2721
      %v2769 = vpack.c.bf16 %v2724, %v2723
      %v2770 = vpack.c.bf16 %v2726, %v2725
      %v2771 = vpack.c.bf16 %v2728, %v2727
      %v2772 = vpack.c.bf16 %v2730, %v2729
      %v2773 = vpack.c.bf16 %v2760, %v2731
      %v2774 = vpack.c.bf16 %v2762, %v2761
      %v2775 = vld [vmem:[%s1 + $0x100] sm:$0xf]
      %v2776 = vld [vmem:[%s1 + $0x104] sm:$0xf]
      %v2777 = vld [vmem:[%s1 + $0x108] sm:$0xf]
      %v2778 = vld [vmem:[%s1 + $0x10c] sm:$0xf]
      %v2779 = vld [vmem:[%s1 + $0x110] sm:$0xf]
      %v2780 = vld [vmem:[%s1 + $0x114] sm:$0xf]
      %v2781 = vld [vmem:[%s1 + $0x118] sm:$0xf]
      %v2782 = vld [vmem:[%s1 + $0x11c] sm:$0xf]
      %v2783 = vld [vmem:[%s1 + $0x120] sm:$0xf]
      %v2784 = vld [vmem:[%s1 + $0x124] sm:$0xf]
      %v2785 = vld [vmem:[%s1 + $0x128] sm:$0xf]
      %v2786 = vld [vmem:[%s1 + $0x12c] sm:$0xf]
      %v2787 = vld [vmem:[%s1 + $0x130] sm:$0xf]
      %v2788 = vld [vmem:[%s1 + $0x134] sm:$0xf]
      %v2789 = vld [vmem:[%s1 + $0x138] sm:$0xf]
      %v2790 = vld [vmem:[%s1 + $0x13c] sm:$0xf]
      %v2807 = vunpack.c.l.b16 %v2775
      %v2808 = vunpack.c.l.b16 %v2776
      %v2809 = vunpack.c.l.b16 %v2777
      %v2810 = vunpack.c.l.b16 %v2778
      %v2811 = vunpack.c.l.b16 %v2779
      %v2812 = vunpack.c.l.b16 %v2780
      %v2813 = vunpack.c.l.b16 %v2781
      %v2814 = vunpack.c.l.b16 %v2782
      %v2815 = vunpack.c.l.b16 %v2783
      %v2816 = vunpack.c.l.b16 %v2784
      %v2817 = vunpack.c.l.b16 %v2785
      %v2818 = vunpack.c.l.b16 %v2786
      %v2819 = vunpack.c.l.b16 %v2787
      %v2820 = vunpack.c.l.b16 %v2788
      %v2821 = vunpack.c.l.b16 %v2789
      %v2822 = vunpack.c.l.b16 %v2790
      %v2823 = vpack.c.b16 %v2808, %v2807
      %v2824 = vpack.c.b16 %v2810, %v2809
      %v2825 = vpack.c.b16 %v2812, %v2811
      %v2826 = vpack.c.b16 %v2814, %v2813
      %v2827 = vpack.c.b16 %v2816, %v2815
      %v2828 = vpack.c.b16 %v2818, %v2817
      %v2829 = vpack.c.b16 %v2820, %v2819
      %v2830 = vpack.c.b16 %v2822, %v2821
      %2839 = vmatprep.subr.bf16.mxu0 0
      %2840 = vmatpush1.bf16.msra.mxu0 %v2823
      %2841 = vmatprep.subr.bf16.mxu0 0
      %2842 = vmatpush1.bf16.msra.mxu0 %v2824
      %2843 = vmatprep.subr.bf16.mxu0 0
      %2844 = vmatpush1.bf16.msra.mxu0 %v2825
      %2845 = vmatprep.subr.bf16.mxu0 0
      %2846 = vmatpush1.bf16.msra.mxu0 %v2826
      %2847 = vmatprep.subr.bf16.mxu0 0
      %2848 = vmatpush1.bf16.msra.mxu0 %v2827
      %2849 = vmatprep.subr.bf16.mxu0 0
      %2850 = vmatpush1.bf16.msra.mxu0 %v2828
      %2851 = vmatprep.subr.bf16.mxu0 0
      %2852 = vmatpush1.bf16.msra.mxu0 %v2829
      %2853 = vmatprep.subr.bf16.mxu0 0
      %2854 = vmatpush1.bf16.msra.mxu0 %v2830
      %2855 = vmatprep.subr.bf16.mxu0 0
      %2856 = vmatpush1.bf16.msra.mxu0 0
      %2857 = vmatprep.subr.bf16.mxu0 0
      %2858 = vmatpush1.bf16.msra.mxu0 0
      %2859 = vmatprep.subr.bf16.mxu0 0
      %2860 = vmatpush1.bf16.msra.mxu0 0
      %2861 = vmatprep.subr.bf16.mxu0 0
      %2862 = vmatpush1.bf16.msra.mxu0 0
      %2863 = vmatprep.subr.bf16.mxu0 0
      %2864 = vmatpush1.bf16.msra.mxu0 0
      %2865 = vmatprep.subr.bf16.mxu0 0
      %2866 = vmatpush1.bf16.msra.mxu0 0
      %2867 = vmatprep.subr.bf16.mxu0 0
      %2868 = vmatpush1.bf16.msra.mxu0 0
      %2869 = vmatprep.subr.bf16.mxu0 0
      %2870 = vmatpush1.bf16.msra.mxu0 0
      %2871 = vmatprep.mubr.bf16.mxu0 0
      %2872 = vmatmul.mubr.bf16.gmra.mrb[0].mxu0 %v2763
      %v2873 = vpop.f32.mrb[0].mxu0
      %v2874 = vadd.f32 0.0, %v2873
      %v2875 = vpop.f32.mrb[0].mxu0
      %v2876 = vpop.f32.mrb[0].mxu0
      %v2877 = vadd.f32 0.0, %v2876
      %v2878 = vpop.f32.mrb[0].mxu0
      %2879 = vmatprep.mubr.bf16.mxu0 0
      %2880 = vmatmul.mubr.bf16.gmra.mrb[0].mxu0 %v2764
      %v2881 = vpop.f32.mrb[0].mxu0
      %v2882 = vadd.f32 0.0, %v2881
      %v2883 = vpop.f32.mrb[0].mxu0
      %v2884 = vpop.f32.mrb[0].mxu0
      %v2885 = vadd.f32 0.0, %v2884
      %v2886 = vpop.f32.mrb[0].mxu0
      %2887 = vmatprep.mubr.bf16.mxu0 0
      %2888 = vmatmul.mubr.bf16.gmra.mrb[0].mxu0 %v2765
      %v2889 = vpop.f32.mrb[0].mxu0
      %v2890 = vadd.f32 0.0, %v2889
      %v2891 = vpop.f32.mrb[0].mxu0
      %v2892 = vpop.f32.mrb[0].mxu0
      %v2893 = vadd.f32 0.0, %v2892
      %v2894 = vpop.f32.mrb[0].mxu0
      %2895 = vmatprep.mubr.bf16.mxu0 0
      %2896 = vmatmul.mubr.bf16.gmra.mrb[0].mxu0 %v2766
      %v2897 = vpop.f32.mrb[0].mxu0
      %v2898 = vadd.f32 0.0, %v2897
      %v2899 = vpop.f32.mrb[0].mxu0
      %v2900 = vpop.f32.mrb[0].mxu0
      %v2901 = vadd.f32 0.0, %v2900
      %v2902 = vpop.f32.mrb[0].mxu0
      %2903 = vmatprep.mubr.bf16.mxu0 0
      %2904 = vmatmul.mubr.bf16.gmra.mrb[0].mxu0 %v2767
      %v2905 = vpop.f32.mrb[0].mxu0
      %v2906 = vadd.f32 0.0, %v2905
      %v2907 = vpop.f32.mrb[0].mxu0
      %v2908 = vpop.f32.mrb[0].mxu0
      %v2909 = vadd.f32 0.0, %v2908
      %v2910 = vpop.f32.mrb[0].mxu0
      %2911 = vmatprep.mubr.bf16.mxu0 0
      %2912 = vmatmul.mubr.bf16.gmra.mrb[0].mxu0 %v2768
      %v2913 = vpop.f32.mrb[0].mxu0
      %v2914 = vadd.f32 0.0, %v2913
      %v2915 = vpop.f32.mrb[0].mxu0
      %v2916 = vpop.f32.mrb[0].mxu0
      %v2917 = vadd.f32 0.0, %v2916
      %v2918 = vpop.f32.mrb[0].mxu0
      %2919 = vmatprep.mubr.bf16.mxu0 0
      %2920 = vmatmul.mubr.bf16.gmra.mrb[0].mxu0 %v2769
      %v2921 = vpop.f32.mrb[0].mxu0
      %v2922 = vadd.f32 0.0, %v2921
      %v2923 = vpop.f32.mrb[0].mxu0
      %v2924 = vpop.f32.mrb[0].mxu0
      %v2925 = vadd.f32 0.0, %v2924
      %v2926 = vpop.f32.mrb[0].mxu0
      %2927 = vmatprep.mubr.bf16.mxu0 0
      %2928 = vmatmul.mubr.bf16.gmra.mrb[0].mxu0 %v2770
      %v2929 = vpop.f32.mrb[0].mxu0
      %v2930 = vadd.f32 0.0, %v2929
      %v2931 = vpop.f32.mrb[0].mxu0
      %v2932 = vpop.f32.mrb[0].mxu0
      %v2933 = vadd.f32 0.0, %v2932
      %v2934 = vpop.f32.mrb[0].mxu0
      %2935 = vmatprep.mubr.bf16.mxu0 0
      %2936 = vmatmul.mubr.bf16.gmra.mrb[0].mxu0 %v2771
      %v2937 = vpop.f32.mrb[0].mxu0
      %v2938 = vadd.f32 0.0, %v2937
      %v2939 = vpop.f32.mrb[0].mxu0
      %v2940 = vpop.f32.mrb[0].mxu0
      %v2941 = vadd.f32 0.0, %v2940
      %v2942 = vpop.f32.mrb[0].mxu0
      %2943 = vmatprep.mubr.bf16.mxu0 0
      %2944 = vmatmul.mubr.bf16.gmra.mrb[0].mxu0 %v2772
      %v2945 = vpop.f32.mrb[0].mxu0
      %v2946 = vadd.f32 0.0, %v2945
      %v2947 = vpop.f32.mrb[0].mxu0
      %v2948 = vpop.f32.mrb[0].mxu0
      %v2949 = vadd.f32 0.0, %v2948
      %v2950 = vpop.f32.mrb[0].mxu0
      %2951 = vmatprep.mubr.bf16.mxu0 0
      %2952 = vmatmul.mubr.bf16.gmra.mrb[0].mxu0 %v2773
      %v2953 = vpop.f32.mrb[0].mxu0
      %v2954 = vadd.f32 0.0, %v2953
      %v2955 = vpop.f32.mrb[0].mxu0
      %v2956 = vpop.f32.mrb[0].mxu0
      %v2957 = vadd.f32 0.0, %v2956
      %v2958 = vpop.f32.mrb[0].mxu0
      %2959 = vmatprep.mubr.bf16.mxu0 0
      %2960 = vmatmul.mubr.bf16.gmra.mrb[0].mxu0 %v2774
      %v2961 = vpop.f32.mrb[0].mxu0
      %v2962 = vadd.f32 0.0, %v2961
      %v2963 = vpop.f32.mrb[0].mxu0
      %v2964 = vpop.f32.mrb[0].mxu0
      %v2965 = vadd.f32 0.0, %v2964
      %v2966 = vpop.f32.mrb[0].mxu0
      %2967 = vdwg.mxu0
      %v2984 = vunpack.c.l.b16 %v2744
      %v2985 = vunpack.c.l.b16 %v2745
      %v2986 = vunpack.c.l.b16 %v2746
      %v2987 = vunpack.c.l.b16 %v2747
      %v2988 = vunpack.c.l.b16 %v2748
      %v2989 = vunpack.c.l.b16 %v2749
      %v2990 = vunpack.c.l.b16 %v2750
      %v2991 = vunpack.c.l.b16 %v2751
      %v2992 = vunpack.c.l.b16 %v2752
      %v2993 = vunpack.c.l.b16 %v2753
      %v2994 = vunpack.c.l.b16 %v2754
      %v2995 = vunpack.c.l.b16 %v2755
      %v2996 = vunpack.c.l.b16 %v2756
      %v2997 = vunpack.c.l.b16 %v2757
      %v2998 = vunpack.c.l.b16 %v2758
      %v2999 = vunpack.c.l.b16 %v2759
      %v3000 = vpack.c.b16 %v2985, %v2984
      %v3001 = vpack.c.b16 %v2987, %v2986
      %v3002 = vpack.c.b16 %v2989, %v2988
      %v3003 = vpack.c.b16 %v2991, %v2990
      %v3004 = vpack.c.b16 %v2993, %v2992
      %v3005 = vpack.c.b16 %v2995, %v2994
      %v3006 = vpack.c.b16 %v2997, %v2996
      %v3007 = vpack.c.b16 %v2999, %v2998
      %3016 = vmatprep.subr.bf16.mxu0 0
      %3017 = vmatpush1.bf16.msra.mxu0 %v3000
      %3018 = vmatprep.subr.bf16.mxu0 0
      %3019 = vmatpush1.bf16.msra.mxu0 %v3001
      %3020 = vmatprep.subr.bf16.mxu0 0
      %3021 = vmatpush1.bf16.msra.mxu0 %v3002
      %3022 = vmatprep.subr.bf16.mxu0 0
      %3023 = vmatpush1.bf16.msra.mxu0 %v3003
      %3024 = vmatprep.subr.bf16.mxu0 0
      %3025 = vmatpush1.bf16.msra.mxu0 %v3004
      %3026 = vmatprep.subr.bf16.mxu0 0
      %3027 = vmatpush1.bf16.msra.mxu0 %v3005
      %3028 = vmatprep.subr.bf16.mxu0 0
      %3029 = vmatpush1.bf16.msra.mxu0 %v3006
      %3030 = vmatprep.subr.bf16.mxu0 0
      %3031 = vmatpush1.bf16.msra.mxu0 %v3007
      %3032 = vmatprep.subr.bf16.mxu0 0
      %3033 = vmatpush1.bf16.msra.mxu0 0
      %3034 = vmatprep.subr.bf16.mxu0 0
      %3035 = vmatpush1.bf16.msra.mxu0 0
      %3036 = vmatprep.subr.bf16.mxu0 0
      %3037 = vmatpush1.bf16.msra.mxu0 0
      %3038 = vmatprep.subr.bf16.mxu0 0
      %3039 = vmatpush1.bf16.msra.mxu0 0
      %3040 = vmatprep.subr.bf16.mxu0 0
      %3041 = vmatpush1.bf16.msra.mxu0 0
      %3042 = vmatprep.subr.bf16.mxu0 0
      %3043 = vmatpush1.bf16.msra.mxu0 0
      %3044 = vmatprep.subr.bf16.mxu0 0
      %3045 = vmatpush1.bf16.msra.mxu0 0
      %3046 = vmatprep.subr.bf16.mxu0 0
      %3047 = vmatpush1.bf16.msra.mxu0 0
      %3048 = vmatprep.mubr.bf16.mxu0 0
      %3049 = vmatmul.mubr.bf16.gmra.mrb[0].mxu0 %v2732
      %v3050 = vpop.f32.mrb[0].mxu0
      %v3051 = vadd.f32 %v2874, %v3050
      %v3052 = vpop.f32.mrb[0].mxu0
      %v3053 = vpop.f32.mrb[0].mxu0
      %v3054 = vadd.f32 %v2877, %v3053
      %v3055 = vpop.f32.mrb[0].mxu0
      %3056 = vmatprep.mubr.bf16.mxu0 0
      %3057 = vmatmul.mubr.bf16.gmra.mrb[0].mxu0 %v2733
      %v3058 = vpop.f32.mrb[0].mxu0
      %v3059 = vadd.f32 %v2882, %v3058
      %v3060 = vpop.f32.mrb[0].mxu0
      %v3061 = vpop.f32.mrb[0].mxu0
      %v3062 = vadd.f32 %v2885, %v3061
      %v3063 = vpop.f32.mrb[0].mxu0
      %3064 = vmatprep.mubr.bf16.mxu0 0
      %3065 = vmatmul.mubr.bf16.gmra.mrb[0].mxu0 %v2734
      %v3066 = vpop.f32.mrb[0].mxu0
      %v3067 = vadd.f32 %v2890, %v3066
      %v3068 = vpop.f32.mrb[0].mxu0
      %v3069 = vpop.f32.mrb[0].mxu0
      %v3070 = vadd.f32 %v2893, %v3069
      %v3071 = vpop.f32.mrb[0].mxu0
      %3072 = vmatprep.mubr.bf16.mxu0 0
      %3073 = vmatmul.mubr.bf16.gmra.mrb[0].mxu0 %v2735
      %v3074 = vpop.f32.mrb[0].mxu0
      %v3075 = vadd.f32 %v2898, %v3074
      %v3076 = vpop.f32.mrb[0].mxu0
      %v3077 = vpop.f32.mrb[0].mxu0
      %v3078 = vadd.f32 %v2901, %v3077
      %v3079 = vpop.f32.mrb[0].mxu0
      %3080 = vmatprep.mubr.bf16.mxu0 0
      %3081 = vmatmul.mubr.bf16.gmra.mrb[0].mxu0 %v2736
      %v3082 = vpop.f32.mrb[0].mxu0
      %v3083 = vadd.f32 %v2906, %v3082
      %v3084 = vpop.f32.mrb[0].mxu0
      %v3085 = vpop.f32.mrb[0].mxu0
      %v3086 = vadd.f32 %v2909, %v3085
      %v3087 = vpop.f32.mrb[0].mxu0
      %3088 = vmatprep.mubr.bf16.mxu0 0
      %3089 = vmatmul.mubr.bf16.gmra.mrb[0].mxu0 %v2737
      %v3090 = vpop.f32.mrb[0].mxu0
      %v3091 = vadd.f32 %v2914, %v3090
      %v3092 = vpop.f32.mrb[0].mxu0
      %v3093 = vpop.f32.mrb[0].mxu0
      %v3094 = vadd.f32 %v2917, %v3093
      %v3095 = vpop.f32.mrb[0].mxu0
      %3096 = vmatprep.mubr.bf16.mxu0 0
      %3097 = vmatmul.mubr.bf16.gmra.mrb[0].mxu0 %v2738
      %v3098 = vpop.f32.mrb[0].mxu0
      %v3099 = vadd.f32 %v2922, %v3098
      %v3100 = vpop.f32.mrb[0].mxu0
      %v3101 = vpop.f32.mrb[0].mxu0
      %v3102 = vadd.f32 %v2925, %v3101
      %v3103 = vpop.f32.mrb[0].mxu0
      %3104 = vmatprep.mubr.bf16.mxu0 0
      %3105 = vmatmul.mubr.bf16.gmra.mrb[0].mxu0 %v2739
      %v3106 = vpop.f32.mrb[0].mxu0
      %v3107 = vadd.f32 %v2930, %v3106
      %v3108 = vpop.f32.mrb[0].mxu0
      %v3109 = vpop.f32.mrb[0].mxu0
      %v3110 = vadd.f32 %v2933, %v3109
      %v3111 = vpop.f32.mrb[0].mxu0
      %3112 = vmatprep.mubr.bf16.mxu0 0
      %3113 = vmatmul.mubr.bf16.gmra.mrb[0].mxu0 %v2740
      %v3114 = vpop.f32.mrb[0].mxu0
      %v3115 = vadd.f32 %v2938, %v3114
      %v3116 = vpop.f32.mrb[0].mxu0
      %v3117 = vpop.f32.mrb[0].mxu0
      %v3118 = vadd.f32 %v2941, %v3117
      %v3119 = vpop.f32.mrb[0].mxu0
      %3120 = vmatprep.mubr.bf16.mxu0 0
      %3121 = vmatmul.mubr.bf16.gmra.mrb[0].mxu0 %v2741
      %v3122 = vpop.f32.mrb[0].mxu0
      %v3123 = vadd.f32 %v2946, %v3122
      %v3124 = vpop.f32.mrb[0].mxu0
      %v3125 = vpop.f32.mrb[0].mxu0
      %v3126 = vadd.f32 %v2949, %v3125
      %v3127 = vpop.f32.mrb[0].mxu0
      %3128 = vmatprep.mubr.bf16.mxu0 0
      %3129 = vmatmul.mubr.bf16.gmra.mrb[0].mxu0 %v2742
      %v3130 = vpop.f32.mrb[0].mxu0
      %v3131 = vadd.f32 %v2954, %v3130
      %v3132 = vpop.f32.mrb[0].mxu0
      %v3133 = vpop.f32.mrb[0].mxu0
      %v3134 = vadd.f32 %v2957, %v3133
      %v3135 = vpop.f32.mrb[0].mxu0
      %3136 = vmatprep.mubr.bf16.mxu0 0
      %3137 = vmatmul.mubr.bf16.gmra.mrb[0].mxu0 %v2743
      %v3138 = vpop.f32.mrb[0].mxu0
      %v3139 = vadd.f32 %v2962, %v3138
      %v3140 = vpop.f32.mrb[0].mxu0
      %v3141 = vpop.f32.mrb[0].mxu0
      %v3142 = vadd.f32 %v2965, %v3141
      %v3143 = vpop.f32.mrb[0].mxu0
      %3144 = vdwg.mxu0
      %v3145 = vld [vmem:[#allocation2 + $0x30] sm:$0xff]
      %v3146 = vld [vmem:[#allocation2 + $0x38] sm:$0xff]
      %v3147 = vld [vmem:[#allocation2 + $0x40] sm:$0xff]
      %v3148 = vld [vmem:[#allocation2 + $0x48] sm:$0xff]
      %v3149 = vld [vmem:[#allocation2 + $0x50] sm:$0xff]
      %v3150 = vld [vmem:[#allocation2 + $0x58] sm:$0xff]
      %v3151 = vld [vmem:[#allocation2 + $0x60] sm:$0xff]
      %v3152 = vld [vmem:[#allocation2 + $0x68] sm:$0xff]
      %v3153 = vld [vmem:[#allocation2 + $0x70] sm:$0xff]
      %v3154 = vld [vmem:[#allocation2 + $0x78] sm:$0xff]
      %v3155 = vld [vmem:[#allocation2 + $0x80] sm:$0xff]
      %v3156 = vld [vmem:[#allocation2 + $0x88] sm:$0xff]
      %v3157 = vld [vmem:[#allocation2 + $0x90] sm:$0xff]
      %v3158 = vld [vmem:[#allocation2 + $0x98] sm:$0xff]
      %v3159 = vld [vmem:[#allocation2 + $0xa0] sm:$0xff]
      %v3160 = vld [vmem:[#allocation2 + $0xa8] sm:$0xff]
      %v3161 = vld [vmem:[#allocation2 + $0xb0] sm:$0xff]
      %v3162 = vld [vmem:[#allocation2 + $0xb8] sm:$0xff]
      %v3163 = vld [vmem:[#allocation2 + $0xc0] sm:$0xff]
      %v3164 = vld [vmem:[#allocation2 + $0xc8] sm:$0xff]
      %v3165 = vld [vmem:[#allocation2 + $0xd0] sm:$0xff]
      %v3166 = vld [vmem:[#allocation2 + $0xd8] sm:$0xff]
      %v3167 = vld [vmem:[#allocation2 + $0xe0] sm:$0xff]
      %v3168 = vld [vmem:[#allocation2 + $0xe8] sm:$0xff]
      %v3169 = vpack.c.bf16 %v3146, %v3145
      %v3170 = vpack.c.bf16 %v3148, %v3147
      %v3171 = vpack.c.bf16 %v3150, %v3149
      %v3172 = vpack.c.bf16 %v3152, %v3151
      %v3173 = vpack.c.bf16 %v3154, %v3153
      %v3174 = vpack.c.bf16 %v3156, %v3155
      %v3175 = vpack.c.bf16 %v3158, %v3157
      %v3176 = vpack.c.bf16 %v3160, %v3159
      %v3177 = vpack.c.bf16 %v3162, %v3161
      %v3178 = vpack.c.bf16 %v3164, %v3163
      %v3179 = vpack.c.bf16 %v3166, %v3165
      %v3180 = vpack.c.bf16 %v3168, %v3167
      %v3181 = vld [vmem:[%s1 + $0x140] sm:$0xf]
      %v3182 = vld [vmem:[%s1 + $0x144] sm:$0xf]
      %v3183 = vld [vmem:[%s1 + $0x148] sm:$0xf]
      %v3184 = vld [vmem:[%s1 + $0x14c] sm:$0xf]
      %v3185 = vld [vmem:[%s1 + $0x150] sm:$0xf]
      %v3186 = vld [vmem:[%s1 + $0x154] sm:$0xf]
      %v3187 = vld [vmem:[%s1 + $0x158] sm:$0xf]
      %v3188 = vld [vmem:[%s1 + $0x15c] sm:$0xf]
      %v3189 = vld [vmem:[%s1 + $0x160] sm:$0xf]
      %v3190 = vld [vmem:[%s1 + $0x164] sm:$0xf]
      %v3191 = vld [vmem:[%s1 + $0x168] sm:$0xf]
      %v3192 = vld [vmem:[%s1 + $0x16c] sm:$0xf]
      %v3193 = vld [vmem:[%s1 + $0x170] sm:$0xf]
      %v3194 = vld [vmem:[%s1 + $0x174] sm:$0xf]
      %v3195 = vld [vmem:[%s1 + $0x178] sm:$0xf]
      %v3196 = vld [vmem:[%s1 + $0x17c] sm:$0xf]
      %v3213 = vunpack.c.l.b16 %v3181
      %v3214 = vunpack.c.l.b16 %v3182
      %v3215 = vunpack.c.l.b16 %v3183
      %v3216 = vunpack.c.l.b16 %v3184
      %v3217 = vunpack.c.l.b16 %v3185
      %v3218 = vunpack.c.l.b16 %v3186
      %v3219 = vunpack.c.l.b16 %v3187
      %v3220 = vunpack.c.l.b16 %v3188
      %v3221 = vunpack.c.l.b16 %v3189
      %v3222 = vunpack.c.l.b16 %v3190
      %v3223 = vunpack.c.l.b16 %v3191
      %v3224 = vunpack.c.l.b16 %v3192
      %v3225 = vunpack.c.l.b16 %v3193
      %v3226 = vunpack.c.l.b16 %v3194
      %v3227 = vunpack.c.l.b16 %v3195
      %v3228 = vunpack.c.l.b16 %v3196
      %v3229 = vpack.c.b16 %v3214, %v3213
      %v3230 = vpack.c.b16 %v3216, %v3215
      %v3231 = vpack.c.b16 %v3218, %v3217
      %v3232 = vpack.c.b16 %v3220, %v3219
      %v3233 = vpack.c.b16 %v3222, %v3221
      %v3234 = vpack.c.b16 %v3224, %v3223
      %v3235 = vpack.c.b16 %v3226, %v3225
      %v3236 = vpack.c.b16 %v3228, %v3227
      %3245 = vmatprep.subr.bf16.mxu0 0
      %3246 = vmatpush1.bf16.msra.mxu0 %v3229
      %3247 = vmatprep.subr.bf16.mxu0 0
      %3248 = vmatpush1.bf16.msra.mxu0 %v3230
      %3249 = vmatprep.subr.bf16.mxu0 0
      %3250 = vmatpush1.bf16.msra.mxu0 %v3231
      %3251 = vmatprep.subr.bf16.mxu0 0
      %3252 = vmatpush1.bf16.msra.mxu0 %v3232
      %3253 = vmatprep.subr.bf16.mxu0 0
      %3254 = vmatpush1.bf16.msra.mxu0 %v3233
      %3255 = vmatprep.subr.bf16.mxu0 0
      %3256 = vmatpush1.bf16.msra.mxu0 %v3234
      %3257 = vmatprep.subr.bf16.mxu0 0
      %3258 = vmatpush1.bf16.msra.mxu0 %v3235
      %3259 = vmatprep.subr.bf16.mxu0 0
      %3260 = vmatpush1.bf16.msra.mxu0 %v3236
      %3261 = vmatprep.subr.bf16.mxu0 0
      %3262 = vmatpush1.bf16.msra.mxu0 0
      %3263 = vmatprep.subr.bf16.mxu0 0
      %3264 = vmatpush1.bf16.msra.mxu0 0
      %3265 = vmatprep.subr.bf16.mxu0 0
      %3266 = vmatpush1.bf16.msra.mxu0 0
      %3267 = vmatprep.subr.bf16.mxu0 0
      %3268 = vmatpush1.bf16.msra.mxu0 0
      %3269 = vmatprep.subr.bf16.mxu0 0
      %3270 = vmatpush1.bf16.msra.mxu0 0
      %3271 = vmatprep.subr.bf16.mxu0 0
      %3272 = vmatpush1.bf16.msra.mxu0 0
      %3273 = vmatprep.subr.bf16.mxu0 0
      %3274 = vmatpush1.bf16.msra.mxu0 0
      %3275 = vmatprep.subr.bf16.mxu0 0
      %3276 = vmatpush1.bf16.msra.mxu0 0
      %3277 = vmatprep.mubr.bf16.mxu0 0
      %3278 = vmatmul.mubr.bf16.gmra.mrb[0].mxu0 %v3169
      %v3279 = vpop.f32.mrb[0].mxu0
      %v3280 = vadd.f32 0.0, %v3279
      %v3281 = vpop.f32.mrb[0].mxu0
      %v3282 = vpop.f32.mrb[0].mxu0
      %v3283 = vadd.f32 0.0, %v3282
      %v3284 = vpop.f32.mrb[0].mxu0
      %3285 = vmatprep.mubr.bf16.mxu0 0
      %3286 = vmatmul.mubr.bf16.gmra.mrb[0].mxu0 %v3170
      %v3287 = vpop.f32.mrb[0].mxu0
      %v3288 = vadd.f32 0.0, %v3287
      %v3289 = vpop.f32.mrb[0].mxu0
      %v3290 = vpop.f32.mrb[0].mxu0
      %v3291 = vadd.f32 0.0, %v3290
      %v3292 = vpop.f32.mrb[0].mxu0
      %3293 = vmatprep.mubr.bf16.mxu0 0
      %3294 = vmatmul.mubr.bf16.gmra.mrb[0].mxu0 %v3171
      %v3295 = vpop.f32.mrb[0].mxu0
      %v3296 = vadd.f32 0.0, %v3295
      %v3297 = vpop.f32.mrb[0].mxu0
      %v3298 = vpop.f32.mrb[0].mxu0
      %v3299 = vadd.f32 0.0, %v3298
      %v3300 = vpop.f32.mrb[0].mxu0
      %3301 = vmatprep.mubr.bf16.mxu0 0
      %3302 = vmatmul.mubr.bf16.gmra.mrb[0].mxu0 %v3172
      %v3303 = vpop.f32.mrb[0].mxu0
      %v3304 = vadd.f32 0.0, %v3303
      %v3305 = vpop.f32.mrb[0].mxu0
      %v3306 = vpop.f32.mrb[0].mxu0
      %v3307 = vadd.f32 0.0, %v3306
      %v3308 = vpop.f32.mrb[0].mxu0
      %3309 = vmatprep.mubr.bf16.mxu0 0
      %3310 = vmatmul.mubr.bf16.gmra.mrb[0].mxu0 %v3173
      %v3311 = vpop.f32.mrb[0].mxu0
      %v3312 = vadd.f32 0.0, %v3311
      %v3313 = vpop.f32.mrb[0].mxu0
      %v3314 = vpop.f32.mrb[0].mxu0
      %v3315 = vadd.f32 0.0, %v3314
      %v3316 = vpop.f32.mrb[0].mxu0
      %3317 = vmatprep.mubr.bf16.mxu0 0
      %3318 = vmatmul.mubr.bf16.gmra.mrb[0].mxu0 %v3174
      %v3319 = vpop.f32.mrb[0].mxu0
      %v3320 = vadd.f32 0.0, %v3319
      %v3321 = vpop.f32.mrb[0].mxu0
      %v3322 = vpop.f32.mrb[0].mxu0
      %v3323 = vadd.f32 0.0, %v3322
      %v3324 = vpop.f32.mrb[0].mxu0
      %3325 = vmatprep.mubr.bf16.mxu0 0
      %3326 = vmatmul.mubr.bf16.gmra.mrb[0].mxu0 %v3175
      %v3327 = vpop.f32.mrb[0].mxu0
      %v3328 = vadd.f32 0.0, %v3327
      %v3329 = vpop.f32.mrb[0].mxu0
      %v3330 = vpop.f32.mrb[0].mxu0
      %v3331 = vadd.f32 0.0, %v3330
      %v3332 = vpop.f32.mrb[0].mxu0
      %3333 = vmatprep.mubr.bf16.mxu0 0
      %3334 = vmatmul.mubr.bf16.gmra.mrb[0].mxu0 %v3176
      %v3335 = vpop.f32.mrb[0].mxu0
      %v3336 = vadd.f32 0.0, %v3335
      %v3337 = vpop.f32.mrb[0].mxu0
      %v3338 = vpop.f32.mrb[0].mxu0
      %v3339 = vadd.f32 0.0, %v3338
      %v3340 = vpop.f32.mrb[0].mxu0
      %3341 = vmatprep.mubr.bf16.mxu0 0
      %3342 = vmatmul.mubr.bf16.gmra.mrb[0].mxu0 %v3177
      %v3343 = vpop.f32.mrb[0].mxu0
      %v3344 = vadd.f32 0.0, %v3343
      %v3345 = vpop.f32.mrb[0].mxu0
      %v3346 = vpop.f32.mrb[0].mxu0
      %v3347 = vadd.f32 0.0, %v3346
      %v3348 = vpop.f32.mrb[0].mxu0
      %3349 = vmatprep.mubr.bf16.mxu0 0
      %3350 = vmatmul.mubr.bf16.gmra.mrb[0].mxu0 %v3178
      %v3351 = vpop.f32.mrb[0].mxu0
      %v3352 = vadd.f32 0.0, %v3351
      %v3353 = vpop.f32.mrb[0].mxu0
      %v3354 = vpop.f32.mrb[0].mxu0
      %v3355 = vadd.f32 0.0, %v3354
      %v3356 = vpop.f32.mrb[0].mxu0
      %3357 = vmatprep.mubr.bf16.mxu0 0
      %3358 = vmatmul.mubr.bf16.gmra.mrb[0].mxu0 %v3179
      %v3359 = vpop.f32.mrb[0].mxu0
      %v3360 = vadd.f32 0.0, %v3359
      %v3361 = vpop.f32.mrb[0].mxu0
      %v3362 = vpop.f32.mrb[0].mxu0
      %v3363 = vadd.f32 0.0, %v3362
      %v3364 = vpop.f32.mrb[0].mxu0
      %3365 = vmatprep.mubr.bf16.mxu0 0
      %3366 = vmatmul.mubr.bf16.gmra.mrb[0].mxu0 %v3180
      %v3367 = vpop.f32.mrb[0].mxu0
      %v3368 = vadd.f32 0.0, %v3367
      %v3369 = vpop.f32.mrb[0].mxu0
      %v3370 = vpop.f32.mrb[0].mxu0
      %v3371 = vadd.f32 0.0, %v3370
      %v3372 = vpop.f32.mrb[0].mxu0
      %3373 = vdwg.mxu0
      %v3374 = vadd.f32 %v3051, %v3280
      %v3375 = vadd.f32 %v3054, %v3283
      %v3376 = vadd.f32 %v3059, %v3288
      %v3377 = vadd.f32 %v3062, %v3291
      %v3378 = vadd.f32 %v3067, %v3296
      %v3379 = vadd.f32 %v3070, %v3299
      %v3380 = vadd.f32 %v3075, %v3304
      %v3381 = vadd.f32 %v3078, %v3307
      %v3382 = vadd.f32 %v3083, %v3312
      %v3383 = vadd.f32 %v3086, %v3315
      %v3384 = vadd.f32 %v3091, %v3320
      %v3385 = vadd.f32 %v3094, %v3323
      %v3386 = vadd.f32 %v3099, %v3328
      %v3387 = vadd.f32 %v3102, %v3331
      %v3388 = vadd.f32 %v3107, %v3336
      %v3389 = vadd.f32 %v3110, %v3339
      %v3390 = vadd.f32 %v3115, %v3344
      %v3391 = vadd.f32 %v3118, %v3347
      %v3392 = vadd.f32 %v3123, %v3352
      %v3393 = vadd.f32 %v3126, %v3355
      %v3394 = vadd.f32 %v3131, %v3360
      %v3395 = vadd.f32 %v3134, %v3363
      %v3396 = vadd.f32 %v3139, %v3368
      %v3397 = vadd.f32 %v3142, %v3371
      %v3398 = vadd.f32 %v3374, %v2707
      %v3399 = vadd.f32 %v3375, %v2707
      %v3400 = vadd.f32 %v3376, %v2707
      %v3401 = vadd.f32 %v3377, %v2707
      %v3402 = vadd.f32 %v3378, %v2707
      %v3403 = vadd.f32 %v3379, %v2707
      %v3404 = vadd.f32 %v3380, %v2707
      %v3405 = vadd.f32 %v3381, %v2707
      %v3406 = vadd.f32 %v3382, %v2707
      %v3407 = vadd.f32 %v3383, %v2707
      %v3408 = vadd.f32 %v3384, %v2707
      %v3409 = vadd.f32 %v3385, %v2707
      %v3410 = vadd.f32 %v3386, %v2707
      %v3411 = vadd.f32 %v3387, %v2707
      %v3412 = vadd.f32 %v3388, %v2707
      %v3413 = vadd.f32 %v3389, %v2707
      %v3414 = vadd.f32 %v3390, %v2707
      %v3415 = vadd.f32 %v3391, %v2707
      %v3416 = vadd.f32 %v3392, %v2707
      %v3417 = vadd.f32 %v3393, %v2707
      %v3418 = vadd.f32 %v3394, %v2707
      %v3419 = vadd.f32 %v3395, %v2707
      %v3420 = vadd.f32 %v3396, %v2707
      %v3421 = vadd.f32 %v3397, %v2707
      %v3422 = vxor.u32 %v3398, 2147483648
      %v3423 = vxor.u32 %v3399, 2147483648
      %v3424 = vxor.u32 %v3400, 2147483648
      %v3425 = vxor.u32 %v3401, 2147483648
      %v3426 = vxor.u32 %v3402, 2147483648
      %v3427 = vxor.u32 %v3403, 2147483648
      %v3428 = vxor.u32 %v3404, 2147483648
      %v3429 = vxor.u32 %v3405, 2147483648
      %v3430 = vxor.u32 %v3406, 2147483648
      %v3431 = vxor.u32 %v3407, 2147483648
      %v3432 = vxor.u32 %v3408, 2147483648
      %v3433 = vxor.u32 %v3409, 2147483648
      %v3434 = vxor.u32 %v3410, 2147483648
      %v3435 = vxor.u32 %v3411, 2147483648
      %v3436 = vxor.u32 %v3412, 2147483648
      %v3437 = vxor.u32 %v3413, 2147483648
      %v3438 = vxor.u32 %v3414, 2147483648
      %v3439 = vxor.u32 %v3415, 2147483648
      %v3440 = vxor.u32 %v3416, 2147483648
      %v3441 = vxor.u32 %v3417, 2147483648
      %v3442 = vxor.u32 %v3418, 2147483648
      %v3443 = vxor.u32 %v3419, 2147483648
      %v3444 = vxor.u32 %v3420, 2147483648
      %v3445 = vxor.u32 %v3421, 2147483648
      %v3446 = vmul.f32 %v3422, 1.442695
      %v3447 = vpow.pop %v3446
      %v3448 = vmul.f32 %v3423, 1.442695
      %v3449 = vpow.pop %v3448
      %v3450 = vmul.f32 %v3424, 1.442695
      %v3451 = vpow.pop %v3450
      %v3452 = vmul.f32 %v3425, 1.442695
      %v3453 = vpow.pop %v3452
      %v3454 = vmul.f32 %v3426, 1.442695
      %v3455 = vpow.pop %v3454
      %v3456 = vmul.f32 %v3427, 1.442695
      %v3457 = vpow.pop %v3456
      %v3458 = vmul.f32 %v3428, 1.442695
      %v3459 = vpow.pop %v3458
      %v3460 = vmul.f32 %v3429, 1.442695
      %v3461 = vpow.pop %v3460
      %v3462 = vmul.f32 %v3430, 1.442695
      %v3463 = vpow.pop %v3462
      %v3464 = vmul.f32 %v3431, 1.442695
      %v3465 = vpow.pop %v3464
      %v3466 = vmul.f32 %v3432, 1.442695
      %v3467 = vpow.pop %v3466
      %v3468 = vmul.f32 %v3433, 1.442695
      %v3469 = vpow.pop %v3468
      %v3470 = vmul.f32 %v3434, 1.442695
      %v3471 = vpow.pop %v3470
      %v3472 = vmul.f32 %v3435, 1.442695
      %v3473 = vpow.pop %v3472
      %v3474 = vmul.f32 %v3436, 1.442695
      %v3475 = vpow.pop %v3474
      %v3476 = vmul.f32 %v3437, 1.442695
      %v3477 = vpow.pop %v3476
      %v3478 = vmul.f32 %v3438, 1.442695
      %v3479 = vpow.pop %v3478
      %v3480 = vmul.f32 %v3439, 1.442695
      %v3481 = vpow.pop %v3480
      %v3482 = vmul.f32 %v3440, 1.442695
      %v3483 = vpow.pop %v3482
      %v3484 = vmul.f32 %v3441, 1.442695
      %v3485 = vpow.pop %v3484
      %v3486 = vmul.f32 %v3442, 1.442695
      %v3487 = vpow.pop %v3486
      %v3488 = vmul.f32 %v3443, 1.442695
      %v3489 = vpow.pop %v3488
      %v3490 = vmul.f32 %v3444, 1.442695
      %v3491 = vpow.pop %v3490
      %v3492 = vmul.f32 %v3445, 1.442695
      %v3493 = vpow.pop %v3492
      %v3494 = vadd.f32 %v3447, 1.0
      %v3495 = vadd.f32 %v3449, 1.0
      %v3496 = vadd.f32 %v3451, 1.0
      %v3497 = vadd.f32 %v3453, 1.0
      %v3498 = vadd.f32 %v3455, 1.0
      %v3499 = vadd.f32 %v3457, 1.0
      %v3500 = vadd.f32 %v3459, 1.0
      %v3501 = vadd.f32 %v3461, 1.0
      %v3502 = vadd.f32 %v3463, 1.0
      %v3503 = vadd.f32 %v3465, 1.0
      %v3504 = vadd.f32 %v3467, 1.0
      %v3505 = vadd.f32 %v3469, 1.0
      %v3506 = vadd.f32 %v3471, 1.0
      %v3507 = vadd.f32 %v3473, 1.0
      %v3508 = vadd.f32 %v3475, 1.0
      %v3509 = vadd.f32 %v3477, 1.0
      %v3510 = vadd.f32 %v3479, 1.0
      %v3511 = vadd.f32 %v3481, 1.0
      %v3512 = vadd.f32 %v3483, 1.0
      %v3513 = vadd.f32 %v3485, 1.0
      %v3514 = vadd.f32 %v3487, 1.0
      %v3515 = vadd.f32 %v3489, 1.0
      %v3516 = vadd.f32 %v3491, 1.0
      %v3517 = vadd.f32 %v3493, 1.0
      %v3518 = vrcp.pop %v3494
      %v3519 = vmul.f32 1.0, %v3518
      %v3520 = vrcp.pop %v3495
      %v3521 = vmul.f32 1.0, %v3520
      %v3522 = vrcp.pop %v3496
      %v3523 = vmul.f32 1.0, %v3522
      %v3524 = vrcp.pop %v3497
      %v3525 = vmul.f32 1.0, %v3524
      %v3526 = vrcp.pop %v3498
      %v3527 = vmul.f32 1.0, %v3526
      %v3528 = vrcp.pop %v3499
      %v3529 = vmul.f32 1.0, %v3528
      %v3530 = vrcp.pop %v3500
      %v3531 = vmul.f32 1.0, %v3530
      %v3532 = vrcp.pop %v3501
      %v3533 = vmul.f32 1.0, %v3532
      %v3534 = vrcp.pop %v3502
      %v3535 = vmul.f32 1.0, %v3534
      %v3536 = vrcp.pop %v3503
      %v3537 = vmul.f32 1.0, %v3536
      %v3538 = vrcp.pop %v3504
      %v3539 = vmul.f32 1.0, %v3538
      %v3540 = vrcp.pop %v3505
      %v3541 = vmul.f32 1.0, %v3540
      %v3542 = vrcp.pop %v3506
      %v3543 = vmul.f32 1.0, %v3542
      %v3544 = vrcp.pop %v3507
      %v3545 = vmul.f32 1.0, %v3544
      %v3546 = vrcp.pop %v3508
      %v3547 = vmul.f32 1.0, %v3546
      %v3548 = vrcp.pop %v3509
      %v3549 = vmul.f32 1.0, %v3548
      %v3550 = vrcp.pop %v3510
      %v3551 = vmul.f32 1.0, %v3550
      %v3552 = vrcp.pop %v3511
      %v3553 = vmul.f32 1.0, %v3552
      %v3554 = vrcp.pop %v3512
      %v3555 = vmul.f32 1.0, %v3554
      %v3556 = vrcp.pop %v3513
      %v3557 = vmul.f32 1.0, %v3556
      %v3558 = vrcp.pop %v3514
      %v3559 = vmul.f32 1.0, %v3558
      %v3560 = vrcp.pop %v3515
      %v3561 = vmul.f32 1.0, %v3560
      %v3562 = vrcp.pop %v3516
      %v3563 = vmul.f32 1.0, %v3562
      %v3564 = vrcp.pop %v3517
      %v3565 = vmul.f32 1.0, %v3564
      %v3566 = vmul.f32 %v3398, %v3519
      %v3567 = vmul.f32 %v3399, %v3521
      %v3568 = vmul.f32 %v3400, %v3523
      %v3569 = vmul.f32 %v3401, %v3525
      %v3570 = vmul.f32 %v3402, %v3527
      %v3571 = vmul.f32 %v3403, %v3529
      %v3572 = vmul.f32 %v3404, %v3531
      %v3573 = vmul.f32 %v3405, %v3533
      %v3574 = vmul.f32 %v3406, %v3535
      %v3575 = vmul.f32 %v3407, %v3537
      %v3576 = vmul.f32 %v3408, %v3539
      %v3577 = vmul.f32 %v3409, %v3541
      %v3578 = vmul.f32 %v3410, %v3543
      %v3579 = vmul.f32 %v3411, %v3545
      %v3580 = vmul.f32 %v3412, %v3547
      %v3581 = vmul.f32 %v3413, %v3549
      %v3582 = vmul.f32 %v3414, %v3551
      %v3583 = vmul.f32 %v3415, %v3553
      %v3584 = vmul.f32 %v3416, %v3555
      %v3585 = vmul.f32 %v3417, %v3557
      %v3586 = vmul.f32 %v3418, %v3559
      %v3587 = vmul.f32 %v3419, %v3561
      %v3588 = vmul.f32 %v3420, %v3563
      %v3589 = vmul.f32 %v3421, %v3565
      %v3590 = vld [vmem:[%s3] sm:$0xf]
      %v3591 = vld [vmem:[%s3 + $0x4] sm:$0xf]
      %v3592 = vld [vmem:[%s3 + $0x8] sm:$0xf]
      %v3593 = vld [vmem:[%s3 + $0xc] sm:$0xf]
      %v3594 = vld [vmem:[%s3 + $0x10] sm:$0xf]
      %v3595 = vld [vmem:[%s3 + $0x14] sm:$0xf]
      %v3596 = vld [vmem:[%s3 + $0x18] sm:$0xf]
      %v3597 = vld [vmem:[%s3 + $0x1c] sm:$0xf]
      %v3598 = vld [vmem:[%s3 + $0x20] sm:$0xf]
      %v3599 = vld [vmem:[%s3 + $0x24] sm:$0xf]
      %v3600 = vld [vmem:[%s3 + $0x28] sm:$0xf]
      %v3601 = vld [vmem:[%s3 + $0x2c] sm:$0xf]
      %v3602 = vld [vmem:[%s3 + $0x30] sm:$0xf]
      %v3603 = vld [vmem:[%s3 + $0x34] sm:$0xf]
      %v3604 = vld [vmem:[%s3 + $0x38] sm:$0xf]
      %v3605 = vld [vmem:[%s3 + $0x3c] sm:$0xf]
      %v3606 = vld [vmem:[%s3 + $0x40] sm:$0xf]
      %v3607 = vld [vmem:[%s3 + $0x44] sm:$0xf]
      %v3608 = vld [vmem:[%s3 + $0x48] sm:$0xf]
      %v3609 = vld [vmem:[%s3 + $0x4c] sm:$0xf]
      %v3610 = vld [vmem:[%s3 + $0x50] sm:$0xf]
      %v3611 = vld [vmem:[%s3 + $0x54] sm:$0xf]
      %v3612 = vld [vmem:[%s3 + $0x58] sm:$0xf]
      %v3613 = vld [vmem:[%s3 + $0x5c] sm:$0xf]
      %v3614 = vunpack.c.l.bf16 %v3590
      %v3615 = vunpack.c.l.bf16 %v3591
      %v3616 = vunpack.c.l.bf16 %v3592
      %v3617 = vunpack.c.l.bf16 %v3593
      %v3618 = vunpack.c.l.bf16 %v3594
      %v3619 = vunpack.c.l.bf16 %v3595
      %v3620 = vunpack.c.l.bf16 %v3596
      %v3621 = vunpack.c.l.bf16 %v3597
      %v3622 = vunpack.c.l.bf16 %v3598
      %v3623 = vunpack.c.l.bf16 %v3599
      %v3624 = vunpack.c.l.bf16 %v3600
      %v3625 = vunpack.c.l.bf16 %v3601
      %v3626 = vunpack.c.l.bf16 %v3602
      %v3627 = vunpack.c.l.bf16 %v3603
      %v3628 = vunpack.c.l.bf16 %v3604
      %v3629 = vunpack.c.l.bf16 %v3605
      %v3630 = vunpack.c.l.bf16 %v3606
      %v3631 = vunpack.c.l.bf16 %v3607
      %v3632 = vunpack.c.l.bf16 %v3608
      %v3633 = vunpack.c.l.bf16 %v3609
      %v3634 = vunpack.c.l.bf16 %v3610
      %v3635 = vunpack.c.l.bf16 %v3611
      %v3636 = vunpack.c.l.bf16 %v3612
      %v3637 = vunpack.c.l.bf16 %v3613
      %v3638 = vmul.f32 %v3566, %v3614
      %v3639 = vmul.f32 %v3567, %v3615
      %v3640 = vmul.f32 %v3568, %v3616
      %v3641 = vmul.f32 %v3569, %v3617
      %v3642 = vmul.f32 %v3570, %v3618
      %v3643 = vmul.f32 %v3571, %v3619
      %v3644 = vmul.f32 %v3572, %v3620
      %v3645 = vmul.f32 %v3573, %v3621
      %v3646 = vmul.f32 %v3574, %v3622
      %v3647 = vmul.f32 %v3575, %v3623
      %v3648 = vmul.f32 %v3576, %v3624
      %v3649 = vmul.f32 %v3577, %v3625
      %v3650 = vmul.f32 %v3578, %v3626
      %v3651 = vmul.f32 %v3579, %v3627
      %v3652 = vmul.f32 %v3580, %v3628
      %v3653 = vmul.f32 %v3581, %v3629
      %v3654 = vmul.f32 %v3582, %v3630
      %v3655 = vmul.f32 %v3583, %v3631
      %v3656 = vmul.f32 %v3584, %v3632
      %v3657 = vmul.f32 %v3585, %v3633
      %v3658 = vmul.f32 %v3586, %v3634
      %v3659 = vmul.f32 %v3587, %v3635
      %v3660 = vmul.f32 %v3588, %v3636
      %v3661 = vmul.f32 %v3589, %v3637
      %3686 = vrot.lane.b32.xlu0 %v3638, 32
      %v3687 = vpop.permute.xlu0 %3686
      %3688 = vrot.lane.b32.xlu0 %v3639, 32
      %v3689 = vpop.permute.xlu0 %3688
      %3690 = vrot.lane.b32.xlu0 %v3640, 32
      %v3691 = vpop.permute.xlu0 %3690
      %3692 = vrot.lane.b32.xlu0 %v3641, 32
      %v3693 = vpop.permute.xlu0 %3692
      %3694 = vrot.lane.b32.xlu0 %v3642, 32
      %v3695 = vpop.permute.xlu0 %3694
      %3696 = vrot.lane.b32.xlu0 %v3643, 32
      %v3697 = vpop.permute.xlu0 %3696
      %3698 = vrot.lane.b32.xlu0 %v3644, 32
      %v3699 = vpop.permute.xlu0 %3698
      %3700 = vrot.lane.b32.xlu0 %v3645, 32
      %v3701 = vpop.permute.xlu0 %3700
      %3702 = vrot.lane.b32.xlu0 %v3646, 32
      %v3703 = vpop.permute.xlu0 %3702
      %3704 = vrot.lane.b32.xlu0 %v3647, 32
      %v3705 = vpop.permute.xlu0 %3704
      %3706 = vrot.lane.b32.xlu0 %v3648, 32
      %v3707 = vpop.permute.xlu0 %3706
      %3708 = vrot.lane.b32.xlu0 %v3649, 32
      %v3709 = vpop.permute.xlu0 %3708
      %3710 = vrot.lane.b32.xlu0 %v3650, 32
      %v3711 = vpop.permute.xlu0 %3710
      %3712 = vrot.lane.b32.xlu0 %v3651, 32
      %v3713 = vpop.permute.xlu0 %3712
      %3714 = vrot.lane.b32.xlu0 %v3652, 32
      %v3715 = vpop.permute.xlu0 %3714
      %3716 = vrot.lane.b32.xlu0 %v3653, 32
      %v3717 = vpop.permute.xlu0 %3716
      %3718 = vrot.lane.b32.xlu0 %v3654, 32
      %v3719 = vpop.permute.xlu0 %3718
      %3720 = vrot.lane.b32.xlu0 %v3655, 32
      %v3721 = vpop.permute.xlu0 %3720
      %3722 = vrot.lane.b32.xlu0 %v3656, 32
      %v3723 = vpop.permute.xlu0 %3722
      %3724 = vrot.lane.b32.xlu0 %v3657, 32
      %v3725 = vpop.permute.xlu0 %3724
      %3726 = vrot.lane.b32.xlu0 %v3658, 32
      %v3727 = vpop.permute.xlu0 %3726
      %3728 = vrot.lane.b32.xlu0 %v3659, 32
      %v3729 = vpop.permute.xlu0 %3728
      %3730 = vrot.lane.b32.xlu0 %v3660, 32
      %v3731 = vpop.permute.xlu0 %3730
      %3732 = vrot.lane.b32.xlu0 %v3661, 32
      %v3733 = vpop.permute.xlu0 %3732
      %3758 = vst.msk [vmem:[#allocation3 + $0x18] sm:$0xff] %vm1308, %v3687
      %3759 = vst.msk [vmem:[#allocation3 + $0x20] sm:$0xff] %vm1308, %v3689
      %3760 = vst.msk [vmem:[#allocation3 + $0x28] sm:$0xff] %vm1308, %v3691
      %3761 = vst.msk [vmem:[#allocation3 + $0x30] sm:$0xff] %vm1308, %v3693
      %3762 = vst.msk [vmem:[#allocation3 + $0x38] sm:$0xff] %vm1308, %v3695
      %3763 = vst.msk [vmem:[#allocation3 + $0x40] sm:$0xff] %vm1308, %v3697
      %3764 = vst.msk [vmem:[#allocation3 + $0x48] sm:$0xff] %vm1308, %v3699
      %3765 = vst.msk [vmem:[#allocation3 + $0x50] sm:$0xff] %vm1308, %v3701
      %3766 = vst.msk [vmem:[#allocation3 + $0x58] sm:$0xff] %vm1308, %v3703
      %3767 = vst.msk [vmem:[#allocation3 + $0x60] sm:$0xff] %vm1308, %v3705
      %3768 = vst.msk [vmem:[#allocation3 + $0x68] sm:$0xff] %vm1308, %v3707
      %3769 = vst.msk [vmem:[#allocation3 + $0x70] sm:$0xff] %vm1308, %v3709
      %3770 = vst.msk [vmem:[#allocation3 + $0x78] sm:$0xff] %vm1308, %v3711
      %3771 = vst.msk [vmem:[#allocation3 + $0x80] sm:$0xff] %vm1308, %v3713
      %3772 = vst.msk [vmem:[#allocation3 + $0x88] sm:$0xff] %vm1308, %v3715
      %3773 = vst.msk [vmem:[#allocation3 + $0x90] sm:$0xff] %vm1308, %v3717
      %3774 = vst.msk [vmem:[#allocation3 + $0x98] sm:$0xff] %vm1308, %v3719
      %3775 = vst.msk [vmem:[#allocation3 + $0xa0] sm:$0xff] %vm1308, %v3721
      %3776 = vst.msk [vmem:[#allocation3 + $0xa8] sm:$0xff] %vm1308, %v3723
      %3777 = vst.msk [vmem:[#allocation3 + $0xb0] sm:$0xff] %vm1308, %v3725
      %3778 = vst.msk [vmem:[#allocation3 + $0xb8] sm:$0xff] %vm1308, %v3727
      %3779 = vst.msk [vmem:[#allocation3 + $0xc0] sm:$0xff] %vm1308, %v3729
      %3780 = vst.msk [vmem:[#allocation3 + $0xc8] sm:$0xff] %vm1308, %v3731
      %3781 = vst.msk [vmem:[#allocation3 + $0xd0] sm:$0xff] %vm1308, %v3733
      %3782 = vst.msk [vmem:[#allocation3 + $0x19] sm:$0xff] %vm1333, %v3638
      %3783 = vst.msk [vmem:[#allocation3 + $0x21] sm:$0xff] %vm1333, %v3639
      %3784 = vst.msk [vmem:[#allocation3 + $0x29] sm:$0xff] %vm1333, %v3640
      %3785 = vst.msk [vmem:[#allocation3 + $0x31] sm:$0xff] %vm1333, %v3641
      %3786 = vst.msk [vmem:[#allocation3 + $0x39] sm:$0xff] %vm1333, %v3642
      %3787 = vst.msk [vmem:[#allocation3 + $0x41] sm:$0xff] %vm1333, %v3643
      %3788 = vst.msk [vmem:[#allocation3 + $0x49] sm:$0xff] %vm1333, %v3644
      %3789 = vst.msk [vmem:[#allocation3 + $0x51] sm:$0xff] %vm1333, %v3645
      %3790 = vst.msk [vmem:[#allocation3 + $0x59] sm:$0xff] %vm1333, %v3646
      %3791 = vst.msk [vmem:[#allocation3 + $0x61] sm:$0xff] %vm1333, %v3647
      %3792 = vst.msk [vmem:[#allocation3 + $0x69] sm:$0xff] %vm1333, %v3648
      %3793 = vst.msk [vmem:[#allocation3 + $0x71] sm:$0xff] %vm1333, %v3649
      %3794 = vst.msk [vmem:[#allocation3 + $0x79] sm:$0xff] %vm1333, %v3650
      %3795 = vst.msk [vmem:[#allocation3 + $0x81] sm:$0xff] %vm1333, %v3651
      %3796 = vst.msk [vmem:[#allocation3 + $0x89] sm:$0xff] %vm1333, %v3652
      %3797 = vst.msk [vmem:[#allocation3 + $0x91] sm:$0xff] %vm1333, %v3653
      %3798 = vst.msk [vmem:[#allocation3 + $0x99] sm:$0xff] %vm1333, %v3654
      %3799 = vst.msk [vmem:[#allocation3 + $0xa1] sm:$0xff] %vm1333, %v3655
      %3800 = vst.msk [vmem:[#allocation3 + $0xa9] sm:$0xff] %vm1333, %v3656
      %3801 = vst.msk [vmem:[#allocation3 + $0xb1] sm:$0xff] %vm1333, %v3657
      %3802 = vst.msk [vmem:[#allocation3 + $0xb9] sm:$0xff] %vm1333, %v3658
      %3803 = vst.msk [vmem:[#allocation3 + $0xc1] sm:$0xff] %vm1333, %v3659
      %3804 = vst.msk [vmem:[#allocation3 + $0xc9] sm:$0xff] %vm1333, %v3660
      %3805 = vst.msk [vmem:[#allocation3 + $0xd1] sm:$0xff] %vm1333, %v3661
      %3806 = vrot.lane.b32.xlu0 %v3638, 64
      %v3807 = vpop.permute.xlu0 %3806
      %3808 = vrot.lane.b32.xlu0 %v3639, 64
      %v3809 = vpop.permute.xlu0 %3808
      %3810 = vrot.lane.b32.xlu0 %v3640, 64
      %v3811 = vpop.permute.xlu0 %3810
      %3812 = vrot.lane.b32.xlu0 %v3641, 64
      %v3813 = vpop.permute.xlu0 %3812
      %3814 = vrot.lane.b32.xlu0 %v3642, 64
      %v3815 = vpop.permute.xlu0 %3814
      %3816 = vrot.lane.b32.xlu0 %v3643, 64
      %v3817 = vpop.permute.xlu0 %3816
      %3818 = vrot.lane.b32.xlu0 %v3644, 64
      %v3819 = vpop.permute.xlu0 %3818
      %3820 = vrot.lane.b32.xlu0 %v3645, 64
      %v3821 = vpop.permute.xlu0 %3820
      %3822 = vrot.lane.b32.xlu0 %v3646, 64
      %v3823 = vpop.permute.xlu0 %3822
      %3824 = vrot.lane.b32.xlu0 %v3647, 64
      %v3825 = vpop.permute.xlu0 %3824
      %3826 = vrot.lane.b32.xlu0 %v3648, 64
      %v3827 = vpop.permute.xlu0 %3826
      %3828 = vrot.lane.b32.xlu0 %v3649, 64
      %v3829 = vpop.permute.xlu0 %3828
      %3830 = vrot.lane.b32.xlu0 %v3650, 64
      %v3831 = vpop.permute.xlu0 %3830
      %3832 = vrot.lane.b32.xlu0 %v3651, 64
      %v3833 = vpop.permute.xlu0 %3832
      %3834 = vrot.lane.b32.xlu0 %v3652, 64
      %v3835 = vpop.permute.xlu0 %3834
      %3836 = vrot.lane.b32.xlu0 %v3653, 64
      %v3837 = vpop.permute.xlu0 %3836
      %3838 = vrot.lane.b32.xlu0 %v3654, 64
      %v3839 = vpop.permute.xlu0 %3838
      %3840 = vrot.lane.b32.xlu0 %v3655, 64
      %v3841 = vpop.permute.xlu0 %3840
      %3842 = vrot.lane.b32.xlu0 %v3656, 64
      %v3843 = vpop.permute.xlu0 %3842
      %3844 = vrot.lane.b32.xlu0 %v3657, 64
      %v3845 = vpop.permute.xlu0 %3844
      %3846 = vrot.lane.b32.xlu0 %v3658, 64
      %v3847 = vpop.permute.xlu0 %3846
      %3848 = vrot.lane.b32.xlu0 %v3659, 64
      %v3849 = vpop.permute.xlu0 %3848
      %3850 = vrot.lane.b32.xlu0 %v3660, 64
      %v3851 = vpop.permute.xlu0 %3850
      %3852 = vrot.lane.b32.xlu0 %v3661, 64
      %v3853 = vpop.permute.xlu0 %3852
      %3878 = vst.msk [vmem:[#allocation3 + $0x17] sm:$0xff] %vm1430, %v3807
      %3879 = vst.msk [vmem:[#allocation3 + $0x1f] sm:$0xff] %vm1430, %v3809
      %3880 = vst.msk [vmem:[#allocation3 + $0x27] sm:$0xff] %vm1430, %v3811
      %3881 = vst.msk [vmem:[#allocation3 + $0x2f] sm:$0xff] %vm1430, %v3813
      %3882 = vst.msk [vmem:[#allocation3 + $0x37] sm:$0xff] %vm1430, %v3815
      %3883 = vst.msk [vmem:[#allocation3 + $0x3f] sm:$0xff] %vm1430, %v3817
      %3884 = vst.msk [vmem:[#allocation3 + $0x47] sm:$0xff] %vm1430, %v3819
      %3885 = vst.msk [vmem:[#allocation3 + $0x4f] sm:$0xff] %vm1430, %v3821
      %3886 = vst.msk [vmem:[#allocation3 + $0x57] sm:$0xff] %vm1430, %v3823
      %3887 = vst.msk [vmem:[#allocation3 + $0x5f] sm:$0xff] %vm1430, %v3825
      %3888 = vst.msk [vmem:[#allocation3 + $0x67] sm:$0xff] %vm1430, %v3827
      %3889 = vst.msk [vmem:[#allocation3 + $0x6f] sm:$0xff] %vm1430, %v3829
      %3890 = vst.msk [vmem:[#allocation3 + $0x77] sm:$0xff] %vm1430, %v3831
      %3891 = vst.msk [vmem:[#allocation3 + $0x7f] sm:$0xff] %vm1430, %v3833
      %3892 = vst.msk [vmem:[#allocation3 + $0x87] sm:$0xff] %vm1430, %v3835
      %3893 = vst.msk [vmem:[#allocation3 + $0x8f] sm:$0xff] %vm1430, %v3837
      %3894 = vst.msk [vmem:[#allocation3 + $0x97] sm:$0xff] %vm1430, %v3839
      %3895 = vst.msk [vmem:[#allocation3 + $0x9f] sm:$0xff] %vm1430, %v3841
      %3896 = vst.msk [vmem:[#allocation3 + $0xa7] sm:$0xff] %vm1430, %v3843
      %3897 = vst.msk [vmem:[#allocation3 + $0xaf] sm:$0xff] %vm1430, %v3845
      %3898 = vst.msk [vmem:[#allocation3 + $0xb7] sm:$0xff] %vm1430, %v3847
      %3899 = vst.msk [vmem:[#allocation3 + $0xbf] sm:$0xff] %vm1430, %v3849
      %3900 = vst.msk [vmem:[#allocation3 + $0xc7] sm:$0xff] %vm1430, %v3851
      %3901 = vst.msk [vmem:[#allocation3 + $0xcf] sm:$0xff] %vm1430, %v3853
      %v3902 = vld [vmem:[#allocation2 + $0xc0] sm:$0xff]
      %v3903 = vld [vmem:[#allocation2 + $0xc8] sm:$0xff]
      %v3904 = vld [vmem:[#allocation2 + $0xd0] sm:$0xff]
      %v3905 = vld [vmem:[#allocation2 + $0xd8] sm:$0xff]
      %v3906 = vld [vmem:[#allocation2 + $0xe0] sm:$0xff]
      %v3907 = vld [vmem:[#allocation2 + $0xe8] sm:$0xff]
      %v3908 = vld [vmem:[#allocation2 + $0xf0] sm:$0xff]
      %v3909 = vld [vmem:[#allocation2 + $0xf8] sm:$0xff]
      %v3910 = vld [vmem:[#allocation2 + $0x100] sm:$0xff]
      %v3911 = vld [vmem:[#allocation2 + $0x108] sm:$0xff]
      %v3912 = vld [vmem:[#allocation2 + $0x110] sm:$0xff]
      %v3913 = vld [vmem:[#allocation2 + $0x118] sm:$0xff]
      %v3914 = vld [vmem:[#allocation2 + $0x120] sm:$0xff]
      %v3915 = vld [vmem:[#allocation2 + $0x128] sm:$0xff]
      %v3916 = vld [vmem:[#allocation2 + $0x130] sm:$0xff]
      %v3917 = vld [vmem:[#allocation2 + $0x138] sm:$0xff]
      %v3918 = vld [vmem:[#allocation2 + $0x140] sm:$0xff]
      %v3919 = vld [vmem:[#allocation2 + $0x148] sm:$0xff]
      %v3920 = vld [vmem:[#allocation2 + $0x150] sm:$0xff]
      %v3921 = vld [vmem:[#allocation2 + $0x158] sm:$0xff]
      %v3922 = vld [vmem:[#allocation2 + $0x160] sm:$0xff]
      %v3923 = vld [vmem:[#allocation2 + $0x168] sm:$0xff]
      %v3924 = vld [vmem:[#allocation2 + $0x170] sm:$0xff]
      %v3925 = vld [vmem:[#allocation2 + $0x178] sm:$0xff]
      %v3926 = vpack.c.bf16 %v3903, %v3902
      %v3927 = vpack.c.bf16 %v3905, %v3904
      %v3928 = vpack.c.bf16 %v3907, %v3906
      %v3929 = vpack.c.bf16 %v3909, %v3908
      %v3930 = vpack.c.bf16 %v3911, %v3910
      %v3931 = vpack.c.bf16 %v3913, %v3912
      %v3932 = vpack.c.bf16 %v3915, %v3914
      %v3933 = vpack.c.bf16 %v3917, %v3916
      %v3934 = vpack.c.bf16 %v3919, %v3918
      %v3935 = vpack.c.bf16 %v3921, %v3920
      %v3936 = vpack.c.bf16 %v3923, %v3922
      %v3937 = vpack.c.bf16 %v3925, %v3924
      %v3938 = vld [vmem:[%s1 + $0xc0] sm:$0xf]
      %v3939 = vld [vmem:[%s1 + $0xc4] sm:$0xf]
      %v3940 = vld [vmem:[%s1 + $0xc8] sm:$0xf]
      %v3941 = vld [vmem:[%s1 + $0xcc] sm:$0xf]
      %v3942 = vld [vmem:[%s1 + $0xd0] sm:$0xf]
      %v3943 = vld [vmem:[%s1 + $0xd4] sm:$0xf]
      %v3944 = vld [vmem:[%s1 + $0xd8] sm:$0xf]
      %v3945 = vld [vmem:[%s1 + $0xdc] sm:$0xf]
      %v3946 = vld [vmem:[%s1 + $0xe0] sm:$0xf]
      %v3947 = vld [vmem:[%s1 + $0xe4] sm:$0xf]
      %v3948 = vld [vmem:[%s1 + $0xe8] sm:$0xf]
      %v3949 = vld [vmem:[%s1 + $0xec] sm:$0xf]
      %v3950 = vld [vmem:[%s1 + $0xf0] sm:$0xf]
      %v3951 = vld [vmem:[%s1 + $0xf4] sm:$0xf]
      %v3952 = vld [vmem:[%s1 + $0xf8] sm:$0xf]
      %v3953 = vld [vmem:[%s1 + $0xfc] sm:$0xf]
      %v3954 = vld [vmem:[#allocation2 + $0x180] sm:$0xff]
      %v3955 = vld [vmem:[#allocation2 + $0x188] sm:$0xff]
      %v3956 = vld [vmem:[#allocation2 + $0x190] sm:$0xff]
      %v3957 = vpack.c.bf16 %v3906, %v3905
      %v3958 = vpack.c.bf16 %v3908, %v3907
      %v3959 = vpack.c.bf16 %v3910, %v3909
      %v3960 = vpack.c.bf16 %v3912, %v3911
      %v3961 = vpack.c.bf16 %v3914, %v3913
      %v3962 = vpack.c.bf16 %v3916, %v3915
      %v3963 = vpack.c.bf16 %v3918, %v3917
      %v3964 = vpack.c.bf16 %v3920, %v3919
      %v3965 = vpack.c.bf16 %v3922, %v3921
      %v3966 = vpack.c.bf16 %v3924, %v3923
      %v3967 = vpack.c.bf16 %v3954, %v3925
      %v3968 = vpack.c.bf16 %v3956, %v3955
      %v3969 = vld [vmem:[%s1 + $0x100] sm:$0xf]
      %v3970 = vld [vmem:[%s1 + $0x104] sm:$0xf]
      %v3971 = vld [vmem:[%s1 + $0x108] sm:$0xf]
      %v3972 = vld [vmem:[%s1 + $0x10c] sm:$0xf]
      %v3973 = vld [vmem:[%s1 + $0x110] sm:$0xf]
      %v3974 = vld [vmem:[%s1 + $0x114] sm:$0xf]
      %v3975 = vld [vmem:[%s1 + $0x118] sm:$0xf]
      %v3976 = vld [vmem:[%s1 + $0x11c] sm:$0xf]
      %v3977 = vld [vmem:[%s1 + $0x120] sm:$0xf]
      %v3978 = vld [vmem:[%s1 + $0x124] sm:$0xf]
      %v3979 = vld [vmem:[%s1 + $0x128] sm:$0xf]
      %v3980 = vld [vmem:[%s1 + $0x12c] sm:$0xf]
      %v3981 = vld [vmem:[%s1 + $0x130] sm:$0xf]
      %v3982 = vld [vmem:[%s1 + $0x134] sm:$0xf]
      %v3983 = vld [vmem:[%s1 + $0x138] sm:$0xf]
      %v3984 = vld [vmem:[%s1 + $0x13c] sm:$0xf]
      %v4001 = vunpack.c.l.b16 %v3969
      %v4002 = vunpack.c.l.b16 %v3970
      %v4003 = vunpack.c.l.b16 %v3971
      %v4004 = vunpack.c.l.b16 %v3972
      %v4005 = vunpack.c.l.b16 %v3973
      %v4006 = vunpack.c.l.b16 %v3974
      %v4007 = vunpack.c.l.b16 %v3975
      %v4008 = vunpack.c.l.b16 %v3976
      %v4009 = vunpack.c.l.b16 %v3977
      %v4010 = vunpack.c.l.b16 %v3978
      %v4011 = vunpack.c.l.b16 %v3979
      %v4012 = vunpack.c.l.b16 %v3980
      %v4013 = vunpack.c.l.b16 %v3981
      %v4014 = vunpack.c.l.b16 %v3982
      %v4015 = vunpack.c.l.b16 %v3983
      %v4016 = vunpack.c.l.b16 %v3984
      %v4017 = vpack.c.b16 %v4002, %v4001
      %v4018 = vpack.c.b16 %v4004, %v4003
      %v4019 = vpack.c.b16 %v4006, %v4005
      %v4020 = vpack.c.b16 %v4008, %v4007
      %v4021 = vpack.c.b16 %v4010, %v4009
      %v4022 = vpack.c.b16 %v4012, %v4011
      %v4023 = vpack.c.b16 %v4014, %v4013
      %v4024 = vpack.c.b16 %v4016, %v4015
      %4033 = vmatprep.subr.bf16.mxu0 0
      %4034 = vmatpush1.bf16.msra.mxu0 %v4017
      %4035 = vmatprep.subr.bf16.mxu0 0
      %4036 = vmatpush1.bf16.msra.mxu0 %v4018
      %4037 = vmatprep.subr.bf16.mxu0 0
      %4038 = vmatpush1.bf16.msra.mxu0 %v4019
      %4039 = vmatprep.subr.bf16.mxu0 0
      %4040 = vmatpush1.bf16.msra.mxu0 %v4020
      %4041 = vmatprep.subr.bf16.mxu0 0
      %4042 = vmatpush1.bf16.msra.mxu0 %v4021
      %4043 = vmatprep.subr.bf16.mxu0 0
      %4044 = vmatpush1.bf16.msra.mxu0 %v4022
      %4045 = vmatprep.subr.bf16.mxu0 0
      %4046 = vmatpush1.bf16.msra.mxu0 %v4023
      %4047 = vmatprep.subr.bf16.mxu0 0
      %4048 = vmatpush1.bf16.msra.mxu0 %v4024
      %4049 = vmatprep.subr.bf16.mxu0 0
      %4050 = vmatpush1.bf16.msra.mxu0 0
      %4051 = vmatprep.subr.bf16.mxu0 0
      %4052 = vmatpush1.bf16.msra.mxu0 0
      %4053 = vmatprep.subr.bf16.mxu0 0
      %4054 = vmatpush1.bf16.msra.mxu0 0
      %4055 = vmatprep.subr.bf16.mxu0 0
      %4056 = vmatpush1.bf16.msra.mxu0 0
      %4057 = vmatprep.subr.bf16.mxu0 0
      %4058 = vmatpush1.bf16.msra.mxu0 0
      %4059 = vmatprep.subr.bf16.mxu0 0
      %4060 = vmatpush1.bf16.msra.mxu0 0
      %4061 = vmatprep.subr.bf16.mxu0 0
      %4062 = vmatpush1.bf16.msra.mxu0 0
      %4063 = vmatprep.subr.bf16.mxu0 0
      %4064 = vmatpush1.bf16.msra.mxu0 0
      %4065 = vmatprep.mubr.bf16.mxu0 0
      %4066 = vmatmul.mubr.bf16.gmra.mrb[0].mxu0 %v3957
      %v4067 = vpop.f32.mrb[0].mxu0
      %v4068 = vadd.f32 0.0, %v4067
      %v4069 = vpop.f32.mrb[0].mxu0
      %v4070 = vpop.f32.mrb[0].mxu0
      %v4071 = vadd.f32 0.0, %v4070
      %v4072 = vpop.f32.mrb[0].mxu0
      %4073 = vmatprep.mubr.bf16.mxu0 0
      %4074 = vmatmul.mubr.bf16.gmra.mrb[0].mxu0 %v3958
      %v4075 = vpop.f32.mrb[0].mxu0
      %v4076 = vadd.f32 0.0, %v4075
      %v4077 = vpop.f32.mrb[0].mxu0
      %v4078 = vpop.f32.mrb[0].mxu0
      %v4079 = vadd.f32 0.0, %v4078
      %v4080 = vpop.f32.mrb[0].mxu0
      %4081 = vmatprep.mubr.bf16.mxu0 0
      %4082 = vmatmul.mubr.bf16.gmra.mrb[0].mxu0 %v3959
      %v4083 = vpop.f32.mrb[0].mxu0
      %v4084 = vadd.f32 0.0, %v4083
      %v4085 = vpop.f32.mrb[0].mxu0
      %v4086 = vpop.f32.mrb[0].mxu0
      %v4087 = vadd.f32 0.0, %v4086
      %v4088 = vpop.f32.mrb[0].mxu0
      %4089 = vmatprep.mubr.bf16.mxu0 0
      %4090 = vmatmul.mubr.bf16.gmra.mrb[0].mxu0 %v3960
      %v4091 = vpop.f32.mrb[0].mxu0
      %v4092 = vadd.f32 0.0, %v4091
      %v4093 = vpop.f32.mrb[0].mxu0
      %v4094 = vpop.f32.mrb[0].mxu0
      %v4095 = vadd.f32 0.0, %v4094
      %v4096 = vpop.f32.mrb[0].mxu0
      %4097 = vmatprep.mubr.bf16.mxu0 0
      %4098 = vmatmul.mubr.bf16.gmra.mrb[0].mxu0 %v3961
      %v4099 = vpop.f32.mrb[0].mxu0
      %v4100 = vadd.f32 0.0, %v4099
      %v4101 = vpop.f32.mrb[0].mxu0
      %v4102 = vpop.f32.mrb[0].mxu0
      %v4103 = vadd.f32 0.0, %v4102
      %v4104 = vpop.f32.mrb[0].mxu0
      %4105 = vmatprep.mubr.bf16.mxu0 0
      %4106 = vmatmul.mubr.bf16.gmra.mrb[0].mxu0 %v3962
      %v4107 = vpop.f32.mrb[0].mxu0
      %v4108 = vadd.f32 0.0, %v4107
      %v4109 = vpop.f32.mrb[0].mxu0
      %v4110 = vpop.f32.mrb[0].mxu0
      %v4111 = vadd.f32 0.0, %v4110
      %v4112 = vpop.f32.mrb[0].mxu0
      %4113 = vmatprep.mubr.bf16.mxu0 0
      %4114 = vmatmul.mubr.bf16.gmra.mrb[0].mxu0 %v3963
      %v4115 = vpop.f32.mrb[0].mxu0
      %v4116 = vadd.f32 0.0, %v4115
      %v4117 = vpop.f32.mrb[0].mxu0
      %v4118 = vpop.f32.mrb[0].mxu0
      %v4119 = vadd.f32 0.0, %v4118
      %v4120 = vpop.f32.mrb[0].mxu0
      %4121 = vmatprep.mubr.bf16.mxu0 0
      %4122 = vmatmul.mubr.bf16.gmra.mrb[0].mxu0 %v3964
      %v4123 = vpop.f32.mrb[0].mxu0
      %v4124 = vadd.f32 0.0, %v4123
      %v4125 = vpop.f32.mrb[0].mxu0
      %v4126 = vpop.f32.mrb[0].mxu0
      %v4127 = vadd.f32 0.0, %v4126
      %v4128 = vpop.f32.mrb[0].mxu0
      %4129 = vmatprep.mubr.bf16.mxu0 0
      %4130 = vmatmul.mubr.bf16.gmra.mrb[0].mxu0 %v3965
      %v4131 = vpop.f32.mrb[0].mxu0
      %v4132 = vadd.f32 0.0, %v4131
      %v4133 = vpop.f32.mrb[0].mxu0
      %v4134 = vpop.f32.mrb[0].mxu0
      %v4135 = vadd.f32 0.0, %v4134
      %v4136 = vpop.f32.mrb[0].mxu0
      %4137 = vmatprep.mubr.bf16.mxu0 0
      %4138 = vmatmul.mubr.bf16.gmra.mrb[0].mxu0 %v3966
      %v4139 = vpop.f32.mrb[0].mxu0
      %v4140 = vadd.f32 0.0, %v4139
      %v4141 = vpop.f32.mrb[0].mxu0
      %v4142 = vpop.f32.mrb[0].mxu0
      %v4143 = vadd.f32 0.0, %v4142
      %v4144 = vpop.f32.mrb[0].mxu0
      %4145 = vmatprep.mubr.bf16.mxu0 0
      %4146 = vmatmul.mubr.bf16.gmra.mrb[0].mxu0 %v3967
      %v4147 = vpop.f32.mrb[0].mxu0
      %v4148 = vadd.f32 0.0, %v4147
      %v4149 = vpop.f32.mrb[0].mxu0
      %v4150 = vpop.f32.mrb[0].mxu0
      %v4151 = vadd.f32 0.0, %v4150
      %v4152 = vpop.f32.mrb[0].mxu0
      %4153 = vmatprep.mubr.bf16.mxu0 0
      %4154 = vmatmul.mubr.bf16.gmra.mrb[0].mxu0 %v3968
      %v4155 = vpop.f32.mrb[0].mxu0
      %v4156 = vadd.f32 0.0, %v4155
      %v4157 = vpop.f32.mrb[0].mxu0
      %v4158 = vpop.f32.mrb[0].mxu0
      %v4159 = vadd.f32 0.0, %v4158
      %v4160 = vpop.f32.mrb[0].mxu0
      %4161 = vdwg.mxu0
      %v4178 = vunpack.c.l.b16 %v3938
      %v4179 = vunpack.c.l.b16 %v3939
      %v4180 = vunpack.c.l.b16 %v3940
      %v4181 = vunpack.c.l.b16 %v3941
      %v4182 = vunpack.c.l.b16 %v3942
      %v4183 = vunpack.c.l.b16 %v3943
      %v4184 = vunpack.c.l.b16 %v3944
      %v4185 = vunpack.c.l.b16 %v3945
      %v4186 = vunpack.c.l.b16 %v3946
      %v4187 = vunpack.c.l.b16 %v3947
      %v4188 = vunpack.c.l.b16 %v3948
      %v4189 = vunpack.c.l.b16 %v3949
      %v4190 = vunpack.c.l.b16 %v3950
      %v4191 = vunpack.c.l.b16 %v3951
      %v4192 = vunpack.c.l.b16 %v3952
      %v4193 = vunpack.c.l.b16 %v3953
      %v4194 = vpack.c.b16 %v4179, %v4178
      %v4195 = vpack.c.b16 %v4181, %v4180
      %v4196 = vpack.c.b16 %v4183, %v4182
      %v4197 = vpack.c.b16 %v4185, %v4184
      %v4198 = vpack.c.b16 %v4187, %v4186
      %v4199 = vpack.c.b16 %v4189, %v4188
      %v4200 = vpack.c.b16 %v4191, %v4190
      %v4201 = vpack.c.b16 %v4193, %v4192
      %4210 = vmatprep.subr.bf16.mxu0 0
      %4211 = vmatpush1.bf16.msra.mxu0 %v4194
      %4212 = vmatprep.subr.bf16.mxu0 0
      %4213 = vmatpush1.bf16.msra.mxu0 %v4195
      %4214 = vmatprep.subr.bf16.mxu0 0
      %4215 = vmatpush1.bf16.msra.mxu0 %v4196
      %4216 = vmatprep.subr.bf16.mxu0 0
      %4217 = vmatpush1.bf16.msra.mxu0 %v4197
      %4218 = vmatprep.subr.bf16.mxu0 0
      %4219 = vmatpush1.bf16.msra.mxu0 %v4198
      %4220 = vmatprep.subr.bf16.mxu0 0
      %4221 = vmatpush1.bf16.msra.mxu0 %v4199
      %4222 = vmatprep.subr.bf16.mxu0 0
      %4223 = vmatpush1.bf16.msra.mxu0 %v4200
      %4224 = vmatprep.subr.bf16.mxu0 0
      %4225 = vmatpush1.bf16.msra.mxu0 %v4201
      %4226 = vmatprep.subr.bf16.mxu0 0
      %4227 = vmatpush1.bf16.msra.mxu0 0
      %4228 = vmatprep.subr.bf16.mxu0 0
      %4229 = vmatpush1.bf16.msra.mxu0 0
      %4230 = vmatprep.subr.bf16.mxu0 0
      %4231 = vmatpush1.bf16.msra.mxu0 0
      %4232 = vmatprep.subr.bf16.mxu0 0
      %4233 = vmatpush1.bf16.msra.mxu0 0
      %4234 = vmatprep.subr.bf16.mxu0 0
      %4235 = vmatpush1.bf16.msra.mxu0 0
      %4236 = vmatprep.subr.bf16.mxu0 0
      %4237 = vmatpush1.bf16.msra.mxu0 0
      %4238 = vmatprep.subr.bf16.mxu0 0
      %4239 = vmatpush1.bf16.msra.mxu0 0
      %4240 = vmatprep.subr.bf16.mxu0 0
      %4241 = vmatpush1.bf16.msra.mxu0 0
      %4242 = vmatprep.mubr.bf16.mxu0 0
      %4243 = vmatmul.mubr.bf16.gmra.mrb[0].mxu0 %v3926
      %v4244 = vpop.f32.mrb[0].mxu0
      %v4245 = vadd.f32 %v4068, %v4244
      %v4246 = vpop.f32.mrb[0].mxu0
      %v4247 = vpop.f32.mrb[0].mxu0
      %v4248 = vadd.f32 %v4071, %v4247
      %v4249 = vpop.f32.mrb[0].mxu0
      %4250 = vmatprep.mubr.bf16.mxu0 0
      %4251 = vmatmul.mubr.bf16.gmra.mrb[0].mxu0 %v3927
      %v4252 = vpop.f32.mrb[0].mxu0
      %v4253 = vadd.f32 %v4076, %v4252
      %v4254 = vpop.f32.mrb[0].mxu0
      %v4255 = vpop.f32.mrb[0].mxu0
      %v4256 = vadd.f32 %v4079, %v4255
      %v4257 = vpop.f32.mrb[0].mxu0
      %4258 = vmatprep.mubr.bf16.mxu0 0
      %4259 = vmatmul.mubr.bf16.gmra.mrb[0].mxu0 %v3928
      %v4260 = vpop.f32.mrb[0].mxu0
      %v4261 = vadd.f32 %v4084, %v4260
      %v4262 = vpop.f32.mrb[0].mxu0
      %v4263 = vpop.f32.mrb[0].mxu0
      %v4264 = vadd.f32 %v4087, %v4263
      %v4265 = vpop.f32.mrb[0].mxu0
      %4266 = vmatprep.mubr.bf16.mxu0 0
      %4267 = vmatmul.mubr.bf16.gmra.mrb[0].mxu0 %v3929
      %v4268 = vpop.f32.mrb[0].mxu0
      %v4269 = vadd.f32 %v4092, %v4268
      %v4270 = vpop.f32.mrb[0].mxu0
      %v4271 = vpop.f32.mrb[0].mxu0
      %v4272 = vadd.f32 %v4095, %v4271
      %v4273 = vpop.f32.mrb[0].mxu0
      %4274 = vmatprep.mubr.bf16.mxu0 0
      %4275 = vmatmul.mubr.bf16.gmra.mrb[0].mxu0 %v3930
      %v4276 = vpop.f32.mrb[0].mxu0
      %v4277 = vadd.f32 %v4100, %v4276
      %v4278 = vpop.f32.mrb[0].mxu0
      %v4279 = vpop.f32.mrb[0].mxu0
      %v4280 = vadd.f32 %v4103, %v4279
      %v4281 = vpop.f32.mrb[0].mxu0
      %4282 = vmatprep.mubr.bf16.mxu0 0
      %4283 = vmatmul.mubr.bf16.gmra.mrb[0].mxu0 %v3931
      %v4284 = vpop.f32.mrb[0].mxu0
      %v4285 = vadd.f32 %v4108, %v4284
      %v4286 = vpop.f32.mrb[0].mxu0
      %v4287 = vpop.f32.mrb[0].mxu0
      %v4288 = vadd.f32 %v4111, %v4287
      %v4289 = vpop.f32.mrb[0].mxu0
      %4290 = vmatprep.mubr.bf16.mxu0 0
      %4291 = vmatmul.mubr.bf16.gmra.mrb[0].mxu0 %v3932
      %v4292 = vpop.f32.mrb[0].mxu0
      %v4293 = vadd.f32 %v4116, %v4292
      %v4294 = vpop.f32.mrb[0].mxu0
      %v4295 = vpop.f32.mrb[0].mxu0
      %v4296 = vadd.f32 %v4119, %v4295
      %v4297 = vpop.f32.mrb[0].mxu0
      %4298 = vmatprep.mubr.bf16.mxu0 0
      %4299 = vmatmul.mubr.bf16.gmra.mrb[0].mxu0 %v3933
      %v4300 = vpop.f32.mrb[0].mxu0
      %v4301 = vadd.f32 %v4124, %v4300
      %v4302 = vpop.f32.mrb[0].mxu0
      %v4303 = vpop.f32.mrb[0].mxu0
      %v4304 = vadd.f32 %v4127, %v4303
      %v4305 = vpop.f32.mrb[0].mxu0
      %4306 = vmatprep.mubr.bf16.mxu0 0
      %4307 = vmatmul.mubr.bf16.gmra.mrb[0].mxu0 %v3934
      %v4308 = vpop.f32.mrb[0].mxu0
      %v4309 = vadd.f32 %v4132, %v4308
      %v4310 = vpop.f32.mrb[0].mxu0
      %v4311 = vpop.f32.mrb[0].mxu0
      %v4312 = vadd.f32 %v4135, %v4311
      %v4313 = vpop.f32.mrb[0].mxu0
      %4314 = vmatprep.mubr.bf16.mxu0 0
      %4315 = vmatmul.mubr.bf16.gmra.mrb[0].mxu0 %v3935
      %v4316 = vpop.f32.mrb[0].mxu0
      %v4317 = vadd.f32 %v4140, %v4316
      %v4318 = vpop.f32.mrb[0].mxu0
      %v4319 = vpop.f32.mrb[0].mxu0
      %v4320 = vadd.f32 %v4143, %v4319
      %v4321 = vpop.f32.mrb[0].mxu0
      %4322 = vmatprep.mubr.bf16.mxu0 0
      %4323 = vmatmul.mubr.bf16.gmra.mrb[0].mxu0 %v3936
      %v4324 = vpop.f32.mrb[0].mxu0
      %v4325 = vadd.f32 %v4148, %v4324
      %v4326 = vpop.f32.mrb[0].mxu0
      %v4327 = vpop.f32.mrb[0].mxu0
      %v4328 = vadd.f32 %v4151, %v4327
      %v4329 = vpop.f32.mrb[0].mxu0
      %4330 = vmatprep.mubr.bf16.mxu0 0
      %4331 = vmatmul.mubr.bf16.gmra.mrb[0].mxu0 %v3937
      %v4332 = vpop.f32.mrb[0].mxu0
      %v4333 = vadd.f32 %v4156, %v4332
      %v4334 = vpop.f32.mrb[0].mxu0
      %v4335 = vpop.f32.mrb[0].mxu0
      %v4336 = vadd.f32 %v4159, %v4335
      %v4337 = vpop.f32.mrb[0].mxu0
      %4338 = vdwg.mxu0
      %v4339 = vld [vmem:[#allocation2 + $0xf0] sm:$0xff]
      %v4340 = vld [vmem:[#allocation2 + $0xf8] sm:$0xff]
      %v4341 = vld [vmem:[#allocation2 + $0x100] sm:$0xff]
      %v4342 = vld [vmem:[#allocation2 + $0x108] sm:$0xff]
      %v4343 = vld [vmem:[#allocation2 + $0x110] sm:$0xff]
      %v4344 = vld [vmem:[#allocation2 + $0x118] sm:$0xff]
      %v4345 = vld [vmem:[#allocation2 + $0x120] sm:$0xff]
      %v4346 = vld [vmem:[#allocation2 + $0x128] sm:$0xff]
      %v4347 = vld [vmem:[#allocation2 + $0x130] sm:$0xff]
      %v4348 = vld [vmem:[#allocation2 + $0x138] sm:$0xff]
      %v4349 = vld [vmem:[#allocation2 + $0x140] sm:$0xff]
      %v4350 = vld [vmem:[#allocation2 + $0x148] sm:$0xff]
      %v4351 = vld [vmem:[#allocation2 + $0x150] sm:$0xff]
      %v4352 = vld [vmem:[#allocation2 + $0x158] sm:$0xff]
      %v4353 = vld [vmem:[#allocation2 + $0x160] sm:$0xff]
      %v4354 = vld [vmem:[#allocation2 + $0x168] sm:$0xff]
      %v4355 = vld [vmem:[#allocation2 + $0x170] sm:$0xff]
      %v4356 = vld [vmem:[#allocation2 + $0x178] sm:$0xff]
      %v4357 = vld [vmem:[#allocation2 + $0x180] sm:$0xff]
      %v4358 = vld [vmem:[#allocation2 + $0x188] sm:$0xff]
      %v4359 = vld [vmem:[#allocation2 + $0x190] sm:$0xff]
      %v4360 = vld [vmem:[#allocation2 + $0x198] sm:$0xff]
      %v4361 = vld [vmem:[#allocation2 + $0x1a0] sm:$0xff]
      %v4362 = vld [vmem:[#allocation2 + $0x1a8] sm:$0xff]
      %v4363 = vpack.c.bf16 %v4340, %v4339
      %v4364 = vpack.c.bf16 %v4342, %v4341
      %v4365 = vpack.c.bf16 %v4344, %v4343
      %v4366 = vpack.c.bf16 %v4346, %v4345
      %v4367 = vpack.c.bf16 %v4348, %v4347
      %v4368 = vpack.c.bf16 %v4350, %v4349
      %v4369 = vpack.c.bf16 %v4352, %v4351
      %v4370 = vpack.c.bf16 %v4354, %v4353
      %v4371 = vpack.c.bf16 %v4356, %v4355
      %v4372 = vpack.c.bf16 %v4358, %v4357
      %v4373 = vpack.c.bf16 %v4360, %v4359
      %v4374 = vpack.c.bf16 %v4362, %v4361
      %v4375 = vld [vmem:[%s1 + $0x140] sm:$0xf]
      %v4376 = vld [vmem:[%s1 + $0x144] sm:$0xf]
      %v4377 = vld [vmem:[%s1 + $0x148] sm:$0xf]
      %v4378 = vld [vmem:[%s1 + $0x14c] sm:$0xf]
      %v4379 = vld [vmem:[%s1 + $0x150] sm:$0xf]
      %v4380 = vld [vmem:[%s1 + $0x154] sm:$0xf]
      %v4381 = vld [vmem:[%s1 + $0x158] sm:$0xf]
      %v4382 = vld [vmem:[%s1 + $0x15c] sm:$0xf]
      %v4383 = vld [vmem:[%s1 + $0x160] sm:$0xf]
      %v4384 = vld [vmem:[%s1 + $0x164] sm:$0xf]
      %v4385 = vld [vmem:[%s1 + $0x168] sm:$0xf]
      %v4386 = vld [vmem:[%s1 + $0x16c] sm:$0xf]
      %v4387 = vld [vmem:[%s1 + $0x170] sm:$0xf]
      %v4388 = vld [vmem:[%s1 + $0x174] sm:$0xf]
      %v4389 = vld [vmem:[%s1 + $0x178] sm:$0xf]
      %v4390 = vld [vmem:[%s1 + $0x17c] sm:$0xf]
      %v4407 = vunpack.c.l.b16 %v4375
      %v4408 = vunpack.c.l.b16 %v4376
      %v4409 = vunpack.c.l.b16 %v4377
      %v4410 = vunpack.c.l.b16 %v4378
      %v4411 = vunpack.c.l.b16 %v4379
      %v4412 = vunpack.c.l.b16 %v4380
      %v4413 = vunpack.c.l.b16 %v4381
      %v4414 = vunpack.c.l.b16 %v4382
      %v4415 = vunpack.c.l.b16 %v4383
      %v4416 = vunpack.c.l.b16 %v4384
      %v4417 = vunpack.c.l.b16 %v4385
      %v4418 = vunpack.c.l.b16 %v4386
      %v4419 = vunpack.c.l.b16 %v4387
      %v4420 = vunpack.c.l.b16 %v4388
      %v4421 = vunpack.c.l.b16 %v4389
      %v4422 = vunpack.c.l.b16 %v4390
      %v4423 = vpack.c.b16 %v4408, %v4407
      %v4424 = vpack.c.b16 %v4410, %v4409
      %v4425 = vpack.c.b16 %v4412, %v4411
      %v4426 = vpack.c.b16 %v4414, %v4413
      %v4427 = vpack.c.b16 %v4416, %v4415
      %v4428 = vpack.c.b16 %v4418, %v4417
      %v4429 = vpack.c.b16 %v4420, %v4419
      %v4430 = vpack.c.b16 %v4422, %v4421
      %4439 = vmatprep.subr.bf16.mxu0 0
      %4440 = vmatpush1.bf16.msra.mxu0 %v4423
      %4441 = vmatprep.subr.bf16.mxu0 0
      %4442 = vmatpush1.bf16.msra.mxu0 %v4424
      %4443 = vmatprep.subr.bf16.mxu0 0
      %4444 = vmatpush1.bf16.msra.mxu0 %v4425
      %4445 = vmatprep.subr.bf16.mxu0 0
      %4446 = vmatpush1.bf16.msra.mxu0 %v4426
      %4447 = vmatprep.subr.bf16.mxu0 0
      %4448 = vmatpush1.bf16.msra.mxu0 %v4427
      %4449 = vmatprep.subr.bf16.mxu0 0
      %4450 = vmatpush1.bf16.msra.mxu0 %v4428
      %4451 = vmatprep.subr.bf16.mxu0 0
      %4452 = vmatpush1.bf16.msra.mxu0 %v4429
      %4453 = vmatprep.subr.bf16.mxu0 0
      %4454 = vmatpush1.bf16.msra.mxu0 %v4430
      %4455 = vmatprep.subr.bf16.mxu0 0
      %4456 = vmatpush1.bf16.msra.mxu0 0
      %4457 = vmatprep.subr.bf16.mxu0 0
      %4458 = vmatpush1.bf16.msra.mxu0 0
      %4459 = vmatprep.subr.bf16.mxu0 0
      %4460 = vmatpush1.bf16.msra.mxu0 0
      %4461 = vmatprep.subr.bf16.mxu0 0
      %4462 = vmatpush1.bf16.msra.mxu0 0
      %4463 = vmatprep.subr.bf16.mxu0 0
      %4464 = vmatpush1.bf16.msra.mxu0 0
      %4465 = vmatprep.subr.bf16.mxu0 0
      %4466 = vmatpush1.bf16.msra.mxu0 0
      %4467 = vmatprep.subr.bf16.mxu0 0
      %4468 = vmatpush1.bf16.msra.mxu0 0
      %4469 = vmatprep.subr.bf16.mxu0 0
      %4470 = vmatpush1.bf16.msra.mxu0 0
      %4471 = vmatprep.mubr.bf16.mxu0 0
      %4472 = vmatmul.mubr.bf16.gmra.mrb[0].mxu0 %v4363
      %v4473 = vpop.f32.mrb[0].mxu0
      %v4474 = vadd.f32 0.0, %v4473
      %v4475 = vpop.f32.mrb[0].mxu0
      %v4476 = vpop.f32.mrb[0].mxu0
      %v4477 = vadd.f32 0.0, %v4476
      %v4478 = vpop.f32.mrb[0].mxu0
      %4479 = vmatprep.mubr.bf16.mxu0 0
      %4480 = vmatmul.mubr.bf16.gmra.mrb[0].mxu0 %v4364
      %v4481 = vpop.f32.mrb[0].mxu0
      %v4482 = vadd.f32 0.0, %v4481
      %v4483 = vpop.f32.mrb[0].mxu0
      %v4484 = vpop.f32.mrb[0].mxu0
      %v4485 = vadd.f32 0.0, %v4484
      %v4486 = vpop.f32.mrb[0].mxu0
      %4487 = vmatprep.mubr.bf16.mxu0 0
      %4488 = vmatmul.mubr.bf16.gmra.mrb[0].mxu0 %v4365
      %v4489 = vpop.f32.mrb[0].mxu0
      %v4490 = vadd.f32 0.0, %v4489
      %v4491 = vpop.f32.mrb[0].mxu0
      %v4492 = vpop.f32.mrb[0].mxu0
      %v4493 = vadd.f32 0.0, %v4492
      %v4494 = vpop.f32.mrb[0].mxu0
      %4495 = vmatprep.mubr.bf16.mxu0 0
      %4496 = vmatmul.mubr.bf16.gmra.mrb[0].mxu0 %v4366
      %v4497 = vpop.f32.mrb[0].mxu0
      %v4498 = vadd.f32 0.0, %v4497
      %v4499 = vpop.f32.mrb[0].mxu0
      %v4500 = vpop.f32.mrb[0].mxu0
      %v4501 = vadd.f32 0.0, %v4500
      %v4502 = vpop.f32.mrb[0].mxu0
      %4503 = vmatprep.mubr.bf16.mxu0 0
      %4504 = vmatmul.mubr.bf16.gmra.mrb[0].mxu0 %v4367
      %v4505 = vpop.f32.mrb[0].mxu0
      %v4506 = vadd.f32 0.0, %v4505
      %v4507 = vpop.f32.mrb[0].mxu0
      %v4508 = vpop.f32.mrb[0].mxu0
      %v4509 = vadd.f32 0.0, %v4508
      %v4510 = vpop.f32.mrb[0].mxu0
      %4511 = vmatprep.mubr.bf16.mxu0 0
      %4512 = vmatmul.mubr.bf16.gmra.mrb[0].mxu0 %v4368
      %v4513 = vpop.f32.mrb[0].mxu0
      %v4514 = vadd.f32 0.0, %v4513
      %v4515 = vpop.f32.mrb[0].mxu0
      %v4516 = vpop.f32.mrb[0].mxu0
      %v4517 = vadd.f32 0.0, %v4516
      %v4518 = vpop.f32.mrb[0].mxu0
      %4519 = vmatprep.mubr.bf16.mxu0 0
      %4520 = vmatmul.mubr.bf16.gmra.mrb[0].mxu0 %v4369
      %v4521 = vpop.f32.mrb[0].mxu0
      %v4522 = vadd.f32 0.0, %v4521
      %v4523 = vpop.f32.mrb[0].mxu0
      %v4524 = vpop.f32.mrb[0].mxu0
      %v4525 = vadd.f32 0.0, %v4524
      %v4526 = vpop.f32.mrb[0].mxu0
      %4527 = vmatprep.mubr.bf16.mxu0 0
      %4528 = vmatmul.mubr.bf16.gmra.mrb[0].mxu0 %v4370
      %v4529 = vpop.f32.mrb[0].mxu0
      %v4530 = vadd.f32 0.0, %v4529
      %v4531 = vpop.f32.mrb[0].mxu0
      %v4532 = vpop.f32.mrb[0].mxu0
      %v4533 = vadd.f32 0.0, %v4532
      %v4534 = vpop.f32.mrb[0].mxu0
      %4535 = vmatprep.mubr.bf16.mxu0 0
      %4536 = vmatmul.mubr.bf16.gmra.mrb[0].mxu0 %v4371
      %v4537 = vpop.f32.mrb[0].mxu0
      %v4538 = vadd.f32 0.0, %v4537
      %v4539 = vpop.f32.mrb[0].mxu0
      %v4540 = vpop.f32.mrb[0].mxu0
      %v4541 = vadd.f32 0.0, %v4540
      %v4542 = vpop.f32.mrb[0].mxu0
      %4543 = vmatprep.mubr.bf16.mxu0 0
      %4544 = vmatmul.mubr.bf16.gmra.mrb[0].mxu0 %v4372
      %v4545 = vpop.f32.mrb[0].mxu0
      %v4546 = vadd.f32 0.0, %v4545
      %v4547 = vpop.f32.mrb[0].mxu0
      %v4548 = vpop.f32.mrb[0].mxu0
      %v4549 = vadd.f32 0.0, %v4548
      %v4550 = vpop.f32.mrb[0].mxu0
      %4551 = vmatprep.mubr.bf16.mxu0 0
      %4552 = vmatmul.mubr.bf16.gmra.mrb[0].mxu0 %v4373
      %v4553 = vpop.f32.mrb[0].mxu0
      %v4554 = vadd.f32 0.0, %v4553
      %v4555 = vpop.f32.mrb[0].mxu0
      %v4556 = vpop.f32.mrb[0].mxu0
      %v4557 = vadd.f32 0.0, %v4556
      %v4558 = vpop.f32.mrb[0].mxu0
      %4559 = vmatprep.mubr.bf16.mxu0 0
      %4560 = vmatmul.mubr.bf16.gmra.mrb[0].mxu0 %v4374
      %v4561 = vpop.f32.mrb[0].mxu0
      %v4562 = vadd.f32 0.0, %v4561
      %v4563 = vpop.f32.mrb[0].mxu0
      %v4564 = vpop.f32.mrb[0].mxu0
      %v4565 = vadd.f32 0.0, %v4564
      %v4566 = vpop.f32.mrb[0].mxu0
      %4567 = vdwg.mxu0
      %v4568 = vadd.f32 %v4245, %v4474
      %v4569 = vadd.f32 %v4248, %v4477
      %v4570 = vadd.f32 %v4253, %v4482
      %v4571 = vadd.f32 %v4256, %v4485
      %v4572 = vadd.f32 %v4261, %v4490
      %v4573 = vadd.f32 %v4264, %v4493
      %v4574 = vadd.f32 %v4269, %v4498
      %v4575 = vadd.f32 %v4272, %v4501
      %v4576 = vadd.f32 %v4277, %v4506
      %v4577 = vadd.f32 %v4280, %v4509
      %v4578 = vadd.f32 %v4285, %v4514
      %v4579 = vadd.f32 %v4288, %v4517
      %v4580 = vadd.f32 %v4293, %v4522
      %v4581 = vadd.f32 %v4296, %v4525
      %v4582 = vadd.f32 %v4301, %v4530
      %v4583 = vadd.f32 %v4304, %v4533
      %v4584 = vadd.f32 %v4309, %v4538
      %v4585 = vadd.f32 %v4312, %v4541
      %v4586 = vadd.f32 %v4317, %v4546
      %v4587 = vadd.f32 %v4320, %v4549
      %v4588 = vadd.f32 %v4325, %v4554
      %v4589 = vadd.f32 %v4328, %v4557
      %v4590 = vadd.f32 %v4333, %v4562
      %v4591 = vadd.f32 %v4336, %v4565
      %v4592 = vadd.f32 %v4568, %v2707
      %v4593 = vadd.f32 %v4569, %v2707
      %v4594 = vadd.f32 %v4570, %v2707
      %v4595 = vadd.f32 %v4571, %v2707
      %v4596 = vadd.f32 %v4572, %v2707
      %v4597 = vadd.f32 %v4573, %v2707
      %v4598 = vadd.f32 %v4574, %v2707
      %v4599 = vadd.f32 %v4575, %v2707
      %v4600 = vadd.f32 %v4576, %v2707
      %v4601 = vadd.f32 %v4577, %v2707
      %v4602 = vadd.f32 %v4578, %v2707
      %v4603 = vadd.f32 %v4579, %v2707
      %v4604 = vadd.f32 %v4580, %v2707
      %v4605 = vadd.f32 %v4581, %v2707
      %v4606 = vadd.f32 %v4582, %v2707
      %v4607 = vadd.f32 %v4583, %v2707
      %v4608 = vadd.f32 %v4584, %v2707
      %v4609 = vadd.f32 %v4585, %v2707
      %v4610 = vadd.f32 %v4586, %v2707
      %v4611 = vadd.f32 %v4587, %v2707
      %v4612 = vadd.f32 %v4588, %v2707
      %v4613 = vadd.f32 %v4589, %v2707
      %v4614 = vadd.f32 %v4590, %v2707
      %v4615 = vadd.f32 %v4591, %v2707
      %v4616 = vxor.u32 %v4592, 2147483648
      %v4617 = vxor.u32 %v4593, 2147483648
      %v4618 = vxor.u32 %v4594, 2147483648
      %v4619 = vxor.u32 %v4595, 2147483648
      %v4620 = vxor.u32 %v4596, 2147483648
      %v4621 = vxor.u32 %v4597, 2147483648
      %v4622 = vxor.u32 %v4598, 2147483648
      %v4623 = vxor.u32 %v4599, 2147483648
      %v4624 = vxor.u32 %v4600, 2147483648
      %v4625 = vxor.u32 %v4601, 2147483648
      %v4626 = vxor.u32 %v4602, 2147483648
      %v4627 = vxor.u32 %v4603, 2147483648
      %v4628 = vxor.u32 %v4604, 2147483648
      %v4629 = vxor.u32 %v4605, 2147483648
      %v4630 = vxor.u32 %v4606, 2147483648
      %v4631 = vxor.u32 %v4607, 2147483648
      %v4632 = vxor.u32 %v4608, 2147483648
      %v4633 = vxor.u32 %v4609, 2147483648
      %v4634 = vxor.u32 %v4610, 2147483648
      %v4635 = vxor.u32 %v4611, 2147483648
      %v4636 = vxor.u32 %v4612, 2147483648
      %v4637 = vxor.u32 %v4613, 2147483648
      %v4638 = vxor.u32 %v4614, 2147483648
      %v4639 = vxor.u32 %v4615, 2147483648
      %v4640 = vmul.f32 %v4616, 1.442695
      %v4641 = vpow.pop %v4640
      %v4642 = vmul.f32 %v4617, 1.442695
      %v4643 = vpow.pop %v4642
      %v4644 = vmul.f32 %v4618, 1.442695
      %v4645 = vpow.pop %v4644
      %v4646 = vmul.f32 %v4619, 1.442695
      %v4647 = vpow.pop %v4646
      %v4648 = vmul.f32 %v4620, 1.442695
      %v4649 = vpow.pop %v4648
      %v4650 = vmul.f32 %v4621, 1.442695
      %v4651 = vpow.pop %v4650
      %v4652 = vmul.f32 %v4622, 1.442695
      %v4653 = vpow.pop %v4652
      %v4654 = vmul.f32 %v4623, 1.442695
      %v4655 = vpow.pop %v4654
      %v4656 = vmul.f32 %v4624, 1.442695
      %v4657 = vpow.pop %v4656
      %v4658 = vmul.f32 %v4625, 1.442695
      %v4659 = vpow.pop %v4658
      %v4660 = vmul.f32 %v4626, 1.442695
      %v4661 = vpow.pop %v4660
      %v4662 = vmul.f32 %v4627, 1.442695
      %v4663 = vpow.pop %v4662
      %v4664 = vmul.f32 %v4628, 1.442695
      %v4665 = vpow.pop %v4664
      %v4666 = vmul.f32 %v4629, 1.442695
      %v4667 = vpow.pop %v4666
      %v4668 = vmul.f32 %v4630, 1.442695
      %v4669 = vpow.pop %v4668
      %v4670 = vmul.f32 %v4631, 1.442695
      %v4671 = vpow.pop %v4670
      %v4672 = vmul.f32 %v4632, 1.442695
      %v4673 = vpow.pop %v4672
      %v4674 = vmul.f32 %v4633, 1.442695
      %v4675 = vpow.pop %v4674
      %v4676 = vmul.f32 %v4634, 1.442695
      %v4677 = vpow.pop %v4676
      %v4678 = vmul.f32 %v4635, 1.442695
      %v4679 = vpow.pop %v4678
      %v4680 = vmul.f32 %v4636, 1.442695
      %v4681 = vpow.pop %v4680
      %v4682 = vmul.f32 %v4637, 1.442695
      %v4683 = vpow.pop %v4682
      %v4684 = vmul.f32 %v4638, 1.442695
      %v4685 = vpow.pop %v4684
      %v4686 = vmul.f32 %v4639, 1.442695
      %v4687 = vpow.pop %v4686
      %v4688 = vadd.f32 %v4641, 1.0
      %v4689 = vadd.f32 %v4643, 1.0
      %v4690 = vadd.f32 %v4645, 1.0
      %v4691 = vadd.f32 %v4647, 1.0
      %v4692 = vadd.f32 %v4649, 1.0
      %v4693 = vadd.f32 %v4651, 1.0
      %v4694 = vadd.f32 %v4653, 1.0
      %v4695 = vadd.f32 %v4655, 1.0
      %v4696 = vadd.f32 %v4657, 1.0
      %v4697 = vadd.f32 %v4659, 1.0
      %v4698 = vadd.f32 %v4661, 1.0
      %v4699 = vadd.f32 %v4663, 1.0
      %v4700 = vadd.f32 %v4665, 1.0
      %v4701 = vadd.f32 %v4667, 1.0
      %v4702 = vadd.f32 %v4669, 1.0
      %v4703 = vadd.f32 %v4671, 1.0
      %v4704 = vadd.f32 %v4673, 1.0
      %v4705 = vadd.f32 %v4675, 1.0
      %v4706 = vadd.f32 %v4677, 1.0
      %v4707 = vadd.f32 %v4679, 1.0
      %v4708 = vadd.f32 %v4681, 1.0
      %v4709 = vadd.f32 %v4683, 1.0
      %v4710 = vadd.f32 %v4685, 1.0
      %v4711 = vadd.f32 %v4687, 1.0
      %v4712 = vrcp.pop %v4688
      %v4713 = vmul.f32 1.0, %v4712
      %v4714 = vrcp.pop %v4689
      %v4715 = vmul.f32 1.0, %v4714
      %v4716 = vrcp.pop %v4690
      %v4717 = vmul.f32 1.0, %v4716
      %v4718 = vrcp.pop %v4691
      %v4719 = vmul.f32 1.0, %v4718
      %v4720 = vrcp.pop %v4692
      %v4721 = vmul.f32 1.0, %v4720
      %v4722 = vrcp.pop %v4693
      %v4723 = vmul.f32 1.0, %v4722
      %v4724 = vrcp.pop %v4694
      %v4725 = vmul.f32 1.0, %v4724
      %v4726 = vrcp.pop %v4695
      %v4727 = vmul.f32 1.0, %v4726
      %v4728 = vrcp.pop %v4696
      %v4729 = vmul.f32 1.0, %v4728
      %v4730 = vrcp.pop %v4697
      %v4731 = vmul.f32 1.0, %v4730
      %v4732 = vrcp.pop %v4698
      %v4733 = vmul.f32 1.0, %v4732
      %v4734 = vrcp.pop %v4699
      %v4735 = vmul.f32 1.0, %v4734
      %v4736 = vrcp.pop %v4700
      %v4737 = vmul.f32 1.0, %v4736
      %v4738 = vrcp.pop %v4701
      %v4739 = vmul.f32 1.0, %v4738
      %v4740 = vrcp.pop %v4702
      %v4741 = vmul.f32 1.0, %v4740
      %v4742 = vrcp.pop %v4703
      %v4743 = vmul.f32 1.0, %v4742
      %v4744 = vrcp.pop %v4704
      %v4745 = vmul.f32 1.0, %v4744
      %v4746 = vrcp.pop %v4705
      %v4747 = vmul.f32 1.0, %v4746
      %v4748 = vrcp.pop %v4706
      %v4749 = vmul.f32 1.0, %v4748
      %v4750 = vrcp.pop %v4707
      %v4751 = vmul.f32 1.0, %v4750
      %v4752 = vrcp.pop %v4708
      %v4753 = vmul.f32 1.0, %v4752
      %v4754 = vrcp.pop %v4709
      %v4755 = vmul.f32 1.0, %v4754
      %v4756 = vrcp.pop %v4710
      %v4757 = vmul.f32 1.0, %v4756
      %v4758 = vrcp.pop %v4711
      %v4759 = vmul.f32 1.0, %v4758
      %v4760 = vmul.f32 %v4592, %v4713
      %v4761 = vmul.f32 %v4593, %v4715
      %v4762 = vmul.f32 %v4594, %v4717
      %v4763 = vmul.f32 %v4595, %v4719
      %v4764 = vmul.f32 %v4596, %v4721
      %v4765 = vmul.f32 %v4597, %v4723
      %v4766 = vmul.f32 %v4598, %v4725
      %v4767 = vmul.f32 %v4599, %v4727
      %v4768 = vmul.f32 %v4600, %v4729
      %v4769 = vmul.f32 %v4601, %v4731
      %v4770 = vmul.f32 %v4602, %v4733
      %v4771 = vmul.f32 %v4603, %v4735
      %v4772 = vmul.f32 %v4604, %v4737
      %v4773 = vmul.f32 %v4605, %v4739
      %v4774 = vmul.f32 %v4606, %v4741
      %v4775 = vmul.f32 %v4607, %v4743
      %v4776 = vmul.f32 %v4608, %v4745
      %v4777 = vmul.f32 %v4609, %v4747
      %v4778 = vmul.f32 %v4610, %v4749
      %v4779 = vmul.f32 %v4611, %v4751
      %v4780 = vmul.f32 %v4612, %v4753
      %v4781 = vmul.f32 %v4613, %v4755
      %v4782 = vmul.f32 %v4614, %v4757
      %v4783 = vmul.f32 %v4615, %v4759
      %v4784 = vld [vmem:[%s3 + $0x60] sm:$0xf]
      %v4785 = vld [vmem:[%s3 + $0x64] sm:$0xf]
      %v4786 = vld [vmem:[%s3 + $0x68] sm:$0xf]
      %v4787 = vld [vmem:[%s3 + $0x6c] sm:$0xf]
      %v4788 = vld [vmem:[%s3 + $0x70] sm:$0xf]
      %v4789 = vld [vmem:[%s3 + $0x74] sm:$0xf]
      %v4790 = vld [vmem:[%s3 + $0x78] sm:$0xf]
      %v4791 = vld [vmem:[%s3 + $0x7c] sm:$0xf]
      %v4792 = vld [vmem:[%s3 + $0x80] sm:$0xf]
      %v4793 = vld [vmem:[%s3 + $0x84] sm:$0xf]
      %v4794 = vld [vmem:[%s3 + $0x88] sm:$0xf]
      %v4795 = vld [vmem:[%s3 + $0x8c] sm:$0xf]
      %v4796 = vld [vmem:[%s3 + $0x90] sm:$0xf]
      %v4797 = vld [vmem:[%s3 + $0x94] sm:$0xf]
      %v4798 = vld [vmem:[%s3 + $0x98] sm:$0xf]
      %v4799 = vld [vmem:[%s3 + $0x9c] sm:$0xf]
      %v4800 = vld [vmem:[%s3 + $0xa0] sm:$0xf]
      %v4801 = vld [vmem:[%s3 + $0xa4] sm:$0xf]
      %v4802 = vld [vmem:[%s3 + $0xa8] sm:$0xf]
      %v4803 = vld [vmem:[%s3 + $0xac] sm:$0xf]
      %v4804 = vld [vmem:[%s3 + $0xb0] sm:$0xf]
      %v4805 = vld [vmem:[%s3 + $0xb4] sm:$0xf]
      %v4806 = vld [vmem:[%s3 + $0xb8] sm:$0xf]
      %v4807 = vld [vmem:[%s3 + $0xbc] sm:$0xf]
      %v4808 = vunpack.c.l.bf16 %v4784
      %v4809 = vunpack.c.l.bf16 %v4785
      %v4810 = vunpack.c.l.bf16 %v4786
      %v4811 = vunpack.c.l.bf16 %v4787
      %v4812 = vunpack.c.l.bf16 %v4788
      %v4813 = vunpack.c.l.bf16 %v4789
      %v4814 = vunpack.c.l.bf16 %v4790
      %v4815 = vunpack.c.l.bf16 %v4791
      %v4816 = vunpack.c.l.bf16 %v4792
      %v4817 = vunpack.c.l.bf16 %v4793
      %v4818 = vunpack.c.l.bf16 %v4794
      %v4819 = vunpack.c.l.bf16 %v4795
      %v4820 = vunpack.c.l.bf16 %v4796
      %v4821 = vunpack.c.l.bf16 %v4797
      %v4822 = vunpack.c.l.bf16 %v4798
      %v4823 = vunpack.c.l.bf16 %v4799
      %v4824 = vunpack.c.l.bf16 %v4800
      %v4825 = vunpack.c.l.bf16 %v4801
      %v4826 = vunpack.c.l.bf16 %v4802
      %v4827 = vunpack.c.l.bf16 %v4803
      %v4828 = vunpack.c.l.bf16 %v4804
      %v4829 = vunpack.c.l.bf16 %v4805
      %v4830 = vunpack.c.l.bf16 %v4806
      %v4831 = vunpack.c.l.bf16 %v4807
      %v4832 = vmul.f32 %v4760, %v4808
      %v4833 = vmul.f32 %v4761, %v4809
      %v4834 = vmul.f32 %v4762, %v4810
      %v4835 = vmul.f32 %v4763, %v4811
      %v4836 = vmul.f32 %v4764, %v4812
      %v4837 = vmul.f32 %v4765, %v4813
      %v4838 = vmul.f32 %v4766, %v4814
      %v4839 = vmul.f32 %v4767, %v4815
      %v4840 = vmul.f32 %v4768, %v4816
      %v4841 = vmul.f32 %v4769, %v4817
      %v4842 = vmul.f32 %v4770, %v4818
      %v4843 = vmul.f32 %v4771, %v4819
      %v4844 = vmul.f32 %v4772, %v4820
      %v4845 = vmul.f32 %v4773, %v4821
      %v4846 = vmul.f32 %v4774, %v4822
      %v4847 = vmul.f32 %v4775, %v4823
      %v4848 = vmul.f32 %v4776, %v4824
      %v4849 = vmul.f32 %v4777, %v4825
      %v4850 = vmul.f32 %v4778, %v4826
      %v4851 = vmul.f32 %v4779, %v4827
      %v4852 = vmul.f32 %v4780, %v4828
      %v4853 = vmul.f32 %v4781, %v4829
      %v4854 = vmul.f32 %v4782, %v4830
      %v4855 = vmul.f32 %v4783, %v4831
      %4880 = vrot.lane.b32.xlu0 %v4832, 32
      %v4881 = vpop.permute.xlu0 %4880
      %4882 = vrot.lane.b32.xlu0 %v4833, 32
      %v4883 = vpop.permute.xlu0 %4882
      %4884 = vrot.lane.b32.xlu0 %v4834, 32
      %v4885 = vpop.permute.xlu0 %4884
      %4886 = vrot.lane.b32.xlu0 %v4835, 32
      %v4887 = vpop.permute.xlu0 %4886
      %4888 = vrot.lane.b32.xlu0 %v4836, 32
      %v4889 = vpop.permute.xlu0 %4888
      %4890 = vrot.lane.b32.xlu0 %v4837, 32
      %v4891 = vpop.permute.xlu0 %4890
      %4892 = vrot.lane.b32.xlu0 %v4838, 32
      %v4893 = vpop.permute.xlu0 %4892
      %4894 = vrot.lane.b32.xlu0 %v4839, 32
      %v4895 = vpop.permute.xlu0 %4894
      %4896 = vrot.lane.b32.xlu0 %v4840, 32
      %v4897 = vpop.permute.xlu0 %4896
      %4898 = vrot.lane.b32.xlu0 %v4841, 32
      %v4899 = vpop.permute.xlu0 %4898
      %4900 = vrot.lane.b32.xlu0 %v4842, 32
      %v4901 = vpop.permute.xlu0 %4900
      %4902 = vrot.lane.b32.xlu0 %v4843, 32
      %v4903 = vpop.permute.xlu0 %4902
      %4904 = vrot.lane.b32.xlu0 %v4844, 32
      %v4905 = vpop.permute.xlu0 %4904
      %4906 = vrot.lane.b32.xlu0 %v4845, 32
      %v4907 = vpop.permute.xlu0 %4906
      %4908 = vrot.lane.b32.xlu0 %v4846, 32
      %v4909 = vpop.permute.xlu0 %4908
      %4910 = vrot.lane.b32.xlu0 %v4847, 32
      %v4911 = vpop.permute.xlu0 %4910
      %4912 = vrot.lane.b32.xlu0 %v4848, 32
      %v4913 = vpop.permute.xlu0 %4912
      %4914 = vrot.lane.b32.xlu0 %v4849, 32
      %v4915 = vpop.permute.xlu0 %4914
      %4916 = vrot.lane.b32.xlu0 %v4850, 32
      %v4917 = vpop.permute.xlu0 %4916
      %4918 = vrot.lane.b32.xlu0 %v4851, 32
      %v4919 = vpop.permute.xlu0 %4918
      %4920 = vrot.lane.b32.xlu0 %v4852, 32
      %v4921 = vpop.permute.xlu0 %4920
      %4922 = vrot.lane.b32.xlu0 %v4853, 32
      %v4923 = vpop.permute.xlu0 %4922
      %4924 = vrot.lane.b32.xlu0 %v4854, 32
      %v4925 = vpop.permute.xlu0 %4924
      %4926 = vrot.lane.b32.xlu0 %v4855, 32
      %v4927 = vpop.permute.xlu0 %4926
      %4952 = vst.msk [vmem:[#allocation3 + $0xd8] sm:$0xff] %vm1308, %v4881
      %4953 = vst.msk [vmem:[#allocation3 + $0xe0] sm:$0xff] %vm1308, %v4883
      %4954 = vst.msk [vmem:[#allocation3 + $0xe8] sm:$0xff] %vm1308, %v4885
      %4955 = vst.msk [vmem:[#allocation3 + $0xf0] sm:$0xff] %vm1308, %v4887
      %4956 = vst.msk [vmem:[#allocation3 + $0xf8] sm:$0xff] %vm1308, %v4889
      %4957 = vst.msk [vmem:[#allocation3 + $0x100] sm:$0xff] %vm1308, %v4891
      %4958 = vst.msk [vmem:[#allocation3 + $0x108] sm:$0xff] %vm1308, %v4893
      %4959 = vst.msk [vmem:[#allocation3 + $0x110] sm:$0xff] %vm1308, %v4895
      %4960 = vst.msk [vmem:[#allocation3 + $0x118] sm:$0xff] %vm1308, %v4897
      %4961 = vst.msk [vmem:[#allocation3 + $0x120] sm:$0xff] %vm1308, %v4899
      %4962 = vst.msk [vmem:[#allocation3 + $0x128] sm:$0xff] %vm1308, %v4901
      %4963 = vst.msk [vmem:[#allocation3 + $0x130] sm:$0xff] %vm1308, %v4903
      %4964 = vst.msk [vmem:[#allocation3 + $0x138] sm:$0xff] %vm1308, %v4905
      %4965 = vst.msk [vmem:[#allocation3 + $0x140] sm:$0xff] %vm1308, %v4907
      %4966 = vst.msk [vmem:[#allocation3 + $0x148] sm:$0xff] %vm1308, %v4909
      %4967 = vst.msk [vmem:[#allocation3 + $0x150] sm:$0xff] %vm1308, %v4911
      %4968 = vst.msk [vmem:[#allocation3 + $0x158] sm:$0xff] %vm1308, %v4913
      %4969 = vst.msk [vmem:[#allocation3 + $0x160] sm:$0xff] %vm1308, %v4915
      %4970 = vst.msk [vmem:[#allocation3 + $0x168] sm:$0xff] %vm1308, %v4917
      %4971 = vst.msk [vmem:[#allocation3 + $0x170] sm:$0xff] %vm1308, %v4919
      %4972 = vst.msk [vmem:[#allocation3 + $0x178] sm:$0xff] %vm1308, %v4921
      %4973 = vst.msk [vmem:[#allocation3 + $0x180] sm:$0xff] %vm1308, %v4923
      %4974 = vst.msk [vmem:[#allocation3 + $0x188] sm:$0xff] %vm1308, %v4925
      %4975 = vst.msk [vmem:[#allocation3 + $0x190] sm:$0xff] %vm1308, %v4927
      %4976 = vst.msk [vmem:[#allocation3 + $0xd9] sm:$0xff] %vm1333, %v4832
      %4977 = vst.msk [vmem:[#allocation3 + $0xe1] sm:$0xff] %vm1333, %v4833
      %4978 = vst.msk [vmem:[#allocation3 + $0xe9] sm:$0xff] %vm1333, %v4834
      %4979 = vst.msk [vmem:[#allocation3 + $0xf1] sm:$0xff] %vm1333, %v4835
      %4980 = vst.msk [vmem:[#allocation3 + $0xf9] sm:$0xff] %vm1333, %v4836
      %4981 = vst.msk [vmem:[#allocation3 + $0x101] sm:$0xff] %vm1333, %v4837
      %4982 = vst.msk [vmem:[#allocation3 + $0x109] sm:$0xff] %vm1333, %v4838
      %4983 = vst.msk [vmem:[#allocation3 + $0x111] sm:$0xff] %vm1333, %v4839
      %4984 = vst.msk [vmem:[#allocation3 + $0x119] sm:$0xff] %vm1333, %v4840
      %4985 = vst.msk [vmem:[#allocation3 + $0x121] sm:$0xff] %vm1333, %v4841
      %4986 = vst.msk [vmem:[#allocation3 + $0x129] sm:$0xff] %vm1333, %v4842
      %4987 = vst.msk [vmem:[#allocation3 + $0x131] sm:$0xff] %vm1333, %v4843
      %4988 = vst.msk [vmem:[#allocation3 + $0x139] sm:$0xff] %vm1333, %v4844
      %4989 = vst.msk [vmem:[#allocation3 + $0x141] sm:$0xff] %vm1333, %v4845
      %4990 = vst.msk [vmem:[#allocation3 + $0x149] sm:$0xff] %vm1333, %v4846
      %4991 = vst.msk [vmem:[#allocation3 + $0x151] sm:$0xff] %vm1333, %v4847
      %4992 = vst.msk [vmem:[#allocation3 + $0x159] sm:$0xff] %vm1333, %v4848
      %4993 = vst.msk [vmem:[#allocation3 + $0x161] sm:$0xff] %vm1333, %v4849
      %4994 = vst.msk [vmem:[#allocation3 + $0x169] sm:$0xff] %vm1333, %v4850
      %4995 = vst.msk [vmem:[#allocation3 + $0x171] sm:$0xff] %vm1333, %v4851
      %4996 = vst.msk [vmem:[#allocation3 + $0x179] sm:$0xff] %vm1333, %v4852
      %4997 = vst.msk [vmem:[#allocation3 + $0x181] sm:$0xff] %vm1333, %v4853
      %4998 = vst.msk [vmem:[#allocation3 + $0x189] sm:$0xff] %vm1333, %v4854
      %4999 = vst.msk [vmem:[#allocation3 + $0x191] sm:$0xff] %vm1333, %v4855
      %5000 = vrot.lane.b32.xlu0 %v4832, 64
      %v5001 = vpop.permute.xlu0 %5000
      %5002 = vrot.lane.b32.xlu0 %v4833, 64
      %v5003 = vpop.permute.xlu0 %5002
      %5004 = vrot.lane.b32.xlu0 %v4834, 64
      %v5005 = vpop.permute.xlu0 %5004
      %5006 = vrot.lane.b32.xlu0 %v4835, 64
      %v5007 = vpop.permute.xlu0 %5006
      %5008 = vrot.lane.b32.xlu0 %v4836, 64
      %v5009 = vpop.permute.xlu0 %5008
      %5010 = vrot.lane.b32.xlu0 %v4837, 64
      %v5011 = vpop.permute.xlu0 %5010
      %5012 = vrot.lane.b32.xlu0 %v4838, 64
      %v5013 = vpop.permute.xlu0 %5012
      %5014 = vrot.lane.b32.xlu0 %v4839, 64
      %v5015 = vpop.permute.xlu0 %5014
      %5016 = vrot.lane.b32.xlu0 %v4840, 64
      %v5017 = vpop.permute.xlu0 %5016
      %5018 = vrot.lane.b32.xlu0 %v4841, 64
      %v5019 = vpop.permute.xlu0 %5018
      %5020 = vrot.lane.b32.xlu0 %v4842, 64
      %v5021 = vpop.permute.xlu0 %5020
      %5022 = vrot.lane.b32.xlu0 %v4843, 64
      %v5023 = vpop.permute.xlu0 %5022
      %5024 = vrot.lane.b32.xlu0 %v4844, 64
      %v5025 = vpop.permute.xlu0 %5024
      %5026 = vrot.lane.b32.xlu0 %v4845, 64
      %v5027 = vpop.permute.xlu0 %5026
      %5028 = vrot.lane.b32.xlu0 %v4846, 64
      %v5029 = vpop.permute.xlu0 %5028
      %5030 = vrot.lane.b32.xlu0 %v4847, 64
      %v5031 = vpop.permute.xlu0 %5030
      %5032 = vrot.lane.b32.xlu0 %v4848, 64
      %v5033 = vpop.permute.xlu0 %5032
      %5034 = vrot.lane.b32.xlu0 %v4849, 64
      %v5035 = vpop.permute.xlu0 %5034
      %5036 = vrot.lane.b32.xlu0 %v4850, 64
      %v5037 = vpop.permute.xlu0 %5036
      %5038 = vrot.lane.b32.xlu0 %v4851, 64
      %v5039 = vpop.permute.xlu0 %5038
      %5040 = vrot.lane.b32.xlu0 %v4852, 64
      %v5041 = vpop.permute.xlu0 %5040
      %5042 = vrot.lane.b32.xlu0 %v4853, 64
      %v5043 = vpop.permute.xlu0 %5042
      %5044 = vrot.lane.b32.xlu0 %v4854, 64
      %v5045 = vpop.permute.xlu0 %5044
      %5046 = vrot.lane.b32.xlu0 %v4855, 64
      %v5047 = vpop.permute.xlu0 %5046
      %5072 = vst.msk [vmem:[#allocation3 + $0xd7] sm:$0xff] %vm1430, %v5001
      %5073 = vst.msk [vmem:[#allocation3 + $0xdf] sm:$0xff] %vm1430, %v5003
      %5074 = vst.msk [vmem:[#allocation3 + $0xe7] sm:$0xff] %vm1430, %v5005
      %5075 = vst.msk [vmem:[#allocation3 + $0xef] sm:$0xff] %vm1430, %v5007
      %5076 = vst.msk [vmem:[#allocation3 + $0xf7] sm:$0xff] %vm1430, %v5009
      %5077 = vst.msk [vmem:[#allocation3 + $0xff] sm:$0xff] %vm1430, %v5011
      %5078 = vst.msk [vmem:[#allocation3 + $0x107] sm:$0xff] %vm1430, %v5013
      %5079 = vst.msk [vmem:[#allocation3 + $0x10f] sm:$0xff] %vm1430, %v5015
      %5080 = vst.msk [vmem:[#allocation3 + $0x117] sm:$0xff] %vm1430, %v5017
      %5081 = vst.msk [vmem:[#allocation3 + $0x11f] sm:$0xff] %vm1430, %v5019
      %5082 = vst.msk [vmem:[#allocation3 + $0x127] sm:$0xff] %vm1430, %v5021
      %5083 = vst.msk [vmem:[#allocation3 + $0x12f] sm:$0xff] %vm1430, %v5023
      %5084 = vst.msk [vmem:[#allocation3 + $0x137] sm:$0xff] %vm1430, %v5025
      %5085 = vst.msk [vmem:[#allocation3 + $0x13f] sm:$0xff] %vm1430, %v5027
      %5086 = vst.msk [vmem:[#allocation3 + $0x147] sm:$0xff] %vm1430, %v5029
      %5087 = vst.msk [vmem:[#allocation3 + $0x14f] sm:$0xff] %vm1430, %v5031
      %5088 = vst.msk [vmem:[#allocation3 + $0x157] sm:$0xff] %vm1430, %v5033
      %5089 = vst.msk [vmem:[#allocation3 + $0x15f] sm:$0xff] %vm1430, %v5035
      %5090 = vst.msk [vmem:[#allocation3 + $0x167] sm:$0xff] %vm1430, %v5037
      %5091 = vst.msk [vmem:[#allocation3 + $0x16f] sm:$0xff] %vm1430, %v5039
      %5092 = vst.msk [vmem:[#allocation3 + $0x177] sm:$0xff] %vm1430, %v5041
      %5093 = vst.msk [vmem:[#allocation3 + $0x17f] sm:$0xff] %vm1430, %v5043
      %5094 = vst.msk [vmem:[#allocation3 + $0x187] sm:$0xff] %vm1430, %v5045
      %5095 = vst.msk [vmem:[#allocation3 + $0x18f] sm:$0xff] %vm1430, %v5047
      %5096 = vst [vmem:[#allocation2] sm:$0xff] 0.0
      %5097 = vst [vmem:[#allocation2 + $0x8] sm:$0xff] 0.0
      %5098 = vst [vmem:[#allocation2 + $0x10] sm:$0xff] 0.0
      %5099 = vst [vmem:[#allocation2 + $0x18] sm:$0xff] 0.0
      %5100 = vst [vmem:[#allocation2 + $0x20] sm:$0xff] 0.0
      %5101 = vst [vmem:[#allocation2 + $0x28] sm:$0xff] 0.0
      %5102 = vst [vmem:[#allocation2 + $0x30] sm:$0xff] 0.0
      %5103 = vst [vmem:[#allocation2 + $0x38] sm:$0xff] 0.0
      %5104 = vst [vmem:[#allocation2 + $0x40] sm:$0xff] 0.0
      %5105 = vst [vmem:[#allocation2 + $0x48] sm:$0xff] 0.0
      %5106 = vst [vmem:[#allocation2 + $0x50] sm:$0xff] 0.0
      %5107 = vst [vmem:[#allocation2 + $0x58] sm:$0xff] 0.0
      %5108 = vst [vmem:[#allocation2 + $0x60] sm:$0xff] 0.0
      %5109 = vst [vmem:[#allocation2 + $0x68] sm:$0xff] 0.0
      %5110 = vst [vmem:[#allocation2 + $0x70] sm:$0xff] 0.0
      %5111 = vst [vmem:[#allocation2 + $0x78] sm:$0xff] 0.0
      %5112 = vst [vmem:[#allocation2 + $0x80] sm:$0xff] 0.0
      %5113 = vst [vmem:[#allocation2 + $0x88] sm:$0xff] 0.0
      %5114 = vst [vmem:[#allocation2 + $0x90] sm:$0xff] 0.0
      %5115 = vst [vmem:[#allocation2 + $0x98] sm:$0xff] 0.0
      %v5116 = vld [vmem:[%s2 + $0x2] sm:$0x1]
      %v5117 = vlaneseq
      %v5118 = vshrl.u32 %v5117, 7
      %v5119 = vsub.s32 0, %v5118
      %v5120 = vrot.slane %v5116, %v5119
      %s5121 = scalar_lea.vmem [#allocation3], 1
      %v5122 = vld [vmem:[%s5121] ss:$2 sm:$0xff]
      %v5123 = vpack.c.bf16 %v5122, %v5122
      %v5124 = vld [vmem:[%s1 + $0x180] sm:$0xf]
      %v5125 = vld [vmem:[%s1 + $0x184] sm:$0xf]
      %v5126 = vld [vmem:[%s1 + $0x188] sm:$0xf]
      %v5127 = vld [vmem:[%s1 + $0x18c] sm:$0xf]
      %v5128 = vld [vmem:[%s1 + $0x190] sm:$0xf]
      %v5129 = vld [vmem:[%s1 + $0x194] sm:$0xf]
      %v5130 = vld [vmem:[%s1 + $0x198] sm:$0xf]
      %v5131 = vld [vmem:[%s1 + $0x19c] sm:$0xf]
      %v5132 = vld [vmem:[%s1 + $0x1a0] sm:$0xf]
      %v5133 = vld [vmem:[%s1 + $0x1a4] sm:$0xf]
      %v5134 = vld [vmem:[%s1 + $0x1a8] sm:$0xf]
      %v5135 = vld [vmem:[%s1 + $0x1ac] sm:$0xf]
      %v5136 = vld [vmem:[%s1 + $0x1b0] sm:$0xf]
      %v5137 = vld [vmem:[%s1 + $0x1b4] sm:$0xf]
      %v5138 = vld [vmem:[%s1 + $0x1b8] sm:$0xf]
      %v5139 = vld [vmem:[%s1 + $0x1bc] sm:$0xf]
      %s5140 = scalar_lea.vmem [#allocation3], 25
      %v5141 = vld [vmem:[%s5140] ss:$2 sm:$0xff]
      %v5142 = vpack.c.bf16 %v5141, %v5141
      %v5143 = vld [vmem:[%s1 + $0x1c0] sm:$0xf]
      %v5144 = vld [vmem:[%s1 + $0x1c4] sm:$0xf]
      %v5145 = vld [vmem:[%s1 + $0x1c8] sm:$0xf]
      %v5146 = vld [vmem:[%s1 + $0x1cc] sm:$0xf]
      %v5147 = vld [vmem:[%s1 + $0x1d0] sm:$0xf]
      %v5148 = vld [vmem:[%s1 + $0x1d4] sm:$0xf]
      %v5149 = vld [vmem:[%s1 + $0x1d8] sm:$0xf]
      %v5150 = vld [vmem:[%s1 + $0x1dc] sm:$0xf]
      %v5151 = vld [vmem:[%s1 + $0x1e0] sm:$0xf]
      %v5152 = vld [vmem:[%s1 + $0x1e4] sm:$0xf]
      %v5153 = vld [vmem:[%s1 + $0x1e8] sm:$0xf]
      %v5154 = vld [vmem:[%s1 + $0x1ec] sm:$0xf]
      %v5155 = vld [vmem:[%s1 + $0x1f0] sm:$0xf]
      %v5156 = vld [vmem:[%s1 + $0x1f4] sm:$0xf]
      %v5157 = vld [vmem:[%s1 + $0x1f8] sm:$0xf]
      %v5158 = vld [vmem:[%s1 + $0x1fc] sm:$0xf]
      %v5175 = vunpack.c.l.b16 %v5143
      %v5176 = vunpack.c.l.b16 %v5144
      %v5177 = vunpack.c.l.b16 %v5145
      %v5178 = vunpack.c.l.b16 %v5146
      %v5179 = vunpack.c.l.b16 %v5147
      %v5180 = vunpack.c.l.b16 %v5148
      %v5181 = vunpack.c.l.b16 %v5149
      %v5182 = vunpack.c.l.b16 %v5150
      %v5183 = vunpack.c.l.b16 %v5151
      %v5184 = vunpack.c.l.b16 %v5152
      %v5185 = vunpack.c.l.b16 %v5153
      %v5186 = vunpack.c.l.b16 %v5154
      %v5187 = vunpack.c.l.b16 %v5155
      %v5188 = vunpack.c.l.b16 %v5156
      %v5189 = vunpack.c.l.b16 %v5157
      %v5190 = vunpack.c.l.b16 %v5158
      %v5191 = vpack.c.b16 %v5176, %v5175
      %v5192 = vpack.c.b16 %v5178, %v5177
      %v5193 = vpack.c.b16 %v5180, %v5179
      %v5194 = vpack.c.b16 %v5182, %v5181
      %v5195 = vpack.c.b16 %v5184, %v5183
      %v5196 = vpack.c.b16 %v5186, %v5185
      %v5197 = vpack.c.b16 %v5188, %v5187
      %v5198 = vpack.c.b16 %v5190, %v5189
      %5207 = vmatprep.subr.bf16.mxu0 0
      %5208 = vmatpush1.bf16.msra.mxu0 %v5191
      %5209 = vmatprep.subr.bf16.mxu0 0
      %5210 = vmatpush1.bf16.msra.mxu0 %v5192
      %5211 = vmatprep.subr.bf16.mxu0 0
      %5212 = vmatpush1.bf16.msra.mxu0 %v5193
      %5213 = vmatprep.subr.bf16.mxu0 0
      %5214 = vmatpush1.bf16.msra.mxu0 %v5194
      %5215 = vmatprep.subr.bf16.mxu0 0
      %5216 = vmatpush1.bf16.msra.mxu0 %v5195
      %5217 = vmatprep.subr.bf16.mxu0 0
      %5218 = vmatpush1.bf16.msra.mxu0 %v5196
      %5219 = vmatprep.subr.bf16.mxu0 0
      %5220 = vmatpush1.bf16.msra.mxu0 %v5197
      %5221 = vmatprep.subr.bf16.mxu0 0
      %5222 = vmatpush1.bf16.msra.mxu0 %v5198
      %5223 = vmatprep.subr.bf16.mxu0 0
      %5224 = vmatpush1.bf16.msra.mxu0 0
      %5225 = vmatprep.subr.bf16.mxu0 0
      %5226 = vmatpush1.bf16.msra.mxu0 0
      %5227 = vmatprep.subr.bf16.mxu0 0
      %5228 = vmatpush1.bf16.msra.mxu0 0
      %5229 = vmatprep.subr.bf16.mxu0 0
      %5230 = vmatpush1.bf16.msra.mxu0 0
      %5231 = vmatprep.subr.bf16.mxu0 0
      %5232 = vmatpush1.bf16.msra.mxu0 0
      %5233 = vmatprep.subr.bf16.mxu0 0
      %5234 = vmatpush1.bf16.msra.mxu0 0
      %5235 = vmatprep.subr.bf16.mxu0 0
      %5236 = vmatpush1.bf16.msra.mxu0 0
      %5237 = vmatprep.subr.bf16.mxu0 0
      %5238 = vmatpush1.bf16.msra.mxu0 0
      %5239 = vmatprep.mubr.bf16.mxu0 0
      %5240 = vmatmul.mubr.bf16.gmra.mrb[0].mxu0 %v5142
      %v5241 = vpop.f32.mrb[0].mxu0
      %v5242 = vadd.f32 0.0, %v5241
      %v5243 = vpop.f32.mrb[0].mxu0
      %v5244 = vpop.f32.mrb[0].mxu0
      %v5245 = vpop.f32.mrb[0].mxu0
      %5246 = vdwg.mxu0
      %v5263 = vunpack.c.l.b16 %v5124
      %v5264 = vunpack.c.l.b16 %v5125
      %v5265 = vunpack.c.l.b16 %v5126
      %v5266 = vunpack.c.l.b16 %v5127
      %v5267 = vunpack.c.l.b16 %v5128
      %v5268 = vunpack.c.l.b16 %v5129
      %v5269 = vunpack.c.l.b16 %v5130
      %v5270 = vunpack.c.l.b16 %v5131
      %v5271 = vunpack.c.l.b16 %v5132
      %v5272 = vunpack.c.l.b16 %v5133
      %v5273 = vunpack.c.l.b16 %v5134
      %v5274 = vunpack.c.l.b16 %v5135
      %v5275 = vunpack.c.l.b16 %v5136
      %v5276 = vunpack.c.l.b16 %v5137
      %v5277 = vunpack.c.l.b16 %v5138
      %v5278 = vunpack.c.l.b16 %v5139
      %v5279 = vpack.c.b16 %v5264, %v5263
      %v5280 = vpack.c.b16 %v5266, %v5265
      %v5281 = vpack.c.b16 %v5268, %v5267
      %v5282 = vpack.c.b16 %v5270, %v5269
      %v5283 = vpack.c.b16 %v5272, %v5271
      %v5284 = vpack.c.b16 %v5274, %v5273
      %v5285 = vpack.c.b16 %v5276, %v5275
      %v5286 = vpack.c.b16 %v5278, %v5277
      %5295 = vmatprep.subr.bf16.mxu0 0
      %5296 = vmatpush1.bf16.msra.mxu0 %v5279
      %5297 = vmatprep.subr.bf16.mxu0 0
      %5298 = vmatpush1.bf16.msra.mxu0 %v5280
      %5299 = vmatprep.subr.bf16.mxu0 0
      %5300 = vmatpush1.bf16.msra.mxu0 %v5281
      %5301 = vmatprep.subr.bf16.mxu0 0
      %5302 = vmatpush1.bf16.msra.mxu0 %v5282
      %5303 = vmatprep.subr.bf16.mxu0 0
      %5304 = vmatpush1.bf16.msra.mxu0 %v5283
      %5305 = vmatprep.subr.bf16.mxu0 0
      %5306 = vmatpush1.bf16.msra.mxu0 %v5284
      %5307 = vmatprep.subr.bf16.mxu0 0
      %5308 = vmatpush1.bf16.msra.mxu0 %v5285
      %5309 = vmatprep.subr.bf16.mxu0 0
      %5310 = vmatpush1.bf16.msra.mxu0 %v5286
      %5311 = vmatprep.subr.bf16.mxu0 0
      %5312 = vmatpush1.bf16.msra.mxu0 0
      %5313 = vmatprep.subr.bf16.mxu0 0
      %5314 = vmatpush1.bf16.msra.mxu0 0
      %5315 = vmatprep.subr.bf16.mxu0 0
      %5316 = vmatpush1.bf16.msra.mxu0 0
      %5317 = vmatprep.subr.bf16.mxu0 0
      %5318 = vmatpush1.bf16.msra.mxu0 0
      %5319 = vmatprep.subr.bf16.mxu0 0
      %5320 = vmatpush1.bf16.msra.mxu0 0
      %5321 = vmatprep.subr.bf16.mxu0 0
      %5322 = vmatpush1.bf16.msra.mxu0 0
      %5323 = vmatprep.subr.bf16.mxu0 0
      %5324 = vmatpush1.bf16.msra.mxu0 0
      %5325 = vmatprep.subr.bf16.mxu0 0
      %5326 = vmatpush1.bf16.msra.mxu0 0
      %5327 = vmatprep.mubr.bf16.mxu0 0
      %5328 = vmatmul.mubr.bf16.gmra.mrb[0].mxu0 %v5123
      %v5329 = vpop.f32.mrb[0].mxu0
      %v5330 = vadd.f32 %v5242, %v5329
      %v5331 = vpop.f32.mrb[0].mxu0
      %v5332 = vpop.f32.mrb[0].mxu0
      %v5333 = vpop.f32.mrb[0].mxu0
      %5334 = vdwg.mxu0
      %s5335 = scalar_lea.vmem [#allocation3], 49
      %v5336 = vld [vmem:[%s5335] ss:$2 sm:$0xff]
      %v5337 = vpack.c.bf16 %v5336, %v5336
      %v5338 = vld [vmem:[%s1 + $0x200] sm:$0xf]
      %v5339 = vld [vmem:[%s1 + $0x204] sm:$0xf]
      %v5340 = vld [vmem:[%s1 + $0x208] sm:$0xf]
      %v5341 = vld [vmem:[%s1 + $0x20c] sm:$0xf]
      %v5342 = vld [vmem:[%s1 + $0x210] sm:$0xf]
      %v5343 = vld [vmem:[%s1 + $0x214] sm:$0xf]
      %v5344 = vld [vmem:[%s1 + $0x218] sm:$0xf]
      %v5345 = vld [vmem:[%s1 + $0x21c] sm:$0xf]
      %v5346 = vld [vmem:[%s1 + $0x220] sm:$0xf]
      %v5347 = vld [vmem:[%s1 + $0x224] sm:$0xf]
      %v5348 = vld [vmem:[%s1 + $0x228] sm:$0xf]
      %v5349 = vld [vmem:[%s1 + $0x22c] sm:$0xf]
      %v5350 = vld [vmem:[%s1 + $0x230] sm:$0xf]
      %v5351 = vld [vmem:[%s1 + $0x234] sm:$0xf]
      %v5352 = vld [vmem:[%s1 + $0x238] sm:$0xf]
      %v5353 = vld [vmem:[%s1 + $0x23c] sm:$0xf]
      %v5370 = vunpack.c.l.b16 %v5338
      %v5371 = vunpack.c.l.b16 %v5339
      %v5372 = vunpack.c.l.b16 %v5340
      %v5373 = vunpack.c.l.b16 %v5341
      %v5374 = vunpack.c.l.b16 %v5342
      %v5375 = vunpack.c.l.b16 %v5343
      %v5376 = vunpack.c.l.b16 %v5344
      %v5377 = vunpack.c.l.b16 %v5345
      %v5378 = vunpack.c.l.b16 %v5346
      %v5379 = vunpack.c.l.b16 %v5347
      %v5380 = vunpack.c.l.b16 %v5348
      %v5381 = vunpack.c.l.b16 %v5349
      %v5382 = vunpack.c.l.b16 %v5350
      %v5383 = vunpack.c.l.b16 %v5351
      %v5384 = vunpack.c.l.b16 %v5352
      %v5385 = vunpack.c.l.b16 %v5353
      %v5386 = vpack.c.b16 %v5371, %v5370
      %v5387 = vpack.c.b16 %v5373, %v5372
      %v5388 = vpack.c.b16 %v5375, %v5374
      %v5389 = vpack.c.b16 %v5377, %v5376
      %v5390 = vpack.c.b16 %v5379, %v5378
      %v5391 = vpack.c.b16 %v5381, %v5380
      %v5392 = vpack.c.b16 %v5383, %v5382
      %v5393 = vpack.c.b16 %v5385, %v5384
      %5402 = vmatprep.subr.bf16.mxu0 0
      %5403 = vmatpush1.bf16.msra.mxu0 %v5386
      %5404 = vmatprep.subr.bf16.mxu0 0
      %5405 = vmatpush1.bf16.msra.mxu0 %v5387
      %5406 = vmatprep.subr.bf16.mxu0 0
      %5407 = vmatpush1.bf16.msra.mxu0 %v5388
      %5408 = vmatprep.subr.bf16.mxu0 0
      %5409 = vmatpush1.bf16.msra.mxu0 %v5389
      %5410 = vmatprep.subr.bf16.mxu0 0
      %5411 = vmatpush1.bf16.msra.mxu0 %v5390
      %5412 = vmatprep.subr.bf16.mxu0 0
      %5413 = vmatpush1.bf16.msra.mxu0 %v5391
      %5414 = vmatprep.subr.bf16.mxu0 0
      %5415 = vmatpush1.bf16.msra.mxu0 %v5392
      %5416 = vmatprep.subr.bf16.mxu0 0
      %5417 = vmatpush1.bf16.msra.mxu0 %v5393
      %5418 = vmatprep.subr.bf16.mxu0 0
      %5419 = vmatpush1.bf16.msra.mxu0 0
      %5420 = vmatprep.subr.bf16.mxu0 0
      %5421 = vmatpush1.bf16.msra.mxu0 0
      %5422 = vmatprep.subr.bf16.mxu0 0
      %5423 = vmatpush1.bf16.msra.mxu0 0
      %5424 = vmatprep.subr.bf16.mxu0 0
      %5425 = vmatpush1.bf16.msra.mxu0 0
      %5426 = vmatprep.subr.bf16.mxu0 0
      %5427 = vmatpush1.bf16.msra.mxu0 0
      %5428 = vmatprep.subr.bf16.mxu0 0
      %5429 = vmatpush1.bf16.msra.mxu0 0
      %5430 = vmatprep.subr.bf16.mxu0 0
      %5431 = vmatpush1.bf16.msra.mxu0 0
      %5432 = vmatprep.subr.bf16.mxu0 0
      %5433 = vmatpush1.bf16.msra.mxu0 0
      %5434 = vmatprep.mubr.bf16.mxu0 0
      %5435 = vmatmul.mubr.bf16.gmra.mrb[0].mxu0 %v5337
      %v5436 = vpop.f32.mrb[0].mxu0
      %v5437 = vadd.f32 0.0, %v5436
      %v5438 = vpop.f32.mrb[0].mxu0
      %v5439 = vpop.f32.mrb[0].mxu0
      %v5440 = vpop.f32.mrb[0].mxu0
      %5441 = vdwg.mxu0
      %v5442 = vadd.f32 %v5330, %v5437
      %v5443 = vadd.f32 %v5442, %v5120
      %v5444 = vxor.u32 %v5443, 2147483648
      %v5445 = vmul.f32 %v5444, 1.442695
      %v5446 = vpow.pop %v5445
      %v5447 = vadd.f32 %v5446, 1.0
      %v5448 = vrcp.pop %v5447
      %v5449 = vmul.f32 1.0, %v5448
      %v5450 = vmul.f32 %v5443, %v5449
      %5452 = vrot.lane.b32.xlu0 %v5450, 32
      %v5453 = vpop.permute.xlu0 %5452
      %5455 = vst.msk [vmem:[#allocation2 + $0x11] sm:$0xff] %vm1308, %v5453
      %5456 = vst.msk [vmem:[#allocation2 + $0x12] sm:$0xff] %vm1333, %v5450
      %5457 = vrot.lane.b32.xlu0 %v5450, 64
      %v5458 = vpop.permute.xlu0 %5457
      %5460 = vst.msk [vmem:[#allocation2 + $0x10] sm:$0xff] %vm1430, %v5458
      %v5461 = vld [vmem:[%s5335] ss:$2 sm:$0xff]
      %v5462 = vpack.c.bf16 %v5461, %v5461
      %v5463 = vld [vmem:[%s1 + $0x180] sm:$0xf]
      %v5464 = vld [vmem:[%s1 + $0x184] sm:$0xf]
      %v5465 = vld [vmem:[%s1 + $0x188] sm:$0xf]
      %v5466 = vld [vmem:[%s1 + $0x18c] sm:$0xf]
      %v5467 = vld [vmem:[%s1 + $0x190] sm:$0xf]
      %v5468 = vld [vmem:[%s1 + $0x194] sm:$0xf]
      %v5469 = vld [vmem:[%s1 + $0x198] sm:$0xf]
      %v5470 = vld [vmem:[%s1 + $0x19c] sm:$0xf]
      %v5471 = vld [vmem:[%s1 + $0x1a0] sm:$0xf]
      %v5472 = vld [vmem:[%s1 + $0x1a4] sm:$0xf]
      %v5473 = vld [vmem:[%s1 + $0x1a8] sm:$0xf]
      %v5474 = vld [vmem:[%s1 + $0x1ac] sm:$0xf]
      %v5475 = vld [vmem:[%s1 + $0x1b0] sm:$0xf]
      %v5476 = vld [vmem:[%s1 + $0x1b4] sm:$0xf]
      %v5477 = vld [vmem:[%s1 + $0x1b8] sm:$0xf]
      %v5478 = vld [vmem:[%s1 + $0x1bc] sm:$0xf]
      %s5479 = scalar_lea.vmem [#allocation3], 73
      %v5480 = vld [vmem:[%s5479] ss:$2 sm:$0xff]
      %v5481 = vpack.c.bf16 %v5480, %v5480
      %v5482 = vld [vmem:[%s1 + $0x1c0] sm:$0xf]
      %v5483 = vld [vmem:[%s1 + $0x1c4] sm:$0xf]
      %v5484 = vld [vmem:[%s1 + $0x1c8] sm:$0xf]
      %v5485 = vld [vmem:[%s1 + $0x1cc] sm:$0xf]
      %v5486 = vld [vmem:[%s1 + $0x1d0] sm:$0xf]
      %v5487 = vld [vmem:[%s1 + $0x1d4] sm:$0xf]
      %v5488 = vld [vmem:[%s1 + $0x1d8] sm:$0xf]
      %v5489 = vld [vmem:[%s1 + $0x1dc] sm:$0xf]
      %v5490 = vld [vmem:[%s1 + $0x1e0] sm:$0xf]
      %v5491 = vld [vmem:[%s1 + $0x1e4] sm:$0xf]
      %v5492 = vld [vmem:[%s1 + $0x1e8] sm:$0xf]
      %v5493 = vld [vmem:[%s1 + $0x1ec] sm:$0xf]
      %v5494 = vld [vmem:[%s1 + $0x1f0] sm:$0xf]
      %v5495 = vld [vmem:[%s1 + $0x1f4] sm:$0xf]
      %v5496 = vld [vmem:[%s1 + $0x1f8] sm:$0xf]
      %v5497 = vld [vmem:[%s1 + $0x1fc] sm:$0xf]
      %v5514 = vunpack.c.l.b16 %v5482
      %v5515 = vunpack.c.l.b16 %v5483
      %v5516 = vunpack.c.l.b16 %v5484
      %v5517 = vunpack.c.l.b16 %v5485
      %v5518 = vunpack.c.l.b16 %v5486
      %v5519 = vunpack.c.l.b16 %v5487
      %v5520 = vunpack.c.l.b16 %v5488
      %v5521 = vunpack.c.l.b16 %v5489
      %v5522 = vunpack.c.l.b16 %v5490
      %v5523 = vunpack.c.l.b16 %v5491
      %v5524 = vunpack.c.l.b16 %v5492
      %v5525 = vunpack.c.l.b16 %v5493
      %v5526 = vunpack.c.l.b16 %v5494
      %v5527 = vunpack.c.l.b16 %v5495
      %v5528 = vunpack.c.l.b16 %v5496
      %v5529 = vunpack.c.l.b16 %v5497
      %v5530 = vpack.c.b16 %v5515, %v5514
      %v5531 = vpack.c.b16 %v5517, %v5516
      %v5532 = vpack.c.b16 %v5519, %v5518
      %v5533 = vpack.c.b16 %v5521, %v5520
      %v5534 = vpack.c.b16 %v5523, %v5522
      %v5535 = vpack.c.b16 %v5525, %v5524
      %v5536 = vpack.c.b16 %v5527, %v5526
      %v5537 = vpack.c.b16 %v5529, %v5528
      %5546 = vmatprep.subr.bf16.mxu0 0
      %5547 = vmatpush1.bf16.msra.mxu0 %v5530
      %5548 = vmatprep.subr.bf16.mxu0 0
      %5549 = vmatpush1.bf16.msra.mxu0 %v5531
      %5550 = vmatprep.subr.bf16.mxu0 0
      %5551 = vmatpush1.bf16.msra.mxu0 %v5532
      %5552 = vmatprep.subr.bf16.mxu0 0
      %5553 = vmatpush1.bf16.msra.mxu0 %v5533
      %5554 = vmatprep.subr.bf16.mxu0 0
      %5555 = vmatpush1.bf16.msra.mxu0 %v5534
      %5556 = vmatprep.subr.bf16.mxu0 0
      %5557 = vmatpush1.bf16.msra.mxu0 %v5535
      %5558 = vmatprep.subr.bf16.mxu0 0
      %5559 = vmatpush1.bf16.msra.mxu0 %v5536
      %5560 = vmatprep.subr.bf16.mxu0 0
      %5561 = vmatpush1.bf16.msra.mxu0 %v5537
      %5562 = vmatprep.subr.bf16.mxu0 0
      %5563 = vmatpush1.bf16.msra.mxu0 0
      %5564 = vmatprep.subr.bf16.mxu0 0
      %5565 = vmatpush1.bf16.msra.mxu0 0
      %5566 = vmatprep.subr.bf16.mxu0 0
      %5567 = vmatpush1.bf16.msra.mxu0 0
      %5568 = vmatprep.subr.bf16.mxu0 0
      %5569 = vmatpush1.bf16.msra.mxu0 0
      %5570 = vmatprep.subr.bf16.mxu0 0
      %5571 = vmatpush1.bf16.msra.mxu0 0
      %5572 = vmatprep.subr.bf16.mxu0 0
      %5573 = vmatpush1.bf16.msra.mxu0 0
      %5574 = vmatprep.subr.bf16.mxu0 0
      %5575 = vmatpush1.bf16.msra.mxu0 0
      %5576 = vmatprep.subr.bf16.mxu0 0
      %5577 = vmatpush1.bf16.msra.mxu0 0
      %5578 = vmatprep.mubr.bf16.mxu0 0
      %5579 = vmatmul.mubr.bf16.gmra.mrb[0].mxu0 %v5481
      %v5580 = vpop.f32.mrb[0].mxu0
      %v5581 = vadd.f32 0.0, %v5580
      %v5582 = vpop.f32.mrb[0].mxu0
      %v5583 = vpop.f32.mrb[0].mxu0
      %v5584 = vpop.f32.mrb[0].mxu0
      %5585 = vdwg.mxu0
      %v5602 = vunpack.c.l.b16 %v5463
      %v5603 = vunpack.c.l.b16 %v5464
      %v5604 = vunpack.c.l.b16 %v5465
      %v5605 = vunpack.c.l.b16 %v5466
      %v5606 = vunpack.c.l.b16 %v5467
      %v5607 = vunpack.c.l.b16 %v5468
      %v5608 = vunpack.c.l.b16 %v5469
      %v5609 = vunpack.c.l.b16 %v5470
      %v5610 = vunpack.c.l.b16 %v5471
      %v5611 = vunpack.c.l.b16 %v5472
      %v5612 = vunpack.c.l.b16 %v5473
      %v5613 = vunpack.c.l.b16 %v5474
      %v5614 = vunpack.c.l.b16 %v5475
      %v5615 = vunpack.c.l.b16 %v5476
      %v5616 = vunpack.c.l.b16 %v5477
      %v5617 = vunpack.c.l.b16 %v5478
      %v5618 = vpack.c.b16 %v5603, %v5602
      %v5619 = vpack.c.b16 %v5605, %v5604
      %v5620 = vpack.c.b16 %v5607, %v5606
      %v5621 = vpack.c.b16 %v5609, %v5608
      %v5622 = vpack.c.b16 %v5611, %v5610
      %v5623 = vpack.c.b16 %v5613, %v5612
      %v5624 = vpack.c.b16 %v5615, %v5614
      %v5625 = vpack.c.b16 %v5617, %v5616
      %5634 = vmatprep.subr.bf16.mxu0 0
      %5635 = vmatpush1.bf16.msra.mxu0 %v5618
      %5636 = vmatprep.subr.bf16.mxu0 0
      %5637 = vmatpush1.bf16.msra.mxu0 %v5619
      %5638 = vmatprep.subr.bf16.mxu0 0
      %5639 = vmatpush1.bf16.msra.mxu0 %v5620
      %5640 = vmatprep.subr.bf16.mxu0 0
      %5641 = vmatpush1.bf16.msra.mxu0 %v5621
      %5642 = vmatprep.subr.bf16.mxu0 0
      %5643 = vmatpush1.bf16.msra.mxu0 %v5622
      %5644 = vmatprep.subr.bf16.mxu0 0
      %5645 = vmatpush1.bf16.msra.mxu0 %v5623
      %5646 = vmatprep.subr.bf16.mxu0 0
      %5647 = vmatpush1.bf16.msra.mxu0 %v5624
      %5648 = vmatprep.subr.bf16.mxu0 0
      %5649 = vmatpush1.bf16.msra.mxu0 %v5625
      %5650 = vmatprep.subr.bf16.mxu0 0
      %5651 = vmatpush1.bf16.msra.mxu0 0
      %5652 = vmatprep.subr.bf16.mxu0 0
      %5653 = vmatpush1.bf16.msra.mxu0 0
      %5654 = vmatprep.subr.bf16.mxu0 0
      %5655 = vmatpush1.bf16.msra.mxu0 0
      %5656 = vmatprep.subr.bf16.mxu0 0
      %5657 = vmatpush1.bf16.msra.mxu0 0
      %5658 = vmatprep.subr.bf16.mxu0 0
      %5659 = vmatpush1.bf16.msra.mxu0 0
      %5660 = vmatprep.subr.bf16.mxu0 0
      %5661 = vmatpush1.bf16.msra.mxu0 0
      %5662 = vmatprep.subr.bf16.mxu0 0
      %5663 = vmatpush1.bf16.msra.mxu0 0
      %5664 = vmatprep.subr.bf16.mxu0 0
      %5665 = vmatpush1.bf16.msra.mxu0 0
      %5666 = vmatprep.mubr.bf16.mxu0 0
      %5667 = vmatmul.mubr.bf16.gmra.mrb[0].mxu0 %v5462
      %v5668 = vpop.f32.mrb[0].mxu0
      %v5669 = vadd.f32 %v5581, %v5668
      %v5670 = vpop.f32.mrb[0].mxu0
      %v5671 = vpop.f32.mrb[0].mxu0
      %v5672 = vpop.f32.mrb[0].mxu0
      %5673 = vdwg.mxu0
      %s5674 = scalar_lea.vmem [#allocation3], 97
      %v5675 = vld [vmem:[%s5674] ss:$2 sm:$0xff]
      %v5676 = vpack.c.bf16 %v5675, %v5675
      %v5677 = vld [vmem:[%s1 + $0x200] sm:$0xf]
      %v5678 = vld [vmem:[%s1 + $0x204] sm:$0xf]
      %v5679 = vld [vmem:[%s1 + $0x208] sm:$0xf]
      %v5680 = vld [vmem:[%s1 + $0x20c] sm:$0xf]
      %v5681 = vld [vmem:[%s1 + $0x210] sm:$0xf]
      %v5682 = vld [vmem:[%s1 + $0x214] sm:$0xf]
      %v5683 = vld [vmem:[%s1 + $0x218] sm:$0xf]
      %v5684 = vld [vmem:[%s1 + $0x21c] sm:$0xf]
      %v5685 = vld [vmem:[%s1 + $0x220] sm:$0xf]
      %v5686 = vld [vmem:[%s1 + $0x224] sm:$0xf]
      %v5687 = vld [vmem:[%s1 + $0x228] sm:$0xf]
      %v5688 = vld [vmem:[%s1 + $0x22c] sm:$0xf]
      %v5689 = vld [vmem:[%s1 + $0x230] sm:$0xf]
      %v5690 = vld [vmem:[%s1 + $0x234] sm:$0xf]
      %v5691 = vld [vmem:[%s1 + $0x238] sm:$0xf]
      %v5692 = vld [vmem:[%s1 + $0x23c] sm:$0xf]
      %v5709 = vunpack.c.l.b16 %v5677
      %v5710 = vunpack.c.l.b16 %v5678
      %v5711 = vunpack.c.l.b16 %v5679
      %v5712 = vunpack.c.l.b16 %v5680
      %v5713 = vunpack.c.l.b16 %v5681
      %v5714 = vunpack.c.l.b16 %v5682
      %v5715 = vunpack.c.l.b16 %v5683
      %v5716 = vunpack.c.l.b16 %v5684
      %v5717 = vunpack.c.l.b16 %v5685
      %v5718 = vunpack.c.l.b16 %v5686
      %v5719 = vunpack.c.l.b16 %v5687
      %v5720 = vunpack.c.l.b16 %v5688
      %v5721 = vunpack.c.l.b16 %v5689
      %v5722 = vunpack.c.l.b16 %v5690
      %v5723 = vunpack.c.l.b16 %v5691
      %v5724 = vunpack.c.l.b16 %v5692
      %v5725 = vpack.c.b16 %v5710, %v5709
      %v5726 = vpack.c.b16 %v5712, %v5711
      %v5727 = vpack.c.b16 %v5714, %v5713
      %v5728 = vpack.c.b16 %v5716, %v5715
      %v5729 = vpack.c.b16 %v5718, %v5717
      %v5730 = vpack.c.b16 %v5720, %v5719
      %v5731 = vpack.c.b16 %v5722, %v5721
      %v5732 = vpack.c.b16 %v5724, %v5723
      %5741 = vmatprep.subr.bf16.mxu0 0
      %5742 = vmatpush1.bf16.msra.mxu0 %v5725
      %5743 = vmatprep.subr.bf16.mxu0 0
      %5744 = vmatpush1.bf16.msra.mxu0 %v5726
      %5745 = vmatprep.subr.bf16.mxu0 0
      %5746 = vmatpush1.bf16.msra.mxu0 %v5727
      %5747 = vmatprep.subr.bf16.mxu0 0
      %5748 = vmatpush1.bf16.msra.mxu0 %v5728
      %5749 = vmatprep.subr.bf16.mxu0 0
      %5750 = vmatpush1.bf16.msra.mxu0 %v5729
      %5751 = vmatprep.subr.bf16.mxu0 0
      %5752 = vmatpush1.bf16.msra.mxu0 %v5730
      %5753 = vmatprep.subr.bf16.mxu0 0
      %5754 = vmatpush1.bf16.msra.mxu0 %v5731
      %5755 = vmatprep.subr.bf16.mxu0 0
      %5756 = vmatpush1.bf16.msra.mxu0 %v5732
      %5757 = vmatprep.subr.bf16.mxu0 0
      %5758 = vmatpush1.bf16.msra.mxu0 0
      %5759 = vmatprep.subr.bf16.mxu0 0
      %5760 = vmatpush1.bf16.msra.mxu0 0
      %5761 = vmatprep.subr.bf16.mxu0 0
      %5762 = vmatpush1.bf16.msra.mxu0 0
      %5763 = vmatprep.subr.bf16.mxu0 0
      %5764 = vmatpush1.bf16.msra.mxu0 0
      %5765 = vmatprep.subr.bf16.mxu0 0
      %5766 = vmatpush1.bf16.msra.mxu0 0
      %5767 = vmatprep.subr.bf16.mxu0 0
      %5768 = vmatpush1.bf16.msra.mxu0 0
      %5769 = vmatprep.subr.bf16.mxu0 0
      %5770 = vmatpush1.bf16.msra.mxu0 0
      %5771 = vmatprep.subr.bf16.mxu0 0
      %5772 = vmatpush1.bf16.msra.mxu0 0
      %5773 = vmatprep.mubr.bf16.mxu0 0
      %5774 = vmatmul.mubr.bf16.gmra.mrb[0].mxu0 %v5676
      %v5775 = vpop.f32.mrb[0].mxu0
      %v5776 = vadd.f32 0.0, %v5775
      %v5777 = vpop.f32.mrb[0].mxu0
      %v5778 = vpop.f32.mrb[0].mxu0
      %v5779 = vpop.f32.mrb[0].mxu0
      %5780 = vdwg.mxu0
      %v5781 = vadd.f32 %v5669, %v5776
      %v5782 = vadd.f32 %v5781, %v5120
      %v5783 = vxor.u32 %v5782, 2147483648
      %v5784 = vmul.f32 %v5783, 1.442695
      %v5785 = vpow.pop %v5784
      %v5786 = vadd.f32 %v5785, 1.0
      %v5787 = vrcp.pop %v5786
      %v5788 = vmul.f32 1.0, %v5787
      %v5789 = vmul.f32 %v5782, %v5788
      %5791 = vrot.lane.b32.xlu0 %v5789, 32
      %v5792 = vpop.permute.xlu0 %5791
      %5794 = vst.msk [vmem:[#allocation2 + $0x21] sm:$0xff] %vm1308, %v5792
      %5795 = vst.msk [vmem:[#allocation2 + $0x22] sm:$0xff] %vm1333, %v5789
      %5796 = vrot.lane.b32.xlu0 %v5789, 64
      %v5797 = vpop.permute.xlu0 %5796
      %5799 = vst.msk [vmem:[#allocation2 + $0x20] sm:$0xff] %vm1430, %v5797
      %v5800 = vld [vmem:[%s5674] ss:$2 sm:$0xff]
      %v5801 = vpack.c.bf16 %v5800, %v5800
      %v5802 = vld [vmem:[%s1 + $0x180] sm:$0xf]
      %v5803 = vld [vmem:[%s1 + $0x184] sm:$0xf]
      %v5804 = vld [vmem:[%s1 + $0x188] sm:$0xf]
      %v5805 = vld [vmem:[%s1 + $0x18c] sm:$0xf]
      %v5806 = vld [vmem:[%s1 + $0x190] sm:$0xf]
      %v5807 = vld [vmem:[%s1 + $0x194] sm:$0xf]
      %v5808 = vld [vmem:[%s1 + $0x198] sm:$0xf]
      %v5809 = vld [vmem:[%s1 + $0x19c] sm:$0xf]
      %v5810 = vld [vmem:[%s1 + $0x1a0] sm:$0xf]
      %v5811 = vld [vmem:[%s1 + $0x1a4] sm:$0xf]
      %v5812 = vld [vmem:[%s1 + $0x1a8] sm:$0xf]
      %v5813 = vld [vmem:[%s1 + $0x1ac] sm:$0xf]
      %v5814 = vld [vmem:[%s1 + $0x1b0] sm:$0xf]
      %v5815 = vld [vmem:[%s1 + $0x1b4] sm:$0xf]
      %v5816 = vld [vmem:[%s1 + $0x1b8] sm:$0xf]
      %v5817 = vld [vmem:[%s1 + $0x1bc] sm:$0xf]
      %s5818 = scalar_lea.vmem [#allocation3], 121
      %v5819 = vld [vmem:[%s5818] ss:$2 sm:$0xff]
      %v5820 = vpack.c.bf16 %v5819, %v5819
      %v5821 = vld [vmem:[%s1 + $0x1c0] sm:$0xf]
      %v5822 = vld [vmem:[%s1 + $0x1c4] sm:$0xf]
      %v5823 = vld [vmem:[%s1 + $0x1c8] sm:$0xf]
      %v5824 = vld [vmem:[%s1 + $0x1cc] sm:$0xf]
      %v5825 = vld [vmem:[%s1 + $0x1d0] sm:$0xf]
      %v5826 = vld [vmem:[%s1 + $0x1d4] sm:$0xf]
      %v5827 = vld [vmem:[%s1 + $0x1d8] sm:$0xf]
      %v5828 = vld [vmem:[%s1 + $0x1dc] sm:$0xf]
      %v5829 = vld [vmem:[%s1 + $0x1e0] sm:$0xf]
      %v5830 = vld [vmem:[%s1 + $0x1e4] sm:$0xf]
      %v5831 = vld [vmem:[%s1 + $0x1e8] sm:$0xf]
      %v5832 = vld [vmem:[%s1 + $0x1ec] sm:$0xf]
      %v5833 = vld [vmem:[%s1 + $0x1f0] sm:$0xf]
      %v5834 = vld [vmem:[%s1 + $0x1f4] sm:$0xf]
      %v5835 = vld [vmem:[%s1 + $0x1f8] sm:$0xf]
      %v5836 = vld [vmem:[%s1 + $0x1fc] sm:$0xf]
      %v5853 = vunpack.c.l.b16 %v5821
      %v5854 = vunpack.c.l.b16 %v5822
      %v5855 = vunpack.c.l.b16 %v5823
      %v5856 = vunpack.c.l.b16 %v5824
      %v5857 = vunpack.c.l.b16 %v5825
      %v5858 = vunpack.c.l.b16 %v5826
      %v5859 = vunpack.c.l.b16 %v5827
      %v5860 = vunpack.c.l.b16 %v5828
      %v5861 = vunpack.c.l.b16 %v5829
      %v5862 = vunpack.c.l.b16 %v5830
      %v5863 = vunpack.c.l.b16 %v5831
      %v5864 = vunpack.c.l.b16 %v5832
      %v5865 = vunpack.c.l.b16 %v5833
      %v5866 = vunpack.c.l.b16 %v5834
      %v5867 = vunpack.c.l.b16 %v5835
      %v5868 = vunpack.c.l.b16 %v5836
      %v5869 = vpack.c.b16 %v5854, %v5853
      %v5870 = vpack.c.b16 %v5856, %v5855
      %v5871 = vpack.c.b16 %v5858, %v5857
      %v5872 = vpack.c.b16 %v5860, %v5859
      %v5873 = vpack.c.b16 %v5862, %v5861
      %v5874 = vpack.c.b16 %v5864, %v5863
      %v5875 = vpack.c.b16 %v5866, %v5865
      %v5876 = vpack.c.b16 %v5868, %v5867
      %5885 = vmatprep.subr.bf16.mxu0 0
      %5886 = vmatpush1.bf16.msra.mxu0 %v5869
      %5887 = vmatprep.subr.bf16.mxu0 0
      %5888 = vmatpush1.bf16.msra.mxu0 %v5870
      %5889 = vmatprep.subr.bf16.mxu0 0
      %5890 = vmatpush1.bf16.msra.mxu0 %v5871
      %5891 = vmatprep.subr.bf16.mxu0 0
      %5892 = vmatpush1.bf16.msra.mxu0 %v5872
      %5893 = vmatprep.subr.bf16.mxu0 0
      %5894 = vmatpush1.bf16.msra.mxu0 %v5873
      %5895 = vmatprep.subr.bf16.mxu0 0
      %5896 = vmatpush1.bf16.msra.mxu0 %v5874
      %5897 = vmatprep.subr.bf16.mxu0 0
      %5898 = vmatpush1.bf16.msra.mxu0 %v5875
      %5899 = vmatprep.subr.bf16.mxu0 0
      %5900 = vmatpush1.bf16.msra.mxu0 %v5876
      %5901 = vmatprep.subr.bf16.mxu0 0
      %5902 = vmatpush1.bf16.msra.mxu0 0
      %5903 = vmatprep.subr.bf16.mxu0 0
      %5904 = vmatpush1.bf16.msra.mxu0 0
      %5905 = vmatprep.subr.bf16.mxu0 0
      %5906 = vmatpush1.bf16.msra.mxu0 0
      %5907 = vmatprep.subr.bf16.mxu0 0
      %5908 = vmatpush1.bf16.msra.mxu0 0
      %5909 = vmatprep.subr.bf16.mxu0 0
      %5910 = vmatpush1.bf16.msra.mxu0 0
      %5911 = vmatprep.subr.bf16.mxu0 0
      %5912 = vmatpush1.bf16.msra.mxu0 0
      %5913 = vmatprep.subr.bf16.mxu0 0
      %5914 = vmatpush1.bf16.msra.mxu0 0
      %5915 = vmatprep.subr.bf16.mxu0 0
      %5916 = vmatpush1.bf16.msra.mxu0 0
      %5917 = vmatprep.mubr.bf16.mxu0 0
      %5918 = vmatmul.mubr.bf16.gmra.mrb[0].mxu0 %v5820
      %v5919 = vpop.f32.mrb[0].mxu0
      %v5920 = vadd.f32 0.0, %v5919
      %v5921 = vpop.f32.mrb[0].mxu0
      %v5922 = vpop.f32.mrb[0].mxu0
      %v5923 = vpop.f32.mrb[0].mxu0
      %5924 = vdwg.mxu0
      %v5941 = vunpack.c.l.b16 %v5802
      %v5942 = vunpack.c.l.b16 %v5803
      %v5943 = vunpack.c.l.b16 %v5804
      %v5944 = vunpack.c.l.b16 %v5805
      %v5945 = vunpack.c.l.b16 %v5806
      %v5946 = vunpack.c.l.b16 %v5807
      %v5947 = vunpack.c.l.b16 %v5808
      %v5948 = vunpack.c.l.b16 %v5809
      %v5949 = vunpack.c.l.b16 %v5810
      %v5950 = vunpack.c.l.b16 %v5811
      %v5951 = vunpack.c.l.b16 %v5812
      %v5952 = vunpack.c.l.b16 %v5813
      %v5953 = vunpack.c.l.b16 %v5814
      %v5954 = vunpack.c.l.b16 %v5815
      %v5955 = vunpack.c.l.b16 %v5816
      %v5956 = vunpack.c.l.b16 %v5817
      %v5957 = vpack.c.b16 %v5942, %v5941
      %v5958 = vpack.c.b16 %v5944, %v5943
      %v5959 = vpack.c.b16 %v5946, %v5945
      %v5960 = vpack.c.b16 %v5948, %v5947
      %v5961 = vpack.c.b16 %v5950, %v5949
      %v5962 = vpack.c.b16 %v5952, %v5951
      %v5963 = vpack.c.b16 %v5954, %v5953
      %v5964 = vpack.c.b16 %v5956, %v5955
      %5973 = vmatprep.subr.bf16.mxu0 0
      %5974 = vmatpush1.bf16.msra.mxu0 %v5957
      %5975 = vmatprep.subr.bf16.mxu0 0
      %5976 = vmatpush1.bf16.msra.mxu0 %v5958
      %5977 = vmatprep.subr.bf16.mxu0 0
      %5978 = vmatpush1.bf16.msra.mxu0 %v5959
      %5979 = vmatprep.subr.bf16.mxu0 0
      %5980 = vmatpush1.bf16.msra.mxu0 %v5960
      %5981 = vmatprep.subr.bf16.mxu0 0
      %5982 = vmatpush1.bf16.msra.mxu0 %v5961
      %5983 = vmatprep.subr.bf16.mxu0 0
      %5984 = vmatpush1.bf16.msra.mxu0 %v5962
      %5985 = vmatprep.subr.bf16.mxu0 0
      %5986 = vmatpush1.bf16.msra.mxu0 %v5963
      %5987 = vmatprep.subr.bf16.mxu0 0
      %5988 = vmatpush1.bf16.msra.mxu0 %v5964
      %5989 = vmatprep.subr.bf16.mxu0 0
      %5990 = vmatpush1.bf16.msra.mxu0 0
      %5991 = vmatprep.subr.bf16.mxu0 0
      %5992 = vmatpush1.bf16.msra.mxu0 0
      %5993 = vmatprep.subr.bf16.mxu0 0
      %5994 = vmatpush1.bf16.msra.mxu0 0
      %5995 = vmatprep.subr.bf16.mxu0 0
      %5996 = vmatpush1.bf16.msra.mxu0 0
      %5997 = vmatprep.subr.bf16.mxu0 0
      %5998 = vmatpush1.bf16.msra.mxu0 0
      %5999 = vmatprep.subr.bf16.mxu0 0
      %6000 = vmatpush1.bf16.msra.mxu0 0
      %6001 = vmatprep.subr.bf16.mxu0 0
      %6002 = vmatpush1.bf16.msra.mxu0 0
      %6003 = vmatprep.subr.bf16.mxu0 0
      %6004 = vmatpush1.bf16.msra.mxu0 0
      %6005 = vmatprep.mubr.bf16.mxu0 0
      %6006 = vmatmul.mubr.bf16.gmra.mrb[0].mxu0 %v5801
      %v6007 = vpop.f32.mrb[0].mxu0
      %v6008 = vadd.f32 %v5920, %v6007
      %v6009 = vpop.f32.mrb[0].mxu0
      %v6010 = vpop.f32.mrb[0].mxu0
      %v6011 = vpop.f32.mrb[0].mxu0
      %6012 = vdwg.mxu0
      %s6013 = scalar_lea.vmem [#allocation3], 145
      %v6014 = vld [vmem:[%s6013] ss:$2 sm:$0xff]
      %v6015 = vpack.c.bf16 %v6014, %v6014
      %v6016 = vld [vmem:[%s1 + $0x200] sm:$0xf]
      %v6017 = vld [vmem:[%s1 + $0x204] sm:$0xf]
      %v6018 = vld [vmem:[%s1 + $0x208] sm:$0xf]
      %v6019 = vld [vmem:[%s1 + $0x20c] sm:$0xf]
      %v6020 = vld [vmem:[%s1 + $0x210] sm:$0xf]
      %v6021 = vld [vmem:[%s1 + $0x214] sm:$0xf]
      %v6022 = vld [vmem:[%s1 + $0x218] sm:$0xf]
      %v6023 = vld [vmem:[%s1 + $0x21c] sm:$0xf]
      %v6024 = vld [vmem:[%s1 + $0x220] sm:$0xf]
      %v6025 = vld [vmem:[%s1 + $0x224] sm:$0xf]
      %v6026 = vld [vmem:[%s1 + $0x228] sm:$0xf]
      %v6027 = vld [vmem:[%s1 + $0x22c] sm:$0xf]
      %v6028 = vld [vmem:[%s1 + $0x230] sm:$0xf]
      %v6029 = vld [vmem:[%s1 + $0x234] sm:$0xf]
      %v6030 = vld [vmem:[%s1 + $0x238] sm:$0xf]
      %v6031 = vld [vmem:[%s1 + $0x23c] sm:$0xf]
      %v6048 = vunpack.c.l.b16 %v6016
      %v6049 = vunpack.c.l.b16 %v6017
      %v6050 = vunpack.c.l.b16 %v6018
      %v6051 = vunpack.c.l.b16 %v6019
      %v6052 = vunpack.c.l.b16 %v6020
      %v6053 = vunpack.c.l.b16 %v6021
      %v6054 = vunpack.c.l.b16 %v6022
      %v6055 = vunpack.c.l.b16 %v6023
      %v6056 = vunpack.c.l.b16 %v6024
      %v6057 = vunpack.c.l.b16 %v6025
      %v6058 = vunpack.c.l.b16 %v6026
      %v6059 = vunpack.c.l.b16 %v6027
      %v6060 = vunpack.c.l.b16 %v6028
      %v6061 = vunpack.c.l.b16 %v6029
      %v6062 = vunpack.c.l.b16 %v6030
      %v6063 = vunpack.c.l.b16 %v6031
      %v6064 = vpack.c.b16 %v6049, %v6048
      %v6065 = vpack.c.b16 %v6051, %v6050
      %v6066 = vpack.c.b16 %v6053, %v6052
      %v6067 = vpack.c.b16 %v6055, %v6054
      %v6068 = vpack.c.b16 %v6057, %v6056
      %v6069 = vpack.c.b16 %v6059, %v6058
      %v6070 = vpack.c.b16 %v6061, %v6060
      %v6071 = vpack.c.b16 %v6063, %v6062
      %6080 = vmatprep.subr.bf16.mxu0 0
      %6081 = vmatpush1.bf16.msra.mxu0 %v6064
      %6082 = vmatprep.subr.bf16.mxu0 0
      %6083 = vmatpush1.bf16.msra.mxu0 %v6065
      %6084 = vmatprep.subr.bf16.mxu0 0
      %6085 = vmatpush1.bf16.msra.mxu0 %v6066
      %6086 = vmatprep.subr.bf16.mxu0 0
      %6087 = vmatpush1.bf16.msra.mxu0 %v6067
      %6088 = vmatprep.subr.bf16.mxu0 0
      %6089 = vmatpush1.bf16.msra.mxu0 %v6068
      %6090 = vmatprep.subr.bf16.mxu0 0
      %6091 = vmatpush1.bf16.msra.mxu0 %v6069
      %6092 = vmatprep.subr.bf16.mxu0 0
      %6093 = vmatpush1.bf16.msra.mxu0 %v6070
      %6094 = vmatprep.subr.bf16.mxu0 0
      %6095 = vmatpush1.bf16.msra.mxu0 %v6071
      %6096 = vmatprep.subr.bf16.mxu0 0
      %6097 = vmatpush1.bf16.msra.mxu0 0
      %6098 = vmatprep.subr.bf16.mxu0 0
      %6099 = vmatpush1.bf16.msra.mxu0 0
      %6100 = vmatprep.subr.bf16.mxu0 0
      %6101 = vmatpush1.bf16.msra.mxu0 0
      %6102 = vmatprep.subr.bf16.mxu0 0
      %6103 = vmatpush1.bf16.msra.mxu0 0
      %6104 = vmatprep.subr.bf16.mxu0 0
      %6105 = vmatpush1.bf16.msra.mxu0 0
      %6106 = vmatprep.subr.bf16.mxu0 0
      %6107 = vmatpush1.bf16.msra.mxu0 0
      %6108 = vmatprep.subr.bf16.mxu0 0
      %6109 = vmatpush1.bf16.msra.mxu0 0
      %6110 = vmatprep.subr.bf16.mxu0 0
      %6111 = vmatpush1.bf16.msra.mxu0 0
      %6112 = vmatprep.mubr.bf16.mxu0 0
      %6113 = vmatmul.mubr.bf16.gmra.mrb[0].mxu0 %v6015
      %v6114 = vpop.f32.mrb[0].mxu0
      %v6115 = vadd.f32 0.0, %v6114
      %v6116 = vpop.f32.mrb[0].mxu0
      %v6117 = vpop.f32.mrb[0].mxu0
      %v6118 = vpop.f32.mrb[0].mxu0
      %6119 = vdwg.mxu0
      %v6120 = vadd.f32 %v6008, %v6115
      %v6121 = vadd.f32 %v6120, %v5120
      %v6122 = vxor.u32 %v6121, 2147483648
      %v6123 = vmul.f32 %v6122, 1.442695
      %v6124 = vpow.pop %v6123
      %v6125 = vadd.f32 %v6124, 1.0
      %v6126 = vrcp.pop %v6125
      %v6127 = vmul.f32 1.0, %v6126
      %v6128 = vmul.f32 %v6121, %v6127
      %6130 = vrot.lane.b32.xlu0 %v6128, 32
      %v6131 = vpop.permute.xlu0 %6130
      %6133 = vst.msk [vmem:[#allocation2 + $0x31] sm:$0xff] %vm1308, %v6131
      %6134 = vst.msk [vmem:[#allocation2 + $0x32] sm:$0xff] %vm1333, %v6128
      %6135 = vrot.lane.b32.xlu0 %v6128, 64
      %v6136 = vpop.permute.xlu0 %6135
      %6138 = vst.msk [vmem:[#allocation2 + $0x30] sm:$0xff] %vm1430, %v6136
      %v6139 = vld [vmem:[%s6013] ss:$2 sm:$0xff]
      %v6140 = vpack.c.bf16 %v6139, %v6139
      %v6141 = vld [vmem:[%s1 + $0x180] sm:$0xf]
      %v6142 = vld [vmem:[%s1 + $0x184] sm:$0xf]
      %v6143 = vld [vmem:[%s1 + $0x188] sm:$0xf]
      %v6144 = vld [vmem:[%s1 + $0x18c] sm:$0xf]
      %v6145 = vld [vmem:[%s1 + $0x190] sm:$0xf]
      %v6146 = vld [vmem:[%s1 + $0x194] sm:$0xf]
      %v6147 = vld [vmem:[%s1 + $0x198] sm:$0xf]
      %v6148 = vld [vmem:[%s1 + $0x19c] sm:$0xf]
      %v6149 = vld [vmem:[%s1 + $0x1a0] sm:$0xf]
      %v6150 = vld [vmem:[%s1 + $0x1a4] sm:$0xf]
      %v6151 = vld [vmem:[%s1 + $0x1a8] sm:$0xf]
      %v6152 = vld [vmem:[%s1 + $0x1ac] sm:$0xf]
      %v6153 = vld [vmem:[%s1 + $0x1b0] sm:$0xf]
      %v6154 = vld [vmem:[%s1 + $0x1b4] sm:$0xf]
      %v6155 = vld [vmem:[%s1 + $0x1b8] sm:$0xf]
      %v6156 = vld [vmem:[%s1 + $0x1bc] sm:$0xf]
      %s6157 = scalar_lea.vmem [#allocation3], 169
      %v6158 = vld [vmem:[%s6157] ss:$2 sm:$0xff]
      %v6159 = vpack.c.bf16 %v6158, %v6158
      %v6160 = vld [vmem:[%s1 + $0x1c0] sm:$0xf]
      %v6161 = vld [vmem:[%s1 + $0x1c4] sm:$0xf]
      %v6162 = vld [vmem:[%s1 + $0x1c8] sm:$0xf]
      %v6163 = vld [vmem:[%s1 + $0x1cc] sm:$0xf]
      %v6164 = vld [vmem:[%s1 + $0x1d0] sm:$0xf]
      %v6165 = vld [vmem:[%s1 + $0x1d4] sm:$0xf]
      %v6166 = vld [vmem:[%s1 + $0x1d8] sm:$0xf]
      %v6167 = vld [vmem:[%s1 + $0x1dc] sm:$0xf]
      %v6168 = vld [vmem:[%s1 + $0x1e0] sm:$0xf]
      %v6169 = vld [vmem:[%s1 + $0x1e4] sm:$0xf]
      %v6170 = vld [vmem:[%s1 + $0x1e8] sm:$0xf]
      %v6171 = vld [vmem:[%s1 + $0x1ec] sm:$0xf]
      %v6172 = vld [vmem:[%s1 + $0x1f0] sm:$0xf]
      %v6173 = vld [vmem:[%s1 + $0x1f4] sm:$0xf]
      %v6174 = vld [vmem:[%s1 + $0x1f8] sm:$0xf]
      %v6175 = vld [vmem:[%s1 + $0x1fc] sm:$0xf]
      %v6192 = vunpack.c.l.b16 %v6160
      %v6193 = vunpack.c.l.b16 %v6161
      %v6194 = vunpack.c.l.b16 %v6162
      %v6195 = vunpack.c.l.b16 %v6163
      %v6196 = vunpack.c.l.b16 %v6164
      %v6197 = vunpack.c.l.b16 %v6165
      %v6198 = vunpack.c.l.b16 %v6166
      %v6199 = vunpack.c.l.b16 %v6167
      %v6200 = vunpack.c.l.b16 %v6168
      %v6201 = vunpack.c.l.b16 %v6169
      %v6202 = vunpack.c.l.b16 %v6170
      %v6203 = vunpack.c.l.b16 %v6171
      %v6204 = vunpack.c.l.b16 %v6172
      %v6205 = vunpack.c.l.b16 %v6173
      %v6206 = vunpack.c.l.b16 %v6174
      %v6207 = vunpack.c.l.b16 %v6175
      %v6208 = vpack.c.b16 %v6193, %v6192
      %v6209 = vpack.c.b16 %v6195, %v6194
      %v6210 = vpack.c.b16 %v6197, %v6196
      %v6211 = vpack.c.b16 %v6199, %v6198
      %v6212 = vpack.c.b16 %v6201, %v6200
      %v6213 = vpack.c.b16 %v6203, %v6202
      %v6214 = vpack.c.b16 %v6205, %v6204
      %v6215 = vpack.c.b16 %v6207, %v6206
      %6224 = vmatprep.subr.bf16.mxu0 0
      %6225 = vmatpush1.bf16.msra.mxu0 %v6208
      %6226 = vmatprep.subr.bf16.mxu0 0
      %6227 = vmatpush1.bf16.msra.mxu0 %v6209
      %6228 = vmatprep.subr.bf16.mxu0 0
      %6229 = vmatpush1.bf16.msra.mxu0 %v6210
      %6230 = vmatprep.subr.bf16.mxu0 0
      %6231 = vmatpush1.bf16.msra.mxu0 %v6211
      %6232 = vmatprep.subr.bf16.mxu0 0
      %6233 = vmatpush1.bf16.msra.mxu0 %v6212
      %6234 = vmatprep.subr.bf16.mxu0 0
      %6235 = vmatpush1.bf16.msra.mxu0 %v6213
      %6236 = vmatprep.subr.bf16.mxu0 0
      %6237 = vmatpush1.bf16.msra.mxu0 %v6214
      %6238 = vmatprep.subr.bf16.mxu0 0
      %6239 = vmatpush1.bf16.msra.mxu0 %v6215
      %6240 = vmatprep.subr.bf16.mxu0 0
      %6241 = vmatpush1.bf16.msra.mxu0 0
      %6242 = vmatprep.subr.bf16.mxu0 0
      %6243 = vmatpush1.bf16.msra.mxu0 0
      %6244 = vmatprep.subr.bf16.mxu0 0
      %6245 = vmatpush1.bf16.msra.mxu0 0
      %6246 = vmatprep.subr.bf16.mxu0 0
      %6247 = vmatpush1.bf16.msra.mxu0 0
      %6248 = vmatprep.subr.bf16.mxu0 0
      %6249 = vmatpush1.bf16.msra.mxu0 0
      %6250 = vmatprep.subr.bf16.mxu0 0
      %6251 = vmatpush1.bf16.msra.mxu0 0
      %6252 = vmatprep.subr.bf16.mxu0 0
      %6253 = vmatpush1.bf16.msra.mxu0 0
      %6254 = vmatprep.subr.bf16.mxu0 0
      %6255 = vmatpush1.bf16.msra.mxu0 0
      %6256 = vmatprep.mubr.bf16.mxu0 0
      %6257 = vmatmul.mubr.bf16.gmra.mrb[0].mxu0 %v6159
      %v6258 = vpop.f32.mrb[0].mxu0
      %v6259 = vadd.f32 0.0, %v6258
      %v6260 = vpop.f32.mrb[0].mxu0
      %v6261 = vpop.f32.mrb[0].mxu0
      %v6262 = vpop.f32.mrb[0].mxu0
      %6263 = vdwg.mxu0
      %v6280 = vunpack.c.l.b16 %v6141
      %v6281 = vunpack.c.l.b16 %v6142
      %v6282 = vunpack.c.l.b16 %v6143
      %v6283 = vunpack.c.l.b16 %v6144
      %v6284 = vunpack.c.l.b16 %v6145
      %v6285 = vunpack.c.l.b16 %v6146
      %v6286 = vunpack.c.l.b16 %v6147
      %v6287 = vunpack.c.l.b16 %v6148
      %v6288 = vunpack.c.l.b16 %v6149
      %v6289 = vunpack.c.l.b16 %v6150
      %v6290 = vunpack.c.l.b16 %v6151
      %v6291 = vunpack.c.l.b16 %v6152
      %v6292 = vunpack.c.l.b16 %v6153
      %v6293 = vunpack.c.l.b16 %v6154
      %v6294 = vunpack.c.l.b16 %v6155
      %v6295 = vunpack.c.l.b16 %v6156
      %v6296 = vpack.c.b16 %v6281, %v6280
      %v6297 = vpack.c.b16 %v6283, %v6282
      %v6298 = vpack.c.b16 %v6285, %v6284
      %v6299 = vpack.c.b16 %v6287, %v6286
      %v6300 = vpack.c.b16 %v6289, %v6288
      %v6301 = vpack.c.b16 %v6291, %v6290
      %v6302 = vpack.c.b16 %v6293, %v6292
      %v6303 = vpack.c.b16 %v6295, %v6294
      %6312 = vmatprep.subr.bf16.mxu0 0
      %6313 = vmatpush1.bf16.msra.mxu0 %v6296
      %6314 = vmatprep.subr.bf16.mxu0 0
      %6315 = vmatpush1.bf16.msra.mxu0 %v6297
      %6316 = vmatprep.subr.bf16.mxu0 0
      %6317 = vmatpush1.bf16.msra.mxu0 %v6298
      %6318 = vmatprep.subr.bf16.mxu0 0
      %6319 = vmatpush1.bf16.msra.mxu0 %v6299
      %6320 = vmatprep.subr.bf16.mxu0 0
      %6321 = vmatpush1.bf16.msra.mxu0 %v6300
      %6322 = vmatprep.subr.bf16.mxu0 0
      %6323 = vmatpush1.bf16.msra.mxu0 %v6301
      %6324 = vmatprep.subr.bf16.mxu0 0
      %6325 = vmatpush1.bf16.msra.mxu0 %v6302
      %6326 = vmatprep.subr.bf16.mxu0 0
      %6327 = vmatpush1.bf16.msra.mxu0 %v6303
      %6328 = vmatprep.subr.bf16.mxu0 0
      %6329 = vmatpush1.bf16.msra.mxu0 0
      %6330 = vmatprep.subr.bf16.mxu0 0
      %6331 = vmatpush1.bf16.msra.mxu0 0
      %6332 = vmatprep.subr.bf16.mxu0 0
      %6333 = vmatpush1.bf16.msra.mxu0 0
      %6334 = vmatprep.subr.bf16.mxu0 0
      %6335 = vmatpush1.bf16.msra.mxu0 0
      %6336 = vmatprep.subr.bf16.mxu0 0
      %6337 = vmatpush1.bf16.msra.mxu0 0
      %6338 = vmatprep.subr.bf16.mxu0 0
      %6339 = vmatpush1.bf16.msra.mxu0 0
      %6340 = vmatprep.subr.bf16.mxu0 0
      %6341 = vmatpush1.bf16.msra.mxu0 0
      %6342 = vmatprep.subr.bf16.mxu0 0
      %6343 = vmatpush1.bf16.msra.mxu0 0
      %6344 = vmatprep.mubr.bf16.mxu0 0
      %6345 = vmatmul.mubr.bf16.gmra.mrb[0].mxu0 %v6140
      %v6346 = vpop.f32.mrb[0].mxu0
      %v6347 = vadd.f32 %v6259, %v6346
      %v6348 = vpop.f32.mrb[0].mxu0
      %v6349 = vpop.f32.mrb[0].mxu0
      %v6350 = vpop.f32.mrb[0].mxu0
      %6351 = vdwg.mxu0
      %s6352 = scalar_lea.vmem [#allocation3], 193
      %v6353 = vld [vmem:[%s6352] ss:$2 sm:$0xff]
      %v6354 = vpack.c.bf16 %v6353, %v6353
      %v6355 = vld [vmem:[%s1 + $0x200] sm:$0xf]
      %v6356 = vld [vmem:[%s1 + $0x204] sm:$0xf]
      %v6357 = vld [vmem:[%s1 + $0x208] sm:$0xf]
      %v6358 = vld [vmem:[%s1 + $0x20c] sm:$0xf]
      %v6359 = vld [vmem:[%s1 + $0x210] sm:$0xf]
      %v6360 = vld [vmem:[%s1 + $0x214] sm:$0xf]
      %v6361 = vld [vmem:[%s1 + $0x218] sm:$0xf]
      %v6362 = vld [vmem:[%s1 + $0x21c] sm:$0xf]
      %v6363 = vld [vmem:[%s1 + $0x220] sm:$0xf]
      %v6364 = vld [vmem:[%s1 + $0x224] sm:$0xf]
      %v6365 = vld [vmem:[%s1 + $0x228] sm:$0xf]
      %v6366 = vld [vmem:[%s1 + $0x22c] sm:$0xf]
      %v6367 = vld [vmem:[%s1 + $0x230] sm:$0xf]
      %v6368 = vld [vmem:[%s1 + $0x234] sm:$0xf]
      %v6369 = vld [vmem:[%s1 + $0x238] sm:$0xf]
      %v6370 = vld [vmem:[%s1 + $0x23c] sm:$0xf]
      %v6387 = vunpack.c.l.b16 %v6355
      %v6388 = vunpack.c.l.b16 %v6356
      %v6389 = vunpack.c.l.b16 %v6357
      %v6390 = vunpack.c.l.b16 %v6358
      %v6391 = vunpack.c.l.b16 %v6359
      %v6392 = vunpack.c.l.b16 %v6360
      %v6393 = vunpack.c.l.b16 %v6361
      %v6394 = vunpack.c.l.b16 %v6362
      %v6395 = vunpack.c.l.b16 %v6363
      %v6396 = vunpack.c.l.b16 %v6364
      %v6397 = vunpack.c.l.b16 %v6365
      %v6398 = vunpack.c.l.b16 %v6366
      %v6399 = vunpack.c.l.b16 %v6367
      %v6400 = vunpack.c.l.b16 %v6368
      %v6401 = vunpack.c.l.b16 %v6369
      %v6402 = vunpack.c.l.b16 %v6370
      %v6403 = vpack.c.b16 %v6388, %v6387
      %v6404 = vpack.c.b16 %v6390, %v6389
      %v6405 = vpack.c.b16 %v6392, %v6391
      %v6406 = vpack.c.b16 %v6394, %v6393
      %v6407 = vpack.c.b16 %v6396, %v6395
      %v6408 = vpack.c.b16 %v6398, %v6397
      %v6409 = vpack.c.b16 %v6400, %v6399
      %v6410 = vpack.c.b16 %v6402, %v6401
      %6419 = vmatprep.subr.bf16.mxu0 0
      %6420 = vmatpush1.bf16.msra.mxu0 %v6403
      %6421 = vmatprep.subr.bf16.mxu0 0
      %6422 = vmatpush1.bf16.msra.mxu0 %v6404
      %6423 = vmatprep.subr.bf16.mxu0 0
      %6424 = vmatpush1.bf16.msra.mxu0 %v6405
      %6425 = vmatprep.subr.bf16.mxu0 0
      %6426 = vmatpush1.bf16.msra.mxu0 %v6406
      %6427 = vmatprep.subr.bf16.mxu0 0
      %6428 = vmatpush1.bf16.msra.mxu0 %v6407
      %6429 = vmatprep.subr.bf16.mxu0 0
      %6430 = vmatpush1.bf16.msra.mxu0 %v6408
      %6431 = vmatprep.subr.bf16.mxu0 0
      %6432 = vmatpush1.bf16.msra.mxu0 %v6409
      %6433 = vmatprep.subr.bf16.mxu0 0
      %6434 = vmatpush1.bf16.msra.mxu0 %v6410
      %6435 = vmatprep.subr.bf16.mxu0 0
      %6436 = vmatpush1.bf16.msra.mxu0 0
      %6437 = vmatprep.subr.bf16.mxu0 0
      %6438 = vmatpush1.bf16.msra.mxu0 0
      %6439 = vmatprep.subr.bf16.mxu0 0
      %6440 = vmatpush1.bf16.msra.mxu0 0
      %6441 = vmatprep.subr.bf16.mxu0 0
      %6442 = vmatpush1.bf16.msra.mxu0 0
      %6443 = vmatprep.subr.bf16.mxu0 0
      %6444 = vmatpush1.bf16.msra.mxu0 0
      %6445 = vmatprep.subr.bf16.mxu0 0
      %6446 = vmatpush1.bf16.msra.mxu0 0
      %6447 = vmatprep.subr.bf16.mxu0 0
      %6448 = vmatpush1.bf16.msra.mxu0 0
      %6449 = vmatprep.subr.bf16.mxu0 0
      %6450 = vmatpush1.bf16.msra.mxu0 0
      %6451 = vmatprep.mubr.bf16.mxu0 0
      %6452 = vmatmul.mubr.bf16.gmra.mrb[0].mxu0 %v6354
      %v6453 = vpop.f32.mrb[0].mxu0
      %v6454 = vadd.f32 0.0, %v6453
      %v6455 = vpop.f32.mrb[0].mxu0
      %v6456 = vpop.f32.mrb[0].mxu0
      %v6457 = vpop.f32.mrb[0].mxu0
      %6458 = vdwg.mxu0
      %v6459 = vadd.f32 %v6347, %v6454
      %v6460 = vadd.f32 %v6459, %v5120
      %v6461 = vxor.u32 %v6460, 2147483648
      %v6462 = vmul.f32 %v6461, 1.442695
      %v6463 = vpow.pop %v6462
      %v6464 = vadd.f32 %v6463, 1.0
      %v6465 = vrcp.pop %v6464
      %v6466 = vmul.f32 1.0, %v6465
      %v6467 = vmul.f32 %v6460, %v6466
      %6469 = vrot.lane.b32.xlu0 %v6467, 32
      %v6470 = vpop.permute.xlu0 %6469
      %6472 = vst.msk [vmem:[#allocation2 + $0x41] sm:$0xff] %vm1308, %v6470
      %6473 = vst.msk [vmem:[#allocation2 + $0x42] sm:$0xff] %vm1333, %v6467
      %6474 = vrot.lane.b32.xlu0 %v6467, 64
      %v6475 = vpop.permute.xlu0 %6474
      %6477 = vst.msk [vmem:[#allocation2 + $0x40] sm:$0xff] %vm1430, %v6475
      %v6478 = vld [vmem:[%s6352] ss:$2 sm:$0xff]
      %v6479 = vpack.c.bf16 %v6478, %v6478
      %v6480 = vld [vmem:[%s1 + $0x180] sm:$0xf]
      %v6481 = vld [vmem:[%s1 + $0x184] sm:$0xf]
      %v6482 = vld [vmem:[%s1 + $0x188] sm:$0xf]
      %v6483 = vld [vmem:[%s1 + $0x18c] sm:$0xf]
      %v6484 = vld [vmem:[%s1 + $0x190] sm:$0xf]
      %v6485 = vld [vmem:[%s1 + $0x194] sm:$0xf]
      %v6486 = vld [vmem:[%s1 + $0x198] sm:$0xf]
      %v6487 = vld [vmem:[%s1 + $0x19c] sm:$0xf]
      %v6488 = vld [vmem:[%s1 + $0x1a0] sm:$0xf]
      %v6489 = vld [vmem:[%s1 + $0x1a4] sm:$0xf]
      %v6490 = vld [vmem:[%s1 + $0x1a8] sm:$0xf]
      %v6491 = vld [vmem:[%s1 + $0x1ac] sm:$0xf]
      %v6492 = vld [vmem:[%s1 + $0x1b0] sm:$0xf]
      %v6493 = vld [vmem:[%s1 + $0x1b4] sm:$0xf]
      %v6494 = vld [vmem:[%s1 + $0x1b8] sm:$0xf]
      %v6495 = vld [vmem:[%s1 + $0x1bc] sm:$0xf]
      %s6496 = scalar_lea.vmem [#allocation3], 217
      %v6497 = vld [vmem:[%s6496] ss:$2 sm:$0xff]
      %v6498 = vpack.c.bf16 %v6497, %v6497
      %v6499 = vld [vmem:[%s1 + $0x1c0] sm:$0xf]
      %v6500 = vld [vmem:[%s1 + $0x1c4] sm:$0xf]
      %v6501 = vld [vmem:[%s1 + $0x1c8] sm:$0xf]
      %v6502 = vld [vmem:[%s1 + $0x1cc] sm:$0xf]
      %v6503 = vld [vmem:[%s1 + $0x1d0] sm:$0xf]
      %v6504 = vld [vmem:[%s1 + $0x1d4] sm:$0xf]
      %v6505 = vld [vmem:[%s1 + $0x1d8] sm:$0xf]
      %v6506 = vld [vmem:[%s1 + $0x1dc] sm:$0xf]
      %v6507 = vld [vmem:[%s1 + $0x1e0] sm:$0xf]
      %v6508 = vld [vmem:[%s1 + $0x1e4] sm:$0xf]
      %v6509 = vld [vmem:[%s1 + $0x1e8] sm:$0xf]
      %v6510 = vld [vmem:[%s1 + $0x1ec] sm:$0xf]
      %v6511 = vld [vmem:[%s1 + $0x1f0] sm:$0xf]
      %v6512 = vld [vmem:[%s1 + $0x1f4] sm:$0xf]
      %v6513 = vld [vmem:[%s1 + $0x1f8] sm:$0xf]
      %v6514 = vld [vmem:[%s1 + $0x1fc] sm:$0xf]
      %v6531 = vunpack.c.l.b16 %v6499
      %v6532 = vunpack.c.l.b16 %v6500
      %v6533 = vunpack.c.l.b16 %v6501
      %v6534 = vunpack.c.l.b16 %v6502
      %v6535 = vunpack.c.l.b16 %v6503
      %v6536 = vunpack.c.l.b16 %v6504
      %v6537 = vunpack.c.l.b16 %v6505
      %v6538 = vunpack.c.l.b16 %v6506
      %v6539 = vunpack.c.l.b16 %v6507
      %v6540 = vunpack.c.l.b16 %v6508
      %v6541 = vunpack.c.l.b16 %v6509
      %v6542 = vunpack.c.l.b16 %v6510
      %v6543 = vunpack.c.l.b16 %v6511
      %v6544 = vunpack.c.l.b16 %v6512
      %v6545 = vunpack.c.l.b16 %v6513
      %v6546 = vunpack.c.l.b16 %v6514
      %v6547 = vpack.c.b16 %v6532, %v6531
      %v6548 = vpack.c.b16 %v6534, %v6533
      %v6549 = vpack.c.b16 %v6536, %v6535
      %v6550 = vpack.c.b16 %v6538, %v6537
      %v6551 = vpack.c.b16 %v6540, %v6539
      %v6552 = vpack.c.b16 %v6542, %v6541
      %v6553 = vpack.c.b16 %v6544, %v6543
      %v6554 = vpack.c.b16 %v6546, %v6545
      %6563 = vmatprep.subr.bf16.mxu0 0
      %6564 = vmatpush1.bf16.msra.mxu0 %v6547
      %6565 = vmatprep.subr.bf16.mxu0 0
      %6566 = vmatpush1.bf16.msra.mxu0 %v6548
      %6567 = vmatprep.subr.bf16.mxu0 0
      %6568 = vmatpush1.bf16.msra.mxu0 %v6549
      %6569 = vmatprep.subr.bf16.mxu0 0
      %6570 = vmatpush1.bf16.msra.mxu0 %v6550
      %6571 = vmatprep.subr.bf16.mxu0 0
      %6572 = vmatpush1.bf16.msra.mxu0 %v6551
      %6573 = vmatprep.subr.bf16.mxu0 0
      %6574 = vmatpush1.bf16.msra.mxu0 %v6552
      %6575 = vmatprep.subr.bf16.mxu0 0
      %6576 = vmatpush1.bf16.msra.mxu0 %v6553
      %6577 = vmatprep.subr.bf16.mxu0 0
      %6578 = vmatpush1.bf16.msra.mxu0 %v6554
      %6579 = vmatprep.subr.bf16.mxu0 0
      %6580 = vmatpush1.bf16.msra.mxu0 0
      %6581 = vmatprep.subr.bf16.mxu0 0
      %6582 = vmatpush1.bf16.msra.mxu0 0
      %6583 = vmatprep.subr.bf16.mxu0 0
      %6584 = vmatpush1.bf16.msra.mxu0 0
      %6585 = vmatprep.subr.bf16.mxu0 0
      %6586 = vmatpush1.bf16.msra.mxu0 0
      %6587 = vmatprep.subr.bf16.mxu0 0
      %6588 = vmatpush1.bf16.msra.mxu0 0
      %6589 = vmatprep.subr.bf16.mxu0 0
      %6590 = vmatpush1.bf16.msra.mxu0 0
      %6591 = vmatprep.subr.bf16.mxu0 0
      %6592 = vmatpush1.bf16.msra.mxu0 0
      %6593 = vmatprep.subr.bf16.mxu0 0
      %6594 = vmatpush1.bf16.msra.mxu0 0
      %6595 = vmatprep.mubr.bf16.mxu0 0
      %6596 = vmatmul.mubr.bf16.gmra.mrb[0].mxu0 %v6498
      %v6597 = vpop.f32.mrb[0].mxu0
      %v6598 = vadd.f32 0.0, %v6597
      %v6599 = vpop.f32.mrb[0].mxu0
      %v6600 = vpop.f32.mrb[0].mxu0
      %v6601 = vpop.f32.mrb[0].mxu0
      %6602 = vdwg.mxu0
      %v6619 = vunpack.c.l.b16 %v6480
      %v6620 = vunpack.c.l.b16 %v6481
      %v6621 = vunpack.c.l.b16 %v6482
      %v6622 = vunpack.c.l.b16 %v6483
      %v6623 = vunpack.c.l.b16 %v6484
      %v6624 = vunpack.c.l.b16 %v6485
      %v6625 = vunpack.c.l.b16 %v6486
      %v6626 = vunpack.c.l.b16 %v6487
      %v6627 = vunpack.c.l.b16 %v6488
      %v6628 = vunpack.c.l.b16 %v6489
      %v6629 = vunpack.c.l.b16 %v6490
      %v6630 = vunpack.c.l.b16 %v6491
      %v6631 = vunpack.c.l.b16 %v6492
      %v6632 = vunpack.c.l.b16 %v6493
      %v6633 = vunpack.c.l.b16 %v6494
      %v6634 = vunpack.c.l.b16 %v6495
      %v6635 = vpack.c.b16 %v6620, %v6619
      %v6636 = vpack.c.b16 %v6622, %v6621
      %v6637 = vpack.c.b16 %v6624, %v6623
      %v6638 = vpack.c.b16 %v6626, %v6625
      %v6639 = vpack.c.b16 %v6628, %v6627
      %v6640 = vpack.c.b16 %v6630, %v6629
      %v6641 = vpack.c.b16 %v6632, %v6631
      %v6642 = vpack.c.b16 %v6634, %v6633
      %6651 = vmatprep.subr.bf16.mxu0 0
      %6652 = vmatpush1.bf16.msra.mxu0 %v6635
      %6653 = vmatprep.subr.bf16.mxu0 0
      %6654 = vmatpush1.bf16.msra.mxu0 %v6636
      %6655 = vmatprep.subr.bf16.mxu0 0
      %6656 = vmatpush1.bf16.msra.mxu0 %v6637
      %6657 = vmatprep.subr.bf16.mxu0 0
      %6658 = vmatpush1.bf16.msra.mxu0 %v6638
      %6659 = vmatprep.subr.bf16.mxu0 0
      %6660 = vmatpush1.bf16.msra.mxu0 %v6639
      %6661 = vmatprep.subr.bf16.mxu0 0
      %6662 = vmatpush1.bf16.msra.mxu0 %v6640
      %6663 = vmatprep.subr.bf16.mxu0 0
      %6664 = vmatpush1.bf16.msra.mxu0 %v6641
      %6665 = vmatprep.subr.bf16.mxu0 0
      %6666 = vmatpush1.bf16.msra.mxu0 %v6642
      %6667 = vmatprep.subr.bf16.mxu0 0
      %6668 = vmatpush1.bf16.msra.mxu0 0
      %6669 = vmatprep.subr.bf16.mxu0 0
      %6670 = vmatpush1.bf16.msra.mxu0 0
      %6671 = vmatprep.subr.bf16.mxu0 0
      %6672 = vmatpush1.bf16.msra.mxu0 0
      %6673 = vmatprep.subr.bf16.mxu0 0
      %6674 = vmatpush1.bf16.msra.mxu0 0
      %6675 = vmatprep.subr.bf16.mxu0 0
      %6676 = vmatpush1.bf16.msra.mxu0 0
      %6677 = vmatprep.subr.bf16.mxu0 0
      %6678 = vmatpush1.bf16.msra.mxu0 0
      %6679 = vmatprep.subr.bf16.mxu0 0
      %6680 = vmatpush1.bf16.msra.mxu0 0
      %6681 = vmatprep.subr.bf16.mxu0 0
      %6682 = vmatpush1.bf16.msra.mxu0 0
      %6683 = vmatprep.mubr.bf16.mxu0 0
      %6684 = vmatmul.mubr.bf16.gmra.mrb[0].mxu0 %v6479
      %v6685 = vpop.f32.mrb[0].mxu0
      %v6686 = vadd.f32 %v6598, %v6685
      %v6687 = vpop.f32.mrb[0].mxu0
      %v6688 = vpop.f32.mrb[0].mxu0
      %v6689 = vpop.f32.mrb[0].mxu0
      %6690 = vdwg.mxu0
      %s6691 = scalar_lea.vmem [#allocation3], 241
      %v6692 = vld [vmem:[%s6691] ss:$2 sm:$0xff]
      %v6693 = vpack.c.bf16 %v6692, %v6692
      %v6694 = vld [vmem:[%s1 + $0x200] sm:$0xf]
      %v6695 = vld [vmem:[%s1 + $0x204] sm:$0xf]
      %v6696 = vld [vmem:[%s1 + $0x208] sm:$0xf]
      %v6697 = vld [vmem:[%s1 + $0x20c] sm:$0xf]
      %v6698 = vld [vmem:[%s1 + $0x210] sm:$0xf]
      %v6699 = vld [vmem:[%s1 + $0x214] sm:$0xf]
      %v6700 = vld [vmem:[%s1 + $0x218] sm:$0xf]
      %v6701 = vld [vmem:[%s1 + $0x21c] sm:$0xf]
      %v6702 = vld [vmem:[%s1 + $0x220] sm:$0xf]
      %v6703 = vld [vmem:[%s1 + $0x224] sm:$0xf]
      %v6704 = vld [vmem:[%s1 + $0x228] sm:$0xf]
      %v6705 = vld [vmem:[%s1 + $0x22c] sm:$0xf]
      %v6706 = vld [vmem:[%s1 + $0x230] sm:$0xf]
      %v6707 = vld [vmem:[%s1 + $0x234] sm:$0xf]
      %v6708 = vld [vmem:[%s1 + $0x238] sm:$0xf]
      %v6709 = vld [vmem:[%s1 + $0x23c] sm:$0xf]
      %v6726 = vunpack.c.l.b16 %v6694
      %v6727 = vunpack.c.l.b16 %v6695
      %v6728 = vunpack.c.l.b16 %v6696
      %v6729 = vunpack.c.l.b16 %v6697
      %v6730 = vunpack.c.l.b16 %v6698
      %v6731 = vunpack.c.l.b16 %v6699
      %v6732 = vunpack.c.l.b16 %v6700
      %v6733 = vunpack.c.l.b16 %v6701
      %v6734 = vunpack.c.l.b16 %v6702
      %v6735 = vunpack.c.l.b16 %v6703
      %v6736 = vunpack.c.l.b16 %v6704
      %v6737 = vunpack.c.l.b16 %v6705
      %v6738 = vunpack.c.l.b16 %v6706
      %v6739 = vunpack.c.l.b16 %v6707
      %v6740 = vunpack.c.l.b16 %v6708
      %v6741 = vunpack.c.l.b16 %v6709
      %v6742 = vpack.c.b16 %v6727, %v6726
      %v6743 = vpack.c.b16 %v6729, %v6728
      %v6744 = vpack.c.b16 %v6731, %v6730
      %v6745 = vpack.c.b16 %v6733, %v6732
      %v6746 = vpack.c.b16 %v6735, %v6734
      %v6747 = vpack.c.b16 %v6737, %v6736
      %v6748 = vpack.c.b16 %v6739, %v6738
      %v6749 = vpack.c.b16 %v6741, %v6740
      %6758 = vmatprep.subr.bf16.mxu0 0
      %6759 = vmatpush1.bf16.msra.mxu0 %v6742
      %6760 = vmatprep.subr.bf16.mxu0 0
      %6761 = vmatpush1.bf16.msra.mxu0 %v6743
      %6762 = vmatprep.subr.bf16.mxu0 0
      %6763 = vmatpush1.bf16.msra.mxu0 %v6744
      %6764 = vmatprep.subr.bf16.mxu0 0
      %6765 = vmatpush1.bf16.msra.mxu0 %v6745
      %6766 = vmatprep.subr.bf16.mxu0 0
      %6767 = vmatpush1.bf16.msra.mxu0 %v6746
      %6768 = vmatprep.subr.bf16.mxu0 0
      %6769 = vmatpush1.bf16.msra.mxu0 %v6747
      %6770 = vmatprep.subr.bf16.mxu0 0
      %6771 = vmatpush1.bf16.msra.mxu0 %v6748
      %6772 = vmatprep.subr.bf16.mxu0 0
      %6773 = vmatpush1.bf16.msra.mxu0 %v6749
      %6774 = vmatprep.subr.bf16.mxu0 0
      %6775 = vmatpush1.bf16.msra.mxu0 0
      %6776 = vmatprep.subr.bf16.mxu0 0
      %6777 = vmatpush1.bf16.msra.mxu0 0
      %6778 = vmatprep.subr.bf16.mxu0 0
      %6779 = vmatpush1.bf16.msra.mxu0 0
      %6780 = vmatprep.subr.bf16.mxu0 0
      %6781 = vmatpush1.bf16.msra.mxu0 0
      %6782 = vmatprep.subr.bf16.mxu0 0
      %6783 = vmatpush1.bf16.msra.mxu0 0
      %6784 = vmatprep.subr.bf16.mxu0 0
      %6785 = vmatpush1.bf16.msra.mxu0 0
      %6786 = vmatprep.subr.bf16.mxu0 0
      %6787 = vmatpush1.bf16.msra.mxu0 0
      %6788 = vmatprep.subr.bf16.mxu0 0
      %6789 = vmatpush1.bf16.msra.mxu0 0
      %6790 = vmatprep.mubr.bf16.mxu0 0
      %6791 = vmatmul.mubr.bf16.gmra.mrb[0].mxu0 %v6693
      %v6792 = vpop.f32.mrb[0].mxu0
      %v6793 = vadd.f32 0.0, %v6792
      %v6794 = vpop.f32.mrb[0].mxu0
      %v6795 = vpop.f32.mrb[0].mxu0
      %v6796 = vpop.f32.mrb[0].mxu0
      %6797 = vdwg.mxu0
      %v6798 = vadd.f32 %v6686, %v6793
      %v6799 = vadd.f32 %v6798, %v5120
      %v6800 = vxor.u32 %v6799, 2147483648
      %v6801 = vmul.f32 %v6800, 1.442695
      %v6802 = vpow.pop %v6801
      %v6803 = vadd.f32 %v6802, 1.0
      %v6804 = vrcp.pop %v6803
      %v6805 = vmul.f32 1.0, %v6804
      %v6806 = vmul.f32 %v6799, %v6805
      %6808 = vrot.lane.b32.xlu0 %v6806, 32
      %v6809 = vpop.permute.xlu0 %6808
      %6811 = vst.msk [vmem:[#allocation2 + $0x51] sm:$0xff] %vm1308, %v6809
      %6812 = vst.msk [vmem:[#allocation2 + $0x52] sm:$0xff] %vm1333, %v6806
      %6813 = vrot.lane.b32.xlu0 %v6806, 64
      %v6814 = vpop.permute.xlu0 %6813
      %6816 = vst.msk [vmem:[#allocation2 + $0x50] sm:$0xff] %vm1430, %v6814
      %v6817 = vld [vmem:[%s6691] ss:$2 sm:$0xff]
      %v6818 = vpack.c.bf16 %v6817, %v6817
      %v6819 = vld [vmem:[%s1 + $0x180] sm:$0xf]
      %v6820 = vld [vmem:[%s1 + $0x184] sm:$0xf]
      %v6821 = vld [vmem:[%s1 + $0x188] sm:$0xf]
      %v6822 = vld [vmem:[%s1 + $0x18c] sm:$0xf]
      %v6823 = vld [vmem:[%s1 + $0x190] sm:$0xf]
      %v6824 = vld [vmem:[%s1 + $0x194] sm:$0xf]
      %v6825 = vld [vmem:[%s1 + $0x198] sm:$0xf]
      %v6826 = vld [vmem:[%s1 + $0x19c] sm:$0xf]
      %v6827 = vld [vmem:[%s1 + $0x1a0] sm:$0xf]
      %v6828 = vld [vmem:[%s1 + $0x1a4] sm:$0xf]
      %v6829 = vld [vmem:[%s1 + $0x1a8] sm:$0xf]
      %v6830 = vld [vmem:[%s1 + $0x1ac] sm:$0xf]
      %v6831 = vld [vmem:[%s1 + $0x1b0] sm:$0xf]
      %v6832 = vld [vmem:[%s1 + $0x1b4] sm:$0xf]
      %v6833 = vld [vmem:[%s1 + $0x1b8] sm:$0xf]
      %v6834 = vld [vmem:[%s1 + $0x1bc] sm:$0xf]
      %s6835 = scalar_lea.vmem [#allocation3], 265
      %v6836 = vld [vmem:[%s6835] ss:$2 sm:$0xff]
      %v6837 = vpack.c.bf16 %v6836, %v6836
      %v6838 = vld [vmem:[%s1 + $0x1c0] sm:$0xf]
      %v6839 = vld [vmem:[%s1 + $0x1c4] sm:$0xf]
      %v6840 = vld [vmem:[%s1 + $0x1c8] sm:$0xf]
      %v6841 = vld [vmem:[%s1 + $0x1cc] sm:$0xf]
      %v6842 = vld [vmem:[%s1 + $0x1d0] sm:$0xf]
      %v6843 = vld [vmem:[%s1 + $0x1d4] sm:$0xf]
      %v6844 = vld [vmem:[%s1 + $0x1d8] sm:$0xf]
      %v6845 = vld [vmem:[%s1 + $0x1dc] sm:$0xf]
      %v6846 = vld [vmem:[%s1 + $0x1e0] sm:$0xf]
      %v6847 = vld [vmem:[%s1 + $0x1e4] sm:$0xf]
      %v6848 = vld [vmem:[%s1 + $0x1e8] sm:$0xf]
      %v6849 = vld [vmem:[%s1 + $0x1ec] sm:$0xf]
      %v6850 = vld [vmem:[%s1 + $0x1f0] sm:$0xf]
      %v6851 = vld [vmem:[%s1 + $0x1f4] sm:$0xf]
      %v6852 = vld [vmem:[%s1 + $0x1f8] sm:$0xf]
      %v6853 = vld [vmem:[%s1 + $0x1fc] sm:$0xf]
      %v6870 = vunpack.c.l.b16 %v6838
      %v6871 = vunpack.c.l.b16 %v6839
      %v6872 = vunpack.c.l.b16 %v6840
      %v6873 = vunpack.c.l.b16 %v6841
      %v6874 = vunpack.c.l.b16 %v6842
      %v6875 = vunpack.c.l.b16 %v6843
      %v6876 = vunpack.c.l.b16 %v6844
      %v6877 = vunpack.c.l.b16 %v6845
      %v6878 = vunpack.c.l.b16 %v6846
      %v6879 = vunpack.c.l.b16 %v6847
      %v6880 = vunpack.c.l.b16 %v6848
      %v6881 = vunpack.c.l.b16 %v6849
      %v6882 = vunpack.c.l.b16 %v6850
      %v6883 = vunpack.c.l.b16 %v6851
      %v6884 = vunpack.c.l.b16 %v6852
      %v6885 = vunpack.c.l.b16 %v6853
      %v6886 = vpack.c.b16 %v6871, %v6870
      %v6887 = vpack.c.b16 %v6873, %v6872
      %v6888 = vpack.c.b16 %v6875, %v6874
      %v6889 = vpack.c.b16 %v6877, %v6876
      %v6890 = vpack.c.b16 %v6879, %v6878
      %v6891 = vpack.c.b16 %v6881, %v6880
      %v6892 = vpack.c.b16 %v6883, %v6882
      %v6893 = vpack.c.b16 %v6885, %v6884
      %6902 = vmatprep.subr.bf16.mxu0 0
      %6903 = vmatpush1.bf16.msra.mxu0 %v6886
      %6904 = vmatprep.subr.bf16.mxu0 0
      %6905 = vmatpush1.bf16.msra.mxu0 %v6887
      %6906 = vmatprep.subr.bf16.mxu0 0
      %6907 = vmatpush1.bf16.msra.mxu0 %v6888
      %6908 = vmatprep.subr.bf16.mxu0 0
      %6909 = vmatpush1.bf16.msra.mxu0 %v6889
      %6910 = vmatprep.subr.bf16.mxu0 0
      %6911 = vmatpush1.bf16.msra.mxu0 %v6890
      %6912 = vmatprep.subr.bf16.mxu0 0
      %6913 = vmatpush1.bf16.msra.mxu0 %v6891
      %6914 = vmatprep.subr.bf16.mxu0 0
      %6915 = vmatpush1.bf16.msra.mxu0 %v6892
      %6916 = vmatprep.subr.bf16.mxu0 0
      %6917 = vmatpush1.bf16.msra.mxu0 %v6893
      %6918 = vmatprep.subr.bf16.mxu0 0
      %6919 = vmatpush1.bf16.msra.mxu0 0
      %6920 = vmatprep.subr.bf16.mxu0 0
      %6921 = vmatpush1.bf16.msra.mxu0 0
      %6922 = vmatprep.subr.bf16.mxu0 0
      %6923 = vmatpush1.bf16.msra.mxu0 0
      %6924 = vmatprep.subr.bf16.mxu0 0
      %6925 = vmatpush1.bf16.msra.mxu0 0
      %6926 = vmatprep.subr.bf16.mxu0 0
      %6927 = vmatpush1.bf16.msra.mxu0 0
      %6928 = vmatprep.subr.bf16.mxu0 0
      %6929 = vmatpush1.bf16.msra.mxu0 0
      %6930 = vmatprep.subr.bf16.mxu0 0
      %6931 = vmatpush1.bf16.msra.mxu0 0
      %6932 = vmatprep.subr.bf16.mxu0 0
      %6933 = vmatpush1.bf16.msra.mxu0 0
      %6934 = vmatprep.mubr.bf16.mxu0 0
      %6935 = vmatmul.mubr.bf16.gmra.mrb[0].mxu0 %v6837
      %v6936 = vpop.f32.mrb[0].mxu0
      %v6937 = vadd.f32 0.0, %v6936
      %v6938 = vpop.f32.mrb[0].mxu0
      %v6939 = vpop.f32.mrb[0].mxu0
      %v6940 = vpop.f32.mrb[0].mxu0
      %6941 = vdwg.mxu0
      %v6958 = vunpack.c.l.b16 %v6819
      %v6959 = vunpack.c.l.b16 %v6820
      %v6960 = vunpack.c.l.b16 %v6821
      %v6961 = vunpack.c.l.b16 %v6822
      %v6962 = vunpack.c.l.b16 %v6823
      %v6963 = vunpack.c.l.b16 %v6824
      %v6964 = vunpack.c.l.b16 %v6825
      %v6965 = vunpack.c.l.b16 %v6826
      %v6966 = vunpack.c.l.b16 %v6827
      %v6967 = vunpack.c.l.b16 %v6828
      %v6968 = vunpack.c.l.b16 %v6829
      %v6969 = vunpack.c.l.b16 %v6830
      %v6970 = vunpack.c.l.b16 %v6831
      %v6971 = vunpack.c.l.b16 %v6832
      %v6972 = vunpack.c.l.b16 %v6833
      %v6973 = vunpack.c.l.b16 %v6834
      %v6974 = vpack.c.b16 %v6959, %v6958
      %v6975 = vpack.c.b16 %v6961, %v6960
      %v6976 = vpack.c.b16 %v6963, %v6962
      %v6977 = vpack.c.b16 %v6965, %v6964
      %v6978 = vpack.c.b16 %v6967, %v6966
      %v6979 = vpack.c.b16 %v6969, %v6968
      %v6980 = vpack.c.b16 %v6971, %v6970
      %v6981 = vpack.c.b16 %v6973, %v6972
      %6990 = vmatprep.subr.bf16.mxu0 0
      %6991 = vmatpush1.bf16.msra.mxu0 %v6974
      %6992 = vmatprep.subr.bf16.mxu0 0
      %6993 = vmatpush1.bf16.msra.mxu0 %v6975
      %6994 = vmatprep.subr.bf16.mxu0 0
      %6995 = vmatpush1.bf16.msra.mxu0 %v6976
      %6996 = vmatprep.subr.bf16.mxu0 0
      %6997 = vmatpush1.bf16.msra.mxu0 %v6977
      %6998 = vmatprep.subr.bf16.mxu0 0
      %6999 = vmatpush1.bf16.msra.mxu0 %v6978
      %7000 = vmatprep.subr.bf16.mxu0 0
      %7001 = vmatpush1.bf16.msra.mxu0 %v6979
      %7002 = vmatprep.subr.bf16.mxu0 0
      %7003 = vmatpush1.bf16.msra.mxu0 %v6980
      %7004 = vmatprep.subr.bf16.mxu0 0
      %7005 = vmatpush1.bf16.msra.mxu0 %v6981
      %7006 = vmatprep.subr.bf16.mxu0 0
      %7007 = vmatpush1.bf16.msra.mxu0 0
      %7008 = vmatprep.subr.bf16.mxu0 0
      %7009 = vmatpush1.bf16.msra.mxu0 0
      %7010 = vmatprep.subr.bf16.mxu0 0
      %7011 = vmatpush1.bf16.msra.mxu0 0
      %7012 = vmatprep.subr.bf16.mxu0 0
      %7013 = vmatpush1.bf16.msra.mxu0 0
      %7014 = vmatprep.subr.bf16.mxu0 0
      %7015 = vmatpush1.bf16.msra.mxu0 0
      %7016 = vmatprep.subr.bf16.mxu0 0
      %7017 = vmatpush1.bf16.msra.mxu0 0
      %7018 = vmatprep.subr.bf16.mxu0 0
      %7019 = vmatpush1.bf16.msra.mxu0 0
      %7020 = vmatprep.subr.bf16.mxu0 0
      %7021 = vmatpush1.bf16.msra.mxu0 0
      %7022 = vmatprep.mubr.bf16.mxu0 0
      %7023 = vmatmul.mubr.bf16.gmra.mrb[0].mxu0 %v6818
      %v7024 = vpop.f32.mrb[0].mxu0
      %v7025 = vadd.f32 %v6937, %v7024
      %v7026 = vpop.f32.mrb[0].mxu0
      %v7027 = vpop.f32.mrb[0].mxu0
      %v7028 = vpop.f32.mrb[0].mxu0
      %7029 = vdwg.mxu0
      %s7030 = scalar_lea.vmem [#allocation3], 289
      %v7031 = vld [vmem:[%s7030] ss:$2 sm:$0xff]
      %v7032 = vpack.c.bf16 %v7031, %v7031
      %v7033 = vld [vmem:[%s1 + $0x200] sm:$0xf]
      %v7034 = vld [vmem:[%s1 + $0x204] sm:$0xf]
      %v7035 = vld [vmem:[%s1 + $0x208] sm:$0xf]
      %v7036 = vld [vmem:[%s1 + $0x20c] sm:$0xf]
      %v7037 = vld [vmem:[%s1 + $0x210] sm:$0xf]
      %v7038 = vld [vmem:[%s1 + $0x214] sm:$0xf]
      %v7039 = vld [vmem:[%s1 + $0x218] sm:$0xf]
      %v7040 = vld [vmem:[%s1 + $0x21c] sm:$0xf]
      %v7041 = vld [vmem:[%s1 + $0x220] sm:$0xf]
      %v7042 = vld [vmem:[%s1 + $0x224] sm:$0xf]
      %v7043 = vld [vmem:[%s1 + $0x228] sm:$0xf]
      %v7044 = vld [vmem:[%s1 + $0x22c] sm:$0xf]
      %v7045 = vld [vmem:[%s1 + $0x230] sm:$0xf]
      %v7046 = vld [vmem:[%s1 + $0x234] sm:$0xf]
      %v7047 = vld [vmem:[%s1 + $0x238] sm:$0xf]
      %v7048 = vld [vmem:[%s1 + $0x23c] sm:$0xf]
      %v7065 = vunpack.c.l.b16 %v7033
      %v7066 = vunpack.c.l.b16 %v7034
      %v7067 = vunpack.c.l.b16 %v7035
      %v7068 = vunpack.c.l.b16 %v7036
      %v7069 = vunpack.c.l.b16 %v7037
      %v7070 = vunpack.c.l.b16 %v7038
      %v7071 = vunpack.c.l.b16 %v7039
      %v7072 = vunpack.c.l.b16 %v7040
      %v7073 = vunpack.c.l.b16 %v7041
      %v7074 = vunpack.c.l.b16 %v7042
      %v7075 = vunpack.c.l.b16 %v7043
      %v7076 = vunpack.c.l.b16 %v7044
      %v7077 = vunpack.c.l.b16 %v7045
      %v7078 = vunpack.c.l.b16 %v7046
      %v7079 = vunpack.c.l.b16 %v7047
      %v7080 = vunpack.c.l.b16 %v7048
      %v7081 = vpack.c.b16 %v7066, %v7065
      %v7082 = vpack.c.b16 %v7068, %v7067
      %v7083 = vpack.c.b16 %v7070, %v7069
      %v7084 = vpack.c.b16 %v7072, %v7071
      %v7085 = vpack.c.b16 %v7074, %v7073
      %v7086 = vpack.c.b16 %v7076, %v7075
      %v7087 = vpack.c.b16 %v7078, %v7077
      %v7088 = vpack.c.b16 %v7080, %v7079
      %7097 = vmatprep.subr.bf16.mxu0 0
      %7098 = vmatpush1.bf16.msra.mxu0 %v7081
      %7099 = vmatprep.subr.bf16.mxu0 0
      %7100 = vmatpush1.bf16.msra.mxu0 %v7082
      %7101 = vmatprep.subr.bf16.mxu0 0
      %7102 = vmatpush1.bf16.msra.mxu0 %v7083
      %7103 = vmatprep.subr.bf16.mxu0 0
      %7104 = vmatpush1.bf16.msra.mxu0 %v7084
      %7105 = vmatprep.subr.bf16.mxu0 0
      %7106 = vmatpush1.bf16.msra.mxu0 %v7085
      %7107 = vmatprep.subr.bf16.mxu0 0
      %7108 = vmatpush1.bf16.msra.mxu0 %v7086
      %7109 = vmatprep.subr.bf16.mxu0 0
      %7110 = vmatpush1.bf16.msra.mxu0 %v7087
      %7111 = vmatprep.subr.bf16.mxu0 0
      %7112 = vmatpush1.bf16.msra.mxu0 %v7088
      %7113 = vmatprep.subr.bf16.mxu0 0
      %7114 = vmatpush1.bf16.msra.mxu0 0
      %7115 = vmatprep.subr.bf16.mxu0 0
      %7116 = vmatpush1.bf16.msra.mxu0 0
      %7117 = vmatprep.subr.bf16.mxu0 0
      %7118 = vmatpush1.bf16.msra.mxu0 0
      %7119 = vmatprep.subr.bf16.mxu0 0
      %7120 = vmatpush1.bf16.msra.mxu0 0
      %7121 = vmatprep.subr.bf16.mxu0 0
      %7122 = vmatpush1.bf16.msra.mxu0 0
      %7123 = vmatprep.subr.bf16.mxu0 0
      %7124 = vmatpush1.bf16.msra.mxu0 0
      %7125 = vmatprep.subr.bf16.mxu0 0
      %7126 = vmatpush1.bf16.msra.mxu0 0
      %7127 = vmatprep.subr.bf16.mxu0 0
      %7128 = vmatpush1.bf16.msra.mxu0 0
      %7129 = vmatprep.mubr.bf16.mxu0 0
      %7130 = vmatmul.mubr.bf16.gmra.mrb[0].mxu0 %v7032
      %v7131 = vpop.f32.mrb[0].mxu0
      %v7132 = vadd.f32 0.0, %v7131
      %v7133 = vpop.f32.mrb[0].mxu0
      %v7134 = vpop.f32.mrb[0].mxu0
      %v7135 = vpop.f32.mrb[0].mxu0
      %7136 = vdwg.mxu0
      %v7137 = vadd.f32 %v7025, %v7132
      %v7138 = vadd.f32 %v7137, %v5120
      %v7139 = vxor.u32 %v7138, 2147483648
      %v7140 = vmul.f32 %v7139, 1.442695
      %v7141 = vpow.pop %v7140
      %v7142 = vadd.f32 %v7141, 1.0
      %v7143 = vrcp.pop %v7142
      %v7144 = vmul.f32 1.0, %v7143
      %v7145 = vmul.f32 %v7138, %v7144
      %7147 = vrot.lane.b32.xlu0 %v7145, 32
      %v7148 = vpop.permute.xlu0 %7147
      %7150 = vst.msk [vmem:[#allocation2 + $0x61] sm:$0xff] %vm1308, %v7148
      %7151 = vst.msk [vmem:[#allocation2 + $0x62] sm:$0xff] %vm1333, %v7145
      %7152 = vrot.lane.b32.xlu0 %v7145, 64
      %v7153 = vpop.permute.xlu0 %7152
      %7155 = vst.msk [vmem:[#allocation2 + $0x60] sm:$0xff] %vm1430, %v7153
      %v7156 = vld [vmem:[%s7030] ss:$2 sm:$0xff]
      %v7157 = vpack.c.bf16 %v7156, %v7156
      %v7158 = vld [vmem:[%s1 + $0x180] sm:$0xf]
      %v7159 = vld [vmem:[%s1 + $0x184] sm:$0xf]
      %v7160 = vld [vmem:[%s1 + $0x188] sm:$0xf]
      %v7161 = vld [vmem:[%s1 + $0x18c] sm:$0xf]
      %v7162 = vld [vmem:[%s1 + $0x190] sm:$0xf]
      %v7163 = vld [vmem:[%s1 + $0x194] sm:$0xf]
      %v7164 = vld [vmem:[%s1 + $0x198] sm:$0xf]
      %v7165 = vld [vmem:[%s1 + $0x19c] sm:$0xf]
      %v7166 = vld [vmem:[%s1 + $0x1a0] sm:$0xf]
      %v7167 = vld [vmem:[%s1 + $0x1a4] sm:$0xf]
      %v7168 = vld [vmem:[%s1 + $0x1a8] sm:$0xf]
      %v7169 = vld [vmem:[%s1 + $0x1ac] sm:$0xf]
      %v7170 = vld [vmem:[%s1 + $0x1b0] sm:$0xf]
      %v7171 = vld [vmem:[%s1 + $0x1b4] sm:$0xf]
      %v7172 = vld [vmem:[%s1 + $0x1b8] sm:$0xf]
      %v7173 = vld [vmem:[%s1 + $0x1bc] sm:$0xf]
      %s7174 = scalar_lea.vmem [#allocation3], 313
      %v7175 = vld [vmem:[%s7174] ss:$2 sm:$0xff]
      %v7176 = vpack.c.bf16 %v7175, %v7175
      %v7177 = vld [vmem:[%s1 + $0x1c0] sm:$0xf]
      %v7178 = vld [vmem:[%s1 + $0x1c4] sm:$0xf]
      %v7179 = vld [vmem:[%s1 + $0x1c8] sm:$0xf]
      %v7180 = vld [vmem:[%s1 + $0x1cc] sm:$0xf]
      %v7181 = vld [vmem:[%s1 + $0x1d0] sm:$0xf]
      %v7182 = vld [vmem:[%s1 + $0x1d4] sm:$0xf]
      %v7183 = vld [vmem:[%s1 + $0x1d8] sm:$0xf]
      %v7184 = vld [vmem:[%s1 + $0x1dc] sm:$0xf]
      %v7185 = vld [vmem:[%s1 + $0x1e0] sm:$0xf]
      %v7186 = vld [vmem:[%s1 + $0x1e4] sm:$0xf]
      %v7187 = vld [vmem:[%s1 + $0x1e8] sm:$0xf]
      %v7188 = vld [vmem:[%s1 + $0x1ec] sm:$0xf]
      %v7189 = vld [vmem:[%s1 + $0x1f0] sm:$0xf]
      %v7190 = vld [vmem:[%s1 + $0x1f4] sm:$0xf]
      %v7191 = vld [vmem:[%s1 + $0x1f8] sm:$0xf]
      %v7192 = vld [vmem:[%s1 + $0x1fc] sm:$0xf]
      %v7209 = vunpack.c.l.b16 %v7177
      %v7210 = vunpack.c.l.b16 %v7178
      %v7211 = vunpack.c.l.b16 %v7179
      %v7212 = vunpack.c.l.b16 %v7180
      %v7213 = vunpack.c.l.b16 %v7181
      %v7214 = vunpack.c.l.b16 %v7182
      %v7215 = vunpack.c.l.b16 %v7183
      %v7216 = vunpack.c.l.b16 %v7184
      %v7217 = vunpack.c.l.b16 %v7185
      %v7218 = vunpack.c.l.b16 %v7186
      %v7219 = vunpack.c.l.b16 %v7187
      %v7220 = vunpack.c.l.b16 %v7188
      %v7221 = vunpack.c.l.b16 %v7189
      %v7222 = vunpack.c.l.b16 %v7190
      %v7223 = vunpack.c.l.b16 %v7191
      %v7224 = vunpack.c.l.b16 %v7192
      %v7225 = vpack.c.b16 %v7210, %v7209
      %v7226 = vpack.c.b16 %v7212, %v7211
      %v7227 = vpack.c.b16 %v7214, %v7213
      %v7228 = vpack.c.b16 %v7216, %v7215
      %v7229 = vpack.c.b16 %v7218, %v7217
      %v7230 = vpack.c.b16 %v7220, %v7219
      %v7231 = vpack.c.b16 %v7222, %v7221
      %v7232 = vpack.c.b16 %v7224, %v7223
      %7241 = vmatprep.subr.bf16.mxu0 0
      %7242 = vmatpush1.bf16.msra.mxu0 %v7225
      %7243 = vmatprep.subr.bf16.mxu0 0
      %7244 = vmatpush1.bf16.msra.mxu0 %v7226
      %7245 = vmatprep.subr.bf16.mxu0 0
      %7246 = vmatpush1.bf16.msra.mxu0 %v7227
      %7247 = vmatprep.subr.bf16.mxu0 0
      %7248 = vmatpush1.bf16.msra.mxu0 %v7228
      %7249 = vmatprep.subr.bf16.mxu0 0
      %7250 = vmatpush1.bf16.msra.mxu0 %v7229
      %7251 = vmatprep.subr.bf16.mxu0 0
      %7252 = vmatpush1.bf16.msra.mxu0 %v7230
      %7253 = vmatprep.subr.bf16.mxu0 0
      %7254 = vmatpush1.bf16.msra.mxu0 %v7231
      %7255 = vmatprep.subr.bf16.mxu0 0
      %7256 = vmatpush1.bf16.msra.mxu0 %v7232
      %7257 = vmatprep.subr.bf16.mxu0 0
      %7258 = vmatpush1.bf16.msra.mxu0 0
      %7259 = vmatprep.subr.bf16.mxu0 0
      %7260 = vmatpush1.bf16.msra.mxu0 0
      %7261 = vmatprep.subr.bf16.mxu0 0
      %7262 = vmatpush1.bf16.msra.mxu0 0
      %7263 = vmatprep.subr.bf16.mxu0 0
      %7264 = vmatpush1.bf16.msra.mxu0 0
      %7265 = vmatprep.subr.bf16.mxu0 0
      %7266 = vmatpush1.bf16.msra.mxu0 0
      %7267 = vmatprep.subr.bf16.mxu0 0
      %7268 = vmatpush1.bf16.msra.mxu0 0
      %7269 = vmatprep.subr.bf16.mxu0 0
      %7270 = vmatpush1.bf16.msra.mxu0 0
      %7271 = vmatprep.subr.bf16.mxu0 0
      %7272 = vmatpush1.bf16.msra.mxu0 0
      %7273 = vmatprep.mubr.bf16.mxu0 0
      %7274 = vmatmul.mubr.bf16.gmra.mrb[0].mxu0 %v7176
      %v7275 = vpop.f32.mrb[0].mxu0
      %v7276 = vadd.f32 0.0, %v7275
      %v7277 = vpop.f32.mrb[0].mxu0
      %v7278 = vpop.f32.mrb[0].mxu0
      %v7279 = vpop.f32.mrb[0].mxu0
      %7280 = vdwg.mxu0
      %v7297 = vunpack.c.l.b16 %v7158
      %v7298 = vunpack.c.l.b16 %v7159
      %v7299 = vunpack.c.l.b16 %v7160
      %v7300 = vunpack.c.l.b16 %v7161
      %v7301 = vunpack.c.l.b16 %v7162
      %v7302 = vunpack.c.l.b16 %v7163
      %v7303 = vunpack.c.l.b16 %v7164
      %v7304 = vunpack.c.l.b16 %v7165
      %v7305 = vunpack.c.l.b16 %v7166
      %v7306 = vunpack.c.l.b16 %v7167
      %v7307 = vunpack.c.l.b16 %v7168
      %v7308 = vunpack.c.l.b16 %v7169
      %v7309 = vunpack.c.l.b16 %v7170
      %v7310 = vunpack.c.l.b16 %v7171
      %v7311 = vunpack.c.l.b16 %v7172
      %v7312 = vunpack.c.l.b16 %v7173
      %v7313 = vpack.c.b16 %v7298, %v7297
      %v7314 = vpack.c.b16 %v7300, %v7299
      %v7315 = vpack.c.b16 %v7302, %v7301
      %v7316 = vpack.c.b16 %v7304, %v7303
      %v7317 = vpack.c.b16 %v7306, %v7305
      %v7318 = vpack.c.b16 %v7308, %v7307
      %v7319 = vpack.c.b16 %v7310, %v7309
      %v7320 = vpack.c.b16 %v7312, %v7311
      %7329 = vmatprep.subr.bf16.mxu0 0
      %7330 = vmatpush1.bf16.msra.mxu0 %v7313
      %7331 = vmatprep.subr.bf16.mxu0 0
      %7332 = vmatpush1.bf16.msra.mxu0 %v7314
      %7333 = vmatprep.subr.bf16.mxu0 0
      %7334 = vmatpush1.bf16.msra.mxu0 %v7315
      %7335 = vmatprep.subr.bf16.mxu0 0
      %7336 = vmatpush1.bf16.msra.mxu0 %v7316
      %7337 = vmatprep.subr.bf16.mxu0 0
      %7338 = vmatpush1.bf16.msra.mxu0 %v7317
      %7339 = vmatprep.subr.bf16.mxu0 0
      %7340 = vmatpush1.bf16.msra.mxu0 %v7318
      %7341 = vmatprep.subr.bf16.mxu0 0
      %7342 = vmatpush1.bf16.msra.mxu0 %v7319
      %7343 = vmatprep.subr.bf16.mxu0 0
      %7344 = vmatpush1.bf16.msra.mxu0 %v7320
      %7345 = vmatprep.subr.bf16.mxu0 0
      %7346 = vmatpush1.bf16.msra.mxu0 0
      %7347 = vmatprep.subr.bf16.mxu0 0
      %7348 = vmatpush1.bf16.msra.mxu0 0
      %7349 = vmatprep.subr.bf16.mxu0 0
      %7350 = vmatpush1.bf16.msra.mxu0 0
      %7351 = vmatprep.subr.bf16.mxu0 0
      %7352 = vmatpush1.bf16.msra.mxu0 0
      %7353 = vmatprep.subr.bf16.mxu0 0
      %7354 = vmatpush1.bf16.msra.mxu0 0
      %7355 = vmatprep.subr.bf16.mxu0 0
      %7356 = vmatpush1.bf16.msra.mxu0 0
      %7357 = vmatprep.subr.bf16.mxu0 0
      %7358 = vmatpush1.bf16.msra.mxu0 0
      %7359 = vmatprep.subr.bf16.mxu0 0
      %7360 = vmatpush1.bf16.msra.mxu0 0
      %7361 = vmatprep.mubr.bf16.mxu0 0
      %7362 = vmatmul.mubr.bf16.gmra.mrb[0].mxu0 %v7157
      %v7363 = vpop.f32.mrb[0].mxu0
      %v7364 = vadd.f32 %v7276, %v7363
      %v7365 = vpop.f32.mrb[0].mxu0
      %v7366 = vpop.f32.mrb[0].mxu0
      %v7367 = vpop.f32.mrb[0].mxu0
      %7368 = vdwg.mxu0
      %s7369 = scalar_lea.vmem [#allocation3], 337
      %v7370 = vld [vmem:[%s7369] ss:$2 sm:$0xff]
      %v7371 = vpack.c.bf16 %v7370, %v7370
      %v7372 = vld [vmem:[%s1 + $0x200] sm:$0xf]
      %v7373 = vld [vmem:[%s1 + $0x204] sm:$0xf]
      %v7374 = vld [vmem:[%s1 + $0x208] sm:$0xf]
      %v7375 = vld [vmem:[%s1 + $0x20c] sm:$0xf]
      %v7376 = vld [vmem:[%s1 + $0x210] sm:$0xf]
      %v7377 = vld [vmem:[%s1 + $0x214] sm:$0xf]
      %v7378 = vld [vmem:[%s1 + $0x218] sm:$0xf]
      %v7379 = vld [vmem:[%s1 + $0x21c] sm:$0xf]
      %v7380 = vld [vmem:[%s1 + $0x220] sm:$0xf]
      %v7381 = vld [vmem:[%s1 + $0x224] sm:$0xf]
      %v7382 = vld [vmem:[%s1 + $0x228] sm:$0xf]
      %v7383 = vld [vmem:[%s1 + $0x22c] sm:$0xf]
      %v7384 = vld [vmem:[%s1 + $0x230] sm:$0xf]
      %v7385 = vld [vmem:[%s1 + $0x234] sm:$0xf]
      %v7386 = vld [vmem:[%s1 + $0x238] sm:$0xf]
      %v7387 = vld [vmem:[%s1 + $0x23c] sm:$0xf]
      %v7404 = vunpack.c.l.b16 %v7372
      %v7405 = vunpack.c.l.b16 %v7373
      %v7406 = vunpack.c.l.b16 %v7374
      %v7407 = vunpack.c.l.b16 %v7375
      %v7408 = vunpack.c.l.b16 %v7376
      %v7409 = vunpack.c.l.b16 %v7377
      %v7410 = vunpack.c.l.b16 %v7378
      %v7411 = vunpack.c.l.b16 %v7379
      %v7412 = vunpack.c.l.b16 %v7380
      %v7413 = vunpack.c.l.b16 %v7381
      %v7414 = vunpack.c.l.b16 %v7382
      %v7415 = vunpack.c.l.b16 %v7383
      %v7416 = vunpack.c.l.b16 %v7384
      %v7417 = vunpack.c.l.b16 %v7385
      %v7418 = vunpack.c.l.b16 %v7386
      %v7419 = vunpack.c.l.b16 %v7387
      %v7420 = vpack.c.b16 %v7405, %v7404
      %v7421 = vpack.c.b16 %v7407, %v7406
      %v7422 = vpack.c.b16 %v7409, %v7408
      %v7423 = vpack.c.b16 %v7411, %v7410
      %v7424 = vpack.c.b16 %v7413, %v7412
      %v7425 = vpack.c.b16 %v7415, %v7414
      %v7426 = vpack.c.b16 %v7417, %v7416
      %v7427 = vpack.c.b16 %v7419, %v7418
      %7436 = vmatprep.subr.bf16.mxu0 0
      %7437 = vmatpush1.bf16.msra.mxu0 %v7420
      %7438 = vmatprep.subr.bf16.mxu0 0
      %7439 = vmatpush1.bf16.msra.mxu0 %v7421
      %7440 = vmatprep.subr.bf16.mxu0 0
      %7441 = vmatpush1.bf16.msra.mxu0 %v7422
      %7442 = vmatprep.subr.bf16.mxu0 0
      %7443 = vmatpush1.bf16.msra.mxu0 %v7423
      %7444 = vmatprep.subr.bf16.mxu0 0
      %7445 = vmatpush1.bf16.msra.mxu0 %v7424
      %7446 = vmatprep.subr.bf16.mxu0 0
      %7447 = vmatpush1.bf16.msra.mxu0 %v7425
      %7448 = vmatprep.subr.bf16.mxu0 0
      %7449 = vmatpush1.bf16.msra.mxu0 %v7426
      %7450 = vmatprep.subr.bf16.mxu0 0
      %7451 = vmatpush1.bf16.msra.mxu0 %v7427
      %7452 = vmatprep.subr.bf16.mxu0 0
      %7453 = vmatpush1.bf16.msra.mxu0 0
      %7454 = vmatprep.subr.bf16.mxu0 0
      %7455 = vmatpush1.bf16.msra.mxu0 0
      %7456 = vmatprep.subr.bf16.mxu0 0
      %7457 = vmatpush1.bf16.msra.mxu0 0
      %7458 = vmatprep.subr.bf16.mxu0 0
      %7459 = vmatpush1.bf16.msra.mxu0 0
      %7460 = vmatprep.subr.bf16.mxu0 0
      %7461 = vmatpush1.bf16.msra.mxu0 0
      %7462 = vmatprep.subr.bf16.mxu0 0
      %7463 = vmatpush1.bf16.msra.mxu0 0
      %7464 = vmatprep.subr.bf16.mxu0 0
      %7465 = vmatpush1.bf16.msra.mxu0 0
      %7466 = vmatprep.subr.bf16.mxu0 0
      %7467 = vmatpush1.bf16.msra.mxu0 0
      %7468 = vmatprep.mubr.bf16.mxu0 0
      %7469 = vmatmul.mubr.bf16.gmra.mrb[0].mxu0 %v7371
      %v7470 = vpop.f32.mrb[0].mxu0
      %v7471 = vadd.f32 0.0, %v7470
      %v7472 = vpop.f32.mrb[0].mxu0
      %v7473 = vpop.f32.mrb[0].mxu0
      %v7474 = vpop.f32.mrb[0].mxu0
      %7475 = vdwg.mxu0
      %v7476 = vadd.f32 %v7364, %v7471
      %v7477 = vadd.f32 %v7476, %v5120
      %v7478 = vxor.u32 %v7477, 2147483648
      %v7479 = vmul.f32 %v7478, 1.442695
      %v7480 = vpow.pop %v7479
      %v7481 = vadd.f32 %v7480, 1.0
      %v7482 = vrcp.pop %v7481
      %v7483 = vmul.f32 1.0, %v7482
      %v7484 = vmul.f32 %v7477, %v7483
      %7486 = vrot.lane.b32.xlu0 %v7484, 32
      %v7487 = vpop.permute.xlu0 %7486
      %7489 = vst.msk [vmem:[#allocation2 + $0x71] sm:$0xff] %vm1308, %v7487
      %7490 = vst.msk [vmem:[#allocation2 + $0x72] sm:$0xff] %vm1333, %v7484
      %7491 = vrot.lane.b32.xlu0 %v7484, 64
      %v7492 = vpop.permute.xlu0 %7491
      %7494 = vst.msk [vmem:[#allocation2 + $0x70] sm:$0xff] %vm1430, %v7492
      %v7495 = vld [vmem:[%s7369] ss:$2 sm:$0xff]
      %v7496 = vpack.c.bf16 %v7495, %v7495
      %v7497 = vld [vmem:[%s1 + $0x180] sm:$0xf]
      %v7498 = vld [vmem:[%s1 + $0x184] sm:$0xf]
      %v7499 = vld [vmem:[%s1 + $0x188] sm:$0xf]
      %v7500 = vld [vmem:[%s1 + $0x18c] sm:$0xf]
      %v7501 = vld [vmem:[%s1 + $0x190] sm:$0xf]
      %v7502 = vld [vmem:[%s1 + $0x194] sm:$0xf]
      %v7503 = vld [vmem:[%s1 + $0x198] sm:$0xf]
      %v7504 = vld [vmem:[%s1 + $0x19c] sm:$0xf]
      %v7505 = vld [vmem:[%s1 + $0x1a0] sm:$0xf]
      %v7506 = vld [vmem:[%s1 + $0x1a4] sm:$0xf]
      %v7507 = vld [vmem:[%s1 + $0x1a8] sm:$0xf]
      %v7508 = vld [vmem:[%s1 + $0x1ac] sm:$0xf]
      %v7509 = vld [vmem:[%s1 + $0x1b0] sm:$0xf]
      %v7510 = vld [vmem:[%s1 + $0x1b4] sm:$0xf]
      %v7511 = vld [vmem:[%s1 + $0x1b8] sm:$0xf]
      %v7512 = vld [vmem:[%s1 + $0x1bc] sm:$0xf]
      %s7513 = scalar_lea.vmem [#allocation3], 361
      %v7514 = vld [vmem:[%s7513] ss:$2 sm:$0xff]
      %v7515 = vpack.c.bf16 %v7514, %v7514
      %v7516 = vld [vmem:[%s1 + $0x1c0] sm:$0xf]
      %v7517 = vld [vmem:[%s1 + $0x1c4] sm:$0xf]
      %v7518 = vld [vmem:[%s1 + $0x1c8] sm:$0xf]
      %v7519 = vld [vmem:[%s1 + $0x1cc] sm:$0xf]
      %v7520 = vld [vmem:[%s1 + $0x1d0] sm:$0xf]
      %v7521 = vld [vmem:[%s1 + $0x1d4] sm:$0xf]
      %v7522 = vld [vmem:[%s1 + $0x1d8] sm:$0xf]
      %v7523 = vld [vmem:[%s1 + $0x1dc] sm:$0xf]
      %v7524 = vld [vmem:[%s1 + $0x1e0] sm:$0xf]
      %v7525 = vld [vmem:[%s1 + $0x1e4] sm:$0xf]
      %v7526 = vld [vmem:[%s1 + $0x1e8] sm:$0xf]
      %v7527 = vld [vmem:[%s1 + $0x1ec] sm:$0xf]
      %v7528 = vld [vmem:[%s1 + $0x1f0] sm:$0xf]
      %v7529 = vld [vmem:[%s1 + $0x1f4] sm:$0xf]
      %v7530 = vld [vmem:[%s1 + $0x1f8] sm:$0xf]
      %v7531 = vld [vmem:[%s1 + $0x1fc] sm:$0xf]
      %v7548 = vunpack.c.l.b16 %v7516
      %v7549 = vunpack.c.l.b16 %v7517
      %v7550 = vunpack.c.l.b16 %v7518
      %v7551 = vunpack.c.l.b16 %v7519
      %v7552 = vunpack.c.l.b16 %v7520
      %v7553 = vunpack.c.l.b16 %v7521
      %v7554 = vunpack.c.l.b16 %v7522
      %v7555 = vunpack.c.l.b16 %v7523
      %v7556 = vunpack.c.l.b16 %v7524
      %v7557 = vunpack.c.l.b16 %v7525
      %v7558 = vunpack.c.l.b16 %v7526
      %v7559 = vunpack.c.l.b16 %v7527
      %v7560 = vunpack.c.l.b16 %v7528
      %v7561 = vunpack.c.l.b16 %v7529
      %v7562 = vunpack.c.l.b16 %v7530
      %v7563 = vunpack.c.l.b16 %v7531
      %v7564 = vpack.c.b16 %v7549, %v7548
      %v7565 = vpack.c.b16 %v7551, %v7550
      %v7566 = vpack.c.b16 %v7553, %v7552
      %v7567 = vpack.c.b16 %v7555, %v7554
      %v7568 = vpack.c.b16 %v7557, %v7556
      %v7569 = vpack.c.b16 %v7559, %v7558
      %v7570 = vpack.c.b16 %v7561, %v7560
      %v7571 = vpack.c.b16 %v7563, %v7562
      %7580 = vmatprep.subr.bf16.mxu0 0
      %7581 = vmatpush1.bf16.msra.mxu0 %v7564
      %7582 = vmatprep.subr.bf16.mxu0 0
      %7583 = vmatpush1.bf16.msra.mxu0 %v7565
      %7584 = vmatprep.subr.bf16.mxu0 0
      %7585 = vmatpush1.bf16.msra.mxu0 %v7566
      %7586 = vmatprep.subr.bf16.mxu0 0
      %7587 = vmatpush1.bf16.msra.mxu0 %v7567
      %7588 = vmatprep.subr.bf16.mxu0 0
      %7589 = vmatpush1.bf16.msra.mxu0 %v7568
      %7590 = vmatprep.subr.bf16.mxu0 0
      %7591 = vmatpush1.bf16.msra.mxu0 %v7569
      %7592 = vmatprep.subr.bf16.mxu0 0
      %7593 = vmatpush1.bf16.msra.mxu0 %v7570
      %7594 = vmatprep.subr.bf16.mxu0 0
      %7595 = vmatpush1.bf16.msra.mxu0 %v7571
      %7596 = vmatprep.subr.bf16.mxu0 0
      %7597 = vmatpush1.bf16.msra.mxu0 0
      %7598 = vmatprep.subr.bf16.mxu0 0
      %7599 = vmatpush1.bf16.msra.mxu0 0
      %7600 = vmatprep.subr.bf16.mxu0 0
      %7601 = vmatpush1.bf16.msra.mxu0 0
      %7602 = vmatprep.subr.bf16.mxu0 0
      %7603 = vmatpush1.bf16.msra.mxu0 0
      %7604 = vmatprep.subr.bf16.mxu0 0
      %7605 = vmatpush1.bf16.msra.mxu0 0
      %7606 = vmatprep.subr.bf16.mxu0 0
      %7607 = vmatpush1.bf16.msra.mxu0 0
      %7608 = vmatprep.subr.bf16.mxu0 0
      %7609 = vmatpush1.bf16.msra.mxu0 0
      %7610 = vmatprep.subr.bf16.mxu0 0
      %7611 = vmatpush1.bf16.msra.mxu0 0
      %7612 = vmatprep.mubr.bf16.mxu0 0
      %7613 = vmatmul.mubr.bf16.gmra.mrb[0].mxu0 %v7515
      %v7614 = vpop.f32.mrb[0].mxu0
      %v7615 = vadd.f32 0.0, %v7614
      %v7616 = vpop.f32.mrb[0].mxu0
      %v7617 = vpop.f32.mrb[0].mxu0
      %v7618 = vpop.f32.mrb[0].mxu0
      %7619 = vdwg.mxu0
      %v7636 = vunpack.c.l.b16 %v7497
      %v7637 = vunpack.c.l.b16 %v7498
      %v7638 = vunpack.c.l.b16 %v7499
      %v7639 = vunpack.c.l.b16 %v7500
      %v7640 = vunpack.c.l.b16 %v7501
      %v7641 = vunpack.c.l.b16 %v7502
      %v7642 = vunpack.c.l.b16 %v7503
      %v7643 = vunpack.c.l.b16 %v7504
      %v7644 = vunpack.c.l.b16 %v7505
      %v7645 = vunpack.c.l.b16 %v7506
      %v7646 = vunpack.c.l.b16 %v7507
      %v7647 = vunpack.c.l.b16 %v7508
      %v7648 = vunpack.c.l.b16 %v7509
      %v7649 = vunpack.c.l.b16 %v7510
      %v7650 = vunpack.c.l.b16 %v7511
      %v7651 = vunpack.c.l.b16 %v7512
      %v7652 = vpack.c.b16 %v7637, %v7636
      %v7653 = vpack.c.b16 %v7639, %v7638
      %v7654 = vpack.c.b16 %v7641, %v7640
      %v7655 = vpack.c.b16 %v7643, %v7642
      %v7656 = vpack.c.b16 %v7645, %v7644
      %v7657 = vpack.c.b16 %v7647, %v7646
      %v7658 = vpack.c.b16 %v7649, %v7648
      %v7659 = vpack.c.b16 %v7651, %v7650
      %7668 = vmatprep.subr.bf16.mxu0 0
      %7669 = vmatpush1.bf16.msra.mxu0 %v7652
      %7670 = vmatprep.subr.bf16.mxu0 0
      %7671 = vmatpush1.bf16.msra.mxu0 %v7653
      %7672 = vmatprep.subr.bf16.mxu0 0
      %7673 = vmatpush1.bf16.msra.mxu0 %v7654
      %7674 = vmatprep.subr.bf16.mxu0 0
      %7675 = vmatpush1.bf16.msra.mxu0 %v7655
      %7676 = vmatprep.subr.bf16.mxu0 0
      %7677 = vmatpush1.bf16.msra.mxu0 %v7656
      %7678 = vmatprep.subr.bf16.mxu0 0
      %7679 = vmatpush1.bf16.msra.mxu0 %v7657
      %7680 = vmatprep.subr.bf16.mxu0 0
      %7681 = vmatpush1.bf16.msra.mxu0 %v7658
      %7682 = vmatprep.subr.bf16.mxu0 0
      %7683 = vmatpush1.bf16.msra.mxu0 %v7659
      %7684 = vmatprep.subr.bf16.mxu0 0
      %7685 = vmatpush1.bf16.msra.mxu0 0
      %7686 = vmatprep.subr.bf16.mxu0 0
      %7687 = vmatpush1.bf16.msra.mxu0 0
      %7688 = vmatprep.subr.bf16.mxu0 0
      %7689 = vmatpush1.bf16.msra.mxu0 0
      %7690 = vmatprep.subr.bf16.mxu0 0
      %7691 = vmatpush1.bf16.msra.mxu0 0
      %7692 = vmatprep.subr.bf16.mxu0 0
      %7693 = vmatpush1.bf16.msra.mxu0 0
      %7694 = vmatprep.subr.bf16.mxu0 0
      %7695 = vmatpush1.bf16.msra.mxu0 0
      %7696 = vmatprep.subr.bf16.mxu0 0
      %7697 = vmatpush1.bf16.msra.mxu0 0
      %7698 = vmatprep.subr.bf16.mxu0 0
      %7699 = vmatpush1.bf16.msra.mxu0 0
      %7700 = vmatprep.mubr.bf16.mxu0 0
      %7701 = vmatmul.mubr.bf16.gmra.mrb[0].mxu0 %v7496
      %v7702 = vpop.f32.mrb[0].mxu0
      %v7703 = vadd.f32 %v7615, %v7702
      %v7704 = vpop.f32.mrb[0].mxu0
      %v7705 = vpop.f32.mrb[0].mxu0
      %v7706 = vpop.f32.mrb[0].mxu0
      %7707 = vdwg.mxu0
      %s7708 = scalar_lea.vmem [#allocation3], 385
      %v7709 = vld [vmem:[%s7708] ss:$2 sm:$0xff]
      %v7710 = vpack.c.bf16 %v7709, %v7709
      %v7711 = vld [vmem:[%s1 + $0x200] sm:$0xf]
      %v7712 = vld [vmem:[%s1 + $0x204] sm:$0xf]
      %v7713 = vld [vmem:[%s1 + $0x208] sm:$0xf]
      %v7714 = vld [vmem:[%s1 + $0x20c] sm:$0xf]
      %v7715 = vld [vmem:[%s1 + $0x210] sm:$0xf]
      %v7716 = vld [vmem:[%s1 + $0x214] sm:$0xf]
      %v7717 = vld [vmem:[%s1 + $0x218] sm:$0xf]
      %v7718 = vld [vmem:[%s1 + $0x21c] sm:$0xf]
      %v7719 = vld [vmem:[%s1 + $0x220] sm:$0xf]
      %v7720 = vld [vmem:[%s1 + $0x224] sm:$0xf]
      %v7721 = vld [vmem:[%s1 + $0x228] sm:$0xf]
      %v7722 = vld [vmem:[%s1 + $0x22c] sm:$0xf]
      %v7723 = vld [vmem:[%s1 + $0x230] sm:$0xf]
      %v7724 = vld [vmem:[%s1 + $0x234] sm:$0xf]
      %v7725 = vld [vmem:[%s1 + $0x238] sm:$0xf]
      %v7726 = vld [vmem:[%s1 + $0x23c] sm:$0xf]
      %v7743 = vunpack.c.l.b16 %v7711
      %v7744 = vunpack.c.l.b16 %v7712
      %v7745 = vunpack.c.l.b16 %v7713
      %v7746 = vunpack.c.l.b16 %v7714
      %v7747 = vunpack.c.l.b16 %v7715
      %v7748 = vunpack.c.l.b16 %v7716
      %v7749 = vunpack.c.l.b16 %v7717
      %v7750 = vunpack.c.l.b16 %v7718
      %v7751 = vunpack.c.l.b16 %v7719
      %v7752 = vunpack.c.l.b16 %v7720
      %v7753 = vunpack.c.l.b16 %v7721
      %v7754 = vunpack.c.l.b16 %v7722
      %v7755 = vunpack.c.l.b16 %v7723
      %v7756 = vunpack.c.l.b16 %v7724
      %v7757 = vunpack.c.l.b16 %v7725
      %v7758 = vunpack.c.l.b16 %v7726
      %v7759 = vpack.c.b16 %v7744, %v7743
      %v7760 = vpack.c.b16 %v7746, %v7745
      %v7761 = vpack.c.b16 %v7748, %v7747
      %v7762 = vpack.c.b16 %v7750, %v7749
      %v7763 = vpack.c.b16 %v7752, %v7751
      %v7764 = vpack.c.b16 %v7754, %v7753
      %v7765 = vpack.c.b16 %v7756, %v7755
      %v7766 = vpack.c.b16 %v7758, %v7757
      %7775 = vmatprep.subr.bf16.mxu0 0
      %7776 = vmatpush1.bf16.msra.mxu0 %v7759
      %7777 = vmatprep.subr.bf16.mxu0 0
      %7778 = vmatpush1.bf16.msra.mxu0 %v7760
      %7779 = vmatprep.subr.bf16.mxu0 0
      %7780 = vmatpush1.bf16.msra.mxu0 %v7761
      %7781 = vmatprep.subr.bf16.mxu0 0
      %7782 = vmatpush1.bf16.msra.mxu0 %v7762
      %7783 = vmatprep.subr.bf16.mxu0 0
      %7784 = vmatpush1.bf16.msra.mxu0 %v7763
      %7785 = vmatprep.subr.bf16.mxu0 0
      %7786 = vmatpush1.bf16.msra.mxu0 %v7764
      %7787 = vmatprep.subr.bf16.mxu0 0
      %7788 = vmatpush1.bf16.msra.mxu0 %v7765
      %7789 = vmatprep.subr.bf16.mxu0 0
      %7790 = vmatpush1.bf16.msra.mxu0 %v7766
      %7791 = vmatprep.subr.bf16.mxu0 0
      %7792 = vmatpush1.bf16.msra.mxu0 0
      %7793 = vmatprep.subr.bf16.mxu0 0
      %7794 = vmatpush1.bf16.msra.mxu0 0
      %7795 = vmatprep.subr.bf16.mxu0 0
      %7796 = vmatpush1.bf16.msra.mxu0 0
      %7797 = vmatprep.subr.bf16.mxu0 0
      %7798 = vmatpush1.bf16.msra.mxu0 0
      %7799 = vmatprep.subr.bf16.mxu0 0
      %7800 = vmatpush1.bf16.msra.mxu0 0
      %7801 = vmatprep.subr.bf16.mxu0 0
      %7802 = vmatpush1.bf16.msra.mxu0 0
      %7803 = vmatprep.subr.bf16.mxu0 0
      %7804 = vmatpush1.bf16.msra.mxu0 0
      %7805 = vmatprep.subr.bf16.mxu0 0
      %7806 = vmatpush1.bf16.msra.mxu0 0
      %7807 = vmatprep.mubr.bf16.mxu0 0
      %7808 = vmatmul.mubr.bf16.gmra.mrb[0].mxu0 %v7710
      %v7809 = vpop.f32.mrb[0].mxu0
      %v7810 = vadd.f32 0.0, %v7809
      %v7811 = vpop.f32.mrb[0].mxu0
      %v7812 = vpop.f32.mrb[0].mxu0
      %v7813 = vpop.f32.mrb[0].mxu0
      %7814 = vdwg.mxu0
      %v7815 = vadd.f32 %v7703, %v7810
      %v7816 = vadd.f32 %v7815, %v5120
      %v7817 = vxor.u32 %v7816, 2147483648
      %v7818 = vmul.f32 %v7817, 1.442695
      %v7819 = vpow.pop %v7818
      %v7820 = vadd.f32 %v7819, 1.0
      %v7821 = vrcp.pop %v7820
      %v7822 = vmul.f32 1.0, %v7821
      %v7823 = vmul.f32 %v7816, %v7822
      %7825 = vrot.lane.b32.xlu0 %v7823, 32
      %v7826 = vpop.permute.xlu0 %7825
      %7828 = vst.msk [vmem:[#allocation2 + $0x81] sm:$0xff] %vm1308, %v7826
      %7829 = vst.msk [vmem:[#allocation2 + $0x82] sm:$0xff] %vm1333, %v7823
      %7830 = vrot.lane.b32.xlu0 %v7823, 64
      %v7831 = vpop.permute.xlu0 %7830
      %7833 = vst.msk [vmem:[#allocation2 + $0x80] sm:$0xff] %vm1430, %v7831
      %7834 = vst [vmem:[#allocation3] sm:$0xff] 0.0
      %7835 = vst [vmem:[#allocation3 + $0x8] sm:$0xff] 0.0
      %7836 = vst [vmem:[#allocation3 + $0x10] sm:$0xff] 0.0
      %7837 = vst [vmem:[#allocation3 + $0x18] sm:$0xff] 0.0
      %7838 = vst [vmem:[#allocation3 + $0x20] sm:$0xff] 0.0
      %7839 = vst [vmem:[#allocation3 + $0x28] sm:$0xff] 0.0
      %7840 = vst [vmem:[#allocation3 + $0x30] sm:$0xff] 0.0
      %7841 = vst [vmem:[#allocation3 + $0x38] sm:$0xff] 0.0
      %7842 = vst [vmem:[#allocation3 + $0x40] sm:$0xff] 0.0
      %7843 = vst [vmem:[#allocation3 + $0x48] sm:$0xff] 0.0
      %7844 = vst [vmem:[#allocation3 + $0x50] sm:$0xff] 0.0
      %7845 = vst [vmem:[#allocation3 + $0x58] sm:$0xff] 0.0
      %7846 = vst [vmem:[#allocation3 + $0x60] sm:$0xff] 0.0
      %7847 = vst [vmem:[#allocation3 + $0x68] sm:$0xff] 0.0
      %7848 = vst [vmem:[#allocation3 + $0x70] sm:$0xff] 0.0
      %7849 = vst [vmem:[#allocation3 + $0x78] sm:$0xff] 0.0
      %7850 = vst [vmem:[#allocation3 + $0x80] sm:$0xff] 0.0
      %7851 = vst [vmem:[#allocation3 + $0x88] sm:$0xff] 0.0
      %7852 = vst [vmem:[#allocation3 + $0x90] sm:$0xff] 0.0
      %7853 = vst [vmem:[#allocation3 + $0x98] sm:$0xff] 0.0
      %v7854 = vld [vmem:[%s2 + $0x3] sm:$0x1]
      %v7855 = vlaneseq
      %v7856 = vshrl.u32 %v7855, 7
      %v7857 = vsub.s32 0, %v7856
      %v7858 = vrot.slane %v7854, %v7857
      %v7859 = vld [vmem:[#allocation2] sm:$0xff]
      %v7860 = vld [vmem:[#allocation2 + $0x8] sm:$0xff]
      %v7861 = vld [vmem:[#allocation2 + $0x10] sm:$0xff]
      %v7862 = vld [vmem:[#allocation2 + $0x18] sm:$0xff]
      %v7863 = vld [vmem:[#allocation2 + $0x20] sm:$0xff]
      %v7864 = vld [vmem:[#allocation2 + $0x28] sm:$0xff]
      %v7865 = vld [vmem:[#allocation2 + $0x30] sm:$0xff]
      %v7866 = vld [vmem:[#allocation2 + $0x38] sm:$0xff]
      %v7867 = vld [vmem:[#allocation2 + $0x40] sm:$0xff]
      %v7868 = vld [vmem:[#allocation2 + $0x48] sm:$0xff]
      %v7869 = vld [vmem:[#allocation2 + $0x50] sm:$0xff]
      %v7870 = vld [vmem:[#allocation2 + $0x58] sm:$0xff]
      %v7871 = vld [vmem:[#allocation2 + $0x60] sm:$0xff]
      %v7872 = vld [vmem:[#allocation2 + $0x68] sm:$0xff]
      %v7873 = vld [vmem:[#allocation2 + $0x70] sm:$0xff]
      %v7874 = vld [vmem:[#allocation2 + $0x78] sm:$0xff]
      %v7875 = vpack.c.bf16 %v7860, %v7859
      %v7876 = vpack.c.bf16 %v7862, %v7861
      %v7877 = vpack.c.bf16 %v7864, %v7863
      %v7878 = vpack.c.bf16 %v7866, %v7865
      %v7879 = vpack.c.bf16 %v7868, %v7867
      %v7880 = vpack.c.bf16 %v7870, %v7869
      %v7881 = vpack.c.bf16 %v7872, %v7871
      %v7882 = vpack.c.bf16 %v7874, %v7873
      %v7883 = vld [vmem:[%s1 + $0x240] sm:$0xf]
      %v7884 = vld [vmem:[%s1 + $0x244] sm:$0xf]
      %v7885 = vld [vmem:[%s1 + $0x248] sm:$0xf]
      %v7886 = vld [vmem:[%s1 + $0x24c] sm:$0xf]
      %v7887 = vld [vmem:[%s1 + $0x250] sm:$0xf]
      %v7888 = vld [vmem:[%s1 + $0x254] sm:$0xf]
      %v7889 = vld [vmem:[%s1 + $0x258] sm:$0xf]
      %v7890 = vld [vmem:[%s1 + $0x25c] sm:$0xf]
      %v7891 = vld [vmem:[%s1 + $0x260] sm:$0xf]
      %v7892 = vld [vmem:[%s1 + $0x264] sm:$0xf]
      %v7893 = vld [vmem:[%s1 + $0x268] sm:$0xf]
      %v7894 = vld [vmem:[%s1 + $0x26c] sm:$0xf]
      %v7895 = vld [vmem:[%s1 + $0x270] sm:$0xf]
      %v7896 = vld [vmem:[%s1 + $0x274] sm:$0xf]
      %v7897 = vld [vmem:[%s1 + $0x278] sm:$0xf]
      %v7898 = vld [vmem:[%s1 + $0x27c] sm:$0xf]
      %v7899 = vld [vmem:[#allocation2 + $0x80] sm:$0xff]
      %v7900 = vld [vmem:[#allocation2 + $0x88] sm:$0xff]
      %v7901 = vpack.c.bf16 %v7900, %v7899
      %v7902 = vld [vmem:[%s1 + $0x280] sm:$0xf]
      %v7903 = vld [vmem:[%s1 + $0x284] sm:$0xf]
      %v7904 = vld [vmem:[%s1 + $0x288] sm:$0xf]
      %v7905 = vld [vmem:[%s1 + $0x28c] sm:$0xf]
      %v7906 = vld [vmem:[%s1 + $0x290] sm:$0xf]
      %v7907 = vld [vmem:[%s1 + $0x294] sm:$0xf]
      %v7908 = vld [vmem:[%s1 + $0x298] sm:$0xf]
      %v7909 = vld [vmem:[%s1 + $0x29c] sm:$0xf]
      %v7910 = vld [vmem:[%s1 + $0x2a0] sm:$0xf]
      %v7911 = vld [vmem:[%s1 + $0x2a4] sm:$0xf]
      %v7912 = vld [vmem:[%s1 + $0x2a8] sm:$0xf]
      %v7913 = vld [vmem:[%s1 + $0x2ac] sm:$0xf]
      %v7914 = vld [vmem:[%s1 + $0x2b0] sm:$0xf]
      %v7915 = vld [vmem:[%s1 + $0x2b4] sm:$0xf]
      %v7916 = vld [vmem:[%s1 + $0x2b8] sm:$0xf]
      %v7917 = vld [vmem:[%s1 + $0x2bc] sm:$0xf]
      %v7934 = vunpack.c.l.b16 %v7902
      %v7935 = vunpack.c.l.b16 %v7903
      %v7936 = vunpack.c.l.b16 %v7904
      %v7937 = vunpack.c.l.b16 %v7905
      %v7938 = vunpack.c.l.b16 %v7906
      %v7939 = vunpack.c.l.b16 %v7907
      %v7940 = vunpack.c.l.b16 %v7908
      %v7941 = vunpack.c.l.b16 %v7909
      %v7942 = vunpack.c.l.b16 %v7910
      %v7943 = vunpack.c.l.b16 %v7911
      %v7944 = vunpack.c.l.b16 %v7912
      %v7945 = vunpack.c.l.b16 %v7913
      %v7946 = vunpack.c.l.b16 %v7914
      %v7947 = vunpack.c.l.b16 %v7915
      %v7948 = vunpack.c.l.b16 %v7916
      %v7949 = vunpack.c.l.b16 %v7917
      %v7950 = vpack.c.b16 %v7935, %v7934
      %v7951 = vpack.c.b16 %v7937, %v7936
      %v7952 = vpack.c.b16 %v7939, %v7938
      %v7953 = vpack.c.b16 %v7941, %v7940
      %v7954 = vpack.c.b16 %v7943, %v7942
      %v7955 = vpack.c.b16 %v7945, %v7944
      %v7956 = vpack.c.b16 %v7947, %v7946
      %v7957 = vpack.c.b16 %v7949, %v7948
      %7966 = vmatprep.subr.bf16.mxu0 0
      %7967 = vmatpush1.bf16.msra.mxu0 %v7950
      %7968 = vmatprep.subr.bf16.mxu0 0
      %7969 = vmatpush1.bf16.msra.mxu0 %v7951
      %7970 = vmatprep.subr.bf16.mxu0 0
      %7971 = vmatpush1.bf16.msra.mxu0 %v7952
      %7972 = vmatprep.subr.bf16.mxu0 0
      %7973 = vmatpush1.bf16.msra.mxu0 %v7953
      %7974 = vmatprep.subr.bf16.mxu0 0
      %7975 = vmatpush1.bf16.msra.mxu0 %v7954
      %7976 = vmatprep.subr.bf16.mxu0 0
      %7977 = vmatpush1.bf16.msra.mxu0 %v7955
      %7978 = vmatprep.subr.bf16.mxu0 0
      %7979 = vmatpush1.bf16.msra.mxu0 %v7956
      %7980 = vmatprep.subr.bf16.mxu0 0
      %7981 = vmatpush1.bf16.msra.mxu0 %v7957
      %7982 = vmatprep.subr.bf16.mxu0 0
      %7983 = vmatpush1.bf16.msra.mxu0 0
      %7984 = vmatprep.subr.bf16.mxu0 0
      %7985 = vmatpush1.bf16.msra.mxu0 0
      %7986 = vmatprep.subr.bf16.mxu0 0
      %7987 = vmatpush1.bf16.msra.mxu0 0
      %7988 = vmatprep.subr.bf16.mxu0 0
      %7989 = vmatpush1.bf16.msra.mxu0 0
      %7990 = vmatprep.subr.bf16.mxu0 0
      %7991 = vmatpush1.bf16.msra.mxu0 0
      %7992 = vmatprep.subr.bf16.mxu0 0
      %7993 = vmatpush1.bf16.msra.mxu0 0
      %7994 = vmatprep.subr.bf16.mxu0 0
      %7995 = vmatpush1.bf16.msra.mxu0 0
      %7996 = vmatprep.subr.bf16.mxu0 0
      %7997 = vmatpush1.bf16.msra.mxu0 0
      %7998 = vmatprep.mubr.bf16.mxu0 0
      %7999 = vmatmul.mubr.bf16.gmra.mrb[0].mxu0 %v7876
      %v8000 = vpop.f32.mrb[0].mxu0
      %v8001 = vadd.f32 0.0, %v8000
      %v8002 = vpop.f32.mrb[0].mxu0
      %v8003 = vpop.f32.mrb[0].mxu0
      %v8004 = vadd.f32 0.0, %v8003
      %v8005 = vpop.f32.mrb[0].mxu0
      %8006 = vmatprep.mubr.bf16.mxu0 0
      %8007 = vmatmul.mubr.bf16.gmra.mrb[0].mxu0 %v7877
      %v8008 = vpop.f32.mrb[0].mxu0
      %v8009 = vadd.f32 0.0, %v8008
      %v8010 = vpop.f32.mrb[0].mxu0
      %v8011 = vpop.f32.mrb[0].mxu0
      %v8012 = vadd.f32 0.0, %v8011
      %v8013 = vpop.f32.mrb[0].mxu0
      %8014 = vmatprep.mubr.bf16.mxu0 0
      %8015 = vmatmul.mubr.bf16.gmra.mrb[0].mxu0 %v7878
      %v8016 = vpop.f32.mrb[0].mxu0
      %v8017 = vadd.f32 0.0, %v8016
      %v8018 = vpop.f32.mrb[0].mxu0
      %v8019 = vpop.f32.mrb[0].mxu0
      %v8020 = vadd.f32 0.0, %v8019
      %v8021 = vpop.f32.mrb[0].mxu0
      %8022 = vmatprep.mubr.bf16.mxu0 0
      %8023 = vmatmul.mubr.bf16.gmra.mrb[0].mxu0 %v7879
      %v8024 = vpop.f32.mrb[0].mxu0
      %v8025 = vadd.f32 0.0, %v8024
      %v8026 = vpop.f32.mrb[0].mxu0
      %v8027 = vpop.f32.mrb[0].mxu0
      %v8028 = vadd.f32 0.0, %v8027
      %v8029 = vpop.f32.mrb[0].mxu0
      %8030 = vmatprep.mubr.bf16.mxu0 0
      %8031 = vmatmul.mubr.bf16.gmra.mrb[0].mxu0 %v7880
      %v8032 = vpop.f32.mrb[0].mxu0
      %v8033 = vadd.f32 0.0, %v8032
      %v8034 = vpop.f32.mrb[0].mxu0
      %v8035 = vpop.f32.mrb[0].mxu0
      %v8036 = vadd.f32 0.0, %v8035
      %v8037 = vpop.f32.mrb[0].mxu0
      %8038 = vmatprep.mubr.bf16.mxu0 0
      %8039 = vmatmul.mubr.bf16.gmra.mrb[0].mxu0 %v7881
      %v8040 = vpop.f32.mrb[0].mxu0
      %v8041 = vadd.f32 0.0, %v8040
      %v8042 = vpop.f32.mrb[0].mxu0
      %v8043 = vpop.f32.mrb[0].mxu0
      %v8044 = vadd.f32 0.0, %v8043
      %v8045 = vpop.f32.mrb[0].mxu0
      %8046 = vmatprep.mubr.bf16.mxu0 0
      %8047 = vmatmul.mubr.bf16.gmra.mrb[0].mxu0 %v7882
      %v8048 = vpop.f32.mrb[0].mxu0
      %v8049 = vadd.f32 0.0, %v8048
      %v8050 = vpop.f32.mrb[0].mxu0
      %v8051 = vpop.f32.mrb[0].mxu0
      %v8052 = vadd.f32 0.0, %v8051
      %v8053 = vpop.f32.mrb[0].mxu0
      %8054 = vmatprep.mubr.bf16.mxu0 0
      %8055 = vmatmul.mubr.bf16.gmra.mrb[0].mxu0 %v7901
      %v8056 = vpop.f32.mrb[0].mxu0
      %v8057 = vadd.f32 0.0, %v8056
      %v8058 = vpop.f32.mrb[0].mxu0
      %v8059 = vpop.f32.mrb[0].mxu0
      %v8060 = vadd.f32 0.0, %v8059
      %v8061 = vpop.f32.mrb[0].mxu0
      %8062 = vdwg.mxu0
      %v8079 = vunpack.c.l.b16 %v7883
      %v8080 = vunpack.c.l.b16 %v7884
      %v8081 = vunpack.c.l.b16 %v7885
      %v8082 = vunpack.c.l.b16 %v7886
      %v8083 = vunpack.c.l.b16 %v7887
      %v8084 = vunpack.c.l.b16 %v7888
      %v8085 = vunpack.c.l.b16 %v7889
      %v8086 = vunpack.c.l.b16 %v7890
      %v8087 = vunpack.c.l.b16 %v7891
      %v8088 = vunpack.c.l.b16 %v7892
      %v8089 = vunpack.c.l.b16 %v7893
      %v8090 = vunpack.c.l.b16 %v7894
      %v8091 = vunpack.c.l.b16 %v7895
      %v8092 = vunpack.c.l.b16 %v7896
      %v8093 = vunpack.c.l.b16 %v7897
      %v8094 = vunpack.c.l.b16 %v7898
      %v8095 = vpack.c.b16 %v8080, %v8079
      %v8096 = vpack.c.b16 %v8082, %v8081
      %v8097 = vpack.c.b16 %v8084, %v8083
      %v8098 = vpack.c.b16 %v8086, %v8085
      %v8099 = vpack.c.b16 %v8088, %v8087
      %v8100 = vpack.c.b16 %v8090, %v8089
      %v8101 = vpack.c.b16 %v8092, %v8091
      %v8102 = vpack.c.b16 %v8094, %v8093
      %8111 = vmatprep.subr.bf16.mxu0 0
      %8112 = vmatpush1.bf16.msra.mxu0 %v8095
      %8113 = vmatprep.subr.bf16.mxu0 0
      %8114 = vmatpush1.bf16.msra.mxu0 %v8096
      %8115 = vmatprep.subr.bf16.mxu0 0
      %8116 = vmatpush1.bf16.msra.mxu0 %v8097
      %8117 = vmatprep.subr.bf16.mxu0 0
      %8118 = vmatpush1.bf16.msra.mxu0 %v8098
      %8119 = vmatprep.subr.bf16.mxu0 0
      %8120 = vmatpush1.bf16.msra.mxu0 %v8099
      %8121 = vmatprep.subr.bf16.mxu0 0
      %8122 = vmatpush1.bf16.msra.mxu0 %v8100
      %8123 = vmatprep.subr.bf16.mxu0 0
      %8124 = vmatpush1.bf16.msra.mxu0 %v8101
      %8125 = vmatprep.subr.bf16.mxu0 0
      %8126 = vmatpush1.bf16.msra.mxu0 %v8102
      %8127 = vmatprep.subr.bf16.mxu0 0
      %8128 = vmatpush1.bf16.msra.mxu0 0
      %8129 = vmatprep.subr.bf16.mxu0 0
      %8130 = vmatpush1.bf16.msra.mxu0 0
      %8131 = vmatprep.subr.bf16.mxu0 0
      %8132 = vmatpush1.bf16.msra.mxu0 0
      %8133 = vmatprep.subr.bf16.mxu0 0
      %8134 = vmatpush1.bf16.msra.mxu0 0
      %8135 = vmatprep.subr.bf16.mxu0 0
      %8136 = vmatpush1.bf16.msra.mxu0 0
      %8137 = vmatprep.subr.bf16.mxu0 0
      %8138 = vmatpush1.bf16.msra.mxu0 0
      %8139 = vmatprep.subr.bf16.mxu0 0
      %8140 = vmatpush1.bf16.msra.mxu0 0
      %8141 = vmatprep.subr.bf16.mxu0 0
      %8142 = vmatpush1.bf16.msra.mxu0 0
      %8143 = vmatprep.mubr.bf16.mxu0 0
      %8144 = vmatmul.mubr.bf16.gmra.mrb[0].mxu0 %v7875
      %v8145 = vpop.f32.mrb[0].mxu0
      %v8146 = vadd.f32 %v8001, %v8145
      %v8147 = vpop.f32.mrb[0].mxu0
      %v8148 = vpop.f32.mrb[0].mxu0
      %v8149 = vadd.f32 %v8004, %v8148
      %v8150 = vpop.f32.mrb[0].mxu0
      %8151 = vmatprep.mubr.bf16.mxu0 0
      %8152 = vmatmul.mubr.bf16.gmra.mrb[0].mxu0 %v7876
      %v8153 = vpop.f32.mrb[0].mxu0
      %v8154 = vadd.f32 %v8009, %v8153
      %v8155 = vpop.f32.mrb[0].mxu0
      %v8156 = vpop.f32.mrb[0].mxu0
      %v8157 = vadd.f32 %v8012, %v8156
      %v8158 = vpop.f32.mrb[0].mxu0
      %8159 = vmatprep.mubr.bf16.mxu0 0
      %8160 = vmatmul.mubr.bf16.gmra.mrb[0].mxu0 %v7877
      %v8161 = vpop.f32.mrb[0].mxu0
      %v8162 = vadd.f32 %v8017, %v8161
      %v8163 = vpop.f32.mrb[0].mxu0
      %v8164 = vpop.f32.mrb[0].mxu0
      %v8165 = vadd.f32 %v8020, %v8164
      %v8166 = vpop.f32.mrb[0].mxu0
      %8167 = vmatprep.mubr.bf16.mxu0 0
      %8168 = vmatmul.mubr.bf16.gmra.mrb[0].mxu0 %v7878
      %v8169 = vpop.f32.mrb[0].mxu0
      %v8170 = vadd.f32 %v8025, %v8169
      %v8171 = vpop.f32.mrb[0].mxu0
      %v8172 = vpop.f32.mrb[0].mxu0
      %v8173 = vadd.f32 %v8028, %v8172
      %v8174 = vpop.f32.mrb[0].mxu0
      %8175 = vmatprep.mubr.bf16.mxu0 0
      %8176 = vmatmul.mubr.bf16.gmra.mrb[0].mxu0 %v7879
      %v8177 = vpop.f32.mrb[0].mxu0
      %v8178 = vadd.f32 %v8033, %v8177
      %v8179 = vpop.f32.mrb[0].mxu0
      %v8180 = vpop.f32.mrb[0].mxu0
      %v8181 = vadd.f32 %v8036, %v8180
      %v8182 = vpop.f32.mrb[0].mxu0
      %8183 = vmatprep.mubr.bf16.mxu0 0
      %8184 = vmatmul.mubr.bf16.gmra.mrb[0].mxu0 %v7880
      %v8185 = vpop.f32.mrb[0].mxu0
      %v8186 = vadd.f32 %v8041, %v8185
      %v8187 = vpop.f32.mrb[0].mxu0
      %v8188 = vpop.f32.mrb[0].mxu0
      %v8189 = vadd.f32 %v8044, %v8188
      %v8190 = vpop.f32.mrb[0].mxu0
      %8191 = vmatprep.mubr.bf16.mxu0 0
      %8192 = vmatmul.mubr.bf16.gmra.mrb[0].mxu0 %v7881
      %v8193 = vpop.f32.mrb[0].mxu0
      %v8194 = vadd.f32 %v8049, %v8193
      %v8195 = vpop.f32.mrb[0].mxu0
      %v8196 = vpop.f32.mrb[0].mxu0
      %v8197 = vadd.f32 %v8052, %v8196
      %v8198 = vpop.f32.mrb[0].mxu0
      %8199 = vmatprep.mubr.bf16.mxu0 0
      %8200 = vmatmul.mubr.bf16.gmra.mrb[0].mxu0 %v7882
      %v8201 = vpop.f32.mrb[0].mxu0
      %v8202 = vadd.f32 %v8057, %v8201
      %v8203 = vpop.f32.mrb[0].mxu0
      %v8204 = vpop.f32.mrb[0].mxu0
      %v8205 = vadd.f32 %v8060, %v8204
      %v8206 = vpop.f32.mrb[0].mxu0
      %8207 = vdwg.mxu0
      %v8208 = vld [vmem:[#allocation2 + $0x20] sm:$0xff]
      %v8209 = vld [vmem:[#allocation2 + $0x28] sm:$0xff]
      %v8210 = vld [vmem:[#allocation2 + $0x30] sm:$0xff]
      %v8211 = vld [vmem:[#allocation2 + $0x38] sm:$0xff]
      %v8212 = vld [vmem:[#allocation2 + $0x40] sm:$0xff]
      %v8213 = vld [vmem:[#allocation2 + $0x48] sm:$0xff]
      %v8214 = vld [vmem:[#allocation2 + $0x50] sm:$0xff]
      %v8215 = vld [vmem:[#allocation2 + $0x58] sm:$0xff]
      %v8216 = vld [vmem:[#allocation2 + $0x60] sm:$0xff]
      %v8217 = vld [vmem:[#allocation2 + $0x68] sm:$0xff]
      %v8218 = vld [vmem:[#allocation2 + $0x70] sm:$0xff]
      %v8219 = vld [vmem:[#allocation2 + $0x78] sm:$0xff]
      %v8220 = vld [vmem:[#allocation2 + $0x80] sm:$0xff]
      %v8221 = vld [vmem:[#allocation2 + $0x88] sm:$0xff]
      %v8222 = vld [vmem:[#allocation2 + $0x90] sm:$0xff]
      %v8223 = vld [vmem:[#allocation2 + $0x98] sm:$0xff]
      %v8224 = vpack.c.bf16 %v8209, %v8208
      %v8225 = vpack.c.bf16 %v8211, %v8210
      %v8226 = vpack.c.bf16 %v8213, %v8212
      %v8227 = vpack.c.bf16 %v8215, %v8214
      %v8228 = vpack.c.bf16 %v8217, %v8216
      %v8229 = vpack.c.bf16 %v8219, %v8218
      %v8230 = vpack.c.bf16 %v8221, %v8220
      %v8231 = vpack.c.bf16 %v8223, %v8222
      %v8232 = vld [vmem:[%s1 + $0x2c0] sm:$0xf]
      %v8233 = vld [vmem:[%s1 + $0x2c4] sm:$0xf]
      %v8234 = vld [vmem:[%s1 + $0x2c8] sm:$0xf]
      %v8235 = vld [vmem:[%s1 + $0x2cc] sm:$0xf]
      %v8236 = vld [vmem:[%s1 + $0x2d0] sm:$0xf]
      %v8237 = vld [vmem:[%s1 + $0x2d4] sm:$0xf]
      %v8238 = vld [vmem:[%s1 + $0x2d8] sm:$0xf]
      %v8239 = vld [vmem:[%s1 + $0x2dc] sm:$0xf]
      %v8240 = vld [vmem:[%s1 + $0x2e0] sm:$0xf]
      %v8241 = vld [vmem:[%s1 + $0x2e4] sm:$0xf]
      %v8242 = vld [vmem:[%s1 + $0x2e8] sm:$0xf]
      %v8243 = vld [vmem:[%s1 + $0x2ec] sm:$0xf]
      %v8244 = vld [vmem:[%s1 + $0x2f0] sm:$0xf]
      %v8245 = vld [vmem:[%s1 + $0x2f4] sm:$0xf]
      %v8246 = vld [vmem:[%s1 + $0x2f8] sm:$0xf]
      %v8247 = vld [vmem:[%s1 + $0x2fc] sm:$0xf]
      %v8264 = vunpack.c.l.b16 %v8232
      %v8265 = vunpack.c.l.b16 %v8233
      %v8266 = vunpack.c.l.b16 %v8234
      %v8267 = vunpack.c.l.b16 %v8235
      %v8268 = vunpack.c.l.b16 %v8236
      %v8269 = vunpack.c.l.b16 %v8237
      %v8270 = vunpack.c.l.b16 %v8238
      %v8271 = vunpack.c.l.b16 %v8239
      %v8272 = vunpack.c.l.b16 %v8240
      %v8273 = vunpack.c.l.b16 %v8241
      %v8274 = vunpack.c.l.b16 %v8242
      %v8275 = vunpack.c.l.b16 %v8243
      %v8276 = vunpack.c.l.b16 %v8244
      %v8277 = vunpack.c.l.b16 %v8245
      %v8278 = vunpack.c.l.b16 %v8246
      %v8279 = vunpack.c.l.b16 %v8247
      %v8280 = vpack.c.b16 %v8265, %v8264
      %v8281 = vpack.c.b16 %v8267, %v8266
      %v8282 = vpack.c.b16 %v8269, %v8268
      %v8283 = vpack.c.b16 %v8271, %v8270
      %v8284 = vpack.c.b16 %v8273, %v8272
      %v8285 = vpack.c.b16 %v8275, %v8274
      %v8286 = vpack.c.b16 %v8277, %v8276
      %v8287 = vpack.c.b16 %v8279, %v8278
      %8296 = vmatprep.subr.bf16.mxu0 0
      %8297 = vmatpush1.bf16.msra.mxu0 %v8280
      %8298 = vmatprep.subr.bf16.mxu0 0
      %8299 = vmatpush1.bf16.msra.mxu0 %v8281
      %8300 = vmatprep.subr.bf16.mxu0 0
      %8301 = vmatpush1.bf16.msra.mxu0 %v8282
      %8302 = vmatprep.subr.bf16.mxu0 0
      %8303 = vmatpush1.bf16.msra.mxu0 %v8283
      %8304 = vmatprep.subr.bf16.mxu0 0
      %8305 = vmatpush1.bf16.msra.mxu0 %v8284
      %8306 = vmatprep.subr.bf16.mxu0 0
      %8307 = vmatpush1.bf16.msra.mxu0 %v8285
      %8308 = vmatprep.subr.bf16.mxu0 0
      %8309 = vmatpush1.bf16.msra.mxu0 %v8286
      %8310 = vmatprep.subr.bf16.mxu0 0
      %8311 = vmatpush1.bf16.msra.mxu0 %v8287
      %8312 = vmatprep.subr.bf16.mxu0 0
      %8313 = vmatpush1.bf16.msra.mxu0 0
      %8314 = vmatprep.subr.bf16.mxu0 0
      %8315 = vmatpush1.bf16.msra.mxu0 0
      %8316 = vmatprep.subr.bf16.mxu0 0
      %8317 = vmatpush1.bf16.msra.mxu0 0
      %8318 = vmatprep.subr.bf16.mxu0 0
      %8319 = vmatpush1.bf16.msra.mxu0 0
      %8320 = vmatprep.subr.bf16.mxu0 0
      %8321 = vmatpush1.bf16.msra.mxu0 0
      %8322 = vmatprep.subr.bf16.mxu0 0
      %8323 = vmatpush1.bf16.msra.mxu0 0
      %8324 = vmatprep.subr.bf16.mxu0 0
      %8325 = vmatpush1.bf16.msra.mxu0 0
      %8326 = vmatprep.subr.bf16.mxu0 0
      %8327 = vmatpush1.bf16.msra.mxu0 0
      %8328 = vmatprep.mubr.bf16.mxu0 0
      %8329 = vmatmul.mubr.bf16.gmra.mrb[0].mxu0 %v8224
      %v8330 = vpop.f32.mrb[0].mxu0
      %v8331 = vadd.f32 0.0, %v8330
      %v8332 = vpop.f32.mrb[0].mxu0
      %v8333 = vpop.f32.mrb[0].mxu0
      %v8334 = vadd.f32 0.0, %v8333
      %v8335 = vpop.f32.mrb[0].mxu0
      %8336 = vmatprep.mubr.bf16.mxu0 0
      %8337 = vmatmul.mubr.bf16.gmra.mrb[0].mxu0 %v8225
      %v8338 = vpop.f32.mrb[0].mxu0
      %v8339 = vadd.f32 0.0, %v8338
      %v8340 = vpop.f32.mrb[0].mxu0
      %v8341 = vpop.f32.mrb[0].mxu0
      %v8342 = vadd.f32 0.0, %v8341
      %v8343 = vpop.f32.mrb[0].mxu0
      %8344 = vmatprep.mubr.bf16.mxu0 0
      %8345 = vmatmul.mubr.bf16.gmra.mrb[0].mxu0 %v8226
      %v8346 = vpop.f32.mrb[0].mxu0
      %v8347 = vadd.f32 0.0, %v8346
      %v8348 = vpop.f32.mrb[0].mxu0
      %v8349 = vpop.f32.mrb[0].mxu0
      %v8350 = vadd.f32 0.0, %v8349
      %v8351 = vpop.f32.mrb[0].mxu0
      %8352 = vmatprep.mubr.bf16.mxu0 0
      %8353 = vmatmul.mubr.bf16.gmra.mrb[0].mxu0 %v8227
      %v8354 = vpop.f32.mrb[0].mxu0
      %v8355 = vadd.f32 0.0, %v8354
      %v8356 = vpop.f32.mrb[0].mxu0
      %v8357 = vpop.f32.mrb[0].mxu0
      %v8358 = vadd.f32 0.0, %v8357
      %v8359 = vpop.f32.mrb[0].mxu0
      %8360 = vmatprep.mubr.bf16.mxu0 0
      %8361 = vmatmul.mubr.bf16.gmra.mrb[0].mxu0 %v8228
      %v8362 = vpop.f32.mrb[0].mxu0
      %v8363 = vadd.f32 0.0, %v8362
      %v8364 = vpop.f32.mrb[0].mxu0
      %v8365 = vpop.f32.mrb[0].mxu0
      %v8366 = vadd.f32 0.0, %v8365
      %v8367 = vpop.f32.mrb[0].mxu0
      %8368 = vmatprep.mubr.bf16.mxu0 0
      %8369 = vmatmul.mubr.bf16.gmra.mrb[0].mxu0 %v8229
      %v8370 = vpop.f32.mrb[0].mxu0
      %v8371 = vadd.f32 0.0, %v8370
      %v8372 = vpop.f32.mrb[0].mxu0
      %v8373 = vpop.f32.mrb[0].mxu0
      %v8374 = vadd.f32 0.0, %v8373
      %v8375 = vpop.f32.mrb[0].mxu0
      %8376 = vmatprep.mubr.bf16.mxu0 0
      %8377 = vmatmul.mubr.bf16.gmra.mrb[0].mxu0 %v8230
      %v8378 = vpop.f32.mrb[0].mxu0
      %v8379 = vadd.f32 0.0, %v8378
      %v8380 = vpop.f32.mrb[0].mxu0
      %v8381 = vpop.f32.mrb[0].mxu0
      %v8382 = vadd.f32 0.0, %v8381
      %v8383 = vpop.f32.mrb[0].mxu0
      %8384 = vmatprep.mubr.bf16.mxu0 0
      %8385 = vmatmul.mubr.bf16.gmra.mrb[0].mxu0 %v8231
      %v8386 = vpop.f32.mrb[0].mxu0
      %v8387 = vadd.f32 0.0, %v8386
      %v8388 = vpop.f32.mrb[0].mxu0
      %v8389 = vpop.f32.mrb[0].mxu0
      %v8390 = vadd.f32 0.0, %v8389
      %v8391 = vpop.f32.mrb[0].mxu0
      %8392 = vdwg.mxu0
      %v8393 = vadd.f32 %v8146, %v8331
      %v8394 = vadd.f32 %v8149, %v8334
      %v8395 = vadd.f32 %v8154, %v8339
      %v8396 = vadd.f32 %v8157, %v8342
      %v8397 = vadd.f32 %v8162, %v8347
      %v8398 = vadd.f32 %v8165, %v8350
      %v8399 = vadd.f32 %v8170, %v8355
      %v8400 = vadd.f32 %v8173, %v8358
      %v8401 = vadd.f32 %v8178, %v8363
      %v8402 = vadd.f32 %v8181, %v8366
      %v8403 = vadd.f32 %v8186, %v8371
      %v8404 = vadd.f32 %v8189, %v8374
      %v8405 = vadd.f32 %v8194, %v8379
      %v8406 = vadd.f32 %v8197, %v8382
      %v8407 = vadd.f32 %v8202, %v8387
      %v8408 = vadd.f32 %v8205, %v8390
      %v8409 = vadd.f32 %v8393, %v7858
      %v8410 = vadd.f32 %v8394, %v7858
      %v8411 = vadd.f32 %v8395, %v7858
      %v8412 = vadd.f32 %v8396, %v7858
      %v8413 = vadd.f32 %v8397, %v7858
      %v8414 = vadd.f32 %v8398, %v7858
      %v8415 = vadd.f32 %v8399, %v7858
      %v8416 = vadd.f32 %v8400, %v7858
      %v8417 = vadd.f32 %v8401, %v7858
      %v8418 = vadd.f32 %v8402, %v7858
      %v8419 = vadd.f32 %v8403, %v7858
      %v8420 = vadd.f32 %v8404, %v7858
      %v8421 = vadd.f32 %v8405, %v7858
      %v8422 = vadd.f32 %v8406, %v7858
      %v8423 = vadd.f32 %v8407, %v7858
      %v8424 = vadd.f32 %v8408, %v7858
      %v8425 = vxor.u32 %v8409, 2147483648
      %v8426 = vxor.u32 %v8410, 2147483648
      %v8427 = vxor.u32 %v8411, 2147483648
      %v8428 = vxor.u32 %v8412, 2147483648
      %v8429 = vxor.u32 %v8413, 2147483648
      %v8430 = vxor.u32 %v8414, 2147483648
      %v8431 = vxor.u32 %v8415, 2147483648
      %v8432 = vxor.u32 %v8416, 2147483648
      %v8433 = vxor.u32 %v8417, 2147483648
      %v8434 = vxor.u32 %v8418, 2147483648
      %v8435 = vxor.u32 %v8419, 2147483648
      %v8436 = vxor.u32 %v8420, 2147483648
      %v8437 = vxor.u32 %v8421, 2147483648
      %v8438 = vxor.u32 %v8422, 2147483648
      %v8439 = vxor.u32 %v8423, 2147483648
      %v8440 = vxor.u32 %v8424, 2147483648
      %v8441 = vmul.f32 %v8425, 1.442695
      %v8442 = vpow.pop %v8441
      %v8443 = vmul.f32 %v8426, 1.442695
      %v8444 = vpow.pop %v8443
      %v8445 = vmul.f32 %v8427, 1.442695
      %v8446 = vpow.pop %v8445
      %v8447 = vmul.f32 %v8428, 1.442695
      %v8448 = vpow.pop %v8447
      %v8449 = vmul.f32 %v8429, 1.442695
      %v8450 = vpow.pop %v8449
      %v8451 = vmul.f32 %v8430, 1.442695
      %v8452 = vpow.pop %v8451
      %v8453 = vmul.f32 %v8431, 1.442695
      %v8454 = vpow.pop %v8453
      %v8455 = vmul.f32 %v8432, 1.442695
      %v8456 = vpow.pop %v8455
      %v8457 = vmul.f32 %v8433, 1.442695
      %v8458 = vpow.pop %v8457
      %v8459 = vmul.f32 %v8434, 1.442695
      %v8460 = vpow.pop %v8459
      %v8461 = vmul.f32 %v8435, 1.442695
      %v8462 = vpow.pop %v8461
      %v8463 = vmul.f32 %v8436, 1.442695
      %v8464 = vpow.pop %v8463
      %v8465 = vmul.f32 %v8437, 1.442695
      %v8466 = vpow.pop %v8465
      %v8467 = vmul.f32 %v8438, 1.442695
      %v8468 = vpow.pop %v8467
      %v8469 = vmul.f32 %v8439, 1.442695
      %v8470 = vpow.pop %v8469
      %v8471 = vmul.f32 %v8440, 1.442695
      %v8472 = vpow.pop %v8471
      %v8473 = vadd.f32 %v8442, 1.0
      %v8474 = vadd.f32 %v8444, 1.0
      %v8475 = vadd.f32 %v8446, 1.0
      %v8476 = vadd.f32 %v8448, 1.0
      %v8477 = vadd.f32 %v8450, 1.0
      %v8478 = vadd.f32 %v8452, 1.0
      %v8479 = vadd.f32 %v8454, 1.0
      %v8480 = vadd.f32 %v8456, 1.0
      %v8481 = vadd.f32 %v8458, 1.0
      %v8482 = vadd.f32 %v8460, 1.0
      %v8483 = vadd.f32 %v8462, 1.0
      %v8484 = vadd.f32 %v8464, 1.0
      %v8485 = vadd.f32 %v8466, 1.0
      %v8486 = vadd.f32 %v8468, 1.0
      %v8487 = vadd.f32 %v8470, 1.0
      %v8488 = vadd.f32 %v8472, 1.0
      %v8489 = vrcp.pop %v8473
      %v8490 = vmul.f32 1.0, %v8489
      %v8491 = vrcp.pop %v8474
      %v8492 = vmul.f32 1.0, %v8491
      %v8493 = vrcp.pop %v8475
      %v8494 = vmul.f32 1.0, %v8493
      %v8495 = vrcp.pop %v8476
      %v8496 = vmul.f32 1.0, %v8495
      %v8497 = vrcp.pop %v8477
      %v8498 = vmul.f32 1.0, %v8497
      %v8499 = vrcp.pop %v8478
      %v8500 = vmul.f32 1.0, %v8499
      %v8501 = vrcp.pop %v8479
      %v8502 = vmul.f32 1.0, %v8501
      %v8503 = vrcp.pop %v8480
      %v8504 = vmul.f32 1.0, %v8503
      %v8505 = vrcp.pop %v8481
      %v8506 = vmul.f32 1.0, %v8505
      %v8507 = vrcp.pop %v8482
      %v8508 = vmul.f32 1.0, %v8507
      %v8509 = vrcp.pop %v8483
      %v8510 = vmul.f32 1.0, %v8509
      %v8511 = vrcp.pop %v8484
      %v8512 = vmul.f32 1.0, %v8511
      %v8513 = vrcp.pop %v8485
      %v8514 = vmul.f32 1.0, %v8513
      %v8515 = vrcp.pop %v8486
      %v8516 = vmul.f32 1.0, %v8515
      %v8517 = vrcp.pop %v8487
      %v8518 = vmul.f32 1.0, %v8517
      %v8519 = vrcp.pop %v8488
      %v8520 = vmul.f32 1.0, %v8519
      %v8521 = vmul.f32 %v8409, %v8490
      %v8522 = vmul.f32 %v8410, %v8492
      %v8523 = vmul.f32 %v8411, %v8494
      %v8524 = vmul.f32 %v8412, %v8496
      %v8525 = vmul.f32 %v8413, %v8498
      %v8526 = vmul.f32 %v8414, %v8500
      %v8527 = vmul.f32 %v8415, %v8502
      %v8528 = vmul.f32 %v8416, %v8504
      %v8529 = vmul.f32 %v8417, %v8506
      %v8530 = vmul.f32 %v8418, %v8508
      %v8531 = vmul.f32 %v8419, %v8510
      %v8532 = vmul.f32 %v8420, %v8512
      %v8533 = vmul.f32 %v8421, %v8514
      %v8534 = vmul.f32 %v8422, %v8516
      %v8535 = vmul.f32 %v8423, %v8518
      %v8536 = vmul.f32 %v8424, %v8520
      %v8537 = vld [vmem:[%s3 + $0xc0] sm:$0xf]
      %v8538 = vld [vmem:[%s3 + $0xc4] sm:$0xf]
      %v8539 = vld [vmem:[%s3 + $0xc8] sm:$0xf]
      %v8540 = vld [vmem:[%s3 + $0xcc] sm:$0xf]
      %v8541 = vld [vmem:[%s3 + $0xd0] sm:$0xf]
      %v8542 = vld [vmem:[%s3 + $0xd4] sm:$0xf]
      %v8543 = vld [vmem:[%s3 + $0xd8] sm:$0xf]
      %v8544 = vld [vmem:[%s3 + $0xdc] sm:$0xf]
      %v8545 = vld [vmem:[%s3 + $0xe0] sm:$0xf]
      %v8546 = vld [vmem:[%s3 + $0xe4] sm:$0xf]
      %v8547 = vld [vmem:[%s3 + $0xe8] sm:$0xf]
      %v8548 = vld [vmem:[%s3 + $0xec] sm:$0xf]
      %v8549 = vld [vmem:[%s3 + $0xf0] sm:$0xf]
      %v8550 = vld [vmem:[%s3 + $0xf4] sm:$0xf]
      %v8551 = vld [vmem:[%s3 + $0xf8] sm:$0xf]
      %v8552 = vld [vmem:[%s3 + $0xfc] sm:$0xf]
      %v8553 = vunpack.c.l.bf16 %v8537
      %v8554 = vunpack.c.l.bf16 %v8538
      %v8555 = vunpack.c.l.bf16 %v8539
      %v8556 = vunpack.c.l.bf16 %v8540
      %v8557 = vunpack.c.l.bf16 %v8541
      %v8558 = vunpack.c.l.bf16 %v8542
      %v8559 = vunpack.c.l.bf16 %v8543
      %v8560 = vunpack.c.l.bf16 %v8544
      %v8561 = vunpack.c.l.bf16 %v8545
      %v8562 = vunpack.c.l.bf16 %v8546
      %v8563 = vunpack.c.l.bf16 %v8547
      %v8564 = vunpack.c.l.bf16 %v8548
      %v8565 = vunpack.c.l.bf16 %v8549
      %v8566 = vunpack.c.l.bf16 %v8550
      %v8567 = vunpack.c.l.bf16 %v8551
      %v8568 = vunpack.c.l.bf16 %v8552
      %v8569 = vmul.f32 %v8521, %v8553
      %v8570 = vmul.f32 %v8522, %v8554
      %v8571 = vmul.f32 %v8523, %v8555
      %v8572 = vmul.f32 %v8524, %v8556
      %v8573 = vmul.f32 %v8525, %v8557
      %v8574 = vmul.f32 %v8526, %v8558
      %v8575 = vmul.f32 %v8527, %v8559
      %v8576 = vmul.f32 %v8528, %v8560
      %v8577 = vmul.f32 %v8529, %v8561
      %v8578 = vmul.f32 %v8530, %v8562
      %v8579 = vmul.f32 %v8531, %v8563
      %v8580 = vmul.f32 %v8532, %v8564
      %v8581 = vmul.f32 %v8533, %v8565
      %v8582 = vmul.f32 %v8534, %v8566
      %v8583 = vmul.f32 %v8535, %v8567
      %v8584 = vmul.f32 %v8536, %v8568
      %8601 = vrot.lane.b32.xlu0 %v8569, 32
      %v8602 = vpop.permute.xlu0 %8601
      %8603 = vrot.lane.b32.xlu0 %v8570, 32
      %v8604 = vpop.permute.xlu0 %8603
      %8605 = vrot.lane.b32.xlu0 %v8571, 32
      %v8606 = vpop.permute.xlu0 %8605
      %8607 = vrot.lane.b32.xlu0 %v8572, 32
      %v8608 = vpop.permute.xlu0 %8607
      %8609 = vrot.lane.b32.xlu0 %v8573, 32
      %v8610 = vpop.permute.xlu0 %8609
      %8611 = vrot.lane.b32.xlu0 %v8574, 32
      %v8612 = vpop.permute.xlu0 %8611
      %8613 = vrot.lane.b32.xlu0 %v8575, 32
      %v8614 = vpop.permute.xlu0 %8613
      %8615 = vrot.lane.b32.xlu0 %v8576, 32
      %v8616 = vpop.permute.xlu0 %8615
      %8617 = vrot.lane.b32.xlu0 %v8577, 32
      %v8618 = vpop.permute.xlu0 %8617
      %8619 = vrot.lane.b32.xlu0 %v8578, 32
      %v8620 = vpop.permute.xlu0 %8619
      %8621 = vrot.lane.b32.xlu0 %v8579, 32
      %v8622 = vpop.permute.xlu0 %8621
      %8623 = vrot.lane.b32.xlu0 %v8580, 32
      %v8624 = vpop.permute.xlu0 %8623
      %8625 = vrot.lane.b32.xlu0 %v8581, 32
      %v8626 = vpop.permute.xlu0 %8625
      %8627 = vrot.lane.b32.xlu0 %v8582, 32
      %v8628 = vpop.permute.xlu0 %8627
      %8629 = vrot.lane.b32.xlu0 %v8583, 32
      %v8630 = vpop.permute.xlu0 %8629
      %8631 = vrot.lane.b32.xlu0 %v8584, 32
      %v8632 = vpop.permute.xlu0 %8631
      %8649 = vst.msk [vmem:[#allocation3 + $0x10] sm:$0xff] %vm1308, %v8602
      %8650 = vst.msk [vmem:[#allocation3 + $0x18] sm:$0xff] %vm1308, %v8604
      %8651 = vst.msk [vmem:[#allocation3 + $0x20] sm:$0xff] %vm1308, %v8606
      %8652 = vst.msk [vmem:[#allocation3 + $0x28] sm:$0xff] %vm1308, %v8608
      %8653 = vst.msk [vmem:[#allocation3 + $0x30] sm:$0xff] %vm1308, %v8610
      %8654 = vst.msk [vmem:[#allocation3 + $0x38] sm:$0xff] %vm1308, %v8612
      %8655 = vst.msk [vmem:[#allocation3 + $0x40] sm:$0xff] %vm1308, %v8614
      %8656 = vst.msk [vmem:[#allocation3 + $0x48] sm:$0xff] %vm1308, %v8616
      %8657 = vst.msk [vmem:[#allocation3 + $0x50] sm:$0xff] %vm1308, %v8618
      %8658 = vst.msk [vmem:[#allocation3 + $0x58] sm:$0xff] %vm1308, %v8620
      %8659 = vst.msk [vmem:[#allocation3 + $0x60] sm:$0xff] %vm1308, %v8622
      %8660 = vst.msk [vmem:[#allocation3 + $0x68] sm:$0xff] %vm1308, %v8624
      %8661 = vst.msk [vmem:[#allocation3 + $0x70] sm:$0xff] %vm1308, %v8626
      %8662 = vst.msk [vmem:[#allocation3 + $0x78] sm:$0xff] %vm1308, %v8628
      %8663 = vst.msk [vmem:[#allocation3 + $0x80] sm:$0xff] %vm1308, %v8630
      %8664 = vst.msk [vmem:[#allocation3 + $0x88] sm:$0xff] %vm1308, %v8632
      %8665 = vst.msk [vmem:[#allocation3 + $0x11] sm:$0xff] %vm1333, %v8569
      %8666 = vst.msk [vmem:[#allocation3 + $0x19] sm:$0xff] %vm1333, %v8570
      %8667 = vst.msk [vmem:[#allocation3 + $0x21] sm:$0xff] %vm1333, %v8571
      %8668 = vst.msk [vmem:[#allocation3 + $0x29] sm:$0xff] %vm1333, %v8572
      %8669 = vst.msk [vmem:[#allocation3 + $0x31] sm:$0xff] %vm1333, %v8573
      %8670 = vst.msk [vmem:[#allocation3 + $0x39] sm:$0xff] %vm1333, %v8574
      %8671 = vst.msk [vmem:[#allocation3 + $0x41] sm:$0xff] %vm1333, %v8575
      %8672 = vst.msk [vmem:[#allocation3 + $0x49] sm:$0xff] %vm1333, %v8576
      %8673 = vst.msk [vmem:[#allocation3 + $0x51] sm:$0xff] %vm1333, %v8577
      %8674 = vst.msk [vmem:[#allocation3 + $0x59] sm:$0xff] %vm1333, %v8578
      %8675 = vst.msk [vmem:[#allocation3 + $0x61] sm:$0xff] %vm1333, %v8579
      %8676 = vst.msk [vmem:[#allocation3 + $0x69] sm:$0xff] %vm1333, %v8580
      %8677 = vst.msk [vmem:[#allocation3 + $0x71] sm:$0xff] %vm1333, %v8581
      %8678 = vst.msk [vmem:[#allocation3 + $0x79] sm:$0xff] %vm1333, %v8582
      %8679 = vst.msk [vmem:[#allocation3 + $0x81] sm:$0xff] %vm1333, %v8583
      %8680 = vst.msk [vmem:[#allocation3 + $0x89] sm:$0xff] %vm1333, %v8584
      %8681 = vrot.lane.b32.xlu0 %v8569, 64
      %v8682 = vpop.permute.xlu0 %8681
      %8683 = vrot.lane.b32.xlu0 %v8570, 64
      %v8684 = vpop.permute.xlu0 %8683
      %8685 = vrot.lane.b32.xlu0 %v8571, 64
      %v8686 = vpop.permute.xlu0 %8685
      %8687 = vrot.lane.b32.xlu0 %v8572, 64
      %v8688 = vpop.permute.xlu0 %8687
      %8689 = vrot.lane.b32.xlu0 %v8573, 64
      %v8690 = vpop.permute.xlu0 %8689
      %8691 = vrot.lane.b32.xlu0 %v8574, 64
      %v8692 = vpop.permute.xlu0 %8691
      %8693 = vrot.lane.b32.xlu0 %v8575, 64
      %v8694 = vpop.permute.xlu0 %8693
      %8695 = vrot.lane.b32.xlu0 %v8576, 64
      %v8696 = vpop.permute.xlu0 %8695
      %8697 = vrot.lane.b32.xlu0 %v8577, 64
      %v8698 = vpop.permute.xlu0 %8697
      %8699 = vrot.lane.b32.xlu0 %v8578, 64
      %v8700 = vpop.permute.xlu0 %8699
      %8701 = vrot.lane.b32.xlu0 %v8579, 64
      %v8702 = vpop.permute.xlu0 %8701
      %8703 = vrot.lane.b32.xlu0 %v8580, 64
      %v8704 = vpop.permute.xlu0 %8703
      %8705 = vrot.lane.b32.xlu0 %v8581, 64
      %v8706 = vpop.permute.xlu0 %8705
      %8707 = vrot.lane.b32.xlu0 %v8582, 64
      %v8708 = vpop.permute.xlu0 %8707
      %8709 = vrot.lane.b32.xlu0 %v8583, 64
      %v8710 = vpop.permute.xlu0 %8709
      %8711 = vrot.lane.b32.xlu0 %v8584, 64
      %v8712 = vpop.permute.xlu0 %8711
      %8729 = vst.msk [vmem:[#allocation3 + $0xf] sm:$0xff] %vm1430, %v8682
      %8730 = vst.msk [vmem:[#allocation3 + $0x17] sm:$0xff] %vm1430, %v8684
      %8731 = vst.msk [vmem:[#allocation3 + $0x1f] sm:$0xff] %vm1430, %v8686
      %8732 = vst.msk [vmem:[#allocation3 + $0x27] sm:$0xff] %vm1430, %v8688
      %8733 = vst.msk [vmem:[#allocation3 + $0x2f] sm:$0xff] %vm1430, %v8690
      %8734 = vst.msk [vmem:[#allocation3 + $0x37] sm:$0xff] %vm1430, %v8692
      %8735 = vst.msk [vmem:[#allocation3 + $0x3f] sm:$0xff] %vm1430, %v8694
      %8736 = vst.msk [vmem:[#allocation3 + $0x47] sm:$0xff] %vm1430, %v8696
      %8737 = vst.msk [vmem:[#allocation3 + $0x4f] sm:$0xff] %vm1430, %v8698
      %8738 = vst.msk [vmem:[#allocation3 + $0x57] sm:$0xff] %vm1430, %v8700
      %8739 = vst.msk [vmem:[#allocation3 + $0x5f] sm:$0xff] %vm1430, %v8702
      %8740 = vst.msk [vmem:[#allocation3 + $0x67] sm:$0xff] %vm1430, %v8704
      %8741 = vst.msk [vmem:[#allocation3 + $0x6f] sm:$0xff] %vm1430, %v8706
      %8742 = vst.msk [vmem:[#allocation3 + $0x77] sm:$0xff] %vm1430, %v8708
      %8743 = vst.msk [vmem:[#allocation3 + $0x7f] sm:$0xff] %vm1430, %v8710
      %8744 = vst.msk [vmem:[#allocation3 + $0x87] sm:$0xff] %vm1430, %v8712
      %8745 = vst [vmem:[#allocation2] sm:$0xff] 0.0
      %8746 = vst [vmem:[#allocation2 + $0x8] sm:$0xff] 0.0
      %8747 = vst [vmem:[#allocation2 + $0x10] sm:$0xff] 0.0
      %8748 = vst [vmem:[#allocation2 + $0x18] sm:$0xff] 0.0
      %8749 = vst [vmem:[#allocation2 + $0x20] sm:$0xff] 0.0
      %8750 = vst [vmem:[#allocation2 + $0x28] sm:$0xff] 0.0
      %v8751 = vld [vmem:[%s2 + $0x4] sm:$0x1]
      %v8752 = vlaneseq
      %v8753 = vshrl.u32 %v8752, 7
      %v8754 = vsub.s32 0, %v8753
      %v8755 = vrot.slane %v8751, %v8754
      %v8756 = vld [vmem:[%s5121] ss:$2 sm:$0xf]
      %v8757 = vpack.c.bf16 %v8756, %v8756
      %v8758 = vld [vmem:[%s1 + $0x300] sm:$0xf]
      %v8759 = vld [vmem:[%s1 + $0x304] sm:$0xf]
      %v8760 = vld [vmem:[%s1 + $0x308] sm:$0xf]
      %v8761 = vld [vmem:[%s1 + $0x30c] sm:$0xf]
      %v8762 = vld [vmem:[%s1 + $0x310] sm:$0xf]
      %v8763 = vld [vmem:[%s1 + $0x314] sm:$0xf]
      %v8764 = vld [vmem:[%s1 + $0x318] sm:$0xf]
      %v8765 = vld [vmem:[%s1 + $0x31c] sm:$0xf]
      %v8766 = vld [vmem:[%s1 + $0x320] sm:$0xf]
      %v8767 = vld [vmem:[%s1 + $0x324] sm:$0xf]
      %v8768 = vld [vmem:[%s1 + $0x328] sm:$0xf]
      %v8769 = vld [vmem:[%s1 + $0x32c] sm:$0xf]
      %v8770 = vld [vmem:[%s1 + $0x330] sm:$0xf]
      %v8771 = vld [vmem:[%s1 + $0x334] sm:$0xf]
      %v8772 = vld [vmem:[%s1 + $0x338] sm:$0xf]
      %v8773 = vld [vmem:[%s1 + $0x33c] sm:$0xf]
      %s8774 = scalar_lea.vmem [#allocation3], 17
      %v8775 = vld [vmem:[%s8774] ss:$2 sm:$0xf]
      %v8776 = vpack.c.bf16 %v8775, %v8775
      %v8777 = vld [vmem:[%s1 + $0x340] sm:$0xf]
      %v8778 = vld [vmem:[%s1 + $0x344] sm:$0xf]
      %v8779 = vld [vmem:[%s1 + $0x348] sm:$0xf]
      %v8780 = vld [vmem:[%s1 + $0x34c] sm:$0xf]
      %v8781 = vld [vmem:[%s1 + $0x350] sm:$0xf]
      %v8782 = vld [vmem:[%s1 + $0x354] sm:$0xf]
      %v8783 = vld [vmem:[%s1 + $0x358] sm:$0xf]
      %v8784 = vld [vmem:[%s1 + $0x35c] sm:$0xf]
      %v8785 = vld [vmem:[%s1 + $0x360] sm:$0xf]
      %v8786 = vld [vmem:[%s1 + $0x364] sm:$0xf]
      %v8787 = vld [vmem:[%s1 + $0x368] sm:$0xf]
      %v8788 = vld [vmem:[%s1 + $0x36c] sm:$0xf]
      %v8789 = vld [vmem:[%s1 + $0x370] sm:$0xf]
      %v8790 = vld [vmem:[%s1 + $0x374] sm:$0xf]
      %v8791 = vld [vmem:[%s1 + $0x378] sm:$0xf]
      %v8792 = vld [vmem:[%s1 + $0x37c] sm:$0xf]
      %v8809 = vunpack.c.l.b16 %v8777
      %v8810 = vunpack.c.l.b16 %v8778
      %v8811 = vunpack.c.l.b16 %v8779
      %v8812 = vunpack.c.l.b16 %v8780
      %v8813 = vunpack.c.l.b16 %v8781
      %v8814 = vunpack.c.l.b16 %v8782
      %v8815 = vunpack.c.l.b16 %v8783
      %v8816 = vunpack.c.l.b16 %v8784
      %v8817 = vunpack.c.l.b16 %v8785
      %v8818 = vunpack.c.l.b16 %v8786
      %v8819 = vunpack.c.l.b16 %v8787
      %v8820 = vunpack.c.l.b16 %v8788
      %v8821 = vunpack.c.l.b16 %v8789
      %v8822 = vunpack.c.l.b16 %v8790
      %v8823 = vunpack.c.l.b16 %v8791
      %v8824 = vunpack.c.l.b16 %v8792
      %v8825 = vpack.c.b16 %v8810, %v8809
      %v8826 = vpack.c.b16 %v8812, %v8811
      %v8827 = vpack.c.b16 %v8814, %v8813
      %v8828 = vpack.c.b16 %v8816, %v8815
      %v8829 = vpack.c.b16 %v8818, %v8817
      %v8830 = vpack.c.b16 %v8820, %v8819
      %v8831 = vpack.c.b16 %v8822, %v8821
      %v8832 = vpack.c.b16 %v8824, %v8823
      %8841 = vmatprep.subr.bf16.mxu0 0
      %8842 = vmatpush1.bf16.msra.mxu0 %v8825
      %8843 = vmatprep.subr.bf16.mxu0 0
      %8844 = vmatpush1.bf16.msra.mxu0 %v8826
      %8845 = vmatprep.subr.bf16.mxu0 0
      %8846 = vmatpush1.bf16.msra.mxu0 %v8827
      %8847 = vmatprep.subr.bf16.mxu0 0
      %8848 = vmatpush1.bf16.msra.mxu0 %v8828
      %8849 = vmatprep.subr.bf16.mxu0 0
      %8850 = vmatpush1.bf16.msra.mxu0 %v8829
      %8851 = vmatprep.subr.bf16.mxu0 0
      %8852 = vmatpush1.bf16.msra.mxu0 %v8830
      %8853 = vmatprep.subr.bf16.mxu0 0
      %8854 = vmatpush1.bf16.msra.mxu0 %v8831
      %8855 = vmatprep.subr.bf16.mxu0 0
      %8856 = vmatpush1.bf16.msra.mxu0 %v8832
      %8857 = vmatprep.subr.bf16.mxu0 0
      %8858 = vmatpush1.bf16.msra.mxu0 0
      %8859 = vmatprep.subr.bf16.mxu0 0
      %8860 = vmatpush1.bf16.msra.mxu0 0
      %8861 = vmatprep.subr.bf16.mxu0 0
      %8862 = vmatpush1.bf16.msra.mxu0 0
      %8863 = vmatprep.subr.bf16.mxu0 0
      %8864 = vmatpush1.bf16.msra.mxu0 0
      %8865 = vmatprep.subr.bf16.mxu0 0
      %8866 = vmatpush1.bf16.msra.mxu0 0
      %8867 = vmatprep.subr.bf16.mxu0 0
      %8868 = vmatpush1.bf16.msra.mxu0 0
      %8869 = vmatprep.subr.bf16.mxu0 0
      %8870 = vmatpush1.bf16.msra.mxu0 0
      %8871 = vmatprep.subr.bf16.mxu0 0
      %8872 = vmatpush1.bf16.msra.mxu0 0
      %8873 = vmatprep.mubr.bf16.mxu0 0
      %8874 = vmatmul.mubr.bf16.gmra.mrb[0].mxu0 %v8776
      %v8875 = vpop.f32.mrb[0].mxu0
      %v8876 = vadd.f32 0.0, %v8875
      %v8877 = vpop.f32.mrb[0].mxu0
      %v8878 = vpop.f32.mrb[0].mxu0
      %v8879 = vpop.f32.mrb[0].mxu0
      %8880 = vdwg.mxu0
      %v8897 = vunpack.c.l.b16 %v8758
      %v8898 = vunpack.c.l.b16 %v8759
      %v8899 = vunpack.c.l.b16 %v8760
      %v8900 = vunpack.c.l.b16 %v8761
      %v8901 = vunpack.c.l.b16 %v8762
      %v8902 = vunpack.c.l.b16 %v8763
      %v8903 = vunpack.c.l.b16 %v8764
      %v8904 = vunpack.c.l.b16 %v8765
      %v8905 = vunpack.c.l.b16 %v8766
      %v8906 = vunpack.c.l.b16 %v8767
      %v8907 = vunpack.c.l.b16 %v8768
      %v8908 = vunpack.c.l.b16 %v8769
      %v8909 = vunpack.c.l.b16 %v8770
      %v8910 = vunpack.c.l.b16 %v8771
      %v8911 = vunpack.c.l.b16 %v8772
      %v8912 = vunpack.c.l.b16 %v8773
      %v8913 = vpack.c.b16 %v8898, %v8897
      %v8914 = vpack.c.b16 %v8900, %v8899
      %v8915 = vpack.c.b16 %v8902, %v8901
      %v8916 = vpack.c.b16 %v8904, %v8903
      %v8917 = vpack.c.b16 %v8906, %v8905
      %v8918 = vpack.c.b16 %v8908, %v8907
      %v8919 = vpack.c.b16 %v8910, %v8909
      %v8920 = vpack.c.b16 %v8912, %v8911
      %8929 = vmatprep.subr.bf16.mxu0 0
      %8930 = vmatpush1.bf16.msra.mxu0 %v8913
      %8931 = vmatprep.subr.bf16.mxu0 0
      %8932 = vmatpush1.bf16.msra.mxu0 %v8914
      %8933 = vmatprep.subr.bf16.mxu0 0
      %8934 = vmatpush1.bf16.msra.mxu0 %v8915
      %8935 = vmatprep.subr.bf16.mxu0 0
      %8936 = vmatpush1.bf16.msra.mxu0 %v8916
      %8937 = vmatprep.subr.bf16.mxu0 0
      %8938 = vmatpush1.bf16.msra.mxu0 %v8917
      %8939 = vmatprep.subr.bf16.mxu0 0
      %8940 = vmatpush1.bf16.msra.mxu0 %v8918
      %8941 = vmatprep.subr.bf16.mxu0 0
      %8942 = vmatpush1.bf16.msra.mxu0 %v8919
      %8943 = vmatprep.subr.bf16.mxu0 0
      %8944 = vmatpush1.bf16.msra.mxu0 %v8920
      %8945 = vmatprep.subr.bf16.mxu0 0
      %8946 = vmatpush1.bf16.msra.mxu0 0
      %8947 = vmatprep.subr.bf16.mxu0 0
      %8948 = vmatpush1.bf16.msra.mxu0 0
      %8949 = vmatprep.subr.bf16.mxu0 0
      %8950 = vmatpush1.bf16.msra.mxu0 0
      %8951 = vmatprep.subr.bf16.mxu0 0
      %8952 = vmatpush1.bf16.msra.mxu0 0
      %8953 = vmatprep.subr.bf16.mxu0 0
      %8954 = vmatpush1.bf16.msra.mxu0 0
      %8955 = vmatprep.subr.bf16.mxu0 0
      %8956 = vmatpush1.bf16.msra.mxu0 0
      %8957 = vmatprep.subr.bf16.mxu0 0
      %8958 = vmatpush1.bf16.msra.mxu0 0
      %8959 = vmatprep.subr.bf16.mxu0 0
      %8960 = vmatpush1.bf16.msra.mxu0 0
      %8961 = vmatprep.mubr.bf16.mxu0 0
      %8962 = vmatmul.mubr.bf16.gmra.mrb[0].mxu0 %v8757
      %v8963 = vpop.f32.mrb[0].mxu0
      %v8964 = vadd.f32 %v8876, %v8963
      %v8965 = vpop.f32.mrb[0].mxu0
      %v8966 = vpop.f32.mrb[0].mxu0
      %v8967 = vpop.f32.mrb[0].mxu0
      %8968 = vdwg.mxu0
      %s8969 = scalar_lea.vmem [#allocation3], 33
      %v8970 = vld [vmem:[%s8969] ss:$2 sm:$0xf]
      %v8971 = vpack.c.bf16 %v8970, %v8970
      %v8972 = vld [vmem:[%s1 + $0x380] sm:$0xf]
      %v8973 = vld [vmem:[%s1 + $0x384] sm:$0xf]
      %v8974 = vld [vmem:[%s1 + $0x388] sm:$0xf]
      %v8975 = vld [vmem:[%s1 + $0x38c] sm:$0xf]
      %v8976 = vld [vmem:[%s1 + $0x390] sm:$0xf]
      %v8977 = vld [vmem:[%s1 + $0x394] sm:$0xf]
      %v8978 = vld [vmem:[%s1 + $0x398] sm:$0xf]
      %v8979 = vld [vmem:[%s1 + $0x39c] sm:$0xf]
      %v8980 = vld [vmem:[%s1 + $0x3a0] sm:$0xf]
      %v8981 = vld [vmem:[%s1 + $0x3a4] sm:$0xf]
      %v8982 = vld [vmem:[%s1 + $0x3a8] sm:$0xf]
      %v8983 = vld [vmem:[%s1 + $0x3ac] sm:$0xf]
      %v8984 = vld [vmem:[%s1 + $0x3b0] sm:$0xf]
      %v8985 = vld [vmem:[%s1 + $0x3b4] sm:$0xf]
      %v8986 = vld [vmem:[%s1 + $0x3b8] sm:$0xf]
      %v8987 = vld [vmem:[%s1 + $0x3bc] sm:$0xf]
      %v9004 = vunpack.c.l.b16 %v8972
      %v9005 = vunpack.c.l.b16 %v8973
      %v9006 = vunpack.c.l.b16 %v8974
      %v9007 = vunpack.c.l.b16 %v8975
      %v9008 = vunpack.c.l.b16 %v8976
      %v9009 = vunpack.c.l.b16 %v8977
      %v9010 = vunpack.c.l.b16 %v8978
      %v9011 = vunpack.c.l.b16 %v8979
      %v9012 = vunpack.c.l.b16 %v8980
      %v9013 = vunpack.c.l.b16 %v8981
      %v9014 = vunpack.c.l.b16 %v8982
      %v9015 = vunpack.c.l.b16 %v8983
      %v9016 = vunpack.c.l.b16 %v8984
      %v9017 = vunpack.c.l.b16 %v8985
      %v9018 = vunpack.c.l.b16 %v8986
      %v9019 = vunpack.c.l.b16 %v8987
      %v9020 = vpack.c.b16 %v9005, %v9004
      %v9021 = vpack.c.b16 %v9007, %v9006
      %v9022 = vpack.c.b16 %v9009, %v9008
      %v9023 = vpack.c.b16 %v9011, %v9010
      %v9024 = vpack.c.b16 %v9013, %v9012
      %v9025 = vpack.c.b16 %v9015, %v9014
      %v9026 = vpack.c.b16 %v9017, %v9016
      %v9027 = vpack.c.b16 %v9019, %v9018
      %9036 = vmatprep.subr.bf16.mxu0 0
      %9037 = vmatpush1.bf16.msra.mxu0 %v9020
      %9038 = vmatprep.subr.bf16.mxu0 0
      %9039 = vmatpush1.bf16.msra.mxu0 %v9021
      %9040 = vmatprep.subr.bf16.mxu0 0
      %9041 = vmatpush1.bf16.msra.mxu0 %v9022
      %9042 = vmatprep.subr.bf16.mxu0 0
      %9043 = vmatpush1.bf16.msra.mxu0 %v9023
      %9044 = vmatprep.subr.bf16.mxu0 0
      %9045 = vmatpush1.bf16.msra.mxu0 %v9024
      %9046 = vmatprep.subr.bf16.mxu0 0
      %9047 = vmatpush1.bf16.msra.mxu0 %v9025
      %9048 = vmatprep.subr.bf16.mxu0 0
      %9049 = vmatpush1.bf16.msra.mxu0 %v9026
      %9050 = vmatprep.subr.bf16.mxu0 0
      %9051 = vmatpush1.bf16.msra.mxu0 %v9027
      %9052 = vmatprep.subr.bf16.mxu0 0
      %9053 = vmatpush1.bf16.msra.mxu0 0
      %9054 = vmatprep.subr.bf16.mxu0 0
      %9055 = vmatpush1.bf16.msra.mxu0 0
      %9056 = vmatprep.subr.bf16.mxu0 0
      %9057 = vmatpush1.bf16.msra.mxu0 0
      %9058 = vmatprep.subr.bf16.mxu0 0
      %9059 = vmatpush1.bf16.msra.mxu0 0
      %9060 = vmatprep.subr.bf16.mxu0 0
      %9061 = vmatpush1.bf16.msra.mxu0 0
      %9062 = vmatprep.subr.bf16.mxu0 0
      %9063 = vmatpush1.bf16.msra.mxu0 0
      %9064 = vmatprep.subr.bf16.mxu0 0
      %9065 = vmatpush1.bf16.msra.mxu0 0
      %9066 = vmatprep.subr.bf16.mxu0 0
      %9067 = vmatpush1.bf16.msra.mxu0 0
      %9068 = vmatprep.mubr.bf16.mxu0 0
      %9069 = vmatmul.mubr.bf16.gmra.mrb[0].mxu0 %v8971
      %v9070 = vpop.f32.mrb[0].mxu0
      %v9071 = vadd.f32 0.0, %v9070
      %v9072 = vpop.f32.mrb[0].mxu0
      %v9073 = vpop.f32.mrb[0].mxu0
      %v9074 = vpop.f32.mrb[0].mxu0
      %9075 = vdwg.mxu0
      %v9076 = vadd.f32 %v8964, %v9071
      %v9077 = vadd.f32 %v9076, %v8755
      %v9078 = vxor.u32 %v9077, 2147483648
      %v9079 = vmul.f32 %v9078, 1.442695
      %v9080 = vpow.pop %v9079
      %v9081 = vadd.f32 %v9080, 1.0
      %v9082 = vrcp.pop %v9081
      %v9083 = vmul.f32 1.0, %v9082
      %v9084 = vmul.f32 %v9077, %v9083
      %9086 = vrot.lane.b32.xlu0 %v9084, 32
      %v9087 = vpop.permute.xlu0 %9086
      %vm9089 = vcmask 519424
      %9090 = vst.msk [vmem:[#allocation2 + $0x9] sm:$0xf] %vm9089, %v9087
      %vm9091 = vcmask 257024
      %9092 = vst.msk [vmem:[#allocation2 + $0xa] sm:$0xf] %vm9091, %v9084
      %9093 = vrot.lane.b32.xlu0 %v9084, 64
      %v9094 = vpop.permute.xlu0 %9093
      %vm9096 = vcmask 781824
      %9097 = vst.msk [vmem:[#allocation2 + $0x8] sm:$0xf] %vm9096, %v9094
      %v9098 = vld [vmem:[%s8969] ss:$2 sm:$0xf]
      %v9099 = vpack.c.bf16 %v9098, %v9098
      %v9100 = vld [vmem:[%s1 + $0x300] sm:$0xf]
      %v9101 = vld [vmem:[%s1 + $0x304] sm:$0xf]
      %v9102 = vld [vmem:[%s1 + $0x308] sm:$0xf]
      %v9103 = vld [vmem:[%s1 + $0x30c] sm:$0xf]
      %v9104 = vld [vmem:[%s1 + $0x310] sm:$0xf]
      %v9105 = vld [vmem:[%s1 + $0x314] sm:$0xf]
      %v9106 = vld [vmem:[%s1 + $0x318] sm:$0xf]
      %v9107 = vld [vmem:[%s1 + $0x31c] sm:$0xf]
      %v9108 = vld [vmem:[%s1 + $0x320] sm:$0xf]
      %v9109 = vld [vmem:[%s1 + $0x324] sm:$0xf]
      %v9110 = vld [vmem:[%s1 + $0x328] sm:$0xf]
      %v9111 = vld [vmem:[%s1 + $0x32c] sm:$0xf]
      %v9112 = vld [vmem:[%s1 + $0x330] sm:$0xf]
      %v9113 = vld [vmem:[%s1 + $0x334] sm:$0xf]
      %v9114 = vld [vmem:[%s1 + $0x338] sm:$0xf]
      %v9115 = vld [vmem:[%s1 + $0x33c] sm:$0xf]
      %v9116 = vld [vmem:[%s5335] ss:$2 sm:$0xf]
      %v9117 = vpack.c.bf16 %v9116, %v9116
      %v9118 = vld [vmem:[%s1 + $0x340] sm:$0xf]
      %v9119 = vld [vmem:[%s1 + $0x344] sm:$0xf]
      %v9120 = vld [vmem:[%s1 + $0x348] sm:$0xf]
      %v9121 = vld [vmem:[%s1 + $0x34c] sm:$0xf]
      %v9122 = vld [vmem:[%s1 + $0x350] sm:$0xf]
      %v9123 = vld [vmem:[%s1 + $0x354] sm:$0xf]
      %v9124 = vld [vmem:[%s1 + $0x358] sm:$0xf]
      %v9125 = vld [vmem:[%s1 + $0x35c] sm:$0xf]
      %v9126 = vld [vmem:[%s1 + $0x360] sm:$0xf]
      %v9127 = vld [vmem:[%s1 + $0x364] sm:$0xf]
      %v9128 = vld [vmem:[%s1 + $0x368] sm:$0xf]
      %v9129 = vld [vmem:[%s1 + $0x36c] sm:$0xf]
      %v9130 = vld [vmem:[%s1 + $0x370] sm:$0xf]
      %v9131 = vld [vmem:[%s1 + $0x374] sm:$0xf]
      %v9132 = vld [vmem:[%s1 + $0x378] sm:$0xf]
      %v9133 = vld [vmem:[%s1 + $0x37c] sm:$0xf]
      %v9150 = vunpack.c.l.b16 %v9118
      %v9151 = vunpack.c.l.b16 %v9119
      %v9152 = vunpack.c.l.b16 %v9120
      %v9153 = vunpack.c.l.b16 %v9121
      %v9154 = vunpack.c.l.b16 %v9122
      %v9155 = vunpack.c.l.b16 %v9123
      %v9156 = vunpack.c.l.b16 %v9124
      %v9157 = vunpack.c.l.b16 %v9125
      %v9158 = vunpack.c.l.b16 %v9126
      %v9159 = vunpack.c.l.b16 %v9127
      %v9160 = vunpack.c.l.b16 %v9128
      %v9161 = vunpack.c.l.b16 %v9129
      %v9162 = vunpack.c.l.b16 %v9130
      %v9163 = vunpack.c.l.b16 %v9131
      %v9164 = vunpack.c.l.b16 %v9132
      %v9165 = vunpack.c.l.b16 %v9133
      %v9166 = vpack.c.b16 %v9151, %v9150
      %v9167 = vpack.c.b16 %v9153, %v9152
      %v9168 = vpack.c.b16 %v9155, %v9154
      %v9169 = vpack.c.b16 %v9157, %v9156
      %v9170 = vpack.c.b16 %v9159, %v9158
      %v9171 = vpack.c.b16 %v9161, %v9160
      %v9172 = vpack.c.b16 %v9163, %v9162
      %v9173 = vpack.c.b16 %v9165, %v9164
      %9182 = vmatprep.subr.bf16.mxu0 0
      %9183 = vmatpush1.bf16.msra.mxu0 %v9166
      %9184 = vmatprep.subr.bf16.mxu0 0
      %9185 = vmatpush1.bf16.msra.mxu0 %v9167
      %9186 = vmatprep.subr.bf16.mxu0 0
      %9187 = vmatpush1.bf16.msra.mxu0 %v9168
      %9188 = vmatprep.subr.bf16.mxu0 0
      %9189 = vmatpush1.bf16.msra.mxu0 %v9169
      %9190 = vmatprep.subr.bf16.mxu0 0
      %9191 = vmatpush1.bf16.msra.mxu0 %v9170
      %9192 = vmatprep.subr.bf16.mxu0 0
      %9193 = vmatpush1.bf16.msra.mxu0 %v9171
      %9194 = vmatprep.subr.bf16.mxu0 0
      %9195 = vmatpush1.bf16.msra.mxu0 %v9172
      %9196 = vmatprep.subr.bf16.mxu0 0
      %9197 = vmatpush1.bf16.msra.mxu0 %v9173
      %9198 = vmatprep.subr.bf16.mxu0 0
      %9199 = vmatpush1.bf16.msra.mxu0 0
      %9200 = vmatprep.subr.bf16.mxu0 0
      %9201 = vmatpush1.bf16.msra.mxu0 0
      %9202 = vmatprep.subr.bf16.mxu0 0
      %9203 = vmatpush1.bf16.msra.mxu0 0
      %9204 = vmatprep.subr.bf16.mxu0 0
      %9205 = vmatpush1.bf16.msra.mxu0 0
      %9206 = vmatprep.subr.bf16.mxu0 0
      %9207 = vmatpush1.bf16.msra.mxu0 0
      %9208 = vmatprep.subr.bf16.mxu0 0
      %9209 = vmatpush1.bf16.msra.mxu0 0
      %9210 = vmatprep.subr.bf16.mxu0 0
      %9211 = vmatpush1.bf16.msra.mxu0 0
      %9212 = vmatprep.subr.bf16.mxu0 0
      %9213 = vmatpush1.bf16.msra.mxu0 0
      %9214 = vmatprep.mubr.bf16.mxu0 0
      %9215 = vmatmul.mubr.bf16.gmra.mrb[0].mxu0 %v9117
      %v9216 = vpop.f32.mrb[0].mxu0
      %v9217 = vadd.f32 0.0, %v9216
      %v9218 = vpop.f32.mrb[0].mxu0
      %v9219 = vpop.f32.mrb[0].mxu0
      %v9220 = vpop.f32.mrb[0].mxu0
      %9221 = vdwg.mxu0
      %v9238 = vunpack.c.l.b16 %v9100
      %v9239 = vunpack.c.l.b16 %v9101
      %v9240 = vunpack.c.l.b16 %v9102
      %v9241 = vunpack.c.l.b16 %v9103
      %v9242 = vunpack.c.l.b16 %v9104
      %v9243 = vunpack.c.l.b16 %v9105
      %v9244 = vunpack.c.l.b16 %v9106
      %v9245 = vunpack.c.l.b16 %v9107
      %v9246 = vunpack.c.l.b16 %v9108
      %v9247 = vunpack.c.l.b16 %v9109
      %v9248 = vunpack.c.l.b16 %v9110
      %v9249 = vunpack.c.l.b16 %v9111
      %v9250 = vunpack.c.l.b16 %v9112
      %v9251 = vunpack.c.l.b16 %v9113
      %v9252 = vunpack.c.l.b16 %v9114
      %v9253 = vunpack.c.l.b16 %v9115
      %v9254 = vpack.c.b16 %v9239, %v9238
      %v9255 = vpack.c.b16 %v9241, %v9240
      %v9256 = vpack.c.b16 %v9243, %v9242
      %v9257 = vpack.c.b16 %v9245, %v9244
      %v9258 = vpack.c.b16 %v9247, %v9246
      %v9259 = vpack.c.b16 %v9249, %v9248
      %v9260 = vpack.c.b16 %v9251, %v9250
      %v9261 = vpack.c.b16 %v9253, %v9252
      %9270 = vmatprep.subr.bf16.mxu0 0
      %9271 = vmatpush1.bf16.msra.mxu0 %v9254
      %9272 = vmatprep.subr.bf16.mxu0 0
      %9273 = vmatpush1.bf16.msra.mxu0 %v9255
      %9274 = vmatprep.subr.bf16.mxu0 0
      %9275 = vmatpush1.bf16.msra.mxu0 %v9256
      %9276 = vmatprep.subr.bf16.mxu0 0
      %9277 = vmatpush1.bf16.msra.mxu0 %v9257
      %9278 = vmatprep.subr.bf16.mxu0 0
      %9279 = vmatpush1.bf16.msra.mxu0 %v9258
      %9280 = vmatprep.subr.bf16.mxu0 0
      %9281 = vmatpush1.bf16.msra.mxu0 %v9259
      %9282 = vmatprep.subr.bf16.mxu0 0
      %9283 = vmatpush1.bf16.msra.mxu0 %v9260
      %9284 = vmatprep.subr.bf16.mxu0 0
      %9285 = vmatpush1.bf16.msra.mxu0 %v9261
      %9286 = vmatprep.subr.bf16.mxu0 0
      %9287 = vmatpush1.bf16.msra.mxu0 0
      %9288 = vmatprep.subr.bf16.mxu0 0
      %9289 = vmatpush1.bf16.msra.mxu0 0
      %9290 = vmatprep.subr.bf16.mxu0 0
      %9291 = vmatpush1.bf16.msra.mxu0 0
      %9292 = vmatprep.subr.bf16.mxu0 0
      %9293 = vmatpush1.bf16.msra.mxu0 0
      %9294 = vmatprep.subr.bf16.mxu0 0
      %9295 = vmatpush1.bf16.msra.mxu0 0
      %9296 = vmatprep.subr.bf16.mxu0 0
      %9297 = vmatpush1.bf16.msra.mxu0 0
      %9298 = vmatprep.subr.bf16.mxu0 0
      %9299 = vmatpush1.bf16.msra.mxu0 0
      %9300 = vmatprep.subr.bf16.mxu0 0
      %9301 = vmatpush1.bf16.msra.mxu0 0
      %9302 = vmatprep.mubr.bf16.mxu0 0
      %9303 = vmatmul.mubr.bf16.gmra.mrb[0].mxu0 %v9099
      %v9304 = vpop.f32.mrb[0].mxu0
      %v9305 = vadd.f32 %v9217, %v9304
      %v9306 = vpop.f32.mrb[0].mxu0
      %v9307 = vpop.f32.mrb[0].mxu0
      %v9308 = vpop.f32.mrb[0].mxu0
      %9309 = vdwg.mxu0
      %s9310 = scalar_lea.vmem [#allocation3], 65
      %v9311 = vld [vmem:[%s9310] ss:$2 sm:$0xf]
      %v9312 = vpack.c.bf16 %v9311, %v9311
      %v9313 = vld [vmem:[%s1 + $0x380] sm:$0xf]
      %v9314 = vld [vmem:[%s1 + $0x384] sm:$0xf]
      %v9315 = vld [vmem:[%s1 + $0x388] sm:$0xf]
      %v9316 = vld [vmem:[%s1 + $0x38c] sm:$0xf]
      %v9317 = vld [vmem:[%s1 + $0x390] sm:$0xf]
      %v9318 = vld [vmem:[%s1 + $0x394] sm:$0xf]
      %v9319 = vld [vmem:[%s1 + $0x398] sm:$0xf]
      %v9320 = vld [vmem:[%s1 + $0x39c] sm:$0xf]
      %v9321 = vld [vmem:[%s1 + $0x3a0] sm:$0xf]
      %v9322 = vld [vmem:[%s1 + $0x3a4] sm:$0xf]
      %v9323 = vld [vmem:[%s1 + $0x3a8] sm:$0xf]
      %v9324 = vld [vmem:[%s1 + $0x3ac] sm:$0xf]
      %v9325 = vld [vmem:[%s1 + $0x3b0] sm:$0xf]
      %v9326 = vld [vmem:[%s1 + $0x3b4] sm:$0xf]
      %v9327 = vld [vmem:[%s1 + $0x3b8] sm:$0xf]
      %v9328 = vld [vmem:[%s1 + $0x3bc] sm:$0xf]
      %v9345 = vunpack.c.l.b16 %v9313
      %v9346 = vunpack.c.l.b16 %v9314
      %v9347 = vunpack.c.l.b16 %v9315
      %v9348 = vunpack.c.l.b16 %v9316
      %v9349 = vunpack.c.l.b16 %v9317
      %v9350 = vunpack.c.l.b16 %v9318
      %v9351 = vunpack.c.l.b16 %v9319
      %v9352 = vunpack.c.l.b16 %v9320
      %v9353 = vunpack.c.l.b16 %v9321
      %v9354 = vunpack.c.l.b16 %v9322
      %v9355 = vunpack.c.l.b16 %v9323
      %v9356 = vunpack.c.l.b16 %v9324
      %v9357 = vunpack.c.l.b16 %v9325
      %v9358 = vunpack.c.l.b16 %v9326
      %v9359 = vunpack.c.l.b16 %v9327
      %v9360 = vunpack.c.l.b16 %v9328
      %v9361 = vpack.c.b16 %v9346, %v9345
      %v9362 = vpack.c.b16 %v9348, %v9347
      %v9363 = vpack.c.b16 %v9350, %v9349
      %v9364 = vpack.c.b16 %v9352, %v9351
      %v9365 = vpack.c.b16 %v9354, %v9353
      %v9366 = vpack.c.b16 %v9356, %v9355
      %v9367 = vpack.c.b16 %v9358, %v9357
      %v9368 = vpack.c.b16 %v9360, %v9359
      %9377 = vmatprep.subr.bf16.mxu0 0
      %9378 = vmatpush1.bf16.msra.mxu0 %v9361
      %9379 = vmatprep.subr.bf16.mxu0 0
      %9380 = vmatpush1.bf16.msra.mxu0 %v9362
      %9381 = vmatprep.subr.bf16.mxu0 0
      %9382 = vmatpush1.bf16.msra.mxu0 %v9363
      %9383 = vmatprep.subr.bf16.mxu0 0
      %9384 = vmatpush1.bf16.msra.mxu0 %v9364
      %9385 = vmatprep.subr.bf16.mxu0 0
      %9386 = vmatpush1.bf16.msra.mxu0 %v9365
      %9387 = vmatprep.subr.bf16.mxu0 0
      %9388 = vmatpush1.bf16.msra.mxu0 %v9366
      %9389 = vmatprep.subr.bf16.mxu0 0
      %9390 = vmatpush1.bf16.msra.mxu0 %v9367
      %9391 = vmatprep.subr.bf16.mxu0 0
      %9392 = vmatpush1.bf16.msra.mxu0 %v9368
      %9393 = vmatprep.subr.bf16.mxu0 0
      %9394 = vmatpush1.bf16.msra.mxu0 0
      %9395 = vmatprep.subr.bf16.mxu0 0
      %9396 = vmatpush1.bf16.msra.mxu0 0
      %9397 = vmatprep.subr.bf16.mxu0 0
      %9398 = vmatpush1.bf16.msra.mxu0 0
      %9399 = vmatprep.subr.bf16.mxu0 0
      %9400 = vmatpush1.bf16.msra.mxu0 0
      %9401 = vmatprep.subr.bf16.mxu0 0
      %9402 = vmatpush1.bf16.msra.mxu0 0
      %9403 = vmatprep.subr.bf16.mxu0 0
      %9404 = vmatpush1.bf16.msra.mxu0 0
      %9405 = vmatprep.subr.bf16.mxu0 0
      %9406 = vmatpush1.bf16.msra.mxu0 0
      %9407 = vmatprep.subr.bf16.mxu0 0
      %9408 = vmatpush1.bf16.msra.mxu0 0
      %9409 = vmatprep.mubr.bf16.mxu0 0
      %9410 = vmatmul.mubr.bf16.gmra.mrb[0].mxu0 %v9312
      %v9411 = vpop.f32.mrb[0].mxu0
      %v9412 = vadd.f32 0.0, %v9411
      %v9413 = vpop.f32.mrb[0].mxu0
      %v9414 = vpop.f32.mrb[0].mxu0
      %v9415 = vpop.f32.mrb[0].mxu0
      %9416 = vdwg.mxu0
      %v9417 = vadd.f32 %v9305, %v9412
      %v9418 = vadd.f32 %v9417, %v8755
      %v9419 = vxor.u32 %v9418, 2147483648
      %v9420 = vmul.f32 %v9419, 1.442695
      %v9421 = vpow.pop %v9420
      %v9422 = vadd.f32 %v9421, 1.0
      %v9423 = vrcp.pop %v9422
      %v9424 = vmul.f32 1.0, %v9423
      %v9425 = vmul.f32 %v9418, %v9424
      %9427 = vrot.lane.b32.xlu0 %v9425, 32
      %v9428 = vpop.permute.xlu0 %9427
      %9430 = vst.msk [vmem:[#allocation2 + $0x11] sm:$0xf] %vm9089, %v9428
      %9431 = vst.msk [vmem:[#allocation2 + $0x12] sm:$0xf] %vm9091, %v9425
      %9432 = vrot.lane.b32.xlu0 %v9425, 64
      %v9433 = vpop.permute.xlu0 %9432
      %9435 = vst.msk [vmem:[#allocation2 + $0x10] sm:$0xf] %vm9096, %v9433
      %v9436 = vld [vmem:[%s9310] ss:$2 sm:$0xf]
      %v9437 = vpack.c.bf16 %v9436, %v9436
      %v9438 = vld [vmem:[%s1 + $0x300] sm:$0xf]
      %v9439 = vld [vmem:[%s1 + $0x304] sm:$0xf]
      %v9440 = vld [vmem:[%s1 + $0x308] sm:$0xf]
      %v9441 = vld [vmem:[%s1 + $0x30c] sm:$0xf]
      %v9442 = vld [vmem:[%s1 + $0x310] sm:$0xf]
      %v9443 = vld [vmem:[%s1 + $0x314] sm:$0xf]
      %v9444 = vld [vmem:[%s1 + $0x318] sm:$0xf]
      %v9445 = vld [vmem:[%s1 + $0x31c] sm:$0xf]
      %v9446 = vld [vmem:[%s1 + $0x320] sm:$0xf]
      %v9447 = vld [vmem:[%s1 + $0x324] sm:$0xf]
      %v9448 = vld [vmem:[%s1 + $0x328] sm:$0xf]
      %v9449 = vld [vmem:[%s1 + $0x32c] sm:$0xf]
      %v9450 = vld [vmem:[%s1 + $0x330] sm:$0xf]
      %v9451 = vld [vmem:[%s1 + $0x334] sm:$0xf]
      %v9452 = vld [vmem:[%s1 + $0x338] sm:$0xf]
      %v9453 = vld [vmem:[%s1 + $0x33c] sm:$0xf]
      %s9454 = scalar_lea.vmem [#allocation3], 81
      %v9455 = vld [vmem:[%s9454] ss:$2 sm:$0xf]
      %v9456 = vpack.c.bf16 %v9455, %v9455
      %v9457 = vld [vmem:[%s1 + $0x340] sm:$0xf]
      %v9458 = vld [vmem:[%s1 + $0x344] sm:$0xf]
      %v9459 = vld [vmem:[%s1 + $0x348] sm:$0xf]
      %v9460 = vld [vmem:[%s1 + $0x34c] sm:$0xf]
      %v9461 = vld [vmem:[%s1 + $0x350] sm:$0xf]
      %v9462 = vld [vmem:[%s1 + $0x354] sm:$0xf]
      %v9463 = vld [vmem:[%s1 + $0x358] sm:$0xf]
      %v9464 = vld [vmem:[%s1 + $0x35c] sm:$0xf]
      %v9465 = vld [vmem:[%s1 + $0x360] sm:$0xf]
      %v9466 = vld [vmem:[%s1 + $0x364] sm:$0xf]
      %v9467 = vld [vmem:[%s1 + $0x368] sm:$0xf]
      %v9468 = vld [vmem:[%s1 + $0x36c] sm:$0xf]
      %v9469 = vld [vmem:[%s1 + $0x370] sm:$0xf]
      %v9470 = vld [vmem:[%s1 + $0x374] sm:$0xf]
      %v9471 = vld [vmem:[%s1 + $0x378] sm:$0xf]
      %v9472 = vld [vmem:[%s1 + $0x37c] sm:$0xf]
      %v9489 = vunpack.c.l.b16 %v9457
      %v9490 = vunpack.c.l.b16 %v9458
      %v9491 = vunpack.c.l.b16 %v9459
      %v9492 = vunpack.c.l.b16 %v9460
      %v9493 = vunpack.c.l.b16 %v9461
      %v9494 = vunpack.c.l.b16 %v9462
      %v9495 = vunpack.c.l.b16 %v9463
      %v9496 = vunpack.c.l.b16 %v9464
      %v9497 = vunpack.c.l.b16 %v9465
      %v9498 = vunpack.c.l.b16 %v9466
      %v9499 = vunpack.c.l.b16 %v9467
      %v9500 = vunpack.c.l.b16 %v9468
      %v9501 = vunpack.c.l.b16 %v9469
      %v9502 = vunpack.c.l.b16 %v9470
      %v9503 = vunpack.c.l.b16 %v9471
      %v9504 = vunpack.c.l.b16 %v9472
      %v9505 = vpack.c.b16 %v9490, %v9489
      %v9506 = vpack.c.b16 %v9492, %v9491
      %v9507 = vpack.c.b16 %v9494, %v9493
      %v9508 = vpack.c.b16 %v9496, %v9495
      %v9509 = vpack.c.b16 %v9498, %v9497
      %v9510 = vpack.c.b16 %v9500, %v9499
      %v9511 = vpack.c.b16 %v9502, %v9501
      %v9512 = vpack.c.b16 %v9504, %v9503
      %9521 = vmatprep.subr.bf16.mxu0 0
      %9522 = vmatpush1.bf16.msra.mxu0 %v9505
      %9523 = vmatprep.subr.bf16.mxu0 0
      %9524 = vmatpush1.bf16.msra.mxu0 %v9506
      %9525 = vmatprep.subr.bf16.mxu0 0
      %9526 = vmatpush1.bf16.msra.mxu0 %v9507
      %9527 = vmatprep.subr.bf16.mxu0 0
      %9528 = vmatpush1.bf16.msra.mxu0 %v9508
      %9529 = vmatprep.subr.bf16.mxu0 0
      %9530 = vmatpush1.bf16.msra.mxu0 %v9509
      %9531 = vmatprep.subr.bf16.mxu0 0
      %9532 = vmatpush1.bf16.msra.mxu0 %v9510
      %9533 = vmatprep.subr.bf16.mxu0 0
      %9534 = vmatpush1.bf16.msra.mxu0 %v9511
      %9535 = vmatprep.subr.bf16.mxu0 0
      %9536 = vmatpush1.bf16.msra.mxu0 %v9512
      %9537 = vmatprep.subr.bf16.mxu0 0
      %9538 = vmatpush1.bf16.msra.mxu0 0
      %9539 = vmatprep.subr.bf16.mxu0 0
      %9540 = vmatpush1.bf16.msra.mxu0 0
      %9541 = vmatprep.subr.bf16.mxu0 0
      %9542 = vmatpush1.bf16.msra.mxu0 0
      %9543 = vmatprep.subr.bf16.mxu0 0
      %9544 = vmatpush1.bf16.msra.mxu0 0
      %9545 = vmatprep.subr.bf16.mxu0 0
      %9546 = vmatpush1.bf16.msra.mxu0 0
      %9547 = vmatprep.subr.bf16.mxu0 0
      %9548 = vmatpush1.bf16.msra.mxu0 0
      %9549 = vmatprep.subr.bf16.mxu0 0
      %9550 = vmatpush1.bf16.msra.mxu0 0
      %9551 = vmatprep.subr.bf16.mxu0 0
      %9552 = vmatpush1.bf16.msra.mxu0 0
      %9553 = vmatprep.mubr.bf16.mxu0 0
      %9554 = vmatmul.mubr.bf16.gmra.mrb[0].mxu0 %v9456
      %v9555 = vpop.f32.mrb[0].mxu0
      %v9556 = vadd.f32 0.0, %v9555
      %v9557 = vpop.f32.mrb[0].mxu0
      %v9558 = vpop.f32.mrb[0].mxu0
      %v9559 = vpop.f32.mrb[0].mxu0
      %9560 = vdwg.mxu0
      %v9577 = vunpack.c.l.b16 %v9438
      %v9578 = vunpack.c.l.b16 %v9439
      %v9579 = vunpack.c.l.b16 %v9440
      %v9580 = vunpack.c.l.b16 %v9441
      %v9581 = vunpack.c.l.b16 %v9442
      %v9582 = vunpack.c.l.b16 %v9443
      %v9583 = vunpack.c.l.b16 %v9444
      %v9584 = vunpack.c.l.b16 %v9445
      %v9585 = vunpack.c.l.b16 %v9446
      %v9586 = vunpack.c.l.b16 %v9447
      %v9587 = vunpack.c.l.b16 %v9448
      %v9588 = vunpack.c.l.b16 %v9449
      %v9589 = vunpack.c.l.b16 %v9450
      %v9590 = vunpack.c.l.b16 %v9451
      %v9591 = vunpack.c.l.b16 %v9452
      %v9592 = vunpack.c.l.b16 %v9453
      %v9593 = vpack.c.b16 %v9578, %v9577
      %v9594 = vpack.c.b16 %v9580, %v9579
      %v9595 = vpack.c.b16 %v9582, %v9581
      %v9596 = vpack.c.b16 %v9584, %v9583
      %v9597 = vpack.c.b16 %v9586, %v9585
      %v9598 = vpack.c.b16 %v9588, %v9587
      %v9599 = vpack.c.b16 %v9590, %v9589
      %v9600 = vpack.c.b16 %v9592, %v9591
      %9609 = vmatprep.subr.bf16.mxu0 0
      %9610 = vmatpush1.bf16.msra.mxu0 %v9593
      %9611 = vmatprep.subr.bf16.mxu0 0
      %9612 = vmatpush1.bf16.msra.mxu0 %v9594
      %9613 = vmatprep.subr.bf16.mxu0 0
      %9614 = vmatpush1.bf16.msra.mxu0 %v9595
      %9615 = vmatprep.subr.bf16.mxu0 0
      %9616 = vmatpush1.bf16.msra.mxu0 %v9596
      %9617 = vmatprep.subr.bf16.mxu0 0
      %9618 = vmatpush1.bf16.msra.mxu0 %v9597
      %9619 = vmatprep.subr.bf16.mxu0 0
      %9620 = vmatpush1.bf16.msra.mxu0 %v9598
      %9621 = vmatprep.subr.bf16.mxu0 0
      %9622 = vmatpush1.bf16.msra.mxu0 %v9599
      %9623 = vmatprep.subr.bf16.mxu0 0
      %9624 = vmatpush1.bf16.msra.mxu0 %v9600
      %9625 = vmatprep.subr.bf16.mxu0 0
      %9626 = vmatpush1.bf16.msra.mxu0 0
      %9627 = vmatprep.subr.bf16.mxu0 0
      %9628 = vmatpush1.bf16.msra.mxu0 0
      %9629 = vmatprep.subr.bf16.mxu0 0
      %9630 = vmatpush1.bf16.msra.mxu0 0
      %9631 = vmatprep.subr.bf16.mxu0 0
      %9632 = vmatpush1.bf16.msra.mxu0 0
      %9633 = vmatprep.subr.bf16.mxu0 0
      %9634 = vmatpush1.bf16.msra.mxu0 0
      %9635 = vmatprep.subr.bf16.mxu0 0
      %9636 = vmatpush1.bf16.msra.mxu0 0
      %9637 = vmatprep.subr.bf16.mxu0 0
      %9638 = vmatpush1.bf16.msra.mxu0 0
      %9639 = vmatprep.subr.bf16.mxu0 0
      %9640 = vmatpush1.bf16.msra.mxu0 0
      %9641 = vmatprep.mubr.bf16.mxu0 0
      %9642 = vmatmul.mubr.bf16.gmra.mrb[0].mxu0 %v9437
      %v9643 = vpop.f32.mrb[0].mxu0
      %v9644 = vadd.f32 %v9556, %v9643
      %v9645 = vpop.f32.mrb[0].mxu0
      %v9646 = vpop.f32.mrb[0].mxu0
      %v9647 = vpop.f32.mrb[0].mxu0
      %9648 = vdwg.mxu0
      %v9649 = vld [vmem:[%s5674] ss:$2 sm:$0xf]
      %v9650 = vpack.c.bf16 %v9649, %v9649
      %v9651 = vld [vmem:[%s1 + $0x380] sm:$0xf]
      %v9652 = vld [vmem:[%s1 + $0x384] sm:$0xf]
      %v9653 = vld [vmem:[%s1 + $0x388] sm:$0xf]
      %v9654 = vld [vmem:[%s1 + $0x38c] sm:$0xf]
      %v9655 = vld [vmem:[%s1 + $0x390] sm:$0xf]
      %v9656 = vld [vmem:[%s1 + $0x394] sm:$0xf]
      %v9657 = vld [vmem:[%s1 + $0x398] sm:$0xf]
      %v9658 = vld [vmem:[%s1 + $0x39c] sm:$0xf]
      %v9659 = vld [vmem:[%s1 + $0x3a0] sm:$0xf]
      %v9660 = vld [vmem:[%s1 + $0x3a4] sm:$0xf]
      %v9661 = vld [vmem:[%s1 + $0x3a8] sm:$0xf]
      %v9662 = vld [vmem:[%s1 + $0x3ac] sm:$0xf]
      %v9663 = vld [vmem:[%s1 + $0x3b0] sm:$0xf]
      %v9664 = vld [vmem:[%s1 + $0x3b4] sm:$0xf]
      %v9665 = vld [vmem:[%s1 + $0x3b8] sm:$0xf]
      %v9666 = vld [vmem:[%s1 + $0x3bc] sm:$0xf]
      %v9683 = vunpack.c.l.b16 %v9651
      %v9684 = vunpack.c.l.b16 %v9652
      %v9685 = vunpack.c.l.b16 %v9653
      %v9686 = vunpack.c.l.b16 %v9654
      %v9687 = vunpack.c.l.b16 %v9655
      %v9688 = vunpack.c.l.b16 %v9656
      %v9689 = vunpack.c.l.b16 %v9657
      %v9690 = vunpack.c.l.b16 %v9658
      %v9691 = vunpack.c.l.b16 %v9659
      %v9692 = vunpack.c.l.b16 %v9660
      %v9693 = vunpack.c.l.b16 %v9661
      %v9694 = vunpack.c.l.b16 %v9662
      %v9695 = vunpack.c.l.b16 %v9663
      %v9696 = vunpack.c.l.b16 %v9664
      %v9697 = vunpack.c.l.b16 %v9665
      %v9698 = vunpack.c.l.b16 %v9666
      %v9699 = vpack.c.b16 %v9684, %v9683
      %v9700 = vpack.c.b16 %v9686, %v9685
      %v9701 = vpack.c.b16 %v9688, %v9687
      %v9702 = vpack.c.b16 %v9690, %v9689
      %v9703 = vpack.c.b16 %v9692, %v9691
      %v9704 = vpack.c.b16 %v9694, %v9693
      %v9705 = vpack.c.b16 %v9696, %v9695
      %v9706 = vpack.c.b16 %v9698, %v9697
      %9715 = vmatprep.subr.bf16.mxu0 0
      %9716 = vmatpush1.bf16.msra.mxu0 %v9699
      %9717 = vmatprep.subr.bf16.mxu0 0
      %9718 = vmatpush1.bf16.msra.mxu0 %v9700
      %9719 = vmatprep.subr.bf16.mxu0 0
      %9720 = vmatpush1.bf16.msra.mxu0 %v9701
      %9721 = vmatprep.subr.bf16.mxu0 0
      %9722 = vmatpush1.bf16.msra.mxu0 %v9702
      %9723 = vmatprep.subr.bf16.mxu0 0
      %9724 = vmatpush1.bf16.msra.mxu0 %v9703
      %9725 = vmatprep.subr.bf16.mxu0 0
      %9726 = vmatpush1.bf16.msra.mxu0 %v9704
      %9727 = vmatprep.subr.bf16.mxu0 0
      %9728 = vmatpush1.bf16.msra.mxu0 %v9705
      %9729 = vmatprep.subr.bf16.mxu0 0
      %9730 = vmatpush1.bf16.msra.mxu0 %v9706
      %9731 = vmatprep.subr.bf16.mxu0 0
      %9732 = vmatpush1.bf16.msra.mxu0 0
      %9733 = vmatprep.subr.bf16.mxu0 0
      %9734 = vmatpush1.bf16.msra.mxu0 0
      %9735 = vmatprep.subr.bf16.mxu0 0
      %9736 = vmatpush1.bf16.msra.mxu0 0
      %9737 = vmatprep.subr.bf16.mxu0 0
      %9738 = vmatpush1.bf16.msra.mxu0 0
      %9739 = vmatprep.subr.bf16.mxu0 0
      %9740 = vmatpush1.bf16.msra.mxu0 0
      %9741 = vmatprep.subr.bf16.mxu0 0
      %9742 = vmatpush1.bf16.msra.mxu0 0
      %9743 = vmatprep.subr.bf16.mxu0 0
      %9744 = vmatpush1.bf16.msra.mxu0 0
      %9745 = vmatprep.subr.bf16.mxu0 0
      %9746 = vmatpush1.bf16.msra.mxu0 0
      %9747 = vmatprep.mubr.bf16.mxu0 0
      %9748 = vmatmul.mubr.bf16.gmra.mrb[0].mxu0 %v9650
      %v9749 = vpop.f32.mrb[0].mxu0
      %v9750 = vadd.f32 0.0, %v9749
      %v9751 = vpop.f32.mrb[0].mxu0
      %v9752 = vpop.f32.mrb[0].mxu0
      %v9753 = vpop.f32.mrb[0].mxu0
      %9754 = vdwg.mxu0
      %v9755 = vadd.f32 %v9644, %v9750
      %v9756 = vadd.f32 %v9755, %v8755
      %v9757 = vxor.u32 %v9756, 2147483648
      %v9758 = vmul.f32 %v9757, 1.442695
      %v9759 = vpow.pop %v9758
      %v9760 = vadd.f32 %v9759, 1.0
      %v9761 = vrcp.pop %v9760
      %v9762 = vmul.f32 1.0, %v9761
      %v9763 = vmul.f32 %v9756, %v9762
      %9765 = vrot.lane.b32.xlu0 %v9763, 32
      %v9766 = vpop.permute.xlu0 %9765
      %9768 = vst.msk [vmem:[#allocation2 + $0x19] sm:$0xf] %vm9089, %v9766
      %9769 = vst.msk [vmem:[#allocation2 + $0x1a] sm:$0xf] %vm9091, %v9763
      %9770 = vrot.lane.b32.xlu0 %v9763, 64
      %v9771 = vpop.permute.xlu0 %9770
      %9773 = vst.msk [vmem:[#allocation2 + $0x18] sm:$0xf] %vm9096, %v9771
      %v9774 = vld [vmem:[%s5674] ss:$2 sm:$0xf]
      %v9775 = vpack.c.bf16 %v9774, %v9774
      %v9776 = vld [vmem:[%s1 + $0x300] sm:$0xf]
      %v9777 = vld [vmem:[%s1 + $0x304] sm:$0xf]
      %v9778 = vld [vmem:[%s1 + $0x308] sm:$0xf]
      %v9779 = vld [vmem:[%s1 + $0x30c] sm:$0xf]
      %v9780 = vld [vmem:[%s1 + $0x310] sm:$0xf]
      %v9781 = vld [vmem:[%s1 + $0x314] sm:$0xf]
      %v9782 = vld [vmem:[%s1 + $0x318] sm:$0xf]
      %v9783 = vld [vmem:[%s1 + $0x31c] sm:$0xf]
      %v9784 = vld [vmem:[%s1 + $0x320] sm:$0xf]
      %v9785 = vld [vmem:[%s1 + $0x324] sm:$0xf]
      %v9786 = vld [vmem:[%s1 + $0x328] sm:$0xf]
      %v9787 = vld [vmem:[%s1 + $0x32c] sm:$0xf]
      %v9788 = vld [vmem:[%s1 + $0x330] sm:$0xf]
      %v9789 = vld [vmem:[%s1 + $0x334] sm:$0xf]
      %v9790 = vld [vmem:[%s1 + $0x338] sm:$0xf]
      %v9791 = vld [vmem:[%s1 + $0x33c] sm:$0xf]
      %s9792 = scalar_lea.vmem [#allocation3], 113
      %v9793 = vld [vmem:[%s9792] ss:$2 sm:$0xf]
      %v9794 = vpack.c.bf16 %v9793, %v9793
      %v9795 = vld [vmem:[%s1 + $0x340] sm:$0xf]
      %v9796 = vld [vmem:[%s1 + $0x344] sm:$0xf]
      %v9797 = vld [vmem:[%s1 + $0x348] sm:$0xf]
      %v9798 = vld [vmem:[%s1 + $0x34c] sm:$0xf]
      %v9799 = vld [vmem:[%s1 + $0x350] sm:$0xf]
      %v9800 = vld [vmem:[%s1 + $0x354] sm:$0xf]
      %v9801 = vld [vmem:[%s1 + $0x358] sm:$0xf]
      %v9802 = vld [vmem:[%s1 + $0x35c] sm:$0xf]
      %v9803 = vld [vmem:[%s1 + $0x360] sm:$0xf]
      %v9804 = vld [vmem:[%s1 + $0x364] sm:$0xf]
      %v9805 = vld [vmem:[%s1 + $0x368] sm:$0xf]
      %v9806 = vld [vmem:[%s1 + $0x36c] sm:$0xf]
      %v9807 = vld [vmem:[%s1 + $0x370] sm:$0xf]
      %v9808 = vld [vmem:[%s1 + $0x374] sm:$0xf]
      %v9809 = vld [vmem:[%s1 + $0x378] sm:$0xf]
      %v9810 = vld [vmem:[%s1 + $0x37c] sm:$0xf]
      %v9827 = vunpack.c.l.b16 %v9795
      %v9828 = vunpack.c.l.b16 %v9796
      %v9829 = vunpack.c.l.b16 %v9797
      %v9830 = vunpack.c.l.b16 %v9798
      %v9831 = vunpack.c.l.b16 %v9799
      %v9832 = vunpack.c.l.b16 %v9800
      %v9833 = vunpack.c.l.b16 %v9801
      %v9834 = vunpack.c.l.b16 %v9802
      %v9835 = vunpack.c.l.b16 %v9803
      %v9836 = vunpack.c.l.b16 %v9804
      %v9837 = vunpack.c.l.b16 %v9805
      %v9838 = vunpack.c.l.b16 %v9806
      %v9839 = vunpack.c.l.b16 %v9807
      %v9840 = vunpack.c.l.b16 %v9808
      %v9841 = vunpack.c.l.b16 %v9809
      %v9842 = vunpack.c.l.b16 %v9810
      %v9843 = vpack.c.b16 %v9828, %v9827
      %v9844 = vpack.c.b16 %v9830, %v9829
      %v9845 = vpack.c.b16 %v9832, %v9831
      %v9846 = vpack.c.b16 %v9834, %v9833
      %v9847 = vpack.c.b16 %v9836, %v9835
      %v9848 = vpack.c.b16 %v9838, %v9837
      %v9849 = vpack.c.b16 %v9840, %v9839
      %v9850 = vpack.c.b16 %v9842, %v9841
      %9859 = vmatprep.subr.bf16.mxu0 0
      %9860 = vmatpush1.bf16.msra.mxu0 %v9843
      %9861 = vmatprep.subr.bf16.mxu0 0
      %9862 = vmatpush1.bf16.msra.mxu0 %v9844
      %9863 = vmatprep.subr.bf16.mxu0 0
      %9864 = vmatpush1.bf16.msra.mxu0 %v9845
      %9865 = vmatprep.subr.bf16.mxu0 0
      %9866 = vmatpush1.bf16.msra.mxu0 %v9846
      %9867 = vmatprep.subr.bf16.mxu0 0
      %9868 = vmatpush1.bf16.msra.mxu0 %v9847
      %9869 = vmatprep.subr.bf16.mxu0 0
      %9870 = vmatpush1.bf16.msra.mxu0 %v9848
      %9871 = vmatprep.subr.bf16.mxu0 0
      %9872 = vmatpush1.bf16.msra.mxu0 %v9849
      %9873 = vmatprep.subr.bf16.mxu0 0
      %9874 = vmatpush1.bf16.msra.mxu0 %v9850
      %9875 = vmatprep.subr.bf16.mxu0 0
      %9876 = vmatpush1.bf16.msra.mxu0 0
      %9877 = vmatprep.subr.bf16.mxu0 0
      %9878 = vmatpush1.bf16.msra.mxu0 0
      %9879 = vmatprep.subr.bf16.mxu0 0
      %9880 = vmatpush1.bf16.msra.mxu0 0
      %9881 = vmatprep.subr.bf16.mxu0 0
      %9882 = vmatpush1.bf16.msra.mxu0 0
      %9883 = vmatprep.subr.bf16.mxu0 0
      %9884 = vmatpush1.bf16.msra.mxu0 0
      %9885 = vmatprep.subr.bf16.mxu0 0
      %9886 = vmatpush1.bf16.msra.mxu0 0
      %9887 = vmatprep.subr.bf16.mxu0 0
      %9888 = vmatpush1.bf16.msra.mxu0 0
      %9889 = vmatprep.subr.bf16.mxu0 0
      %9890 = vmatpush1.bf16.msra.mxu0 0
      %9891 = vmatprep.mubr.bf16.mxu0 0
      %9892 = vmatmul.mubr.bf16.gmra.mrb[0].mxu0 %v9794
      %v9893 = vpop.f32.mrb[0].mxu0
      %v9894 = vadd.f32 0.0, %v9893
      %v9895 = vpop.f32.mrb[0].mxu0
      %v9896 = vpop.f32.mrb[0].mxu0
      %v9897 = vpop.f32.mrb[0].mxu0
      %9898 = vdwg.mxu0
      %v9915 = vunpack.c.l.b16 %v9776
      %v9916 = vunpack.c.l.b16 %v9777
      %v9917 = vunpack.c.l.b16 %v9778
      %v9918 = vunpack.c.l.b16 %v9779
      %v9919 = vunpack.c.l.b16 %v9780
      %v9920 = vunpack.c.l.b16 %v9781
      %v9921 = vunpack.c.l.b16 %v9782
      %v9922 = vunpack.c.l.b16 %v9783
      %v9923 = vunpack.c.l.b16 %v9784
      %v9924 = vunpack.c.l.b16 %v9785
      %v9925 = vunpack.c.l.b16 %v9786
      %v9926 = vunpack.c.l.b16 %v9787
      %v9927 = vunpack.c.l.b16 %v9788
      %v9928 = vunpack.c.l.b16 %v9789
      %v9929 = vunpack.c.l.b16 %v9790
      %v9930 = vunpack.c.l.b16 %v9791
      %v9931 = vpack.c.b16 %v9916, %v9915
      %v9932 = vpack.c.b16 %v9918, %v9917
      %v9933 = vpack.c.b16 %v9920, %v9919
      %v9934 = vpack.c.b16 %v9922, %v9921
      %v9935 = vpack.c.b16 %v9924, %v9923
      %v9936 = vpack.c.b16 %v9926, %v9925
      %v9937 = vpack.c.b16 %v9928, %v9927
      %v9938 = vpack.c.b16 %v9930, %v9929
      %9947 = vmatprep.subr.bf16.mxu0 0
      %9948 = vmatpush1.bf16.msra.mxu0 %v9931
      %9949 = vmatprep.subr.bf16.mxu0 0
      %9950 = vmatpush1.bf16.msra.mxu0 %v9932
      %9951 = vmatprep.subr.bf16.mxu0 0
      %9952 = vmatpush1.bf16.msra.mxu0 %v9933
      %9953 = vmatprep.subr.bf16.mxu0 0
      %9954 = vmatpush1.bf16.msra.mxu0 %v9934
      %9955 = vmatprep.subr.bf16.mxu0 0
      %9956 = vmatpush1.bf16.msra.mxu0 %v9935
      %9957 = vmatprep.subr.bf16.mxu0 0
      %9958 = vmatpush1.bf16.msra.mxu0 %v9936
      %9959 = vmatprep.subr.bf16.mxu0 0
      %9960 = vmatpush1.bf16.msra.mxu0 %v9937
      %9961 = vmatprep.subr.bf16.mxu0 0
      %9962 = vmatpush1.bf16.msra.mxu0 %v9938
      %9963 = vmatprep.subr.bf16.mxu0 0
      %9964 = vmatpush1.bf16.msra.mxu0 0
      %9965 = vmatprep.subr.bf16.mxu0 0
      %9966 = vmatpush1.bf16.msra.mxu0 0
      %9967 = vmatprep.subr.bf16.mxu0 0
      %9968 = vmatpush1.bf16.msra.mxu0 0
      %9969 = vmatprep.subr.bf16.mxu0 0
      %9970 = vmatpush1.bf16.msra.mxu0 0
      %9971 = vmatprep.subr.bf16.mxu0 0
      %9972 = vmatpush1.bf16.msra.mxu0 0
      %9973 = vmatprep.subr.bf16.mxu0 0
      %9974 = vmatpush1.bf16.msra.mxu0 0
      %9975 = vmatprep.subr.bf16.mxu0 0
      %9976 = vmatpush1.bf16.msra.mxu0 0
      %9977 = vmatprep.subr.bf16.mxu0 0
      %9978 = vmatpush1.bf16.msra.mxu0 0
      %9979 = vmatprep.mubr.bf16.mxu0 0
      %9980 = vmatmul.mubr.bf16.gmra.mrb[0].mxu0 %v9775
      %v9981 = vpop.f32.mrb[0].mxu0
      %v9982 = vadd.f32 %v9894, %v9981
      %v9983 = vpop.f32.mrb[0].mxu0
      %v9984 = vpop.f32.mrb[0].mxu0
      %v9985 = vpop.f32.mrb[0].mxu0
      %9986 = vdwg.mxu0
      %s9987 = scalar_lea.vmem [#allocation3], 129
      %v9988 = vld [vmem:[%s9987] ss:$2 sm:$0xf]
      %v9989 = vpack.c.bf16 %v9988, %v9988
      %v9990 = vld [vmem:[%s1 + $0x380] sm:$0xf]
      %v9991 = vld [vmem:[%s1 + $0x384] sm:$0xf]
      %v9992 = vld [vmem:[%s1 + $0x388] sm:$0xf]
      %v9993 = vld [vmem:[%s1 + $0x38c] sm:$0xf]
      %v9994 = vld [vmem:[%s1 + $0x390] sm:$0xf]
      %v9995 = vld [vmem:[%s1 + $0x394] sm:$0xf]
      %v9996 = vld [vmem:[%s1 + $0x398] sm:$0xf]
      %v9997 = vld [vmem:[%s1 + $0x39c] sm:$0xf]
      %v9998 = vld [vmem:[%s1 + $0x3a0] sm:$0xf]
      %v9999 = vld [vmem:[%s1 + $0x3a4] sm:$0xf]
      %v10000 = vld [vmem:[%s1 + $0x3a8] sm:$0xf]
      %v10001 = vld [vmem:[%s1 + $0x3ac] sm:$0xf]
      %v10002 = vld [vmem:[%s1 + $0x3b0] sm:$0xf]
      %v10003 = vld [vmem:[%s1 + $0x3b4] sm:$0xf]
      %v10004 = vld [vmem:[%s1 + $0x3b8] sm:$0xf]
      %v10005 = vld [vmem:[%s1 + $0x3bc] sm:$0xf]
      %v10022 = vunpack.c.l.b16 %v9990
      %v10023 = vunpack.c.l.b16 %v9991
      %v10024 = vunpack.c.l.b16 %v9992
      %v10025 = vunpack.c.l.b16 %v9993
      %v10026 = vunpack.c.l.b16 %v9994
      %v10027 = vunpack.c.l.b16 %v9995
      %v10028 = vunpack.c.l.b16 %v9996
      %v10029 = vunpack.c.l.b16 %v9997
      %v10030 = vunpack.c.l.b16 %v9998
      %v10031 = vunpack.c.l.b16 %v9999
      %v10032 = vunpack.c.l.b16 %v10000
      %v10033 = vunpack.c.l.b16 %v10001
      %v10034 = vunpack.c.l.b16 %v10002
      %v10035 = vunpack.c.l.b16 %v10003
      %v10036 = vunpack.c.l.b16 %v10004
      %v10037 = vunpack.c.l.b16 %v10005
      %v10038 = vpack.c.b16 %v10023, %v10022
      %v10039 = vpack.c.b16 %v10025, %v10024
      %v10040 = vpack.c.b16 %v10027, %v10026
      %v10041 = vpack.c.b16 %v10029, %v10028
      %v10042 = vpack.c.b16 %v10031, %v10030
      %v10043 = vpack.c.b16 %v10033, %v10032
      %v10044 = vpack.c.b16 %v10035, %v10034
      %v10045 = vpack.c.b16 %v10037, %v10036
      %10054 = vmatprep.subr.bf16.mxu0 0
      %10055 = vmatpush1.bf16.msra.mxu0 %v10038
      %10056 = vmatprep.subr.bf16.mxu0 0
      %10057 = vmatpush1.bf16.msra.mxu0 %v10039
      %10058 = vmatprep.subr.bf16.mxu0 0
      %10059 = vmatpush1.bf16.msra.mxu0 %v10040
      %10060 = vmatprep.subr.bf16.mxu0 0
      %10061 = vmatpush1.bf16.msra.mxu0 %v10041
      %10062 = vmatprep.subr.bf16.mxu0 0
      %10063 = vmatpush1.bf16.msra.mxu0 %v10042
      %10064 = vmatprep.subr.bf16.mxu0 0
      %10065 = vmatpush1.bf16.msra.mxu0 %v10043
      %10066 = vmatprep.subr.bf16.mxu0 0
      %10067 = vmatpush1.bf16.msra.mxu0 %v10044
      %10068 = vmatprep.subr.bf16.mxu0 0
      %10069 = vmatpush1.bf16.msra.mxu0 %v10045
      %10070 = vmatprep.subr.bf16.mxu0 0
      %10071 = vmatpush1.bf16.msra.mxu0 0
      %10072 = vmatprep.subr.bf16.mxu0 0
      %10073 = vmatpush1.bf16.msra.mxu0 0
      %10074 = vmatprep.subr.bf16.mxu0 0
      %10075 = vmatpush1.bf16.msra.mxu0 0
      %10076 = vmatprep.subr.bf16.mxu0 0
      %10077 = vmatpush1.bf16.msra.mxu0 0
      %10078 = vmatprep.subr.bf16.mxu0 0
      %10079 = vmatpush1.bf16.msra.mxu0 0
      %10080 = vmatprep.subr.bf16.mxu0 0
      %10081 = vmatpush1.bf16.msra.mxu0 0
      %10082 = vmatprep.subr.bf16.mxu0 0
      %10083 = vmatpush1.bf16.msra.mxu0 0
      %10084 = vmatprep.subr.bf16.mxu0 0
      %10085 = vmatpush1.bf16.msra.mxu0 0
      %10086 = vmatprep.mubr.bf16.mxu0 0
      %10087 = vmatmul.mubr.bf16.gmra.mrb[0].mxu0 %v9989
      %v10088 = vpop.f32.mrb[0].mxu0
      %v10089 = vadd.f32 0.0, %v10088
      %v10090 = vpop.f32.mrb[0].mxu0
      %v10091 = vpop.f32.mrb[0].mxu0
      %v10092 = vpop.f32.mrb[0].mxu0
      %10093 = vdwg.mxu0
      %v10094 = vadd.f32 %v9982, %v10089
      %v10095 = vadd.f32 %v10094, %v8755
      %v10096 = vxor.u32 %v10095, 2147483648
      %v10097 = vmul.f32 %v10096, 1.442695
      %v10098 = vpow.pop %v10097
      %v10099 = vadd.f32 %v10098, 1.0
      %v10100 = vrcp.pop %v10099
      %v10101 = vmul.f32 1.0, %v10100
      %v10102 = vmul.f32 %v10095, %v10101
      %10104 = vrot.lane.b32.xlu0 %v10102, 32
      %v10105 = vpop.permute.xlu0 %10104
      %10107 = vst.msk [vmem:[#allocation2 + $0x21] sm:$0xf] %vm9089, %v10105
      %10108 = vst.msk [vmem:[#allocation2 + $0x22] sm:$0xf] %vm9091, %v10102
      %10109 = vrot.lane.b32.xlu0 %v10102, 64
      %v10110 = vpop.permute.xlu0 %10109
      %10112 = vst.msk [vmem:[#allocation2 + $0x20] sm:$0xf] %vm9096, %v10110
      %v10113 = vld [vmem:[%s2 + $0x5] sm:$0x1]
      %v10114 = vlaneseq
      %v10115 = vshrl.u32 %v10114, 7
      %v10116 = vsub.s32 0, %v10115
      %v10117 = vrot.slane %v10113, %v10116
      %v10118 = vld [vmem:[#allocation2] sm:$0xff]
      %v10119 = vld [vmem:[#allocation2 + $0x8] sm:$0xff]
      %v10120 = vld [vmem:[#allocation2 + $0x10] sm:$0xff]
      %v10121 = vld [vmem:[#allocation2 + $0x18] sm:$0xff]
      %v10122 = vpack.c.bf16 %v10119, %v10118
      %v10123 = vpack.c.bf16 %v10121, %v10120
      %v10124 = vld [vmem:[%s1 + $0x3c0] sm:$0xf]
      %v10125 = vld [vmem:[%s1 + $0x3c4] sm:$0xf]
      %v10126 = vld [vmem:[%s1 + $0x3c8] sm:$0xf]
      %v10127 = vld [vmem:[%s1 + $0x3cc] sm:$0xf]
      %v10128 = vld [vmem:[%s1 + $0x3d0] sm:$0xf]
      %v10129 = vld [vmem:[%s1 + $0x3d4] sm:$0xf]
      %v10130 = vld [vmem:[%s1 + $0x3d8] sm:$0xf]
      %v10131 = vld [vmem:[%s1 + $0x3dc] sm:$0xf]
      %v10132 = vld [vmem:[%s1 + $0x3e0] sm:$0xf]
      %v10133 = vld [vmem:[%s1 + $0x3e4] sm:$0xf]
      %v10134 = vld [vmem:[%s1 + $0x3e8] sm:$0xf]
      %v10135 = vld [vmem:[%s1 + $0x3ec] sm:$0xf]
      %v10136 = vld [vmem:[%s1 + $0x3f0] sm:$0xf]
      %v10137 = vld [vmem:[%s1 + $0x3f4] sm:$0xf]
      %v10138 = vld [vmem:[%s1 + $0x3f8] sm:$0xf]
      %v10139 = vld [vmem:[%s1 + $0x3fc] sm:$0xf]
      %v10140 = vld [vmem:[#allocation2 + $0x20] sm:$0xff]
      %v10141 = vpack.c.bf16 %v10120, %v10119
      %v10142 = vpack.c.bf16 %v10140, %v10121
      %v10143 = vld [vmem:[%s1 + $0x400] sm:$0xf]
      %v10144 = vld [vmem:[%s1 + $0x404] sm:$0xf]
      %v10145 = vld [vmem:[%s1 + $0x408] sm:$0xf]
      %v10146 = vld [vmem:[%s1 + $0x40c] sm:$0xf]
      %v10147 = vld [vmem:[%s1 + $0x410] sm:$0xf]
      %v10148 = vld [vmem:[%s1 + $0x414] sm:$0xf]
      %v10149 = vld [vmem:[%s1 + $0x418] sm:$0xf]
      %v10150 = vld [vmem:[%s1 + $0x41c] sm:$0xf]
      %v10151 = vld [vmem:[%s1 + $0x420] sm:$0xf]
      %v10152 = vld [vmem:[%s1 + $0x424] sm:$0xf]
      %v10153 = vld [vmem:[%s1 + $0x428] sm:$0xf]
      %v10154 = vld [vmem:[%s1 + $0x42c] sm:$0xf]
      %v10155 = vld [vmem:[%s1 + $0x430] sm:$0xf]
      %v10156 = vld [vmem:[%s1 + $0x434] sm:$0xf]
      %v10157 = vld [vmem:[%s1 + $0x438] sm:$0xf]
      %v10158 = vld [vmem:[%s1 + $0x43c] sm:$0xf]
      %v10175 = vunpack.c.l.b16 %v10143
      %v10176 = vunpack.c.l.b16 %v10144
      %v10177 = vunpack.c.l.b16 %v10145
      %v10178 = vunpack.c.l.b16 %v10146
      %v10179 = vunpack.c.l.b16 %v10147
      %v10180 = vunpack.c.l.b16 %v10148
      %v10181 = vunpack.c.l.b16 %v10149
      %v10182 = vunpack.c.l.b16 %v10150
      %v10183 = vunpack.c.l.b16 %v10151
      %v10184 = vunpack.c.l.b16 %v10152
      %v10185 = vunpack.c.l.b16 %v10153
      %v10186 = vunpack.c.l.b16 %v10154
      %v10187 = vunpack.c.l.b16 %v10155
      %v10188 = vunpack.c.l.b16 %v10156
      %v10189 = vunpack.c.l.b16 %v10157
      %v10190 = vunpack.c.l.b16 %v10158
      %v10191 = vpack.c.b16 %v10176, %v10175
      %v10192 = vpack.c.b16 %v10178, %v10177
      %v10193 = vpack.c.b16 %v10180, %v10179
      %v10194 = vpack.c.b16 %v10182, %v10181
      %v10195 = vpack.c.b16 %v10184, %v10183
      %v10196 = vpack.c.b16 %v10186, %v10185
      %v10197 = vpack.c.b16 %v10188, %v10187
      %v10198 = vpack.c.b16 %v10190, %v10189
      %10207 = vmatprep.subr.bf16.mxu0 0
      %10208 = vmatpush1.bf16.msra.mxu0 %v10191
      %10209 = vmatprep.subr.bf16.mxu0 0
      %10210 = vmatpush1.bf16.msra.mxu0 %v10192
      %10211 = vmatprep.subr.bf16.mxu0 0
      %10212 = vmatpush1.bf16.msra.mxu0 %v10193
      %10213 = vmatprep.subr.bf16.mxu0 0
      %10214 = vmatpush1.bf16.msra.mxu0 %v10194
      %10215 = vmatprep.subr.bf16.mxu0 0
      %10216 = vmatpush1.bf16.msra.mxu0 %v10195
      %10217 = vmatprep.subr.bf16.mxu0 0
      %10218 = vmatpush1.bf16.msra.mxu0 %v10196
      %10219 = vmatprep.subr.bf16.mxu0 0
      %10220 = vmatpush1.bf16.msra.mxu0 %v10197
      %10221 = vmatprep.subr.bf16.mxu0 0
      %10222 = vmatpush1.bf16.msra.mxu0 %v10198
      %10223 = vmatprep.subr.bf16.mxu0 0
      %10224 = vmatpush1.bf16.msra.mxu0 0
      %10225 = vmatprep.subr.bf16.mxu0 0
      %10226 = vmatpush1.bf16.msra.mxu0 0
      %10227 = vmatprep.subr.bf16.mxu0 0
      %10228 = vmatpush1.bf16.msra.mxu0 0
      %10229 = vmatprep.subr.bf16.mxu0 0
      %10230 = vmatpush1.bf16.msra.mxu0 0
      %10231 = vmatprep.subr.bf16.mxu0 0
      %10232 = vmatpush1.bf16.msra.mxu0 0
      %10233 = vmatprep.subr.bf16.mxu0 0
      %10234 = vmatpush1.bf16.msra.mxu0 0
      %10235 = vmatprep.subr.bf16.mxu0 0
      %10236 = vmatpush1.bf16.msra.mxu0 0
      %10237 = vmatprep.subr.bf16.mxu0 0
      %10238 = vmatpush1.bf16.msra.mxu0 0
      %10239 = vmatprep.mubr.bf16.mxu0 0
      %10240 = vmatmul.mubr.bf16.gmra.mrb[0].mxu0 %v10141
      %v10241 = vpop.f32.mrb[0].mxu0
      %v10242 = vadd.f32 0.0, %v10241
      %v10243 = vpop.f32.mrb[0].mxu0
      %v10244 = vpop.f32.mrb[0].mxu0
      %v10245 = vadd.f32 0.0, %v10244
      %v10246 = vpop.f32.mrb[0].mxu0
      %10247 = vmatprep.mubr.bf16.mxu0 0
      %10248 = vmatmul.mubr.bf16.gmra.mrb[0].mxu0 %v10142
      %v10249 = vpop.f32.mrb[0].mxu0
      %v10250 = vadd.f32 0.0, %v10249
      %v10251 = vpop.f32.mrb[0].mxu0
      %v10252 = vpop.f32.mrb[0].mxu0
      %v10253 = vadd.f32 0.0, %v10252
      %v10254 = vpop.f32.mrb[0].mxu0
      %10255 = vdwg.mxu0
      %v10272 = vunpack.c.l.b16 %v10124
      %v10273 = vunpack.c.l.b16 %v10125
      %v10274 = vunpack.c.l.b16 %v10126
      %v10275 = vunpack.c.l.b16 %v10127
      %v10276 = vunpack.c.l.b16 %v10128
      %v10277 = vunpack.c.l.b16 %v10129
      %v10278 = vunpack.c.l.b16 %v10130
      %v10279 = vunpack.c.l.b16 %v10131
      %v10280 = vunpack.c.l.b16 %v10132
      %v10281 = vunpack.c.l.b16 %v10133
      %v10282 = vunpack.c.l.b16 %v10134
      %v10283 = vunpack.c.l.b16 %v10135
      %v10284 = vunpack.c.l.b16 %v10136
      %v10285 = vunpack.c.l.b16 %v10137
      %v10286 = vunpack.c.l.b16 %v10138
      %v10287 = vunpack.c.l.b16 %v10139
      %v10288 = vpack.c.b16 %v10273, %v10272
      %v10289 = vpack.c.b16 %v10275, %v10274
      %v10290 = vpack.c.b16 %v10277, %v10276
      %v10291 = vpack.c.b16 %v10279, %v10278
      %v10292 = vpack.c.b16 %v10281, %v10280
      %v10293 = vpack.c.b16 %v10283, %v10282
      %v10294 = vpack.c.b16 %v10285, %v10284
      %v10295 = vpack.c.b16 %v10287, %v10286
      %10304 = vmatprep.subr.bf16.mxu0 0
      %10305 = vmatpush1.bf16.msra.mxu0 %v10288
      %10306 = vmatprep.subr.bf16.mxu0 0
      %10307 = vmatpush1.bf16.msra.mxu0 %v10289
      %10308 = vmatprep.subr.bf16.mxu0 0
      %10309 = vmatpush1.bf16.msra.mxu0 %v10290
      %10310 = vmatprep.subr.bf16.mxu0 0
      %10311 = vmatpush1.bf16.msra.mxu0 %v10291
      %10312 = vmatprep.subr.bf16.mxu0 0
      %10313 = vmatpush1.bf16.msra.mxu0 %v10292
      %10314 = vmatprep.subr.bf16.mxu0 0
      %10315 = vmatpush1.bf16.msra.mxu0 %v10293
      %10316 = vmatprep.subr.bf16.mxu0 0
      %10317 = vmatpush1.bf16.msra.mxu0 %v10294
      %10318 = vmatprep.subr.bf16.mxu0 0
      %10319 = vmatpush1.bf16.msra.mxu0 %v10295
      %10320 = vmatprep.subr.bf16.mxu0 0
      %10321 = vmatpush1.bf16.msra.mxu0 0
      %10322 = vmatprep.subr.bf16.mxu0 0
      %10323 = vmatpush1.bf16.msra.mxu0 0
      %10324 = vmatprep.subr.bf16.mxu0 0
      %10325 = vmatpush1.bf16.msra.mxu0 0
      %10326 = vmatprep.subr.bf16.mxu0 0
      %10327 = vmatpush1.bf16.msra.mxu0 0
      %10328 = vmatprep.subr.bf16.mxu0 0
      %10329 = vmatpush1.bf16.msra.mxu0 0
      %10330 = vmatprep.subr.bf16.mxu0 0
      %10331 = vmatpush1.bf16.msra.mxu0 0
      %10332 = vmatprep.subr.bf16.mxu0 0
      %10333 = vmatpush1.bf16.msra.mxu0 0
      %10334 = vmatprep.subr.bf16.mxu0 0
      %10335 = vmatpush1.bf16.msra.mxu0 0
      %10336 = vmatprep.mubr.bf16.mxu0 0
      %10337 = vmatmul.mubr.bf16.gmra.mrb[0].mxu0 %v10122
      %v10338 = vpop.f32.mrb[0].mxu0
      %v10339 = vadd.f32 %v10242, %v10338
      %v10340 = vpop.f32.mrb[0].mxu0
      %v10341 = vpop.f32.mrb[0].mxu0
      %v10342 = vadd.f32 %v10245, %v10341
      %v10343 = vpop.f32.mrb[0].mxu0
      %10344 = vmatprep.mubr.bf16.mxu0 0
      %10345 = vmatmul.mubr.bf16.gmra.mrb[0].mxu0 %v10123
      %v10346 = vpop.f32.mrb[0].mxu0
      %v10347 = vadd.f32 %v10250, %v10346
      %v10348 = vpop.f32.mrb[0].mxu0
      %v10349 = vpop.f32.mrb[0].mxu0
      %v10350 = vadd.f32 %v10253, %v10349
      %v10351 = vpop.f32.mrb[0].mxu0
      %10352 = vdwg.mxu0
      %v10353 = vld [vmem:[#allocation2 + $0x10] sm:$0xff]
      %v10354 = vld [vmem:[#allocation2 + $0x18] sm:$0xff]
      %v10355 = vld [vmem:[#allocation2 + $0x20] sm:$0xff]
      %v10356 = vld [vmem:[#allocation2 + $0x28] sm:$0xff]
      %v10357 = vpack.c.bf16 %v10354, %v10353
      %v10358 = vpack.c.bf16 %v10356, %v10355
      %v10359 = vld [vmem:[%s1 + $0x440] sm:$0xf]
      %v10360 = vld [vmem:[%s1 + $0x444] sm:$0xf]
      %v10361 = vld [vmem:[%s1 + $0x448] sm:$0xf]
      %v10362 = vld [vmem:[%s1 + $0x44c] sm:$0xf]
      %v10363 = vld [vmem:[%s1 + $0x450] sm:$0xf]
      %v10364 = vld [vmem:[%s1 + $0x454] sm:$0xf]
      %v10365 = vld [vmem:[%s1 + $0x458] sm:$0xf]
      %v10366 = vld [vmem:[%s1 + $0x45c] sm:$0xf]
      %v10367 = vld [vmem:[%s1 + $0x460] sm:$0xf]
      %v10368 = vld [vmem:[%s1 + $0x464] sm:$0xf]
      %v10369 = vld [vmem:[%s1 + $0x468] sm:$0xf]
      %v10370 = vld [vmem:[%s1 + $0x46c] sm:$0xf]
      %v10371 = vld [vmem:[%s1 + $0x470] sm:$0xf]
      %v10372 = vld [vmem:[%s1 + $0x474] sm:$0xf]
      %v10373 = vld [vmem:[%s1 + $0x478] sm:$0xf]
      %v10374 = vld [vmem:[%s1 + $0x47c] sm:$0xf]
      %v10391 = vunpack.c.l.b16 %v10359
      %v10392 = vunpack.c.l.b16 %v10360
      %v10393 = vunpack.c.l.b16 %v10361
      %v10394 = vunpack.c.l.b16 %v10362
      %v10395 = vunpack.c.l.b16 %v10363
      %v10396 = vunpack.c.l.b16 %v10364
      %v10397 = vunpack.c.l.b16 %v10365
      %v10398 = vunpack.c.l.b16 %v10366
      %v10399 = vunpack.c.l.b16 %v10367
      %v10400 = vunpack.c.l.b16 %v10368
      %v10401 = vunpack.c.l.b16 %v10369
      %v10402 = vunpack.c.l.b16 %v10370
      %v10403 = vunpack.c.l.b16 %v10371
      %v10404 = vunpack.c.l.b16 %v10372
      %v10405 = vunpack.c.l.b16 %v10373
      %v10406 = vunpack.c.l.b16 %v10374
      %v10407 = vpack.c.b16 %v10392, %v10391
      %v10408 = vpack.c.b16 %v10394, %v10393
      %v10409 = vpack.c.b16 %v10396, %v10395
      %v10410 = vpack.c.b16 %v10398, %v10397
      %v10411 = vpack.c.b16 %v10400, %v10399
      %v10412 = vpack.c.b16 %v10402, %v10401
      %v10413 = vpack.c.b16 %v10404, %v10403
      %v10414 = vpack.c.b16 %v10406, %v10405
      %10423 = vmatprep.subr.bf16.mxu0 0
      %10424 = vmatpush1.bf16.msra.mxu0 %v10407
      %10425 = vmatprep.subr.bf16.mxu0 0
      %10426 = vmatpush1.bf16.msra.mxu0 %v10408
      %10427 = vmatprep.subr.bf16.mxu0 0
      %10428 = vmatpush1.bf16.msra.mxu0 %v10409
      %10429 = vmatprep.subr.bf16.mxu0 0
      %10430 = vmatpush1.bf16.msra.mxu0 %v10410
      %10431 = vmatprep.subr.bf16.mxu0 0
      %10432 = vmatpush1.bf16.msra.mxu0 %v10411
      %10433 = vmatprep.subr.bf16.mxu0 0
      %10434 = vmatpush1.bf16.msra.mxu0 %v10412
      %10435 = vmatprep.subr.bf16.mxu0 0
      %10436 = vmatpush1.bf16.msra.mxu0 %v10413
      %10437 = vmatprep.subr.bf16.mxu0 0
      %10438 = vmatpush1.bf16.msra.mxu0 %v10414
      %10439 = vmatprep.subr.bf16.mxu0 0
      %10440 = vmatpush1.bf16.msra.mxu0 0
      %10441 = vmatprep.subr.bf16.mxu0 0
      %10442 = vmatpush1.bf16.msra.mxu0 0
      %10443 = vmatprep.subr.bf16.mxu0 0
      %10444 = vmatpush1.bf16.msra.mxu0 0
      %10445 = vmatprep.subr.bf16.mxu0 0
      %10446 = vmatpush1.bf16.msra.mxu0 0
      %10447 = vmatprep.subr.bf16.mxu0 0
      %10448 = vmatpush1.bf16.msra.mxu0 0
      %10449 = vmatprep.subr.bf16.mxu0 0
      %10450 = vmatpush1.bf16.msra.mxu0 0
      %10451 = vmatprep.subr.bf16.mxu0 0
      %10452 = vmatpush1.bf16.msra.mxu0 0
      %10453 = vmatprep.subr.bf16.mxu0 0
      %10454 = vmatpush1.bf16.msra.mxu0 0
      %10455 = vmatprep.mubr.bf16.mxu0 0
      %10456 = vmatmul.mubr.bf16.gmra.mrb[0].mxu0 %v10357
      %v10457 = vpop.f32.mrb[0].mxu0
      %v10458 = vadd.f32 0.0, %v10457
      %v10459 = vpop.f32.mrb[0].mxu0
      %v10460 = vpop.f32.mrb[0].mxu0
      %v10461 = vadd.f32 0.0, %v10460
      %v10462 = vpop.f32.mrb[0].mxu0
      %10463 = vmatprep.mubr.bf16.mxu0 0
      %10464 = vmatmul.mubr.bf16.gmra.mrb[0].mxu0 %v10358
      %v10465 = vpop.f32.mrb[0].mxu0
      %v10466 = vadd.f32 0.0, %v10465
      %v10467 = vpop.f32.mrb[0].mxu0
      %v10468 = vpop.f32.mrb[0].mxu0
      %v10469 = vadd.f32 0.0, %v10468
      %v10470 = vpop.f32.mrb[0].mxu0
      %10471 = vdwg.mxu0
      %v10472 = vadd.f32 %v10339, %v10458
      %v10473 = vadd.f32 %v10342, %v10461
      %v10474 = vadd.f32 %v10347, %v10466
      %v10475 = vadd.f32 %v10350, %v10469
      %v10476 = vadd.f32 %v10472, %v10117
      %v10477 = vadd.f32 %v10473, %v10117
      %v10478 = vadd.f32 %v10474, %v10117
      %v10479 = vadd.f32 %v10475, %v10117
      %10480 = vst [vmem:[%s197] sm:$0xff] %v10476
      %10481 = vst [vmem:[%s197 + $0x8] sm:$0xff] %v10477
      %10482 = vst [vmem:[%s197 + $0x10] sm:$0xff] %v10478
      %10483 = vst [vmem:[%s197 + $0x18] sm:$0xff] %v10479
      %p10484 = scmp.lt.s32.totalorder %s15, 1
      %s10485 = scalar_select %p10484, %s15, 1
      %s10486 = smul.addr %s10485, 4
      %s10487 = smul.addr %s10486, 8
      %s10488 = scalar_lea.vmem %s4, %s10487
      // Predicated region
      $region37: #{controlnet_cond_embedding.1} parent=35 // pred_check
        %p10489 = pneg %p122
      $region38: #{controlnet_cond_embedding.1} parent=35 // pred_check_branch
        %10491 = sbr.rel (%p10489) target = $region40
      $region39: #{controlnet_cond_embedding.1} parent=35 // pred_region
        _
      $region40: #{controlnet_cond_embedding.1} parent=35 // pred_fallthru
        _
    $region36: #{controlnet_cond_embedding.1} parent=5 // pred_fallthru
      _
    %p10492 = scmp.le.s32.totalorder 2, %s10
    // Predicated region
    $region41: #{controlnet_cond_embedding.1} parent=5 // pred_check
      %p10493 = pneg %p10492
    $region42: #{controlnet_cond_embedding.1} parent=5 // pred_check_branch
      %10495 = sbr.rel (%p10493) target = $region44
    $region43: #{controlnet_cond_embedding.1} parent=5 // pred_region
      %s10496 = ssub.s32 %s10, 2
      // Predicated region
      $region45: #{controlnet_cond_embedding.1} parent=43 // pred_check
        %p10497 = pneg %p128
      $region46: #{controlnet_cond_embedding.1} parent=43 // pred_check_branch
        %10499 = sbr.rel (%p10497) target = $region48
      $region47: #{controlnet_cond_embedding.1} parent=43 // pred_region
        %p10500 = scmp.lt.s32.totalorder %s16, 1
        %s10501 = scalar_select %p10500, %s16, 1
        %s10502 = smul.addr %s10501, 4
        %s10503 = smul.addr %s10502, 8
        %s10504 = scalar_lea.vmem %s4, %s10503
      $region48: #{controlnet_cond_embedding.1} parent=43 // pred_fallthru
        _
    $region44: #{controlnet_cond_embedding.1} parent=5 // pred_fallthru
      _
  $region6: #{controlnet_cond_embedding.1} parent=0 // loop_footer
    %s14 = sadd.s32 1, %s10
  $region7: #{controlnet_cond_embedding.1} parent=0 // loop_footer_branch
    %9 = sbr.rel target = $region3
  $region8: #{controlnet_cond_embedding.1} parent=0 // loop_exit
    _

</llo_original>
